<compile_context>
chip_gen: v7x
topology: tpu7x:2x2x1
jax: 0.10.0
libtpu: 0.0.40
codegen_flags: <defaults>
</compile_context>

<pallas_src>
import math
import numpy as np
import jax
import jax.numpy as jnp
from jax.experimental import pallas as pl
from jax.experimental.pallas import tpu as pltpu

D_MODEL = 512
N_HEADS = 8
D_K = 64
D_FF = 2048
LN_EPS = 1e-5
_SCALE = 1.0 / math.sqrt(64.0)


def _to_head_major(a):
    """[M, H, DK] -> [H, M, DK] (lane-layout aware when einshape exists)."""
    if hasattr(pltpu, "einshape"):
        return pltpu.einshape("mhd->hmd", a)
    return jnp.transpose(a, (1, 0, 2))


def _from_head_major(a):
    """[H, M, DK] -> [M, H, DK]."""
    if hasattr(pltpu, "einshape"):
        return pltpu.einshape("hmd->mhd", a)
    return jnp.transpose(a, (1, 0, 2))


# ---------------------------------------------------------------------------
# Fused encoder-layer kernel for one (batch, query-tile) grid step.
#   Q projection -> batched-over-heads scaled-dot-product attention against
#   precomputed head-major K^T / V -> single flat output projection ->
#   residual + LayerNorm -> position-wise FFN -> residual + LayerNorm.
# ---------------------------------------------------------------------------
def encoder_layer_kernel(xq_ref, kh_ref, vh_ref, mask_ref,
                         wq_ref, wo_ref, bq_ref, bo_ref,
                         ln1g_ref, ln1b_ref,
                         w1_ref, b1_ref, w2_ref, b2_ref,
                         ln2g_ref, ln2b_ref,
                         out_ref, attn_ref):
    f32, bf16 = jnp.float32, jnp.bfloat16

    xq = xq_ref[0]                                   # [TQ, D] f32 (residual)
    TQ = xq.shape[0]

    # --- Q projection: one fully-packed 512x512 MXU matmul (bf16 in, f32 acc) ---
    q = jnp.dot(xq.astype(bf16), wq_ref[...], preferred_element_type=f32) + bq_ref[...]
    qh = _to_head_major(q.reshape(TQ, N_HEADS, D_K)).astype(bf16)   # [H, TQ, DK]

    kh = kh_ref[0]                                   # [H, DK, S] bf16 (hoisted K^T)
    vh = vh_ref[0]                                   # [H, S, DK] bf16 (hoisted V)

    # --- scaled dot-product attention, batched over heads ---
    scores = jnp.einsum("hqd,hds->hqs", qh, kh,
                        preferred_element_type=f32) * _SCALE        # [H, TQ, S]
    scores = scores + mask_ref[0].astype(f32) * jnp.float32(-1e9)   # additive mask bias
    scores = scores - jnp.max(scores, axis=-1, keepdims=True)       # stable softmax
    e = jnp.exp(scores)
    attn = e * pl.reciprocal(jnp.sum(e, axis=-1, keepdims=True), approx=True)
    attn_ref[0] = attn.astype(attn_ref.dtype)        # bf16 writeback (halves HBM)

    ctx = jnp.einsum("hqs,hsd->hqd", attn.astype(bf16), vh,
                     preferred_element_type=f32)                    # [H, TQ, DK]

    # --- output projection: single K=512 matmul (full MXU utilization) ---
    ctx_flat = _from_head_major(ctx).reshape(TQ, D_MODEL).astype(bf16)   # [TQ, 512]
    o = jnp.dot(ctx_flat, wo_ref[...], preferred_element_type=f32) + bo_ref[...]

    # --- residual + LayerNorm 1 ---
    y1 = o + xq
    mu1 = jnp.mean(y1, axis=-1, keepdims=True)
    c1 = y1 - mu1
    var1 = jnp.mean(c1 * c1, axis=-1, keepdims=True)
    h1 = c1 * jax.lax.rsqrt(var1 + LN_EPS) * ln1g_ref[...] + ln1b_ref[...]

    # --- position-wise FFN (Conv1d k=1 == linear) ---
    hmid = jnp.dot(h1.astype(bf16), w1_ref[...], preferred_element_type=f32) + b1_ref[...]
    hmid = jnp.maximum(hmid, 0.0)
    o2 = jnp.dot(hmid.astype(bf16), w2_ref[...], preferred_element_type=f32) + b2_ref[...]

    # --- residual + LayerNorm 2 ---
    y2 = o2 + h1
    mu2 = jnp.mean(y2, axis=-1, keepdims=True)
    c2 = y2 - mu2
    var2 = jnp.mean(c2 * c2, axis=-1, keepdims=True)
    out_ref[0] = c2 * jax.lax.rsqrt(var2 + LN_EPS) * ln2g_ref[...] + ln2b_ref[...]


# ---------------------------------------------------------------------------
# Wrapper
# ---------------------------------------------------------------------------
def _vmem_limit_bytes():
    try:
        cap = pltpu.get_tpu_info().vmem_capacity_bytes
    except Exception:
        cap = 64 << 20          # assume the smallest (v7x-like) capacity if unknown
    return max(min(int(cap * 3 // 4), 100 << 20), 32 << 20)


def _pick_query_tile(S, B, vmem_limit):
    """Query-row tile. VMEM-aware (attn block + softmax intermediates), and keeps
    B*NQ >= 2 so both TensorCores of a 2-TC chip (v7x) get parallel work."""
    if S % 128 != 0 or S <= 256:
        if B == 1 and S > 16 and S % 16 == 0:
            return S // 2        # give the second TensorCore something to do
        return S
    # Live attention-path bytes per query row: bf16 attn output block
    # (double-buffered) + f32 scores/exp intermediates + int8 mask tile.
    per_row = N_HEADS * S * (2 * 2 + 2 * 4 + 1)
    budget = vmem_limit // 3
    if S % 256 == 0 and 256 * per_row <= budget:
        return 256               # bigger tiles on 128 MiB chips (v5e/v6e)
    return 128                   # v7x (64 MiB) / long sequences


def encoder_layer(x, attn_mask, params):
    """x: [B, S, 512] f32, attn_mask: [B, S, S] bool -> (out [B,S,512], attn [B,8,S,S])"""
    B, S, D = x.shape
    assert D == D_MODEL

    vmem_limit = _vmem_limit_bytes()
    TQ = _pick_query_tile(S, B, vmem_limit)
    NQ = S // TQ

    f32, bf16 = jnp.float32, jnp.bfloat16
    bf = lambda w: w.astype(bf16)
    row = lambda v: v.reshape(1, -1).astype(f32)

    # K/V projections hoisted out of the kernel (computed once per batch rather
    # than once per query tile), laid out head-major in bf16.  K is stored
    # pre-transposed ([H, DK, S]) so the scores matmul needs no in-kernel relayout.
    xf = x.reshape(B * S, D)
    k = (xf @ params["Wk"] + params["bk"]).reshape(B, S, N_HEADS, D_K)
    v = (xf @ params["Wv"] + params["bv"]).reshape(B, S, N_HEADS, D_K)
    kh = jnp.transpose(k, (0, 2, 3, 1)).astype(bf16)     # [B, H, DK, S]
    vh = jnp.transpose(v, (0, 2, 1, 3)).astype(bf16)     # [B, H, S, DK]

    # Mask streamed as int8 (4x less HBM/VMEM than an f32 bias).
    mask_i8 = attn_mask.astype(jnp.int8)

    const = lambda shape: pl.BlockSpec(shape, lambda b, t, _s=len(shape): (0,) * _s)
    # TODO(synk): on v7x (64 MiB VMEM) add pipeline_mode=pl.Buffered(1) to the
    # constant-weight specs to reclaim ~6 MiB of needlessly double-buffered weights.

    call = pl.pallas_call(
        encoder_layer_kernel,
        out_shape=(jax.ShapeDtypeStruct((B, S, D), f32),
                   jax.ShapeDtypeStruct((B, N_HEADS, S, S), bf16)),
        grid=(B, NQ),
        in_specs=[
            pl.BlockSpec((1, TQ, D), lambda b, t: (b, t, 0)),                # x query tile
            pl.BlockSpec((1, N_HEADS, D_K, S), lambda b, t: (b, 0, 0, 0)),   # K^T heads
            pl.BlockSpec((1, N_HEADS, S, D_K), lambda b, t: (b, 0, 0, 0)),   # V heads
            pl.BlockSpec((1, TQ, S), lambda b, t: (b, t, 0)),                # mask tile (int8)
            const((D, D)),                                                   # Wq (bf16)
            const((D, D)),                                                   # Wo (bf16, flat)
            const((1, D)), const((1, D)),                                    # bq, bo
            const((1, D)), const((1, D)),                                    # ln1 gamma/beta
            const((D, D_FF)), const((1, D_FF)),                              # W1, b1
            const((D_FF, D)), const((1, D)),                                 # W2, b2
            const((1, D)), const((1, D)),                                    # ln2 gamma/beta
        ],
        out_specs=(pl.BlockSpec((1, TQ, D), lambda b, t: (b, t, 0)),
                   pl.BlockSpec((1, N_HEADS, TQ, S), lambda b, t: (b, 0, t, 0))),
        compiler_params=pltpu.CompilerParams(
            dimension_semantics=("parallel", "parallel"),
            vmem_limit_bytes=vmem_limit),
    )

    out, attn_bf16 = call(
        x, kh, vh, mask_i8,
        bf(params["Wq"]), bf(params["Wo"]),
        row(params["bq"]), row(params["bo"]),
        row(params["ln1_g"]), row(params["ln1_b"]),
        bf(params["W1"]), row(params["b1"]),
        bf(params["W2"]), row(params["b2"]),
        row(params["ln2_g"]), row(params["ln2_b"]),
    )
    return out, attn_bf16.astype(f32)


# ---------------------------------------------------------------------------
# Pure-JAX f32 reference (mirrors the PyTorch forward) for a sanity check
# ---------------------------------------------------------------------------
def encoder_layer_ref(x, attn_mask, p):
    B, S, D = x.shape

    def ln(y, g, b):
        m = jnp.mean(y, axis=-1, keepdims=True)
        v = jnp.mean((y - m) ** 2, axis=-1, keepdims=True)
        return (y - m) * jax.lax.rsqrt(v + LN_EPS) * g + b

    q = (x @ p["Wq"] + p["bq"]).reshape(B, S, N_HEADS, D_K).transpose(0, 2, 1, 3)
    k = (x @ p["Wk"] + p["bk"]).reshape(B, S, N_HEADS, D_K).transpose(0, 2, 1, 3)
    v = (x @ p["Wv"] + p["bv"]).reshape(B, S, N_HEADS, D_K).transpose(0, 2, 1, 3)
    scores = jnp.einsum("bhqd,bhkd->bhqk", q, k) / math.sqrt(64.0)
    scores = jnp.where(attn_mask[:, None, :, :], -1e9, scores)
    attn = jax.nn.softmax(scores, axis=-1)
    ctx = jnp.einsum("bhqk,bhkd->bhqd", attn, v).transpose(0, 2, 1, 3).reshape(B, S, D)
    out1 = ln(ctx @ p["Wo"] + p["bo"] + x, p["ln1_g"], p["ln1_b"])
    h = jnp.maximum(out1 @ p["W1"] + p["b1"], 0.0)
    out2 = ln(h @ p["W2"] + p["b2"] + out1, p["ln2_g"], p["ln2_b"])
    return out2, attn


def make_params(key):
    ks = jax.random.split(key, 8)
    s = 0.02
    return {
        "Wq": s * jax.random.normal(ks[0], (D_MODEL, D_MODEL), jnp.float32),
        "Wk": s * jax.random.normal(ks[1], (D_MODEL, D_MODEL), jnp.float32),
        "Wv": s * jax.random.normal(ks[2], (D_MODEL, D_MODEL), jnp.float32),
        "Wo": s * jax.random.normal(ks[3], (D_MODEL, D_MODEL), jnp.float32),
        "bq": jnp.zeros((D_MODEL,), jnp.float32),
        "bk": jnp.zeros((D_MODEL,), jnp.float32),
        "bv": jnp.zeros((D_MODEL,), jnp.float32),
        "bo": jnp.zeros((D_MODEL,), jnp.float32),
        # conv1 weight [2048,512,1] -> matmul weight [512,2048]; conv2 likewise
        "W1": s * jax.random.normal(ks[4], (D_MODEL, D_FF), jnp.float32),
        "b1": 0.01 * jnp.ones((D_FF,), jnp.float32),
        "W2": s * jax.random.normal(ks[5], (D_FF, D_MODEL), jnp.float32),
        "b2": 0.01 * jnp.ones((D_MODEL,), jnp.float32),
        "ln1_g": jnp.ones((D_MODEL,), jnp.float32),
        "ln1_b": jnp.zeros((D_MODEL,), jnp.float32),
        "ln2_g": jnp.ones((D_MODEL,), jnp.float32),
        "ln2_b": jnp.zeros((D_MODEL,), jnp.float32),
    }


if __name__ == "__main__":
    B, S = 2, 8
    key = jax.random.PRNGKey(0)
    kx, kp = jax.random.split(key)
    x = jax.random.normal(kx, (B, S, D_MODEL), jnp.float32)
    # deterministic padding-style mask: last 2 key positions of batch 1 are masked
    mask = jnp.zeros((B, S, S), dtype=bool)
    mask = mask.at[1, :, S - 2:].set(True)
    params = make_params(kp)

    out, attn = encoder_layer(x, mask, params)
    out = jax.block_until_ready(out)
    attn = jax.block_until_ready(attn)

    out_ref, attn_ref = encoder_layer_ref(x, mask, params)
    assert out.shape == (B, S, D_MODEL) and attn.shape == (B, N_HEADS, S, S)
    # Loosened tolerances: bf16 MXU inputs, bf16 attn writeback, approx reciprocal.
    np.testing.assert_allclose(np.asarray(attn), np.asarray(attn_ref), atol=1e-2, rtol=1e-2)
    np.testing.assert_allclose(np.asarray(out), np.asarray(out_ref), atol=5e-2, rtol=5e-2)

    print("KERNEL_OK")
</pallas_src>

<mosaic_0001>
module attributes {stable_mosaic.version = 11 : i64} {
  func.func @encoder_layer_kernel(%arg0: i32, %arg1: i32, %arg2: memref<1x8x512xf32, #tpu.memory_space<vmem>>, %arg3: memref<1x8x64x8xbf16, #tpu.memory_space<vmem>>, %arg4: memref<1x8x8x64xbf16, #tpu.memory_space<vmem>>, %arg5: memref<1x8x8xi8, #tpu.memory_space<vmem>>, %arg6: memref<512x512xbf16, #tpu.memory_space<vmem>>, %arg7: memref<512x512xbf16, #tpu.memory_space<vmem>>, %arg8: memref<1x512xf32, #tpu.memory_space<vmem>>, %arg9: memref<1x512xf32, #tpu.memory_space<vmem>>, %arg10: memref<1x512xf32, #tpu.memory_space<vmem>>, %arg11: memref<1x512xf32, #tpu.memory_space<vmem>>, %arg12: memref<512x2048xbf16, #tpu.memory_space<vmem>>, %arg13: memref<1x2048xf32, #tpu.memory_space<vmem>>, %arg14: memref<2048x512xbf16, #tpu.memory_space<vmem>>, %arg15: memref<1x512xf32, #tpu.memory_space<vmem>>, %arg16: memref<1x512xf32, #tpu.memory_space<vmem>>, %arg17: memref<1x512xf32, #tpu.memory_space<vmem>>, %arg18: memref<1x8x512xf32, #tpu.memory_space<vmem>>, %arg19: memref<1x8x8x8xbf16, #tpu.memory_space<vmem>>) attributes {dimension_semantics = [#tpu.dimension_semantics<parallel>, #tpu.dimension_semantics<parallel>], iteration_bounds = array<i64: 2, 1>, scalar_prefetch = 0 : i64, scratch_operands = 0 : i64, tpu.core_type = #tpu.core_type<tc>, window_params = [{transform_indices = @transform_0, window_bounds = array<i64: 1, 8, 512>}, {transform_indices = @transform_1, window_bounds = array<i64: 1, 8, 64, 8>}, {transform_indices = @transform_2, window_bounds = array<i64: 1, 8, 8, 64>}, {transform_indices = @transform_3, window_bounds = array<i64: 1, 8, 8>}, {pipeline_mode = #tpu.pipeline_mode<synchronous>, transform_indices = @transform_4, window_bounds = array<i64: 512, 512>}, {pipeline_mode = #tpu.pipeline_mode<synchronous>, transform_indices = @transform_5, window_bounds = array<i64: 512, 512>}, {pipeline_mode = #tpu.pipeline_mode<synchronous>, transform_indices = @transform_6, window_bounds = array<i64: 1, 512>}, {pipeline_mode = #tpu.pipeline_mode<synchronous>, transform_indices = @transform_7, window_bounds = array<i64: 1, 512>}, {pipeline_mode = #tpu.pipeline_mode<synchronous>, transform_indices = @transform_8, window_bounds = array<i64: 1, 512>}, {pipeline_mode = #tpu.pipeline_mode<synchronous>, transform_indices = @transform_9, window_bounds = array<i64: 1, 512>}, {pipeline_mode = #tpu.pipeline_mode<synchronous>, transform_indices = @transform_10, window_bounds = array<i64: 512, 2048>}, {pipeline_mode = #tpu.pipeline_mode<synchronous>, transform_indices = @transform_11, window_bounds = array<i64: 1, 2048>}, {pipeline_mode = #tpu.pipeline_mode<synchronous>, transform_indices = @transform_12, window_bounds = array<i64: 2048, 512>}, {pipeline_mode = #tpu.pipeline_mode<synchronous>, transform_indices = @transform_13, window_bounds = array<i64: 1, 512>}, {pipeline_mode = #tpu.pipeline_mode<synchronous>, transform_indices = @transform_14, window_bounds = array<i64: 1, 512>}, {pipeline_mode = #tpu.pipeline_mode<synchronous>, transform_indices = @transform_15, window_bounds = array<i64: 1, 512>}, {transform_indices = @transform_16, window_bounds = array<i64: 1, 8, 512>}, {transform_indices = @transform_17, window_bounds = array<i64: 1, 8, 8, 8>}]} {
    %c0 = arith.constant 0 : index
    %c0_0 = arith.constant 0 : index
    %c0_1 = arith.constant 0 : index
    %0 = vector.load %arg2[%c0, %c0_0, %c0_1] : memref<1x8x512xf32, #tpu.memory_space<vmem>>, vector<1x8x512xf32>
    %1 = vector.shape_cast %0 : vector<1x8x512xf32> to vector<8x512xf32>
    %2 = arith.truncf %1 : vector<8x512xf32> to vector<8x512xbf16>
    %c0_2 = arith.constant 0 : index
    %c0_3 = arith.constant 0 : index
    %3 = vector.load %arg6[%c0_2, %c0_3] : memref<512x512xbf16, #tpu.memory_space<vmem>>, vector<512x512xbf16>
    %cst = arith.constant dense<0.000000e+00> : vector<8x512xf32>
    %4 = tpu.matmul %2, %3, %cst {dimension_numbers = #tpu.dot_dimension_numbers<[1], [0], [0], [1], [0, 0, 1, 1], [], []>} : vector<8x512xbf16>, vector<512x512xbf16>, vector<8x512xf32> -> vector<8x512xf32>
    %c0_4 = arith.constant 0 : index
    %c0_5 = arith.constant 0 : index
    %5 = vector.load %arg8[%c0_4, %c0_5] : memref<1x512xf32, #tpu.memory_space<vmem>>, vector<1x512xf32>
    %6 = vector.broadcast %5 : vector<1x512xf32> to vector<8x512xf32>
    %7 = arith.addf %4, %6 : vector<8x512xf32>
    %8 = vector.shape_cast %7 : vector<8x512xf32> to vector<8x8x64xf32>
    %9 = tpu.transpose %8, [1, 0, 2] : vector<8x8x64xf32> -> vector<8x8x64xf32>
    %10 = arith.truncf %9 : vector<8x8x64xf32> to vector<8x8x64xbf16>
    %c0_6 = arith.constant 0 : index
    %c0_7 = arith.constant 0 : index
    %c0_8 = arith.constant 0 : index
    %c0_9 = arith.constant 0 : index
    %11 = vector.load %arg3[%c0_6, %c0_7, %c0_8, %c0_9] : memref<1x8x64x8xbf16, #tpu.memory_space<vmem>>, vector<1x8x64x8xbf16>
    %12 = vector.shape_cast %11 : vector<1x8x64x8xbf16> to vector<8x64x8xbf16>
    %c0_10 = arith.constant 0 : index
    %c0_11 = arith.constant 0 : index
    %c0_12 = arith.constant 0 : index
    %c0_13 = arith.constant 0 : index
    %13 = vector.load %arg4[%c0_10, %c0_11, %c0_12, %c0_13] : memref<1x8x8x64xbf16, #tpu.memory_space<vmem>>, vector<1x8x8x64xbf16>
    %14 = vector.shape_cast %13 : vector<1x8x8x64xbf16> to vector<8x8x64xbf16>
    "tpu.trace_start"() <{level = 10 : i32, message = "hqd,hds->hqs"}> : () -> ()
    %cst_14 = arith.constant dense<0.000000e+00> : vector<8x8x8xf32>
    %15 = tpu.matmul %10, %12, %cst_14 {dimension_numbers = #tpu.dot_dimension_numbers<[2], [1], [1], [2], [0, 0, 0, 1, 1, 2], [0], [0]>} : vector<8x8x64xbf16>, vector<8x64x8xbf16>, vector<8x8x8xf32> -> vector<8x8x8xf32>
    "tpu.trace_stop"() : () -> ()
    %cst_15 = arith.constant 1.250000e-01 : f32
    %16 = vector.broadcast %cst_15 : f32 to vector<8x8x8xf32>
    %17 = arith.mulf %15, %16 : vector<8x8x8xf32>
    %c0_16 = arith.constant 0 : index
    %c0_17 = arith.constant 0 : index
    %c0_18 = arith.constant 0 : index
    %18 = vector.load %arg5[%c0_16, %c0_17, %c0_18] : memref<1x8x8xi8, #tpu.memory_space<vmem>>, vector<1x8x8xi8>
    %19 = vector.shape_cast %18 : vector<1x8x8xi8> to vector<8x8xi8>
    %20 = arith.sitofp %19 : vector<8x8xi8> to vector<8x8xf32>
    %cst_19 = arith.constant -1.000000e+09 : f32
    %21 = vector.broadcast %cst_19 : f32 to vector<8x8xf32>
    %22 = arith.mulf %20, %21 : vector<8x8xf32>
    %23 = vector.shape_cast %22 : vector<8x8xf32> to vector<1x8x8xf32>
    %24 = vector.broadcast %23 : vector<1x8x8xf32> to vector<8x8x8xf32>
    %25 = arith.addf %17, %24 : vector<8x8x8xf32>
    %cst_20 = arith.constant dense<0xFF800000> : vector<8x8xf32>
    %26 = vector.multi_reduction <maximumf>, %25, %cst_20 [2] : vector<8x8x8xf32> to vector<8x8xf32>
    %27 = vector.shape_cast %26 : vector<8x8xf32> to vector<8x8x1xf32>
    %28 = vector.broadcast %27 : vector<8x8x1xf32> to vector<8x8x8xf32>
    %29 = arith.subf %25, %28 : vector<8x8x8xf32>
    %30 = math.exp %29 : vector<8x8x8xf32>
    %cst_21 = arith.constant dense<0.000000e+00> : vector<8x8xf32>
    %31 = vector.multi_reduction <add>, %30, %cst_21 [2] : vector<8x8x8xf32> to vector<8x8xf32>
    %32 = vector.shape_cast %31 : vector<8x8xf32> to vector<8x8x1xf32>
    %33 = tpu.reciprocal %32 {approx = true} : vector<8x8x1xf32> -> vector<8x8x1xf32>
    %34 = vector.broadcast %33 : vector<8x8x1xf32> to vector<8x8x8xf32>
    %35 = arith.mulf %30, %34 : vector<8x8x8xf32>
    %36 = arith.truncf %35 : vector<8x8x8xf32> to vector<8x8x8xbf16>
    %c0_22 = arith.constant 0 : index
    %c0_23 = arith.constant 0 : index
    %c0_24 = arith.constant 0 : index
    %c0_25 = arith.constant 0 : index
    %37 = vector.load %arg19[%c0_22, %c0_23, %c0_24, %c0_25] : memref<1x8x8x8xbf16, #tpu.memory_space<vmem>>, vector<1x8x8x8xbf16>
    %38 = vector.shape_cast %37 : vector<1x8x8x8xbf16> to vector<8x8x8xbf16>
    %39 = vector.shape_cast %36 : vector<8x8x8xbf16> to vector<1x8x8x8xbf16>
    tpu.vector_store %arg19[%c0_22, %c0_23, %c0_24, %c0_25], %39 {strides = array<i32>} : memref<1x8x8x8xbf16, #tpu.memory_space<vmem>>, vector<1x8x8x8xbf16>,
    %40 = arith.truncf %35 : vector<8x8x8xf32> to vector<8x8x8xbf16>
    "tpu.trace_start"() <{level = 10 : i32, message = "hqs,hsd->hqd"}> : () -> ()
    %cst_26 = arith.constant dense<0.000000e+00> : vector<8x8x64xf32>
    %41 = tpu.matmul %40, %14, %cst_26 {dimension_numbers = #tpu.dot_dimension_numbers<[2], [1], [1], [2], [0, 0, 0, 1, 1, 2], [0], [0]>} : vector<8x8x8xbf16>, vector<8x8x64xbf16>, vector<8x8x64xf32> -> vector<8x8x64xf32>
    "tpu.trace_stop"() : () -> ()
    %42 = tpu.transpose %41, [1, 0, 2] : vector<8x8x64xf32> -> vector<8x8x64xf32>
    %43 = vector.shape_cast %42 : vector<8x8x64xf32> to vector<8x512xf32>
    %44 = arith.truncf %43 : vector<8x512xf32> to vector<8x512xbf16>
    %c0_27 = arith.constant 0 : index
    %c0_28 = arith.constant 0 : index
    %45 = vector.load %arg7[%c0_27, %c0_28] : memref<512x512xbf16, #tpu.memory_space<vmem>>, vector<512x512xbf16>
    %cst_29 = arith.constant dense<0.000000e+00> : vector<8x512xf32>
    %46 = tpu.matmul %44, %45, %cst_29 {dimension_numbers = #tpu.dot_dimension_numbers<[1], [0], [0], [1], [0, 0, 1, 1], [], []>} : vector<8x512xbf16>, vector<512x512xbf16>, vector<8x512xf32> -> vector<8x512xf32>
    %c0_30 = arith.constant 0 : index
    %c0_31 = arith.constant 0 : index
    %47 = vector.load %arg9[%c0_30, %c0_31] : memref<1x512xf32, #tpu.memory_space<vmem>>, vector<1x512xf32>
    %48 = vector.broadcast %47 : vector<1x512xf32> to vector<8x512xf32>
    %49 = arith.addf %46, %48 : vector<8x512xf32>
    %50 = arith.addf %49, %1 : vector<8x512xf32>
    %cst_32 = arith.constant dense<0.000000e+00> : vector<8xf32>
    %51 = vector.multi_reduction <add>, %50, %cst_32 [1] : vector<8x512xf32> to vector<8xf32>
    %52 = vector.shape_cast %51 : vector<8xf32> to vector<8x1xf32>
    %cst_33 = arith.constant 5.120000e+02 : f32
    %53 = vector.broadcast %cst_33 : f32 to vector<8x1xf32>
    %54 = arith.divf %52, %53 : vector<8x1xf32>
    %55 = vector.broadcast %54 : vector<8x1xf32> to vector<8x512xf32>
    %56 = arith.subf %50, %55 : vector<8x512xf32>
    %57 = arith.mulf %56, %56 : vector<8x512xf32>
    %cst_34 = arith.constant dense<0.000000e+00> : vector<8xf32>
    %58 = vector.multi_reduction <add>, %57, %cst_34 [1] : vector<8x512xf32> to vector<8xf32>
    %59 = vector.shape_cast %58 : vector<8xf32> to vector<8x1xf32>
    %cst_35 = arith.constant 5.120000e+02 : f32
    %60 = vector.broadcast %cst_35 : f32 to vector<8x1xf32>
    %61 = arith.divf %59, %60 : vector<8x1xf32>
    %cst_36 = arith.constant 9.99999974E-6 : f32
    %62 = vector.broadcast %cst_36 : f32 to vector<8x1xf32>
    %63 = arith.addf %61, %62 : vector<8x1xf32>
    %64 = math.rsqrt %63 : vector<8x1xf32>
    %65 = vector.broadcast %64 : vector<8x1xf32> to vector<8x512xf32>
    %66 = arith.mulf %56, %65 : vector<8x512xf32>
    %c0_37 = arith.constant 0 : index
    %c0_38 = arith.constant 0 : index
    %67 = vector.load %arg10[%c0_37, %c0_38] : memref<1x512xf32, #tpu.memory_space<vmem>>, vector<1x512xf32>
    %68 = vector.broadcast %67 : vector<1x512xf32> to vector<8x512xf32>
    %69 = arith.mulf %66, %68 : vector<8x512xf32>
    %c0_39 = arith.constant 0 : index
    %c0_40 = arith.constant 0 : index
    %70 = vector.load %arg11[%c0_39, %c0_40] : memref<1x512xf32, #tpu.memory_space<vmem>>, vector<1x512xf32>
    %71 = vector.broadcast %70 : vector<1x512xf32> to vector<8x512xf32>
    %72 = arith.addf %69, %71 : vector<8x512xf32>
    %73 = arith.truncf %72 : vector<8x512xf32> to vector<8x512xbf16>
    %c0_41 = arith.constant 0 : index
    %c0_42 = arith.constant 0 : index
    %74 = vector.load %arg12[%c0_41, %c0_42] : memref<512x2048xbf16, #tpu.memory_space<vmem>>, vector<512x2048xbf16>
    %cst_43 = arith.constant dense<0.000000e+00> : vector<8x2048xf32>
    %75 = tpu.matmul %73, %74, %cst_43 {dimension_numbers = #tpu.dot_dimension_numbers<[1], [0], [0], [1], [0, 0, 1, 1], [], []>} : vector<8x512xbf16>, vector<512x2048xbf16>, vector<8x2048xf32> -> vector<8x2048xf32>
    %c0_44 = arith.constant 0 : index
    %c0_45 = arith.constant 0 : index
    %76 = vector.load %arg13[%c0_44, %c0_45] : memref<1x2048xf32, #tpu.memory_space<vmem>>, vector<1x2048xf32>
    %77 = vector.broadcast %76 : vector<1x2048xf32> to vector<8x2048xf32>
    %78 = arith.addf %75, %77 : vector<8x2048xf32>
    %cst_46 = arith.constant 0.000000e+00 : f32
    %79 = vector.broadcast %cst_46 : f32 to vector<8x2048xf32>
    %80 = arith.maximumf %78, %79 : vector<8x2048xf32>
    %81 = arith.truncf %80 : vector<8x2048xf32> to vector<8x2048xbf16>
    %c0_47 = arith.constant 0 : index
    %c0_48 = arith.constant 0 : index
    %82 = vector.load %arg14[%c0_47, %c0_48] : memref<2048x512xbf16, #tpu.memory_space<vmem>>, vector<2048x512xbf16>
    %cst_49 = arith.constant dense<0.000000e+00> : vector<8x512xf32>
    %83 = tpu.matmul %81, %82, %cst_49 {dimension_numbers = #tpu.dot_dimension_numbers<[1], [0], [0], [1], [0, 0, 1, 1], [], []>} : vector<8x2048xbf16>, vector<2048x512xbf16>, vector<8x512xf32> -> vector<8x512xf32>
    %c0_50 = arith.constant 0 : index
    %c0_51 = arith.constant 0 : index
    %84 = vector.load %arg15[%c0_50, %c0_51] : memref<1x512xf32, #tpu.memory_space<vmem>>, vector<1x512xf32>
    %85 = vector.broadcast %84 : vector<1x512xf32> to vector<8x512xf32>
    %86 = arith.addf %83, %85 : vector<8x512xf32>
    %87 = arith.addf %86, %72 : vector<8x512xf32>
    %cst_52 = arith.constant dense<0.000000e+00> : vector<8xf32>
    %88 = vector.multi_reduction <add>, %87, %cst_52 [1] : vector<8x512xf32> to vector<8xf32>
    %89 = vector.shape_cast %88 : vector<8xf32> to vector<8x1xf32>
    %cst_53 = arith.constant 5.120000e+02 : f32
    %90 = vector.broadcast %cst_53 : f32 to vector<8x1xf32>
    %91 = arith.divf %89, %90 : vector<8x1xf32>
    %92 = vector.broadcast %91 : vector<8x1xf32> to vector<8x512xf32>
    %93 = arith.subf %87, %92 : vector<8x512xf32>
    %94 = arith.mulf %93, %93 : vector<8x512xf32>
    %cst_54 = arith.constant dense<0.000000e+00> : vector<8xf32>
    %95 = vector.multi_reduction <add>, %94, %cst_54 [1] : vector<8x512xf32> to vector<8xf32>
    %96 = vector.shape_cast %95 : vector<8xf32> to vector<8x1xf32>
    %cst_55 = arith.constant 5.120000e+02 : f32
    %97 = vector.broadcast %cst_55 : f32 to vector<8x1xf32>
    %98 = arith.divf %96, %97 : vector<8x1xf32>
    %cst_56 = arith.constant 9.99999974E-6 : f32
    %99 = vector.broadcast %cst_56 : f32 to vector<8x1xf32>
    %100 = arith.addf %98, %99 : vector<8x1xf32>
    %101 = math.rsqrt %100 : vector<8x1xf32>
    %102 = vector.broadcast %101 : vector<8x1xf32> to vector<8x512xf32>
    %103 = arith.mulf %93, %102 : vector<8x512xf32>
    %c0_57 = arith.constant 0 : index
    %c0_58 = arith.constant 0 : index
    %104 = vector.load %arg16[%c0_57, %c0_58] : memref<1x512xf32, #tpu.memory_space<vmem>>, vector<1x512xf32>
    %105 = vector.broadcast %104 : vector<1x512xf32> to vector<8x512xf32>
    %106 = arith.mulf %103, %105 : vector<8x512xf32>
    %c0_59 = arith.constant 0 : index
    %c0_60 = arith.constant 0 : index
    %107 = vector.load %arg17[%c0_59, %c0_60] : memref<1x512xf32, #tpu.memory_space<vmem>>, vector<1x512xf32>
    %108 = vector.broadcast %107 : vector<1x512xf32> to vector<8x512xf32>
    %109 = arith.addf %106, %108 : vector<8x512xf32>
    %c0_61 = arith.constant 0 : index
    %c0_62 = arith.constant 0 : index
    %c0_63 = arith.constant 0 : index
    %110 = vector.load %arg18[%c0_61, %c0_62, %c0_63] : memref<1x8x512xf32, #tpu.memory_space<vmem>>, vector<1x8x512xf32>
    %111 = vector.shape_cast %110 : vector<1x8x512xf32> to vector<8x512xf32>
    %112 = vector.shape_cast %109 : vector<8x512xf32> to vector<1x8x512xf32>
    tpu.vector_store %arg18[%c0_61, %c0_62, %c0_63], %112 {strides = array<i32>} : memref<1x8x512xf32, #tpu.memory_space<vmem>>, vector<1x8x512xf32>,
    return
  }
  func.func @transform_0(%arg0: i32, %arg1: i32) -> (i32, i32, i32) {
    %c0_i32 = arith.constant 0 : i32
    %c0_i32_0 = arith.constant 0 : i32
    return %arg0, %arg1, %c0_i32 : i32, i32, i32
  }
  func.func @transform_1(%arg0: i32, %arg1: i32) -> (i32, i32, i32, i32) {
    %c0_i32 = arith.constant 0 : i32
    %c0_i32_0 = arith.constant 0 : i32
    %c0_i32_1 = arith.constant 0 : i32
    %c0_i32_2 = arith.constant 0 : i32
    return %arg0, %c0_i32, %c0_i32_0, %c0_i32_1 : i32, i32, i32, i32
  }
  func.func @transform_2(%arg0: i32, %arg1: i32) -> (i32, i32, i32, i32) {
    %c0_i32 = arith.constant 0 : i32
    %c0_i32_0 = arith.constant 0 : i32
    %c0_i32_1 = arith.constant 0 : i32
    %c0_i32_2 = arith.constant 0 : i32
    return %arg0, %c0_i32, %c0_i32_0, %c0_i32_1 : i32, i32, i32, i32
  }
  func.func @transform_3(%arg0: i32, %arg1: i32) -> (i32, i32, i32) {
    %c0_i32 = arith.constant 0 : i32
    %c0_i32_0 = arith.constant 0 : i32
    return %arg0, %arg1, %c0_i32 : i32, i32, i32
  }
  func.func @transform_4(%arg0: i32, %arg1: i32) -> (i32, i32) {
    %c0_i32 = arith.constant 0 : i32
    %c0_i32_0 = arith.constant 0 : i32
    %c0_i32_1 = arith.constant 0 : i32
    return %c0_i32, %c0_i32_0 : i32, i32
  }
  func.func @transform_5(%arg0: i32, %arg1: i32) -> (i32, i32) {
    %c0_i32 = arith.constant 0 : i32
    %c0_i32_0 = arith.constant 0 : i32
    %c0_i32_1 = arith.constant 0 : i32
    return %c0_i32, %c0_i32_0 : i32, i32
  }
  func.func @transform_6(%arg0: i32, %arg1: i32) -> (i32, i32) {
    %c0_i32 = arith.constant 0 : i32
    %c0_i32_0 = arith.constant 0 : i32
    %c0_i32_1 = arith.constant 0 : i32
    return %c0_i32, %c0_i32_0 : i32, i32
  }
  func.func @transform_7(%arg0: i32, %arg1: i32) -> (i32, i32) {
    %c0_i32 = arith.constant 0 : i32
    %c0_i32_0 = arith.constant 0 : i32
    %c0_i32_1 = arith.constant 0 : i32
    return %c0_i32, %c0_i32_0 : i32, i32
  }
  func.func @transform_8(%arg0: i32, %arg1: i32) -> (i32, i32) {
    %c0_i32 = arith.constant 0 : i32
    %c0_i32_0 = arith.constant 0 : i32
    %c0_i32_1 = arith.constant 0 : i32
    return %c0_i32, %c0_i32_0 : i32, i32
  }
  func.func @transform_9(%arg0: i32, %arg1: i32) -> (i32, i32) {
    %c0_i32 = arith.constant 0 : i32
    %c0_i32_0 = arith.constant 0 : i32
    %c0_i32_1 = arith.constant 0 : i32
    return %c0_i32, %c0_i32_0 : i32, i32
  }
  func.func @transform_10(%arg0: i32, %arg1: i32) -> (i32, i32) {
    %c0_i32 = arith.constant 0 : i32
    %c0_i32_0 = arith.constant 0 : i32
    %c0_i32_1 = arith.constant 0 : i32
    return %c0_i32, %c0_i32_0 : i32, i32
  }
  func.func @transform_11(%arg0: i32, %arg1: i32) -> (i32, i32) {
    %c0_i32 = arith.constant 0 : i32
    %c0_i32_0 = arith.constant 0 : i32
    %c0_i32_1 = arith.constant 0 : i32
    return %c0_i32, %c0_i32_0 : i32, i32
  }
  func.func @transform_12(%arg0: i32, %arg1: i32) -> (i32, i32) {
    %c0_i32 = arith.constant 0 : i32
    %c0_i32_0 = arith.constant 0 : i32
    %c0_i32_1 = arith.constant 0 : i32
    return %c0_i32, %c0_i32_0 : i32, i32
  }
  func.func @transform_13(%arg0: i32, %arg1: i32) -> (i32, i32) {
    %c0_i32 = arith.constant 0 : i32
    %c0_i32_0 = arith.constant 0 : i32
    %c0_i32_1 = arith.constant 0 : i32
    return %c0_i32, %c0_i32_0 : i32, i32
  }
  func.func @transform_14(%arg0: i32, %arg1: i32) -> (i32, i32) {
    %c0_i32 = arith.constant 0 : i32
    %c0_i32_0 = arith.constant 0 : i32
    %c0_i32_1 = arith.constant 0 : i32
    return %c0_i32, %c0_i32_0 : i32, i32
  }
  func.func @transform_15(%arg0: i32, %arg1: i32) -> (i32, i32) {
    %c0_i32 = arith.constant 0 : i32
    %c0_i32_0 = arith.constant 0 : i32
    %c0_i32_1 = arith.constant 0 : i32
    return %c0_i32, %c0_i32_0 : i32, i32
  }
  func.func @transform_16(%arg0: i32, %arg1: i32) -> (i32, i32, i32) {
    %c0_i32 = arith.constant 0 : i32
    %c0_i32_0 = arith.constant 0 : i32
    return %arg0, %arg1, %c0_i32 : i32, i32, i32
  }
  func.func @transform_17(%arg0: i32, %arg1: i32) -> (i32, i32, i32, i32) {
    %c0_i32 = arith.constant 0 : i32
    %c0_i32_0 = arith.constant 0 : i32
    %c0_i32_1 = arith.constant 0 : i32
    return %arg0, %c0_i32, %arg1, %c0_i32_0 : i32, i32, i32, i32
  }
}

</mosaic_0001>

<llo_original>
// kernel: tpu_custom_call.1
$region0: #{tpu_custom_call.1}
  #allocation0 [shape = 'u32[]', space=smem, size = 0x4, offset = 0x4, fixed_abs, tag = 'smem constant byte address 0x4 - core index']
  #allocation1 [shape = 'u32[144,128]{1,0:T(1,128)}', space=vmem, size = 0x12000, scoped, tag = 'internal scratch']
  %s0 = inlined_call_operand.hbm [shape: f32[2,8,512], index: 0, kind: input, shape index: {}]
  %s1 = inlined_call_operand.vmem [shape: bf16[2,8,64,8], index: 1, kind: input, shape index: {}]
  %s2 = inlined_call_operand.hbm [shape: bf16[2,8,8,64], index: 2, kind: input, shape index: {}]
  %s3 = inlined_call_operand.hbm [shape: s8[2,8,8], index: 3, kind: input, shape index: {}]
  %s4 = inlined_call_operand.hbm [shape: bf16[512,512], index: 4, kind: input, shape index: {}]
  %s5 = inlined_call_operand.hbm [shape: bf16[512,512], index: 5, kind: input, shape index: {}]
  %s6 = inlined_call_operand.hbm [shape: f32[1,512], index: 6, kind: input, shape index: {}]
  %s7 = inlined_call_operand.hbm [shape: f32[1,512], index: 7, kind: input, shape index: {}]
  %s8 = inlined_call_operand.hbm [shape: f32[1,512], index: 8, kind: input, shape index: {}]
  %s9 = inlined_call_operand.hbm [shape: f32[1,512], index: 9, kind: input, shape index: {}]
  %s10 = inlined_call_operand.hbm [shape: bf16[512,2048], index: 10, kind: input, shape index: {}]
  %s11 = inlined_call_operand.hbm [shape: f32[1,2048], index: 11, kind: input, shape index: {}]
  %s12 = inlined_call_operand.hbm [shape: bf16[2048,512], index: 12, kind: input, shape index: {}]
  %s13 = inlined_call_operand.hbm [shape: f32[1,512], index: 13, kind: input, shape index: {}]
  %s14 = inlined_call_operand.hbm [shape: f32[1,512], index: 14, kind: input, shape index: {}]
  %s15 = inlined_call_operand.hbm [shape: f32[1,512], index: 15, kind: input, shape index: {}]
  %s16 = inlined_call_operand.hbm [shape: f32[2,8,512], index: 16, kind: output, shape index: {0}]
  %s17 = inlined_call_operand.hbm [shape: bf16[2,8,8,8], index: 17, kind: output, shape index: {1}]
  %18 = xla_tuple %s16, %s17
  %s19 = sld [smem:[#allocation0]]
  $region165: #{tpu_custom_call.1} parent=0
    _
  %s21 = ssub.s32 1, %s19
  %s22 = scalar_select 0, %s21, %s19
  $region1: #{tpu_custom_call.1} parent=0
    #allocation2 [shape = 'u8[32768]{0}', space=vmem, size = 0x8000, scoped, tag = 'input window, operand 0']
    #allocation3 [shape = 's32[2]{0}', space=sflag, size = 0x8, scoped, tag = 'scoped memory for tpu_custom_call.1']
    #allocation4 [shape = 's32[2]{0}', space=sflag, size = 0x8, scoped, tag = 'scoped memory for tpu_custom_call.1']
    #allocation5 [shape = 'u8[32768]{0}', space=vmem, size = 0x8000, scoped, tag = 'input window, operand 2']
    #allocation6 [shape = 's32[2]{0}', space=sflag, size = 0x8, scoped, tag = 'scoped memory for tpu_custom_call.1']
    #allocation7 [shape = 'u8[2048]{0}', space=vmem, size = 0x800, scoped, tag = 'input window, operand 3']
    #allocation8 [shape = 'u8[524288]{0}', space=vmem, size = 0x80000, scoped, tag = 'input window, operand 4, single buffered']
    #allocation9 [shape = 's32[1]{0}', space=sflag, size = 0x4, scoped, tag = 'scoped memory for tpu_custom_call.1']
    #allocation10 [shape = 'u8[524288]{0}', space=vmem, size = 0x80000, scoped, tag = 'input window, operand 5, single buffered']
    #allocation11 [shape = 'u8[2048]{0}', space=vmem, size = 0x800, scoped, tag = 'input window, operand 6, single buffered']
    #allocation12 [shape = 's32[1]{0}', space=sflag, size = 0x4, scoped, tag = 'scoped memory for tpu_custom_call.1']
    #allocation13 [shape = 'u8[2048]{0}', space=vmem, size = 0x800, scoped, tag = 'input window, operand 7, single buffered']
    #allocation14 [shape = 'u8[2048]{0}', space=vmem, size = 0x800, scoped, tag = 'input window, operand 8, single buffered']
    #allocation15 [shape = 's32[1]{0}', space=sflag, size = 0x4, scoped, tag = 'scoped memory for tpu_custom_call.1']
    #allocation16 [shape = 'u8[2048]{0}', space=vmem, size = 0x800, scoped, tag = 'input window, operand 9, single buffered']
    #allocation17 [shape = 'u8[2097152]{0}', space=vmem, size = 0x200000, scoped, tag = 'input window, operand 10, single buffered']
    #allocation18 [shape = 's32[1]{0}', space=sflag, size = 0x4, scoped, tag = 'scoped memory for tpu_custom_call.1']
    #allocation19 [shape = 'u8[8192]{0}', space=vmem, size = 0x2000, scoped, tag = 'input window, operand 11, single buffered']
    #allocation20 [shape = 'u8[2097152]{0}', space=vmem, size = 0x200000, scoped, tag = 'input window, operand 12, single buffered']
    #allocation21 [shape = 's32[1]{0}', space=sflag, size = 0x4, scoped, tag = 'scoped memory for tpu_custom_call.1']
    #allocation22 [shape = 'u8[2048]{0}', space=vmem, size = 0x800, scoped, tag = 'input window, operand 13, single buffered']
    #allocation23 [shape = 'u8[2048]{0}', space=vmem, size = 0x800, scoped, tag = 'input window, operand 14, single buffered']
    #allocation24 [shape = 's32[1]{0}', space=sflag, size = 0x4, scoped, tag = 'scoped memory for tpu_custom_call.1']
    #allocation25 [shape = 'u8[2048]{0}', space=vmem, size = 0x800, scoped, tag = 'input window, operand 15, single buffered']
    #allocation26 [shape = 'u8[32768]{0}', space=vmem, size = 0x8000, scoped, tag = 'output window, operand 0']
    #allocation27 [shape = 'u8[32768]{0}', space=vmem, size = 0x8000, scoped, tag = 'output window, operand 1']
    #allocation28 [shape = 's32[2]{0}', space=sflag, size = 0x8, scoped, tag = 'scoped memory for tpu_custom_call.1']
    %23 = vsyncpa [#allocation3], 0
    %s24 = scalar_lea.sflag [#allocation3], 1
    %25 = vsyncpa %s24, 0
    %26 = vsyncpa [#allocation6], 0
    %s27 = scalar_lea.sflag [#allocation6], 1
    %28 = vsyncpa %s27, 0
    %29 = vsyncpa [#allocation9], 0
    %30 = vsyncpa [#allocation12], 0
    %31 = vsyncpa [#allocation15], 0
    %32 = vsyncpa [#allocation18], 0
    %33 = vsyncpa [#allocation21], 0
    %34 = vsyncpa [#allocation24], 0
    %35 = vsyncpa [#allocation4], 0
    %s36 = scalar_lea.sflag [#allocation4], 1
    %37 = vsyncpa %s36, 0
    %38 = vsyncpa [#allocation28], 0
    %s39 = scalar_lea.sflag [#allocation28], 1
    %40 = vsyncpa %s39, 0
    loop: start=0, step=1, limit=4
    $region2: #{tpu_custom_call.1} parent=1 // loop_pre_header
      _
    $region3: #{tpu_custom_call.1} parent=1 // loop_header
      %s42 = sphi 0, %s46
      %p43 = scmp.ge.s32.totalorder %s42, 4
      %s49 = sphi 0, %s61
      %s50 = sphi 0, %s57
      %s51 = sphi 0, %s49
      %s52 = sphi 0, %s50
      %s53 = sphi 0, %s51
      %s54 = sphi 0, %s52
      %s66 = sphi 0, %s68
      %s69 = sphi 0, %s66
      %s70 = sphi 0, %s69
      %s86 = sphi 0, %s70
      %s92 = sphi 0, %s94
      %s95 = sphi 0, %s92
      %s96 = sphi 0, %s95
      %s112 = sphi 0, %s96
      %s118 = sphi 0, %s120
      %s121 = sphi 0, %s118
      %s122 = sphi 0, %s121
      %s138 = sphi 0, %s122
      %s146 = sphi 0, %s148
      %s149 = sphi 0, %s146
      %s150 = sphi 0, %s149
      %s166 = sphi 0, %s150
      %s170 = sphi 0, %s170
      %s172 = sphi 0, %s170
      %s173 = sphi 0, %s172
      %s187 = sphi 0, %s173
      %s191 = sphi 0, %s191
      %s193 = sphi 0, %s191
      %s194 = sphi 0, %s193
      %s208 = sphi 0, %s194
      %s212 = sphi 0, %s212
      %s214 = sphi 0, %s212
      %s215 = sphi 0, %s214
      %s229 = sphi 0, %s215
      %s233 = sphi 0, %s233
      %s235 = sphi 0, %s233
      %s236 = sphi 0, %s235
      %s250 = sphi 0, %s236
      %s254 = sphi 0, %s254
      %s256 = sphi 0, %s254
      %s257 = sphi 0, %s256
      %s271 = sphi 0, %s257
      %s275 = sphi 0, %s275
      %s277 = sphi 0, %s275
      %s278 = sphi 0, %s277
      %s292 = sphi 0, %s278
      %s296 = sphi 0, %s296
      %s298 = sphi 0, %s296
      %s299 = sphi 0, %s298
      %s313 = sphi 0, %s299
      %s317 = sphi 0, %s317
      %s319 = sphi 0, %s317
      %s320 = sphi 0, %s319
      %s334 = sphi 0, %s320
      %s338 = sphi 0, %s338
      %s340 = sphi 0, %s338
      %s341 = sphi 0, %s340
      %s355 = sphi 0, %s341
      %s359 = sphi 0, %s359
      %s361 = sphi 0, %s359
      %s362 = sphi 0, %s361
      %s376 = sphi 0, %s362
      %s380 = sphi 0, %s380
      %s382 = sphi 0, %s380
      %s383 = sphi 0, %s382
      %s397 = sphi 0, %s383
      %s401 = sphi 0, %s401
      %s403 = sphi 0, %s401
      %s404 = sphi 0, %s403
      %s418 = sphi 0, %s404
      %s426 = sphi 0, %s428
      %s429 = sphi 0, %s426
      %s430 = sphi 0, %s429
      %s446 = sphi 0, %s430
      %s454 = sphi 0, %s456
      %s457 = sphi 0, %s454
      %s458 = sphi 0, %s457
      %s474 = sphi 0, %s458
    $region4: #{tpu_custom_call.1} parent=1 // loop_header_branch
      %45 = sbr.rel (%p43) target = $region8
    $region5: #{tpu_custom_call.1} parent=1 // loop_body
      %s47 = ssub.s32 %s42, 1
      %s48 = ssub.s32 %s42, 2
      %s55 = sadd.s32 1, %s50
      %p56 = scmp.ge.s32.totalorder %s55, 1
      %s57 = scalar_select %p56, 0, %s55
      %s58 = sadd.s32 1, %s49
      %s59 = scalar_select %p56, %s58, %s49
      %p60 = scmp.ge.s32.totalorder %s59, 2
      %s61 = scalar_select %p60, 0, %s59
      %s62 = ssub.s32 %s49, %s61
      %s63 = ssub.s32 %s50, %s57
      %s64 = sor.u32 %s62, %s63
      %p65 = scmp.eq.s32.totalorder %s64, 0
      %s67 = sadd.s32 %s66, 1
      %s68 = scalar_select %p65, %s66, %s67
      %p71 = pneg %p65
      %p72 = scmp.eq.s32.totalorder %s42, 1
      %p73 = por %p71, %p72
      %p74 = scmp.ne.s32.totalorder %s66, %s69
      %p75 = scmp.eq.s32.totalorder %s42, 0
      %p76 = por %p74, %p75
      %p77 = scmp.ne.s32.totalorder %s66, %s69
      %p78 = scmp.eq.s32.totalorder %s47, 1
      %p79 = por %p77, %p78
      %p80 = scmp.ne.s32.totalorder %s69, %s70
      %p81 = scmp.eq.s32.totalorder %s47, 0
      %p82 = por %p80, %p81
      %p83 = scmp.ne.s32.totalorder %s69, %s70
      %p84 = scmp.eq.s32.totalorder %s48, 1
      %p85 = por %p83, %p84
      %p87 = scmp.ne.s32.totalorder %s70, %s86
      %p88 = scmp.eq.s32.totalorder %s48, 0
      %p89 = por %p87, %p88
      %s90 = ssub.s32 %s49, %s61
      %p91 = scmp.eq.s32.totalorder %s90, 0
      %s93 = sadd.s32 %s92, 1
      %s94 = scalar_select %p91, %s92, %s93
      %p97 = pneg %p91
      %p98 = scmp.eq.s32.totalorder %s42, 1
      %p99 = por %p97, %p98
      %p100 = scmp.ne.s32.totalorder %s92, %s95
      %p101 = scmp.eq.s32.totalorder %s42, 0
      %p102 = por %p100, %p101
      %p103 = scmp.ne.s32.totalorder %s92, %s95
      %p104 = scmp.eq.s32.totalorder %s47, 1
      %p105 = por %p103, %p104
      %p106 = scmp.ne.s32.totalorder %s95, %s96
      %p107 = scmp.eq.s32.totalorder %s47, 0
      %p108 = por %p106, %p107
      %p109 = scmp.ne.s32.totalorder %s95, %s96
      %p110 = scmp.eq.s32.totalorder %s48, 1
      %p111 = por %p109, %p110
      %p113 = scmp.ne.s32.totalorder %s96, %s112
      %p114 = scmp.eq.s32.totalorder %s48, 0
      %p115 = por %p113, %p114
      %s116 = ssub.s32 %s49, %s61
      %p117 = scmp.eq.s32.totalorder %s116, 0
      %s119 = sadd.s32 %s118, 1
      %s120 = scalar_select %p117, %s118, %s119
      %p123 = pneg %p117
      %p124 = scmp.eq.s32.totalorder %s42, 1
      %p125 = por %p123, %p124
      %p126 = scmp.ne.s32.totalorder %s118, %s121
      %p127 = scmp.eq.s32.totalorder %s42, 0
      %p128 = por %p126, %p127
      %p129 = scmp.ne.s32.totalorder %s118, %s121
      %p130 = scmp.eq.s32.totalorder %s47, 1
      %p131 = por %p129, %p130
      %p132 = scmp.ne.s32.totalorder %s121, %s122
      %p133 = scmp.eq.s32.totalorder %s47, 0
      %p134 = por %p132, %p133
      %p135 = scmp.ne.s32.totalorder %s121, %s122
      %p136 = scmp.eq.s32.totalorder %s48, 1
      %p137 = por %p135, %p136
      %p139 = scmp.ne.s32.totalorder %s122, %s138
      %p140 = scmp.eq.s32.totalorder %s48, 0
      %p141 = por %p139, %p140
      %s142 = ssub.s32 %s49, %s61
      %s143 = ssub.s32 %s50, %s57
      %s144 = sor.u32 %s142, %s143
      %p145 = scmp.eq.s32.totalorder %s144, 0
      %s147 = sadd.s32 %s146, 1
      %s148 = scalar_select %p145, %s146, %s147
      %p151 = pneg %p145
      %p152 = scmp.eq.s32.totalorder %s42, 1
      %p153 = por %p151, %p152
      %p154 = scmp.ne.s32.totalorder %s146, %s149
      %p155 = scmp.eq.s32.totalorder %s42, 0
      %p156 = por %p154, %p155
      %p157 = scmp.ne.s32.totalorder %s146, %s149
      %p158 = scmp.eq.s32.totalorder %s47, 1
      %p159 = por %p157, %p158
      %p160 = scmp.ne.s32.totalorder %s149, %s150
      %p161 = scmp.eq.s32.totalorder %s47, 0
      %p162 = por %p160, %p161
      %p163 = scmp.ne.s32.totalorder %s149, %s150
      %p164 = scmp.eq.s32.totalorder %s48, 1
      %p165 = por %p163, %p164
      %p167 = scmp.ne.s32.totalorder %s150, %s166
      %p168 = scmp.eq.s32.totalorder %s48, 0
      %p169 = por %p167, %p168
      %s171 = sadd.s32 %s170, 1
      %p174 = scmp.eq.s32.totalorder %s42, 1
      %p175 = scmp.ne.s32.totalorder %s170, %s172
      %p176 = scmp.eq.s32.totalorder %s42, 0
      %p177 = por %p175, %p176
      %p178 = scmp.ne.s32.totalorder %s170, %s172
      %p179 = scmp.eq.s32.totalorder %s47, 1
      %p180 = por %p178, %p179
      %p181 = scmp.ne.s32.totalorder %s172, %s173
      %p182 = scmp.eq.s32.totalorder %s47, 0
      %p183 = por %p181, %p182
      %p184 = scmp.ne.s32.totalorder %s172, %s173
      %p185 = scmp.eq.s32.totalorder %s48, 1
      %p186 = por %p184, %p185
      %p188 = scmp.ne.s32.totalorder %s173, %s187
      %p189 = scmp.eq.s32.totalorder %s48, 0
      %p190 = por %p188, %p189
      %s192 = sadd.s32 %s191, 1
      %p195 = scmp.eq.s32.totalorder %s42, 1
      %p196 = scmp.ne.s32.totalorder %s191, %s193
      %p197 = scmp.eq.s32.totalorder %s42, 0
      %p198 = por %p196, %p197
      %p199 = scmp.ne.s32.totalorder %s191, %s193
      %p200 = scmp.eq.s32.totalorder %s47, 1
      %p201 = por %p199, %p200
      %p202 = scmp.ne.s32.totalorder %s193, %s194
      %p203 = scmp.eq.s32.totalorder %s47, 0
      %p204 = por %p202, %p203
      %p205 = scmp.ne.s32.totalorder %s193, %s194
      %p206 = scmp.eq.s32.totalorder %s48, 1
      %p207 = por %p205, %p206
      %p209 = scmp.ne.s32.totalorder %s194, %s208
      %p210 = scmp.eq.s32.totalorder %s48, 0
      %p211 = por %p209, %p210
      %s213 = sadd.s32 %s212, 1
      %p216 = scmp.eq.s32.totalorder %s42, 1
      %p217 = scmp.ne.s32.totalorder %s212, %s214
      %p218 = scmp.eq.s32.totalorder %s42, 0
      %p219 = por %p217, %p218
      %p220 = scmp.ne.s32.totalorder %s212, %s214
      %p221 = scmp.eq.s32.totalorder %s47, 1
      %p222 = por %p220, %p221
      %p223 = scmp.ne.s32.totalorder %s214, %s215
      %p224 = scmp.eq.s32.totalorder %s47, 0
      %p225 = por %p223, %p224
      %p226 = scmp.ne.s32.totalorder %s214, %s215
      %p227 = scmp.eq.s32.totalorder %s48, 1
      %p228 = por %p226, %p227
      %p230 = scmp.ne.s32.totalorder %s215, %s229
      %p231 = scmp.eq.s32.totalorder %s48, 0
      %p232 = por %p230, %p231
      %s234 = sadd.s32 %s233, 1
      %p237 = scmp.eq.s32.totalorder %s42, 1
      %p238 = scmp.ne.s32.totalorder %s233, %s235
      %p239 = scmp.eq.s32.totalorder %s42, 0
      %p240 = por %p238, %p239
      %p241 = scmp.ne.s32.totalorder %s233, %s235
      %p242 = scmp.eq.s32.totalorder %s47, 1
      %p243 = por %p241, %p242
      %p244 = scmp.ne.s32.totalorder %s235, %s236
      %p245 = scmp.eq.s32.totalorder %s47, 0
      %p246 = por %p244, %p245
      %p247 = scmp.ne.s32.totalorder %s235, %s236
      %p248 = scmp.eq.s32.totalorder %s48, 1
      %p249 = por %p247, %p248
      %p251 = scmp.ne.s32.totalorder %s236, %s250
      %p252 = scmp.eq.s32.totalorder %s48, 0
      %p253 = por %p251, %p252
      %s255 = sadd.s32 %s254, 1
      %p258 = scmp.eq.s32.totalorder %s42, 1
      %p259 = scmp.ne.s32.totalorder %s254, %s256
      %p260 = scmp.eq.s32.totalorder %s42, 0
      %p261 = por %p259, %p260
      %p262 = scmp.ne.s32.totalorder %s254, %s256
      %p263 = scmp.eq.s32.totalorder %s47, 1
      %p264 = por %p262, %p263
      %p265 = scmp.ne.s32.totalorder %s256, %s257
      %p266 = scmp.eq.s32.totalorder %s47, 0
      %p267 = por %p265, %p266
      %p268 = scmp.ne.s32.totalorder %s256, %s257
      %p269 = scmp.eq.s32.totalorder %s48, 1
      %p270 = por %p268, %p269
      %p272 = scmp.ne.s32.totalorder %s257, %s271
      %p273 = scmp.eq.s32.totalorder %s48, 0
      %p274 = por %p272, %p273
      %s276 = sadd.s32 %s275, 1
      %p279 = scmp.eq.s32.totalorder %s42, 1
      %p280 = scmp.ne.s32.totalorder %s275, %s277
      %p281 = scmp.eq.s32.totalorder %s42, 0
      %p282 = por %p280, %p281
      %p283 = scmp.ne.s32.totalorder %s275, %s277
      %p284 = scmp.eq.s32.totalorder %s47, 1
      %p285 = por %p283, %p284
      %p286 = scmp.ne.s32.totalorder %s277, %s278
      %p287 = scmp.eq.s32.totalorder %s47, 0
      %p288 = por %p286, %p287
      %p289 = scmp.ne.s32.totalorder %s277, %s278
      %p290 = scmp.eq.s32.totalorder %s48, 1
      %p291 = por %p289, %p290
      %p293 = scmp.ne.s32.totalorder %s278, %s292
      %p294 = scmp.eq.s32.totalorder %s48, 0
      %p295 = por %p293, %p294
      %s297 = sadd.s32 %s296, 1
      %p300 = scmp.eq.s32.totalorder %s42, 1
      %p301 = scmp.ne.s32.totalorder %s296, %s298
      %p302 = scmp.eq.s32.totalorder %s42, 0
      %p303 = por %p301, %p302
      %p304 = scmp.ne.s32.totalorder %s296, %s298
      %p305 = scmp.eq.s32.totalorder %s47, 1
      %p306 = por %p304, %p305
      %p307 = scmp.ne.s32.totalorder %s298, %s299
      %p308 = scmp.eq.s32.totalorder %s47, 0
      %p309 = por %p307, %p308
      %p310 = scmp.ne.s32.totalorder %s298, %s299
      %p311 = scmp.eq.s32.totalorder %s48, 1
      %p312 = por %p310, %p311
      %p314 = scmp.ne.s32.totalorder %s299, %s313
      %p315 = scmp.eq.s32.totalorder %s48, 0
      %p316 = por %p314, %p315
      %s318 = sadd.s32 %s317, 1
      %p321 = scmp.eq.s32.totalorder %s42, 1
      %p322 = scmp.ne.s32.totalorder %s317, %s319
      %p323 = scmp.eq.s32.totalorder %s42, 0
      %p324 = por %p322, %p323
      %p325 = scmp.ne.s32.totalorder %s317, %s319
      %p326 = scmp.eq.s32.totalorder %s47, 1
      %p327 = por %p325, %p326
      %p328 = scmp.ne.s32.totalorder %s319, %s320
      %p329 = scmp.eq.s32.totalorder %s47, 0
      %p330 = por %p328, %p329
      %p331 = scmp.ne.s32.totalorder %s319, %s320
      %p332 = scmp.eq.s32.totalorder %s48, 1
      %p333 = por %p331, %p332
      %p335 = scmp.ne.s32.totalorder %s320, %s334
      %p336 = scmp.eq.s32.totalorder %s48, 0
      %p337 = por %p335, %p336
      %s339 = sadd.s32 %s338, 1
      %p342 = scmp.eq.s32.totalorder %s42, 1
      %p343 = scmp.ne.s32.totalorder %s338, %s340
      %p344 = scmp.eq.s32.totalorder %s42, 0
      %p345 = por %p343, %p344
      %p346 = scmp.ne.s32.totalorder %s338, %s340
      %p347 = scmp.eq.s32.totalorder %s47, 1
      %p348 = por %p346, %p347
      %p349 = scmp.ne.s32.totalorder %s340, %s341
      %p350 = scmp.eq.s32.totalorder %s47, 0
      %p351 = por %p349, %p350
      %p352 = scmp.ne.s32.totalorder %s340, %s341
      %p353 = scmp.eq.s32.totalorder %s48, 1
      %p354 = por %p352, %p353
      %p356 = scmp.ne.s32.totalorder %s341, %s355
      %p357 = scmp.eq.s32.totalorder %s48, 0
      %p358 = por %p356, %p357
      %s360 = sadd.s32 %s359, 1
      %p363 = scmp.eq.s32.totalorder %s42, 1
      %p364 = scmp.ne.s32.totalorder %s359, %s361
      %p365 = scmp.eq.s32.totalorder %s42, 0
      %p366 = por %p364, %p365
      %p367 = scmp.ne.s32.totalorder %s359, %s361
      %p368 = scmp.eq.s32.totalorder %s47, 1
      %p369 = por %p367, %p368
      %p370 = scmp.ne.s32.totalorder %s361, %s362
      %p371 = scmp.eq.s32.totalorder %s47, 0
      %p372 = por %p370, %p371
      %p373 = scmp.ne.s32.totalorder %s361, %s362
      %p374 = scmp.eq.s32.totalorder %s48, 1
      %p375 = por %p373, %p374
      %p377 = scmp.ne.s32.totalorder %s362, %s376
      %p378 = scmp.eq.s32.totalorder %s48, 0
      %p379 = por %p377, %p378
      %s381 = sadd.s32 %s380, 1
      %p384 = scmp.eq.s32.totalorder %s42, 1
      %p385 = scmp.ne.s32.totalorder %s380, %s382
      %p386 = scmp.eq.s32.totalorder %s42, 0
      %p387 = por %p385, %p386
      %p388 = scmp.ne.s32.totalorder %s380, %s382
      %p389 = scmp.eq.s32.totalorder %s47, 1
      %p390 = por %p388, %p389
      %p391 = scmp.ne.s32.totalorder %s382, %s383
      %p392 = scmp.eq.s32.totalorder %s47, 0
      %p393 = por %p391, %p392
      %p394 = scmp.ne.s32.totalorder %s382, %s383
      %p395 = scmp.eq.s32.totalorder %s48, 1
      %p396 = por %p394, %p395
      %p398 = scmp.ne.s32.totalorder %s383, %s397
      %p399 = scmp.eq.s32.totalorder %s48, 0
      %p400 = por %p398, %p399
      %s402 = sadd.s32 %s401, 1
      %p405 = scmp.eq.s32.totalorder %s42, 1
      %p406 = scmp.ne.s32.totalorder %s401, %s403
      %p407 = scmp.eq.s32.totalorder %s42, 0
      %p408 = por %p406, %p407
      %p409 = scmp.ne.s32.totalorder %s401, %s403
      %p410 = scmp.eq.s32.totalorder %s47, 1
      %p411 = por %p409, %p410
      %p412 = scmp.ne.s32.totalorder %s403, %s404
      %p413 = scmp.eq.s32.totalorder %s47, 0
      %p414 = por %p412, %p413
      %p415 = scmp.ne.s32.totalorder %s403, %s404
      %p416 = scmp.eq.s32.totalorder %s48, 1
      %p417 = por %p415, %p416
      %p419 = scmp.ne.s32.totalorder %s404, %s418
      %p420 = scmp.eq.s32.totalorder %s48, 0
      %p421 = por %p419, %p420
      %s422 = ssub.s32 %s49, %s61
      %s423 = ssub.s32 %s50, %s57
      %s424 = sor.u32 %s422, %s423
      %p425 = scmp.eq.s32.totalorder %s424, 0
      %s427 = sadd.s32 %s426, 1
      %s428 = scalar_select %p425, %s426, %s427
      %p431 = pneg %p425
      %p432 = scmp.eq.s32.totalorder %s42, 1
      %p433 = por %p431, %p432
      %p434 = scmp.ne.s32.totalorder %s426, %s429
      %p435 = scmp.eq.s32.totalorder %s42, 0
      %p436 = por %p434, %p435
      %p437 = scmp.ne.s32.totalorder %s426, %s429
      %p438 = scmp.eq.s32.totalorder %s47, 1
      %p439 = por %p437, %p438
      %p440 = scmp.ne.s32.totalorder %s429, %s430
      %p441 = scmp.eq.s32.totalorder %s47, 0
      %p442 = por %p440, %p441
      %p443 = scmp.ne.s32.totalorder %s429, %s430
      %p444 = scmp.eq.s32.totalorder %s48, 1
      %p445 = por %p443, %p444
      %p447 = scmp.ne.s32.totalorder %s430, %s446
      %p448 = scmp.eq.s32.totalorder %s48, 0
      %p449 = por %p447, %p448
      %s450 = ssub.s32 %s49, %s61
      %s451 = ssub.s32 %s50, %s57
      %s452 = sor.u32 %s450, %s451
      %p453 = scmp.eq.s32.totalorder %s452, 0
      %s455 = sadd.s32 %s454, 1
      %s456 = scalar_select %p453, %s454, %s455
      %p459 = pneg %p453
      %p460 = scmp.eq.s32.totalorder %s42, 1
      %p461 = por %p459, %p460
      %p462 = scmp.ne.s32.totalorder %s454, %s457
      %p463 = scmp.eq.s32.totalorder %s42, 0
      %p464 = por %p462, %p463
      %p465 = scmp.ne.s32.totalorder %s454, %s457
      %p466 = scmp.eq.s32.totalorder %s47, 1
      %p467 = por %p465, %p466
      %p468 = scmp.ne.s32.totalorder %s457, %s458
      %p469 = scmp.eq.s32.totalorder %s47, 0
      %p470 = por %p468, %p469
      %p471 = scmp.ne.s32.totalorder %s457, %s458
      %p472 = scmp.eq.s32.totalorder %s48, 1
      %p473 = por %p471, %p472
      %p475 = scmp.ne.s32.totalorder %s458, %s474
      %p476 = scmp.eq.s32.totalorder %s48, 0
      %p477 = por %p475, %p476
      %p478 = scmp.le.s32.totalorder 1, %s42
      %p479 = scmp.lt.s32.totalorder %s42, 3
      %p480 = pnand %p478, %p479
      %p481 = pneg %p480
      // Predicated region
      $region9: #{tpu_custom_call.1} parent=5 // pred_check
        _
      $region10: #{tpu_custom_call.1} parent=5 // pred_check_branch
        %483 = sbr.rel (%p480) target = $region12
      $region11: #{tpu_custom_call.1} parent=5 // pred_region
        %s484 = ssub.s32 %s42, 1
        // Predicated region
        $region13: #{tpu_custom_call.1} parent=11 // pred_check
          %p485 = pneg %p183
        $region14: #{tpu_custom_call.1} parent=11 // pred_check_branch
          %487 = sbr.rel (%p485) target = $region16
        $region15: #{tpu_custom_call.1} parent=11 // pred_region
          %s489 = ssub.s32 16384, 16384
          %490 = vsyncadd [#allocation9], %s489
          %s491 = sshll.u32 [#allocation8], 4
          %s492 = int_to_ptr.vmem [resolvable:$true] %s491
          %497 = dma.hbm_to_vmem [thread:$0]  %s4, 16384, %s492, [#allocation9], 256, 256, 16
        $region16: #{tpu_custom_call.1} parent=11 // pred_fallthru
          _
        // Predicated region
        $region17: #{tpu_custom_call.1} parent=11 // pred_check
          %p498 = pneg %p204
        $region18: #{tpu_custom_call.1} parent=11 // pred_check_branch
          %500 = sbr.rel (%p498) target = $region20
        $region19: #{tpu_custom_call.1} parent=11 // pred_region
          %s502 = ssub.s32 16384, 16384
          %503 = vsyncadd [#allocation9], %s502
          %s504 = sshll.u32 [#allocation10], 4
          %s505 = int_to_ptr.vmem [resolvable:$true] %s504
          %510 = dma.hbm_to_vmem [thread:$0]  %s5, 16384, %s505, [#allocation9], 256, 256, 16
        $region20: #{tpu_custom_call.1} parent=11 // pred_fallthru
          _
        // Predicated region
        $region21: #{tpu_custom_call.1} parent=11 // pred_check
          %p511 = pneg %p225
        $region22: #{tpu_custom_call.1} parent=11 // pred_check_branch
          %513 = sbr.rel (%p511) target = $region24
        $region23: #{tpu_custom_call.1} parent=11 // pred_region
          %s515 = ssub.s32 64, 64
          %516 = vsyncadd [#allocation12], %s515
          %s518 = sshll.u32 [#allocation11], 4
          %s519 = int_to_ptr.vmem [resolvable:$true] %s518
          %521 = dma.hbm_to_vmem [thread:$0]  %s6, 64, %s519, [#allocation12]
        $region24: #{tpu_custom_call.1} parent=11 // pred_fallthru
          _
        // Predicated region
        $region25: #{tpu_custom_call.1} parent=11 // pred_check
          %p522 = pneg %p246
        $region26: #{tpu_custom_call.1} parent=11 // pred_check_branch
          %524 = sbr.rel (%p522) target = $region28
        $region27: #{tpu_custom_call.1} parent=11 // pred_region
          %s526 = ssub.s32 64, 64
          %527 = vsyncadd [#allocation12], %s526
          %s529 = sshll.u32 [#allocation13], 4
          %s530 = int_to_ptr.vmem [resolvable:$true] %s529
          %532 = dma.hbm_to_vmem [thread:$0]  %s7, 64, %s530, [#allocation12]
        $region28: #{tpu_custom_call.1} parent=11 // pred_fallthru
          _
        // Predicated region
        $region29: #{tpu_custom_call.1} parent=11 // pred_check
          %p533 = pneg %p267
        $region30: #{tpu_custom_call.1} parent=11 // pred_check_branch
          %535 = sbr.rel (%p533) target = $region32
        $region31: #{tpu_custom_call.1} parent=11 // pred_region
          %s537 = ssub.s32 64, 64
          %538 = vsyncadd [#allocation15], %s537
          %s540 = sshll.u32 [#allocation14], 4
          %s541 = int_to_ptr.vmem [resolvable:$true] %s540
          %543 = dma.hbm_to_vmem [thread:$0]  %s8, 64, %s541, [#allocation15]
        $region32: #{tpu_custom_call.1} parent=11 // pred_fallthru
          _
        // Predicated region
        $region33: #{tpu_custom_call.1} parent=11 // pred_check
          %p544 = pneg %p288
        $region34: #{tpu_custom_call.1} parent=11 // pred_check_branch
          %546 = sbr.rel (%p544) target = $region36
        $region35: #{tpu_custom_call.1} parent=11 // pred_region
          %s548 = ssub.s32 64, 64
          %549 = vsyncadd [#allocation15], %s548
          %s551 = sshll.u32 [#allocation16], 4
          %s552 = int_to_ptr.vmem [resolvable:$true] %s551
          %554 = dma.hbm_to_vmem [thread:$0]  %s9, 64, %s552, [#allocation15]
        $region36: #{tpu_custom_call.1} parent=11 // pred_fallthru
          _
        // Predicated region
        $region37: #{tpu_custom_call.1} parent=11 // pred_check
          %p555 = pneg %p309
        $region38: #{tpu_custom_call.1} parent=11 // pred_check_branch
          %557 = sbr.rel (%p555) target = $region40
        $region39: #{tpu_custom_call.1} parent=11 // pred_region
          %s559 = ssub.s32 65536, 65536
          %560 = vsyncadd [#allocation18], %s559
          %s561 = sshll.u32 [#allocation17], 4
          %s562 = int_to_ptr.vmem [resolvable:$true] %s561
          %567 = dma.hbm_to_vmem [thread:$0]  %s10, 65536, %s562, [#allocation18], 1024, 1024, 64
        $region40: #{tpu_custom_call.1} parent=11 // pred_fallthru
          _
        // Predicated region
        $region41: #{tpu_custom_call.1} parent=11 // pred_check
          %p568 = pneg %p330
        $region42: #{tpu_custom_call.1} parent=11 // pred_check_branch
          %570 = sbr.rel (%p568) target = $region44
        $region43: #{tpu_custom_call.1} parent=11 // pred_region
          %s572 = ssub.s32 256, 256
          %573 = vsyncadd [#allocation18], %s572
          %s575 = sshll.u32 [#allocation19], 4
          %s576 = int_to_ptr.vmem [resolvable:$true] %s575
          %578 = dma.hbm_to_vmem [thread:$0]  %s11, 256, %s576, [#allocation18]
        $region44: #{tpu_custom_call.1} parent=11 // pred_fallthru
          _
        // Predicated region
        $region45: #{tpu_custom_call.1} parent=11 // pred_check
          %p579 = pneg %p351
        $region46: #{tpu_custom_call.1} parent=11 // pred_check_branch
          %581 = sbr.rel (%p579) target = $region48
        $region47: #{tpu_custom_call.1} parent=11 // pred_region
          %s583 = ssub.s32 65536, 65536
          %584 = vsyncadd [#allocation21], %s583
          %s585 = sshll.u32 [#allocation20], 4
          %s586 = int_to_ptr.vmem [resolvable:$true] %s585
          %591 = dma.hbm_to_vmem [thread:$0]  %s12, 65536, %s586, [#allocation21], 256, 256, 16
        $region48: #{tpu_custom_call.1} parent=11 // pred_fallthru
          _
        // Predicated region
        $region49: #{tpu_custom_call.1} parent=11 // pred_check
          %p592 = pneg %p372
        $region50: #{tpu_custom_call.1} parent=11 // pred_check_branch
          %594 = sbr.rel (%p592) target = $region52
        $region51: #{tpu_custom_call.1} parent=11 // pred_region
          %s596 = ssub.s32 64, 64
          %597 = vsyncadd [#allocation21], %s596
          %s599 = sshll.u32 [#allocation22], 4
          %s600 = int_to_ptr.vmem [resolvable:$true] %s599
          %602 = dma.hbm_to_vmem [thread:$0]  %s13, 64, %s600, [#allocation21]
        $region52: #{tpu_custom_call.1} parent=11 // pred_fallthru
          _
        // Predicated region
        $region53: #{tpu_custom_call.1} parent=11 // pred_check
          %p603 = pneg %p393
        $region54: #{tpu_custom_call.1} parent=11 // pred_check_branch
          %605 = sbr.rel (%p603) target = $region56
        $region55: #{tpu_custom_call.1} parent=11 // pred_region
          %s607 = ssub.s32 64, 64
          %608 = vsyncadd [#allocation24], %s607
          %s610 = sshll.u32 [#allocation23], 4
          %s611 = int_to_ptr.vmem [resolvable:$true] %s610
          %613 = dma.hbm_to_vmem [thread:$0]  %s14, 64, %s611, [#allocation24]
        $region56: #{tpu_custom_call.1} parent=11 // pred_fallthru
          _
        // Predicated region
        $region57: #{tpu_custom_call.1} parent=11 // pred_check
          %p614 = pneg %p414
        $region58: #{tpu_custom_call.1} parent=11 // pred_check_branch
          %616 = sbr.rel (%p614) target = $region60
        $region59: #{tpu_custom_call.1} parent=11 // pred_region
          %s618 = ssub.s32 64, 64
          %619 = vsyncadd [#allocation24], %s618
          %s621 = sshll.u32 [#allocation25], 4
          %s622 = int_to_ptr.vmem [resolvable:$true] %s621
          %624 = dma.hbm_to_vmem [thread:$0]  %s15, 64, %s622, [#allocation24]
        $region60: #{tpu_custom_call.1} parent=11 // pred_fallthru
          _
      $region12: #{tpu_custom_call.1} parent=5 // pred_fallthru
        _
      %p625 = scmp.lt.s32.totalorder %s42, 2
      // Predicated region
      $region61: #{tpu_custom_call.1} parent=5 // pred_check
        %p626 = pneg %p625
      $region62: #{tpu_custom_call.1} parent=5 // pred_check_branch
        %628 = sbr.rel (%p626) target = $region64
      $region63: #{tpu_custom_call.1} parent=5 // pred_region
        // Predicated region
        $region65: #{tpu_custom_call.1} parent=63 // pred_check
          %p629 = pneg %p76
        $region66: #{tpu_custom_call.1} parent=63 // pred_check_branch
          %631 = sbr.rel (%p629) target = $region68
        $region67: #{tpu_custom_call.1} parent=63 // pred_region
          %s632 = sand.u32 %s66, 1
          %s633 = scalar_lea.sflag [#allocation3], %s632
          %s634 = sand.u32 %s66, 1
          %s635 = smul.addr %s634, 32
          %s636 = scalar_lea.vmem [#allocation2], %s635
          %s638 = ssub.s32 512, 512
          %639 = vsyncadd %s633, %s638
          %s640 = smul.addr %s50, 4
          %s641 = smul.addr %s49, 4
          %s642 = sadd.s32 %s640, %s641
          %s643 = smul.addr %s642, 128
          %s644 = scalar_lea.hbm %s0, %s643
          %s646 = sshll.u32 %s636, 4
          %s647 = int_to_ptr.vmem [resolvable:$true] %s646
          %649 = dma.hbm_to_vmem [thread:$0]  %s644, 512, %s647, %s633
        $region68: #{tpu_custom_call.1} parent=63 // pred_fallthru
          _
        // Predicated region
        $region69: #{tpu_custom_call.1} parent=63 // pred_check
          %p650 = pneg %p102
        $region70: #{tpu_custom_call.1} parent=63 // pred_check_branch
          %652 = sbr.rel (%p650) target = $region72
        $region71: #{tpu_custom_call.1} parent=63 // pred_region
          %p653 = scmp.lt.s32.totalorder %s49, 1
          %s654 = scalar_select %p653, %s49, 1
          %s655 = smul.addr %s654, 64
          %s656 = smul.addr %s655, 4
          %s657 = scalar_lea.vmem %s1, %s656
        $region72: #{tpu_custom_call.1} parent=63 // pred_fallthru
          _
        // Predicated region
        $region73: #{tpu_custom_call.1} parent=63 // pred_check
          %p658 = pneg %p128
        $region74: #{tpu_custom_call.1} parent=63 // pred_check_branch
          %660 = sbr.rel (%p658) target = $region76
        $region75: #{tpu_custom_call.1} parent=63 // pred_region
          %s661 = sand.u32 %s42, 1
          %s662 = scalar_lea.sflag [#allocation6], %s661
          %s663 = sand.u32 %s118, 1
          %s664 = smul.addr %s663, 32
          %s665 = scalar_lea.vmem [#allocation5], %s664
          %s667 = ssub.s32 512, 512
          %668 = vsyncadd %s662, %s667
          %s669 = smul.addr %s49, 8
          %s670 = smul.addr %s669, 64
          %s671 = scalar_lea.hbm %s2, %s670
          %s672 = sshll.u32 %s665, 4
          %s673 = int_to_ptr.vmem [resolvable:$true] %s672
          %678 = dma.hbm_to_vmem [thread:$0]  %s671, 512, %s673, %s662, 64, 64, 4
        $region76: #{tpu_custom_call.1} parent=63 // pred_fallthru
          _
        // Predicated region
        $region77: #{tpu_custom_call.1} parent=63 // pred_check
          %p679 = pneg %p156
        $region78: #{tpu_custom_call.1} parent=63 // pred_check_branch
          %681 = sbr.rel (%p679) target = $region80
        $region79: #{tpu_custom_call.1} parent=63 // pred_region
          %s682 = sand.u32 %s42, 1
          %s683 = scalar_lea.sflag [#allocation6], %s682
          %s684 = sand.u32 %s146, 1
          %s685 = smul.addr %s684, 2
          %s686 = scalar_lea.vmem [#allocation7], %s685
          %s688 = ssub.s32 32, 32
          %689 = vsyncadd %s683, %s688
          %s690 = sadd.s32 %s50, %s49
          %s691 = smul.addr %s690, 32
          %s692 = scalar_lea.hbm %s3, %s691
          %s694 = sshll.u32 %s686, 4
          %s695 = int_to_ptr.vmem [resolvable:$true] %s694
          %697 = dma.hbm_to_vmem [thread:$0]  %s692, 32, %s695, %s683
        $region80: #{tpu_custom_call.1} parent=63 // pred_fallthru
          _
      $region64: #{tpu_custom_call.1} parent=5 // pred_fallthru
        _
      %p698 = scmp.le.s32.totalorder 1, %s42
      %p699 = scmp.lt.s32.totalorder %s42, 3
      %p700 = pnand %p698, %p699
      %p701 = pneg %p700
      // Predicated region
      $region81: #{tpu_custom_call.1} parent=5 // pred_check
        _
      $region82: #{tpu_custom_call.1} parent=5 // pred_check_branch
        %703 = sbr.rel (%p700) target = $region84
      $region83: #{tpu_custom_call.1} parent=5 // pred_region
        %s704 = ssub.s32 %s42, 1
        %s705 = sand.u32 %s69, 1
        %s706 = scalar_lea.sflag [#allocation3], %s705
        %s707 = sand.u32 %s69, 1
        %s708 = smul.addr %s707, 32
        %s709 = scalar_lea.vmem [#allocation2], %s708
        // Predicated region
        $region85: #{tpu_custom_call.1} parent=83 // pred_check
          %p710 = pneg %p82
        $region86: #{tpu_custom_call.1} parent=83 // pred_check_branch
          %712 = sbr.rel (%p710) target = $region88
        $region87: #{tpu_custom_call.1} parent=83 // pred_region
          %713 = dma.done %s706, 512
        $region88: #{tpu_custom_call.1} parent=83 // pred_fallthru
          _
        %s714 = sand.u32 %s47, 1
        %s715 = scalar_lea.sflag [#allocation6], %s714
        %s716 = sand.u32 %s121, 1
        %s717 = smul.addr %s716, 32
        %s718 = scalar_lea.vmem [#allocation5], %s717
        // Predicated region
        $region89: #{tpu_custom_call.1} parent=83 // pred_check
          %p719 = pneg %p134
        $region90: #{tpu_custom_call.1} parent=83 // pred_check_branch
          %721 = sbr.rel (%p719) target = $region92
        $region91: #{tpu_custom_call.1} parent=83 // pred_region
          %722 = dma.done %s715, 512
        $region92: #{tpu_custom_call.1} parent=83 // pred_fallthru
          _
        %s723 = sand.u32 %s47, 1
        %s724 = scalar_lea.sflag [#allocation6], %s723
        %s725 = sand.u32 %s149, 1
        %s726 = smul.addr %s725, 2
        %s727 = scalar_lea.vmem [#allocation7], %s726
        // Predicated region
        $region93: #{tpu_custom_call.1} parent=83 // pred_check
          %p728 = pneg %p162
        $region94: #{tpu_custom_call.1} parent=83 // pred_check_branch
          %730 = sbr.rel (%p728) target = $region96
        $region95: #{tpu_custom_call.1} parent=83 // pred_region
          %731 = dma.done %s724, 32
        $region96: #{tpu_custom_call.1} parent=83 // pred_fallthru
          _
        // Predicated region
        $region97: #{tpu_custom_call.1} parent=83 // pred_check
          %p732 = pneg %p183
        $region98: #{tpu_custom_call.1} parent=83 // pred_check_branch
          %734 = sbr.rel (%p732) target = $region100
        $region99: #{tpu_custom_call.1} parent=83 // pred_region
          %735 = dma.done [#allocation9], 16384
        $region100: #{tpu_custom_call.1} parent=83 // pred_fallthru
          _
        // Predicated region
        $region101: #{tpu_custom_call.1} parent=83 // pred_check
          %p736 = pneg %p204
        $region102: #{tpu_custom_call.1} parent=83 // pred_check_branch
          %738 = sbr.rel (%p736) target = $region104
        $region103: #{tpu_custom_call.1} parent=83 // pred_region
          %739 = dma.done [#allocation9], 16384
        $region104: #{tpu_custom_call.1} parent=83 // pred_fallthru
          _
        // Predicated region
        $region105: #{tpu_custom_call.1} parent=83 // pred_check
          %p740 = pneg %p225
        $region106: #{tpu_custom_call.1} parent=83 // pred_check_branch
          %742 = sbr.rel (%p740) target = $region108
        $region107: #{tpu_custom_call.1} parent=83 // pred_region
          %743 = dma.done [#allocation12], 64
        $region108: #{tpu_custom_call.1} parent=83 // pred_fallthru
          _
        // Predicated region
        $region109: #{tpu_custom_call.1} parent=83 // pred_check
          %p744 = pneg %p246
        $region110: #{tpu_custom_call.1} parent=83 // pred_check_branch
          %746 = sbr.rel (%p744) target = $region112
        $region111: #{tpu_custom_call.1} parent=83 // pred_region
          %747 = dma.done [#allocation12], 64
        $region112: #{tpu_custom_call.1} parent=83 // pred_fallthru
          _
        // Predicated region
        $region113: #{tpu_custom_call.1} parent=83 // pred_check
          %p748 = pneg %p267
        $region114: #{tpu_custom_call.1} parent=83 // pred_check_branch
          %750 = sbr.rel (%p748) target = $region116
        $region115: #{tpu_custom_call.1} parent=83 // pred_region
          %751 = dma.done [#allocation15], 64
        $region116: #{tpu_custom_call.1} parent=83 // pred_fallthru
          _
        // Predicated region
        $region117: #{tpu_custom_call.1} parent=83 // pred_check
          %p752 = pneg %p288
        $region118: #{tpu_custom_call.1} parent=83 // pred_check_branch
          %754 = sbr.rel (%p752) target = $region120
        $region119: #{tpu_custom_call.1} parent=83 // pred_region
          %755 = dma.done [#allocation15], 64
        $region120: #{tpu_custom_call.1} parent=83 // pred_fallthru
          _
        // Predicated region
        $region121: #{tpu_custom_call.1} parent=83 // pred_check
          %p756 = pneg %p309
        $region122: #{tpu_custom_call.1} parent=83 // pred_check_branch
          %758 = sbr.rel (%p756) target = $region124
        $region123: #{tpu_custom_call.1} parent=83 // pred_region
          %759 = dma.done [#allocation18], 65536
        $region124: #{tpu_custom_call.1} parent=83 // pred_fallthru
          _
        // Predicated region
        $region125: #{tpu_custom_call.1} parent=83 // pred_check
          %p760 = pneg %p330
        $region126: #{tpu_custom_call.1} parent=83 // pred_check_branch
          %762 = sbr.rel (%p760) target = $region128
        $region127: #{tpu_custom_call.1} parent=83 // pred_region
          %763 = dma.done [#allocation18], 256
        $region128: #{tpu_custom_call.1} parent=83 // pred_fallthru
          _
        // Predicated region
        $region129: #{tpu_custom_call.1} parent=83 // pred_check
          %p764 = pneg %p351
        $region130: #{tpu_custom_call.1} parent=83 // pred_check_branch
          %766 = sbr.rel (%p764) target = $region132
        $region131: #{tpu_custom_call.1} parent=83 // pred_region
          %767 = dma.done [#allocation21], 65536
        $region132: #{tpu_custom_call.1} parent=83 // pred_fallthru
          _
        // Predicated region
        $region133: #{tpu_custom_call.1} parent=83 // pred_check
          %p768 = pneg %p372
        $region134: #{tpu_custom_call.1} parent=83 // pred_check_branch
          %770 = sbr.rel (%p768) target = $region136
        $region135: #{tpu_custom_call.1} parent=83 // pred_region
          %771 = dma.done [#allocation21], 64
        $region136: #{tpu_custom_call.1} parent=83 // pred_fallthru
          _
        // Predicated region
        $region137: #{tpu_custom_call.1} parent=83 // pred_check
          %p772 = pneg %p393
        $region138: #{tpu_custom_call.1} parent=83 // pred_check_branch
          %774 = sbr.rel (%p772) target = $region140
        $region139: #{tpu_custom_call.1} parent=83 // pred_region
          %775 = dma.done [#allocation24], 64
        $region140: #{tpu_custom_call.1} parent=83 // pred_fallthru
          _
        // Predicated region
        $region141: #{tpu_custom_call.1} parent=83 // pred_check
          %p776 = pneg %p414
        $region142: #{tpu_custom_call.1} parent=83 // pred_check_branch
          %778 = sbr.rel (%p776) target = $region144
        $region143: #{tpu_custom_call.1} parent=83 // pred_region
          %779 = dma.done [#allocation24], 64
        $region144: #{tpu_custom_call.1} parent=83 // pred_fallthru
          _
        %s780 = sand.u32 %s69, 1
        %s781 = scalar_lea.sflag [#allocation3], %s780
        %s782 = sand.u32 %s69, 1
        %s783 = smul.addr %s782, 32
        %s784 = scalar_lea.vmem [#allocation2], %s783
        %p785 = pneg %p82
        %p786 = pneg %p79
        %p787 = scmp.lt.s32.totalorder %s51, 1
        %s788 = scalar_select %p787, %s51, 1
        %s789 = smul.addr %s788, 64
        %s790 = smul.addr %s789, 4
        %s791 = scalar_lea.vmem %s1, %s790
        %p792 = pneg %p108
        %p793 = pneg %p105
        %s794 = sand.u32 %s47, 1
        %s795 = scalar_lea.sflag [#allocation6], %s794
        %s796 = sand.u32 %s121, 1
        %s797 = smul.addr %s796, 32
        %s798 = scalar_lea.vmem [#allocation5], %s797
        %p799 = pneg %p134
        %p800 = pneg %p131
        %s801 = sand.u32 %s47, 1
        %s802 = scalar_lea.sflag [#allocation6], %s801
        %s803 = sand.u32 %s149, 1
        %s804 = smul.addr %s803, 2
        %s805 = scalar_lea.vmem [#allocation7], %s804
        %p806 = pneg %p162
        %p807 = pneg %p159
        %p808 = pneg %p183
        %p809 = pneg %p180
        %p810 = pneg %p204
        %p811 = pneg %p201
        %p812 = pneg %p225
        %p813 = pneg %p222
        %p814 = pneg %p246
        %p815 = pneg %p243
        %p816 = pneg %p267
        %p817 = pneg %p264
        %p818 = pneg %p288
        %p819 = pneg %p285
        %p820 = pneg %p309
        %p821 = pneg %p306
        %p822 = pneg %p330
        %p823 = pneg %p327
        %p824 = pneg %p351
        %p825 = pneg %p348
        %p826 = pneg %p372
        %p827 = pneg %p369
        %p828 = pneg %p393
        %p829 = pneg %p390
        %p830 = pneg %p414
        %p831 = pneg %p411
        %p832 = pneg %p442
        %p833 = pneg %p439
        %s834 = sand.u32 %s429, 1
        %s835 = scalar_lea.sflag [#allocation4], %s834
        %s836 = sand.u32 %s429, 1
        %s837 = smul.addr %s836, 32
        %s838 = scalar_lea.vmem [#allocation26], %s837
        %p839 = pneg %p470
        %p840 = pneg %p467
        %s841 = sand.u32 %s457, 1
        %s842 = scalar_lea.sflag [#allocation28], %s841
        %s843 = sand.u32 %s457, 1
        %s844 = smul.addr %s843, 32
        %s845 = scalar_lea.vmem [#allocation27], %s844
        %p846 = scmp.lt.s32.totalorder %s51, 1
        %s847 = scalar_select %p846, %s51, 1
        %s848 = smul.addr %s847, 64
        %s849 = smul.addr %s848, 4
        %s850 = scalar_lea.vmem %s1, %s849
        %v852 = vld [vmem:[%s709] sm:$0xff]
        %v853 = vld [vmem:[%s709 + $0x8] sm:$0xff]
        %v854 = vld [vmem:[%s709 + $0x10] sm:$0xff]
        %v855 = vld [vmem:[%s709 + $0x18] sm:$0xff]
        %v856 = vpack.c.bf16 %v852, %v852
        %v857 = vpack.c.bf16 %v853, %v853
        %v858 = vpack.c.bf16 %v854, %v854
        %v859 = vpack.c.bf16 %v855, %v855
        %v860 = vld [vmem:[#allocation8] sm:$0xff]
        %v861 = vld [vmem:[#allocation8 + $0x8] sm:$0xff]
        %v862 = vld [vmem:[#allocation8 + $0x10] sm:$0xff]
        %v863 = vld [vmem:[#allocation8 + $0x18] sm:$0xff]
        %v864 = vld [vmem:[#allocation8 + $0x20] sm:$0xff]
        %v865 = vld [vmem:[#allocation8 + $0x28] sm:$0xff]
        %v866 = vld [vmem:[#allocation8 + $0x30] sm:$0xff]
        %v867 = vld [vmem:[#allocation8 + $0x38] sm:$0xff]
        %v868 = vld [vmem:[#allocation8 + $0x40] sm:$0xff]
        %v869 = vld [vmem:[#allocation8 + $0x48] sm:$0xff]
        %v870 = vld [vmem:[#allocation8 + $0x50] sm:$0xff]
        %v871 = vld [vmem:[#allocation8 + $0x58] sm:$0xff]
        %v872 = vld [vmem:[#allocation8 + $0x60] sm:$0xff]
        %v873 = vld [vmem:[#allocation8 + $0x68] sm:$0xff]
        %v874 = vld [vmem:[#allocation8 + $0x70] sm:$0xff]
        %v875 = vld [vmem:[#allocation8 + $0x78] sm:$0xff]
        %v876 = vld [vmem:[#allocation8 + $0x80] sm:$0xff]
        %v877 = vld [vmem:[#allocation8 + $0x88] sm:$0xff]
        %v878 = vld [vmem:[#allocation8 + $0x90] sm:$0xff]
        %v879 = vld [vmem:[#allocation8 + $0x98] sm:$0xff]
        %v880 = vld [vmem:[#allocation8 + $0xa0] sm:$0xff]
        %v881 = vld [vmem:[#allocation8 + $0xa8] sm:$0xff]
        %v882 = vld [vmem:[#allocation8 + $0xb0] sm:$0xff]
        %v883 = vld [vmem:[#allocation8 + $0xb8] sm:$0xff]
        %v884 = vld [vmem:[#allocation8 + $0xc0] sm:$0xff]
        %v885 = vld [vmem:[#allocation8 + $0xc8] sm:$0xff]
        %v886 = vld [vmem:[#allocation8 + $0xd0] sm:$0xff]
        %v887 = vld [vmem:[#allocation8 + $0xd8] sm:$0xff]
        %v888 = vld [vmem:[#allocation8 + $0xe0] sm:$0xff]
        %v889 = vld [vmem:[#allocation8 + $0xe8] sm:$0xff]
        %v890 = vld [vmem:[#allocation8 + $0xf0] sm:$0xff]
        %v891 = vld [vmem:[#allocation8 + $0xf8] sm:$0xff]
        %v892 = vld [vmem:[#allocation8 + $0x100] sm:$0xff]
        %v893 = vld [vmem:[#allocation8 + $0x108] sm:$0xff]
        %v894 = vld [vmem:[#allocation8 + $0x110] sm:$0xff]
        %v895 = vld [vmem:[#allocation8 + $0x118] sm:$0xff]
        %v896 = vld [vmem:[#allocation8 + $0x120] sm:$0xff]
        %v897 = vld [vmem:[#allocation8 + $0x128] sm:$0xff]
        %v898 = vld [vmem:[#allocation8 + $0x130] sm:$0xff]
        %v899 = vld [vmem:[#allocation8 + $0x138] sm:$0xff]
        %v900 = vld [vmem:[#allocation8 + $0x140] sm:$0xff]
        %v901 = vld [vmem:[#allocation8 + $0x148] sm:$0xff]
        %v902 = vld [vmem:[#allocation8 + $0x150] sm:$0xff]
        %v903 = vld [vmem:[#allocation8 + $0x158] sm:$0xff]
        %v904 = vld [vmem:[#allocation8 + $0x160] sm:$0xff]
        %v905 = vld [vmem:[#allocation8 + $0x168] sm:$0xff]
        %v906 = vld [vmem:[#allocation8 + $0x170] sm:$0xff]
        %v907 = vld [vmem:[#allocation8 + $0x178] sm:$0xff]
        %v908 = vld [vmem:[#allocation8 + $0x180] sm:$0xff]
        %v909 = vld [vmem:[#allocation8 + $0x188] sm:$0xff]
        %v910 = vld [vmem:[#allocation8 + $0x190] sm:$0xff]
        %v911 = vld [vmem:[#allocation8 + $0x198] sm:$0xff]
        %v912 = vld [vmem:[#allocation8 + $0x1a0] sm:$0xff]
        %v913 = vld [vmem:[#allocation8 + $0x1a8] sm:$0xff]
        %v914 = vld [vmem:[#allocation8 + $0x1b0] sm:$0xff]
        %v915 = vld [vmem:[#allocation8 + $0x1b8] sm:$0xff]
        %v916 = vld [vmem:[#allocation8 + $0x1c0] sm:$0xff]
        %v917 = vld [vmem:[#allocation8 + $0x1c8] sm:$0xff]
        %v918 = vld [vmem:[#allocation8 + $0x1d0] sm:$0xff]
        %v919 = vld [vmem:[#allocation8 + $0x1d8] sm:$0xff]
        %v920 = vld [vmem:[#allocation8 + $0x1e0] sm:$0xff]
        %v921 = vld [vmem:[#allocation8 + $0x1e8] sm:$0xff]
        %v922 = vld [vmem:[#allocation8 + $0x1f0] sm:$0xff]
        %v923 = vld [vmem:[#allocation8 + $0x1f8] sm:$0xff]
        %v924 = vld [vmem:[#allocation8 + $0x200] sm:$0xff]
        %v925 = vld [vmem:[#allocation8 + $0x208] sm:$0xff]
        %v926 = vld [vmem:[#allocation8 + $0x210] sm:$0xff]
        %v927 = vld [vmem:[#allocation8 + $0x218] sm:$0xff]
        %v928 = vld [vmem:[#allocation8 + $0x220] sm:$0xff]
        %v929 = vld [vmem:[#allocation8 + $0x228] sm:$0xff]
        %v930 = vld [vmem:[#allocation8 + $0x230] sm:$0xff]
        %v931 = vld [vmem:[#allocation8 + $0x238] sm:$0xff]
        %v932 = vld [vmem:[#allocation8 + $0x240] sm:$0xff]
        %v933 = vld [vmem:[#allocation8 + $0x248] sm:$0xff]
        %v934 = vld [vmem:[#allocation8 + $0x250] sm:$0xff]
        %v935 = vld [vmem:[#allocation8 + $0x258] sm:$0xff]
        %v936 = vld [vmem:[#allocation8 + $0x260] sm:$0xff]
        %v937 = vld [vmem:[#allocation8 + $0x268] sm:$0xff]
        %v938 = vld [vmem:[#allocation8 + $0x270] sm:$0xff]
        %v939 = vld [vmem:[#allocation8 + $0x278] sm:$0xff]
        %v940 = vld [vmem:[#allocation8 + $0x280] sm:$0xff]
        %v941 = vld [vmem:[#allocation8 + $0x288] sm:$0xff]
        %v942 = vld [vmem:[#allocation8 + $0x290] sm:$0xff]
        %v943 = vld [vmem:[#allocation8 + $0x298] sm:$0xff]
        %v944 = vld [vmem:[#allocation8 + $0x2a0] sm:$0xff]
        %v945 = vld [vmem:[#allocation8 + $0x2a8] sm:$0xff]
        %v946 = vld [vmem:[#allocation8 + $0x2b0] sm:$0xff]
        %v947 = vld [vmem:[#allocation8 + $0x2b8] sm:$0xff]
        %v948 = vld [vmem:[#allocation8 + $0x2c0] sm:$0xff]
        %v949 = vld [vmem:[#allocation8 + $0x2c8] sm:$0xff]
        %v950 = vld [vmem:[#allocation8 + $0x2d0] sm:$0xff]
        %v951 = vld [vmem:[#allocation8 + $0x2d8] sm:$0xff]
        %v952 = vld [vmem:[#allocation8 + $0x2e0] sm:$0xff]
        %v953 = vld [vmem:[#allocation8 + $0x2e8] sm:$0xff]
        %v954 = vld [vmem:[#allocation8 + $0x2f0] sm:$0xff]
        %v955 = vld [vmem:[#allocation8 + $0x2f8] sm:$0xff]
        %v956 = vld [vmem:[#allocation8 + $0x300] sm:$0xff]
        %v957 = vld [vmem:[#allocation8 + $0x308] sm:$0xff]
        %v958 = vld [vmem:[#allocation8 + $0x310] sm:$0xff]
        %v959 = vld [vmem:[#allocation8 + $0x318] sm:$0xff]
        %v960 = vld [vmem:[#allocation8 + $0x320] sm:$0xff]
        %v961 = vld [vmem:[#allocation8 + $0x328] sm:$0xff]
        %v962 = vld [vmem:[#allocation8 + $0x330] sm:$0xff]
        %v963 = vld [vmem:[#allocation8 + $0x338] sm:$0xff]
        %v964 = vld [vmem:[#allocation8 + $0x340] sm:$0xff]
        %v965 = vld [vmem:[#allocation8 + $0x348] sm:$0xff]
        %v966 = vld [vmem:[#allocation8 + $0x350] sm:$0xff]
        %v967 = vld [vmem:[#allocation8 + $0x358] sm:$0xff]
        %v968 = vld [vmem:[#allocation8 + $0x360] sm:$0xff]
        %v969 = vld [vmem:[#allocation8 + $0x368] sm:$0xff]
        %v970 = vld [vmem:[#allocation8 + $0x370] sm:$0xff]
        %v971 = vld [vmem:[#allocation8 + $0x378] sm:$0xff]
        %v972 = vld [vmem:[#allocation8 + $0x380] sm:$0xff]
        %v973 = vld [vmem:[#allocation8 + $0x388] sm:$0xff]
        %v974 = vld [vmem:[#allocation8 + $0x390] sm:$0xff]
        %v975 = vld [vmem:[#allocation8 + $0x398] sm:$0xff]
        %v976 = vld [vmem:[#allocation8 + $0x3a0] sm:$0xff]
        %v977 = vld [vmem:[#allocation8 + $0x3a8] sm:$0xff]
        %v978 = vld [vmem:[#allocation8 + $0x3b0] sm:$0xff]
        %v979 = vld [vmem:[#allocation8 + $0x3b8] sm:$0xff]
        %v980 = vld [vmem:[#allocation8 + $0x3c0] sm:$0xff]
        %v981 = vld [vmem:[#allocation8 + $0x3c8] sm:$0xff]
        %v982 = vld [vmem:[#allocation8 + $0x3d0] sm:$0xff]
        %v983 = vld [vmem:[#allocation8 + $0x3d8] sm:$0xff]
        %v984 = vld [vmem:[#allocation8 + $0x3e0] sm:$0xff]
        %v985 = vld [vmem:[#allocation8 + $0x3e8] sm:$0xff]
        %v986 = vld [vmem:[#allocation8 + $0x3f0] sm:$0xff]
        %v987 = vld [vmem:[#allocation8 + $0x3f8] sm:$0xff]
        %v988 = vld [vmem:[#allocation11] sm:$0xf]
        %v990 = vlaneseq
        %v991 = vshrl.u32 %v990, 7
        %v992 = vsub.s32 0, %v991
        %v993 = vrot.slane %v988, %v992
        %v994 = vlaneseq
        %v995 = vshrl.u32 %v994, 7
        %v996 = vsub.s32 1, %v995
        %v997 = vrot.slane %v988, %v996
        %v998 = vlaneseq
        %v999 = vshrl.u32 %v998, 7
        %v1000 = vsub.s32 2, %v999
        %v1001 = vrot.slane %v988, %v1000
        %v1002 = vlaneseq
        %v1003 = vshrl.u32 %v1002, 7
        %v1004 = vsub.s32 3, %v1003
        %v1005 = vrot.slane %v988, %v1004
        %v1138 = vunpack.c.l.b16 %v860
        %v1139 = vunpack.c.h.b16 %v860
        %v1140 = vunpack.c.l.b16 %v861
        %v1141 = vunpack.c.h.b16 %v861
        %v1142 = vunpack.c.l.b16 %v862
        %v1143 = vunpack.c.h.b16 %v862
        %v1144 = vunpack.c.l.b16 %v863
        %v1145 = vunpack.c.h.b16 %v863
        %v1146 = vunpack.c.l.b16 %v864
        %v1147 = vunpack.c.h.b16 %v864
        %v1148 = vunpack.c.l.b16 %v865
        %v1149 = vunpack.c.h.b16 %v865
        %v1150 = vunpack.c.l.b16 %v866
        %v1151 = vunpack.c.h.b16 %v866
        %v1152 = vunpack.c.l.b16 %v867
        %v1153 = vunpack.c.h.b16 %v867
        %v1154 = vunpack.c.l.b16 %v868
        %v1155 = vunpack.c.h.b16 %v868
        %v1156 = vunpack.c.l.b16 %v869
        %v1157 = vunpack.c.h.b16 %v869
        %v1158 = vunpack.c.l.b16 %v870
        %v1159 = vunpack.c.h.b16 %v870
        %v1160 = vunpack.c.l.b16 %v871
        %v1161 = vunpack.c.h.b16 %v871
        %v1162 = vunpack.c.l.b16 %v872
        %v1163 = vunpack.c.h.b16 %v872
        %v1164 = vunpack.c.l.b16 %v873
        %v1165 = vunpack.c.h.b16 %v873
        %v1166 = vunpack.c.l.b16 %v874
        %v1167 = vunpack.c.h.b16 %v874
        %v1168 = vunpack.c.l.b16 %v875
        %v1169 = vunpack.c.h.b16 %v875
        %v1170 = vunpack.c.l.b16 %v876
        %v1171 = vunpack.c.h.b16 %v876
        %v1172 = vunpack.c.l.b16 %v877
        %v1173 = vunpack.c.h.b16 %v877
        %v1174 = vunpack.c.l.b16 %v878
        %v1175 = vunpack.c.h.b16 %v878
        %v1176 = vunpack.c.l.b16 %v879
        %v1177 = vunpack.c.h.b16 %v879
        %v1178 = vunpack.c.l.b16 %v880
        %v1179 = vunpack.c.h.b16 %v880
        %v1180 = vunpack.c.l.b16 %v881
        %v1181 = vunpack.c.h.b16 %v881
        %v1182 = vunpack.c.l.b16 %v882
        %v1183 = vunpack.c.h.b16 %v882
        %v1184 = vunpack.c.l.b16 %v883
        %v1185 = vunpack.c.h.b16 %v883
        %v1186 = vunpack.c.l.b16 %v884
        %v1187 = vunpack.c.h.b16 %v884
        %v1188 = vunpack.c.l.b16 %v885
        %v1189 = vunpack.c.h.b16 %v885
        %v1190 = vunpack.c.l.b16 %v886
        %v1191 = vunpack.c.h.b16 %v886
        %v1192 = vunpack.c.l.b16 %v887
        %v1193 = vunpack.c.h.b16 %v887
        %v1194 = vunpack.c.l.b16 %v888
        %v1195 = vunpack.c.h.b16 %v888
        %v1196 = vunpack.c.l.b16 %v889
        %v1197 = vunpack.c.h.b16 %v889
        %v1198 = vunpack.c.l.b16 %v890
        %v1199 = vunpack.c.h.b16 %v890
        %v1200 = vunpack.c.l.b16 %v891
        %v1201 = vunpack.c.h.b16 %v891
        %v1202 = vunpack.c.l.b16 %v892
        %v1203 = vunpack.c.h.b16 %v892
        %v1204 = vunpack.c.l.b16 %v893
        %v1205 = vunpack.c.h.b16 %v893
        %v1206 = vunpack.c.l.b16 %v894
        %v1207 = vunpack.c.h.b16 %v894
        %v1208 = vunpack.c.l.b16 %v895
        %v1209 = vunpack.c.h.b16 %v895
        %v1210 = vunpack.c.l.b16 %v896
        %v1211 = vunpack.c.h.b16 %v896
        %v1212 = vunpack.c.l.b16 %v897
        %v1213 = vunpack.c.h.b16 %v897
        %v1214 = vunpack.c.l.b16 %v898
        %v1215 = vunpack.c.h.b16 %v898
        %v1216 = vunpack.c.l.b16 %v899
        %v1217 = vunpack.c.h.b16 %v899
        %v1218 = vunpack.c.l.b16 %v900
        %v1219 = vunpack.c.h.b16 %v900
        %v1220 = vunpack.c.l.b16 %v901
        %v1221 = vunpack.c.h.b16 %v901
        %v1222 = vunpack.c.l.b16 %v902
        %v1223 = vunpack.c.h.b16 %v902
        %v1224 = vunpack.c.l.b16 %v903
        %v1225 = vunpack.c.h.b16 %v903
        %v1226 = vunpack.c.l.b16 %v904
        %v1227 = vunpack.c.h.b16 %v904
        %v1228 = vunpack.c.l.b16 %v905
        %v1229 = vunpack.c.h.b16 %v905
        %v1230 = vunpack.c.l.b16 %v906
        %v1231 = vunpack.c.h.b16 %v906
        %v1232 = vunpack.c.l.b16 %v907
        %v1233 = vunpack.c.h.b16 %v907
        %v1234 = vunpack.c.l.b16 %v908
        %v1235 = vunpack.c.h.b16 %v908
        %v1236 = vunpack.c.l.b16 %v909
        %v1237 = vunpack.c.h.b16 %v909
        %v1238 = vunpack.c.l.b16 %v910
        %v1239 = vunpack.c.h.b16 %v910
        %v1240 = vunpack.c.l.b16 %v911
        %v1241 = vunpack.c.h.b16 %v911
        %v1242 = vunpack.c.l.b16 %v912
        %v1243 = vunpack.c.h.b16 %v912
        %v1244 = vunpack.c.l.b16 %v913
        %v1245 = vunpack.c.h.b16 %v913
        %v1246 = vunpack.c.l.b16 %v914
        %v1247 = vunpack.c.h.b16 %v914
        %v1248 = vunpack.c.l.b16 %v915
        %v1249 = vunpack.c.h.b16 %v915
        %v1250 = vunpack.c.l.b16 %v916
        %v1251 = vunpack.c.h.b16 %v916
        %v1252 = vunpack.c.l.b16 %v917
        %v1253 = vunpack.c.h.b16 %v917
        %v1254 = vunpack.c.l.b16 %v918
        %v1255 = vunpack.c.h.b16 %v918
        %v1256 = vunpack.c.l.b16 %v919
        %v1257 = vunpack.c.h.b16 %v919
        %v1258 = vunpack.c.l.b16 %v920
        %v1259 = vunpack.c.h.b16 %v920
        %v1260 = vunpack.c.l.b16 %v921
        %v1261 = vunpack.c.h.b16 %v921
        %v1262 = vunpack.c.l.b16 %v922
        %v1263 = vunpack.c.h.b16 %v922
        %v1264 = vunpack.c.l.b16 %v923
        %v1265 = vunpack.c.h.b16 %v923
        %v1266 = vunpack.c.l.b16 %v924
        %v1267 = vunpack.c.h.b16 %v924
        %v1268 = vunpack.c.l.b16 %v925
        %v1269 = vunpack.c.h.b16 %v925
        %v1270 = vunpack.c.l.b16 %v926
        %v1271 = vunpack.c.h.b16 %v926
        %v1272 = vunpack.c.l.b16 %v927
        %v1273 = vunpack.c.h.b16 %v927
        %v1274 = vunpack.c.l.b16 %v928
        %v1275 = vunpack.c.h.b16 %v928
        %v1276 = vunpack.c.l.b16 %v929
        %v1277 = vunpack.c.h.b16 %v929
        %v1278 = vunpack.c.l.b16 %v930
        %v1279 = vunpack.c.h.b16 %v930
        %v1280 = vunpack.c.l.b16 %v931
        %v1281 = vunpack.c.h.b16 %v931
        %v1282 = vunpack.c.l.b16 %v932
        %v1283 = vunpack.c.h.b16 %v932
        %v1284 = vunpack.c.l.b16 %v933
        %v1285 = vunpack.c.h.b16 %v933
        %v1286 = vunpack.c.l.b16 %v934
        %v1287 = vunpack.c.h.b16 %v934
        %v1288 = vunpack.c.l.b16 %v935
        %v1289 = vunpack.c.h.b16 %v935
        %v1290 = vunpack.c.l.b16 %v936
        %v1291 = vunpack.c.h.b16 %v936
        %v1292 = vunpack.c.l.b16 %v937
        %v1293 = vunpack.c.h.b16 %v937
        %v1294 = vunpack.c.l.b16 %v938
        %v1295 = vunpack.c.h.b16 %v938
        %v1296 = vunpack.c.l.b16 %v939
        %v1297 = vunpack.c.h.b16 %v939
        %v1298 = vunpack.c.l.b16 %v940
        %v1299 = vunpack.c.h.b16 %v940
        %v1300 = vunpack.c.l.b16 %v941
        %v1301 = vunpack.c.h.b16 %v941
        %v1302 = vunpack.c.l.b16 %v942
        %v1303 = vunpack.c.h.b16 %v942
        %v1304 = vunpack.c.l.b16 %v943
        %v1305 = vunpack.c.h.b16 %v943
        %v1306 = vunpack.c.l.b16 %v944
        %v1307 = vunpack.c.h.b16 %v944
        %v1308 = vunpack.c.l.b16 %v945
        %v1309 = vunpack.c.h.b16 %v945
        %v1310 = vunpack.c.l.b16 %v946
        %v1311 = vunpack.c.h.b16 %v946
        %v1312 = vunpack.c.l.b16 %v947
        %v1313 = vunpack.c.h.b16 %v947
        %v1314 = vunpack.c.l.b16 %v948
        %v1315 = vunpack.c.h.b16 %v948
        %v1316 = vunpack.c.l.b16 %v949
        %v1317 = vunpack.c.h.b16 %v949
        %v1318 = vunpack.c.l.b16 %v950
        %v1319 = vunpack.c.h.b16 %v950
        %v1320 = vunpack.c.l.b16 %v951
        %v1321 = vunpack.c.h.b16 %v951
        %v1322 = vunpack.c.l.b16 %v952
        %v1323 = vunpack.c.h.b16 %v952
        %v1324 = vunpack.c.l.b16 %v953
        %v1325 = vunpack.c.h.b16 %v953
        %v1326 = vunpack.c.l.b16 %v954
        %v1327 = vunpack.c.h.b16 %v954
        %v1328 = vunpack.c.l.b16 %v955
        %v1329 = vunpack.c.h.b16 %v955
        %v1330 = vunpack.c.l.b16 %v956
        %v1331 = vunpack.c.h.b16 %v956
        %v1332 = vunpack.c.l.b16 %v957
        %v1333 = vunpack.c.h.b16 %v957
        %v1334 = vunpack.c.l.b16 %v958
        %v1335 = vunpack.c.h.b16 %v958
        %v1336 = vunpack.c.l.b16 %v959
        %v1337 = vunpack.c.h.b16 %v959
        %v1338 = vunpack.c.l.b16 %v960
        %v1339 = vunpack.c.h.b16 %v960
        %v1340 = vunpack.c.l.b16 %v961
        %v1341 = vunpack.c.h.b16 %v961
        %v1342 = vunpack.c.l.b16 %v962
        %v1343 = vunpack.c.h.b16 %v962
        %v1344 = vunpack.c.l.b16 %v963
        %v1345 = vunpack.c.h.b16 %v963
        %v1346 = vunpack.c.l.b16 %v964
        %v1347 = vunpack.c.h.b16 %v964
        %v1348 = vunpack.c.l.b16 %v965
        %v1349 = vunpack.c.h.b16 %v965
        %v1350 = vunpack.c.l.b16 %v966
        %v1351 = vunpack.c.h.b16 %v966
        %v1352 = vunpack.c.l.b16 %v967
        %v1353 = vunpack.c.h.b16 %v967
        %v1354 = vunpack.c.l.b16 %v968
        %v1355 = vunpack.c.h.b16 %v968
        %v1356 = vunpack.c.l.b16 %v969
        %v1357 = vunpack.c.h.b16 %v969
        %v1358 = vunpack.c.l.b16 %v970
        %v1359 = vunpack.c.h.b16 %v970
        %v1360 = vunpack.c.l.b16 %v971
        %v1361 = vunpack.c.h.b16 %v971
        %v1362 = vunpack.c.l.b16 %v972
        %v1363 = vunpack.c.h.b16 %v972
        %v1364 = vunpack.c.l.b16 %v973
        %v1365 = vunpack.c.h.b16 %v973
        %v1366 = vunpack.c.l.b16 %v974
        %v1367 = vunpack.c.h.b16 %v974
        %v1368 = vunpack.c.l.b16 %v975
        %v1369 = vunpack.c.h.b16 %v975
        %v1370 = vunpack.c.l.b16 %v976
        %v1371 = vunpack.c.h.b16 %v976
        %v1372 = vunpack.c.l.b16 %v977
        %v1373 = vunpack.c.h.b16 %v977
        %v1374 = vunpack.c.l.b16 %v978
        %v1375 = vunpack.c.h.b16 %v978
        %v1376 = vunpack.c.l.b16 %v979
        %v1377 = vunpack.c.h.b16 %v979
        %v1378 = vunpack.c.l.b16 %v980
        %v1379 = vunpack.c.h.b16 %v980
        %v1380 = vunpack.c.l.b16 %v981
        %v1381 = vunpack.c.h.b16 %v981
        %v1382 = vunpack.c.l.b16 %v982
        %v1383 = vunpack.c.h.b16 %v982
        %v1384 = vunpack.c.l.b16 %v983
        %v1385 = vunpack.c.h.b16 %v983
        %v1386 = vunpack.c.l.b16 %v984
        %v1387 = vunpack.c.h.b16 %v984
        %v1388 = vunpack.c.l.b16 %v985
        %v1389 = vunpack.c.h.b16 %v985
        %v1390 = vunpack.c.l.b16 %v986
        %v1391 = vunpack.c.h.b16 %v986
        %v1392 = vunpack.c.l.b16 %v987
        %v1393 = vunpack.c.h.b16 %v987
        %v1394 = vpack.c.b16 %v1142, %v1138
        %v1395 = vpack.c.b16 %v1143, %v1139
        %v1396 = vpack.c.b16 %v1144, %v1140
        %v1397 = vpack.c.b16 %v1145, %v1141
        %v1398 = vpack.c.b16 %v1150, %v1146
        %v1399 = vpack.c.b16 %v1151, %v1147
        %v1400 = vpack.c.b16 %v1152, %v1148
        %v1401 = vpack.c.b16 %v1153, %v1149
        %v1402 = vpack.c.b16 %v1158, %v1154
        %v1403 = vpack.c.b16 %v1159, %v1155
        %v1404 = vpack.c.b16 %v1160, %v1156
        %v1405 = vpack.c.b16 %v1161, %v1157
        %v1406 = vpack.c.b16 %v1166, %v1162
        %v1407 = vpack.c.b16 %v1167, %v1163
        %v1408 = vpack.c.b16 %v1168, %v1164
        %v1409 = vpack.c.b16 %v1169, %v1165
        %v1410 = vpack.c.b16 %v1174, %v1170
        %v1411 = vpack.c.b16 %v1175, %v1171
        %v1412 = vpack.c.b16 %v1176, %v1172
        %v1413 = vpack.c.b16 %v1177, %v1173
        %v1414 = vpack.c.b16 %v1182, %v1178
        %v1415 = vpack.c.b16 %v1183, %v1179
        %v1416 = vpack.c.b16 %v1184, %v1180
        %v1417 = vpack.c.b16 %v1185, %v1181
        %v1418 = vpack.c.b16 %v1190, %v1186
        %v1419 = vpack.c.b16 %v1191, %v1187
        %v1420 = vpack.c.b16 %v1192, %v1188
        %v1421 = vpack.c.b16 %v1193, %v1189
        %v1422 = vpack.c.b16 %v1198, %v1194
        %v1423 = vpack.c.b16 %v1199, %v1195
        %v1424 = vpack.c.b16 %v1200, %v1196
        %v1425 = vpack.c.b16 %v1201, %v1197
        %v1426 = vpack.c.b16 %v1206, %v1202
        %v1427 = vpack.c.b16 %v1207, %v1203
        %v1428 = vpack.c.b16 %v1208, %v1204
        %v1429 = vpack.c.b16 %v1209, %v1205
        %v1430 = vpack.c.b16 %v1214, %v1210
        %v1431 = vpack.c.b16 %v1215, %v1211
        %v1432 = vpack.c.b16 %v1216, %v1212
        %v1433 = vpack.c.b16 %v1217, %v1213
        %v1434 = vpack.c.b16 %v1222, %v1218
        %v1435 = vpack.c.b16 %v1223, %v1219
        %v1436 = vpack.c.b16 %v1224, %v1220
        %v1437 = vpack.c.b16 %v1225, %v1221
        %v1438 = vpack.c.b16 %v1230, %v1226
        %v1439 = vpack.c.b16 %v1231, %v1227
        %v1440 = vpack.c.b16 %v1232, %v1228
        %v1441 = vpack.c.b16 %v1233, %v1229
        %v1442 = vpack.c.b16 %v1238, %v1234
        %v1443 = vpack.c.b16 %v1239, %v1235
        %v1444 = vpack.c.b16 %v1240, %v1236
        %v1445 = vpack.c.b16 %v1241, %v1237
        %v1446 = vpack.c.b16 %v1246, %v1242
        %v1447 = vpack.c.b16 %v1247, %v1243
        %v1448 = vpack.c.b16 %v1248, %v1244
        %v1449 = vpack.c.b16 %v1249, %v1245
        %v1450 = vpack.c.b16 %v1254, %v1250
        %v1451 = vpack.c.b16 %v1255, %v1251
        %v1452 = vpack.c.b16 %v1256, %v1252
        %v1453 = vpack.c.b16 %v1257, %v1253
        %v1454 = vpack.c.b16 %v1262, %v1258
        %v1455 = vpack.c.b16 %v1263, %v1259
        %v1456 = vpack.c.b16 %v1264, %v1260
        %v1457 = vpack.c.b16 %v1265, %v1261
        %v1458 = vpack.c.b16 %v1270, %v1266
        %v1459 = vpack.c.b16 %v1271, %v1267
        %v1460 = vpack.c.b16 %v1272, %v1268
        %v1461 = vpack.c.b16 %v1273, %v1269
        %v1462 = vpack.c.b16 %v1278, %v1274
        %v1463 = vpack.c.b16 %v1279, %v1275
        %v1464 = vpack.c.b16 %v1280, %v1276
        %v1465 = vpack.c.b16 %v1281, %v1277
        %v1466 = vpack.c.b16 %v1286, %v1282
        %v1467 = vpack.c.b16 %v1287, %v1283
        %v1468 = vpack.c.b16 %v1288, %v1284
        %v1469 = vpack.c.b16 %v1289, %v1285
        %v1470 = vpack.c.b16 %v1294, %v1290
        %v1471 = vpack.c.b16 %v1295, %v1291
        %v1472 = vpack.c.b16 %v1296, %v1292
        %v1473 = vpack.c.b16 %v1297, %v1293
        %v1474 = vpack.c.b16 %v1302, %v1298
        %v1475 = vpack.c.b16 %v1303, %v1299
        %v1476 = vpack.c.b16 %v1304, %v1300
        %v1477 = vpack.c.b16 %v1305, %v1301
        %v1478 = vpack.c.b16 %v1310, %v1306
        %v1479 = vpack.c.b16 %v1311, %v1307
        %v1480 = vpack.c.b16 %v1312, %v1308
        %v1481 = vpack.c.b16 %v1313, %v1309
        %v1482 = vpack.c.b16 %v1318, %v1314
        %v1483 = vpack.c.b16 %v1319, %v1315
        %v1484 = vpack.c.b16 %v1320, %v1316
        %v1485 = vpack.c.b16 %v1321, %v1317
        %v1486 = vpack.c.b16 %v1326, %v1322
        %v1487 = vpack.c.b16 %v1327, %v1323
        %v1488 = vpack.c.b16 %v1328, %v1324
        %v1489 = vpack.c.b16 %v1329, %v1325
        %v1490 = vpack.c.b16 %v1334, %v1330
        %v1491 = vpack.c.b16 %v1335, %v1331
        %v1492 = vpack.c.b16 %v1336, %v1332
        %v1493 = vpack.c.b16 %v1337, %v1333
        %v1494 = vpack.c.b16 %v1342, %v1338
        %v1495 = vpack.c.b16 %v1343, %v1339
        %v1496 = vpack.c.b16 %v1344, %v1340
        %v1497 = vpack.c.b16 %v1345, %v1341
        %v1498 = vpack.c.b16 %v1350, %v1346
        %v1499 = vpack.c.b16 %v1351, %v1347
        %v1500 = vpack.c.b16 %v1352, %v1348
        %v1501 = vpack.c.b16 %v1353, %v1349
        %v1502 = vpack.c.b16 %v1358, %v1354
        %v1503 = vpack.c.b16 %v1359, %v1355
        %v1504 = vpack.c.b16 %v1360, %v1356
        %v1505 = vpack.c.b16 %v1361, %v1357
        %v1506 = vpack.c.b16 %v1366, %v1362
        %v1507 = vpack.c.b16 %v1367, %v1363
        %v1508 = vpack.c.b16 %v1368, %v1364
        %v1509 = vpack.c.b16 %v1369, %v1365
        %v1510 = vpack.c.b16 %v1374, %v1370
        %v1511 = vpack.c.b16 %v1375, %v1371
        %v1512 = vpack.c.b16 %v1376, %v1372
        %v1513 = vpack.c.b16 %v1377, %v1373
        %v1514 = vpack.c.b16 %v1382, %v1378
        %v1515 = vpack.c.b16 %v1383, %v1379
        %v1516 = vpack.c.b16 %v1384, %v1380
        %v1517 = vpack.c.b16 %v1385, %v1381
        %v1518 = vpack.c.b16 %v1390, %v1386
        %v1519 = vpack.c.b16 %v1391, %v1387
        %v1520 = vpack.c.b16 %v1392, %v1388
        %v1521 = vpack.c.b16 %v1393, %v1389
        %1650 = vmatprep.subr.bf16.mxu0 %v1395
        %1651 = vmatpush1.bf16.msra.mxu0 %v1394
        %1652 = vmatprep.subr.bf16.mxu0 %v1399
        %1653 = vmatpush1.bf16.msra.mxu0 %v1398
        %1654 = vmatprep.subr.bf16.mxu0 %v1403
        %1655 = vmatpush1.bf16.msra.mxu0 %v1402
        %1656 = vmatprep.subr.bf16.mxu0 %v1407
        %1657 = vmatpush1.bf16.msra.mxu0 %v1406
        %1658 = vmatprep.subr.bf16.mxu0 %v1411
        %1659 = vmatpush1.bf16.msra.mxu0 %v1410
        %1660 = vmatprep.subr.bf16.mxu0 %v1415
        %1661 = vmatpush1.bf16.msra.mxu0 %v1414
        %1662 = vmatprep.subr.bf16.mxu0 %v1419
        %1663 = vmatpush1.bf16.msra.mxu0 %v1418
        %1664 = vmatprep.subr.bf16.mxu0 %v1423
        %1665 = vmatpush1.bf16.msra.mxu0 %v1422
        %1666 = vmatprep.subr.bf16.mxu0 %v1427
        %1667 = vmatpush1.bf16.msra.mxu0 %v1426
        %1668 = vmatprep.subr.bf16.mxu0 %v1431
        %1669 = vmatpush1.bf16.msra.mxu0 %v1430
        %1670 = vmatprep.subr.bf16.mxu0 %v1435
        %1671 = vmatpush1.bf16.msra.mxu0 %v1434
        %1672 = vmatprep.subr.bf16.mxu0 %v1439
        %1673 = vmatpush1.bf16.msra.mxu0 %v1438
        %1674 = vmatprep.subr.bf16.mxu0 %v1443
        %1675 = vmatpush1.bf16.msra.mxu0 %v1442
        %1676 = vmatprep.subr.bf16.mxu0 %v1447
        %1677 = vmatpush1.bf16.msra.mxu0 %v1446
        %1678 = vmatprep.subr.bf16.mxu0 %v1451
        %1679 = vmatpush1.bf16.msra.mxu0 %v1450
        %1680 = vmatprep.subr.bf16.mxu0 %v1455
        %1681 = vmatpush1.bf16.msra.mxu0 %v1454
        %1682 = vmatprep.mubr.bf16.mxu0 %v857
        %1683 = vmatmul.mubr.bf16.gmra.mrb[0].mxu0 %v856
        %v1684 = vpop.f32.mrb[0].mxu0
        %v1685 = vadd.f32 %v993, %v1684
        %v1686 = vpop.f32.mrb[0].mxu0
        %v1687 = vadd.f32 %v997, %v1686
        %v1688 = vpop.f32.mrb[0].mxu0
        %v1689 = vpop.f32.mrb[0].mxu0
        %1690 = vdwg.mxu0
        %1691 = vmatprep.subr.bf16.mxu0 %v1459
        %1692 = vmatpush1.bf16.msra.mxu0 %v1458
        %1693 = vmatprep.subr.bf16.mxu0 %v1463
        %1694 = vmatpush1.bf16.msra.mxu0 %v1462
        %1695 = vmatprep.subr.bf16.mxu0 %v1467
        %1696 = vmatpush1.bf16.msra.mxu0 %v1466
        %1697 = vmatprep.subr.bf16.mxu0 %v1471
        %1698 = vmatpush1.bf16.msra.mxu0 %v1470
        %1699 = vmatprep.subr.bf16.mxu0 %v1475
        %1700 = vmatpush1.bf16.msra.mxu0 %v1474
        %1701 = vmatprep.subr.bf16.mxu0 %v1479
        %1702 = vmatpush1.bf16.msra.mxu0 %v1478
        %1703 = vmatprep.subr.bf16.mxu0 %v1483
        %1704 = vmatpush1.bf16.msra.mxu0 %v1482
        %1705 = vmatprep.subr.bf16.mxu0 %v1487
        %1706 = vmatpush1.bf16.msra.mxu0 %v1486
        %1707 = vmatprep.subr.bf16.mxu0 %v1491
        %1708 = vmatpush1.bf16.msra.mxu0 %v1490
        %1709 = vmatprep.subr.bf16.mxu0 %v1495
        %1710 = vmatpush1.bf16.msra.mxu0 %v1494
        %1711 = vmatprep.subr.bf16.mxu0 %v1499
        %1712 = vmatpush1.bf16.msra.mxu0 %v1498
        %1713 = vmatprep.subr.bf16.mxu0 %v1503
        %1714 = vmatpush1.bf16.msra.mxu0 %v1502
        %1715 = vmatprep.subr.bf16.mxu0 %v1507
        %1716 = vmatpush1.bf16.msra.mxu0 %v1506
        %1717 = vmatprep.subr.bf16.mxu0 %v1511
        %1718 = vmatpush1.bf16.msra.mxu0 %v1510
        %1719 = vmatprep.subr.bf16.mxu0 %v1515
        %1720 = vmatpush1.bf16.msra.mxu0 %v1514
        %1721 = vmatprep.subr.bf16.mxu0 %v1519
        %1722 = vmatpush1.bf16.msra.mxu0 %v1518
        %1723 = vmatprep.mubr.bf16.mxu0 %v859
        %1724 = vmatmul.mubr.bf16.gmra.mrb[0].mxu0 %v858
        %v1725 = vpop.f32.mrb[0].mxu0
        %v1726 = vadd.f32 %v1685, %v1725
        %v1727 = vpop.f32.mrb[0].mxu0
        %v1728 = vadd.f32 %v1687, %v1727
        %v1729 = vpop.f32.mrb[0].mxu0
        %v1730 = vpop.f32.mrb[0].mxu0
        %1731 = vdwg.mxu0
        %1732 = vmatprep.subr.bf16.mxu0 %v1397
        %1733 = vmatpush1.bf16.msra.mxu0 %v1396
        %1734 = vmatprep.subr.bf16.mxu0 %v1401
        %1735 = vmatpush1.bf16.msra.mxu0 %v1400
        %1736 = vmatprep.subr.bf16.mxu0 %v1405
        %1737 = vmatpush1.bf16.msra.mxu0 %v1404
        %1738 = vmatprep.subr.bf16.mxu0 %v1409
        %1739 = vmatpush1.bf16.msra.mxu0 %v1408
        %1740 = vmatprep.subr.bf16.mxu0 %v1413
        %1741 = vmatpush1.bf16.msra.mxu0 %v1412
        %1742 = vmatprep.subr.bf16.mxu0 %v1417
        %1743 = vmatpush1.bf16.msra.mxu0 %v1416
        %1744 = vmatprep.subr.bf16.mxu0 %v1421
        %1745 = vmatpush1.bf16.msra.mxu0 %v1420
        %1746 = vmatprep.subr.bf16.mxu0 %v1425
        %1747 = vmatpush1.bf16.msra.mxu0 %v1424
        %1748 = vmatprep.subr.bf16.mxu0 %v1429
        %1749 = vmatpush1.bf16.msra.mxu0 %v1428
        %1750 = vmatprep.subr.bf16.mxu0 %v1433
        %1751 = vmatpush1.bf16.msra.mxu0 %v1432
        %1752 = vmatprep.subr.bf16.mxu0 %v1437
        %1753 = vmatpush1.bf16.msra.mxu0 %v1436
        %1754 = vmatprep.subr.bf16.mxu0 %v1441
        %1755 = vmatpush1.bf16.msra.mxu0 %v1440
        %1756 = vmatprep.subr.bf16.mxu0 %v1445
        %1757 = vmatpush1.bf16.msra.mxu0 %v1444
        %1758 = vmatprep.subr.bf16.mxu0 %v1449
        %1759 = vmatpush1.bf16.msra.mxu0 %v1448
        %1760 = vmatprep.subr.bf16.mxu0 %v1453
        %1761 = vmatpush1.bf16.msra.mxu0 %v1452
        %1762 = vmatprep.subr.bf16.mxu0 %v1457
        %1763 = vmatpush1.bf16.msra.mxu0 %v1456
        %1764 = vmatprep.mubr.bf16.mxu0 %v857
        %1765 = vmatmul.mubr.bf16.gmra.mrb[0].mxu0 %v856
        %v1766 = vpop.f32.mrb[0].mxu0
        %v1767 = vadd.f32 %v1001, %v1766
        %v1768 = vpop.f32.mrb[0].mxu0
        %v1769 = vadd.f32 %v1005, %v1768
        %v1770 = vpop.f32.mrb[0].mxu0
        %v1771 = vpop.f32.mrb[0].mxu0
        %1772 = vdwg.mxu0
        %1773 = vmatprep.subr.bf16.mxu0 %v1461
        %1774 = vmatpush1.bf16.msra.mxu0 %v1460
        %1775 = vmatprep.subr.bf16.mxu0 %v1465
        %1776 = vmatpush1.bf16.msra.mxu0 %v1464
        %1777 = vmatprep.subr.bf16.mxu0 %v1469
        %1778 = vmatpush1.bf16.msra.mxu0 %v1468
        %1779 = vmatprep.subr.bf16.mxu0 %v1473
        %1780 = vmatpush1.bf16.msra.mxu0 %v1472
        %1781 = vmatprep.subr.bf16.mxu0 %v1477
        %1782 = vmatpush1.bf16.msra.mxu0 %v1476
        %1783 = vmatprep.subr.bf16.mxu0 %v1481
        %1784 = vmatpush1.bf16.msra.mxu0 %v1480
        %1785 = vmatprep.subr.bf16.mxu0 %v1485
        %1786 = vmatpush1.bf16.msra.mxu0 %v1484
        %1787 = vmatprep.subr.bf16.mxu0 %v1489
        %1788 = vmatpush1.bf16.msra.mxu0 %v1488
        %1789 = vmatprep.subr.bf16.mxu0 %v1493
        %1790 = vmatpush1.bf16.msra.mxu0 %v1492
        %1791 = vmatprep.subr.bf16.mxu0 %v1497
        %1792 = vmatpush1.bf16.msra.mxu0 %v1496
        %1793 = vmatprep.subr.bf16.mxu0 %v1501
        %1794 = vmatpush1.bf16.msra.mxu0 %v1500
        %1795 = vmatprep.subr.bf16.mxu0 %v1505
        %1796 = vmatpush1.bf16.msra.mxu0 %v1504
        %1797 = vmatprep.subr.bf16.mxu0 %v1509
        %1798 = vmatpush1.bf16.msra.mxu0 %v1508
        %1799 = vmatprep.subr.bf16.mxu0 %v1513
        %1800 = vmatpush1.bf16.msra.mxu0 %v1512
        %1801 = vmatprep.subr.bf16.mxu0 %v1517
        %1802 = vmatpush1.bf16.msra.mxu0 %v1516
        %1803 = vmatprep.subr.bf16.mxu0 %v1521
        %1804 = vmatpush1.bf16.msra.mxu0 %v1520
        %1805 = vmatprep.mubr.bf16.mxu0 %v859
        %1806 = vmatmul.mubr.bf16.gmra.mrb[0].mxu0 %v858
        %v1807 = vpop.f32.mrb[0].mxu0
        %v1808 = vadd.f32 %v1767, %v1807
        %v1809 = vpop.f32.mrb[0].mxu0
        %v1810 = vadd.f32 %v1769, %v1809
        %v1811 = vpop.f32.mrb[0].mxu0
        %v1812 = vpop.f32.mrb[0].mxu0
        %1813 = vdwg.mxu0
        %1815 = vrot.lane.b32.xlu0 %v1726, 64
        %v1816 = vpop.permute.xlu0 %1815
        %1819 = vrot.lane.b32.xlu0 %v1728, 64
        %v1820 = vpop.permute.xlu0 %1819
        %1823 = vrot.lane.b32.xlu0 %v1808, 64
        %v1824 = vpop.permute.xlu0 %1823
        %1827 = vrot.lane.b32.xlu0 %v1810, 64
        %v1828 = vpop.permute.xlu0 %1827
        %v1830 = vcombine.low %v1726, %v1728
        %v1831 = vcombine.high %v1726, %v1728
        %v1833 = vunpack.c.l.s4 1983009808
        %v1834 = vunpack.c.0.s8 %v1833
        %v1835 = vlaneseq
        %v1836 = vshrl.u32 %v1835, 7
        %v1837 = vsub.s32 %v1834, %v1836
        %v1838 = vrot.slane %v1830, %v1837
        %v1840 = vunpack.c.l.s4 1983009808
        %v1841 = vunpack.c.0.s8 %v1840
        %v1842 = vlaneseq
        %v1843 = vshrl.u32 %v1842, 7
        %v1844 = vsub.s32 %v1841, %v1843
        %v1845 = vrot.slane %v1831, %v1844
        %v1846 = vcombine.low %v1816, %v1820
        %v1847 = vcombine.high %v1816, %v1820
        %v1849 = vunpack.c.l.s4 1983009808
        %v1850 = vunpack.c.0.s8 %v1849
        %v1851 = vlaneseq
        %v1852 = vshrl.u32 %v1851, 7
        %v1853 = vsub.s32 %v1850, %v1852
        %v1854 = vrot.slane %v1846, %v1853
        %v1856 = vunpack.c.l.s4 1983009808
        %v1857 = vunpack.c.0.s8 %v1856
        %v1858 = vlaneseq
        %v1859 = vshrl.u32 %v1858, 7
        %v1860 = vsub.s32 %v1857, %v1859
        %v1861 = vrot.slane %v1847, %v1860
        %v1862 = vcombine.low %v1808, %v1810
        %v1863 = vcombine.high %v1808, %v1810
        %v1865 = vunpack.c.l.s4 1983009808
        %v1866 = vunpack.c.0.s8 %v1865
        %v1867 = vlaneseq
        %v1868 = vshrl.u32 %v1867, 7
        %v1869 = vsub.s32 %v1866, %v1868
        %v1870 = vrot.slane %v1862, %v1869
        %v1872 = vunpack.c.l.s4 1983009808
        %v1873 = vunpack.c.0.s8 %v1872
        %v1874 = vlaneseq
        %v1875 = vshrl.u32 %v1874, 7
        %v1876 = vsub.s32 %v1873, %v1875
        %v1877 = vrot.slane %v1863, %v1876
        %v1878 = vcombine.low %v1824, %v1828
        %v1879 = vcombine.high %v1824, %v1828
        %v1881 = vunpack.c.l.s4 1983009808
        %v1882 = vunpack.c.0.s8 %v1881
        %v1883 = vlaneseq
        %v1884 = vshrl.u32 %v1883, 7
        %v1885 = vsub.s32 %v1882, %v1884
        %v1886 = vrot.slane %v1878, %v1885
        %v1888 = vunpack.c.l.s4 1983009808
        %v1889 = vunpack.c.0.s8 %v1888
        %v1890 = vlaneseq
        %v1891 = vshrl.u32 %v1890, 7
        %v1892 = vsub.s32 %v1889, %v1891
        %v1893 = vrot.slane %v1879, %v1892
        %v1894 = vcombine.low %v1838, %v1854
        %v1895 = vcombine.high %v1838, %v1854
        %v1897 = vunpack.c.l.s4 1934713408
        %v1898 = vunpack.c.0.s8 %v1897
        %v1899 = vlaneseq
        %v1900 = vshrl.u32 %v1899, 7
        %v1901 = vsub.s32 %v1898, %v1900
        %v1902 = vrot.slane %v1894, %v1901
        %v1904 = vunpack.c.l.s4 1934713408
        %v1905 = vunpack.c.0.s8 %v1904
        %v1906 = vlaneseq
        %v1907 = vshrl.u32 %v1906, 7
        %v1908 = vsub.s32 %v1905, %v1907
        %v1909 = vrot.slane %v1895, %v1908
        %v1910 = vcombine.low %v1845, %v1861
        %v1911 = vcombine.high %v1845, %v1861
        %v1913 = vunpack.c.l.s4 1934713408
        %v1914 = vunpack.c.0.s8 %v1913
        %v1915 = vlaneseq
        %v1916 = vshrl.u32 %v1915, 7
        %v1917 = vsub.s32 %v1914, %v1916
        %v1918 = vrot.slane %v1910, %v1917
        %v1920 = vunpack.c.l.s4 1934713408
        %v1921 = vunpack.c.0.s8 %v1920
        %v1922 = vlaneseq
        %v1923 = vshrl.u32 %v1922, 7
        %v1924 = vsub.s32 %v1921, %v1923
        %v1925 = vrot.slane %v1911, %v1924
        %v1926 = vcombine.low %v1870, %v1886
        %v1927 = vcombine.high %v1870, %v1886
        %v1929 = vunpack.c.l.s4 1934713408
        %v1930 = vunpack.c.0.s8 %v1929
        %v1931 = vlaneseq
        %v1932 = vshrl.u32 %v1931, 7
        %v1933 = vsub.s32 %v1930, %v1932
        %v1934 = vrot.slane %v1926, %v1933
        %v1936 = vunpack.c.l.s4 1934713408
        %v1937 = vunpack.c.0.s8 %v1936
        %v1938 = vlaneseq
        %v1939 = vshrl.u32 %v1938, 7
        %v1940 = vsub.s32 %v1937, %v1939
        %v1941 = vrot.slane %v1927, %v1940
        %v1942 = vcombine.low %v1877, %v1893
        %v1943 = vcombine.high %v1877, %v1893
        %v1945 = vunpack.c.l.s4 1934713408
        %v1946 = vunpack.c.0.s8 %v1945
        %v1947 = vlaneseq
        %v1948 = vshrl.u32 %v1947, 7
        %v1949 = vsub.s32 %v1946, %v1948
        %v1950 = vrot.slane %v1942, %v1949
        %v1952 = vunpack.c.l.s4 1934713408
        %v1953 = vunpack.c.0.s8 %v1952
        %v1954 = vlaneseq
        %v1955 = vshrl.u32 %v1954, 7
        %v1956 = vsub.s32 %v1953, %v1955
        %v1957 = vrot.slane %v1943, %v1956
        %v1958 = vcombine.low %v1902, %v1934
        %v1959 = vcombine.high %v1902, %v1934
        %v1960 = vcombine.low %v1909, %v1941
        %v1961 = vcombine.high %v1909, %v1941
        %v1962 = vcombine.low %v1918, %v1950
        %v1963 = vcombine.high %v1918, %v1950
        %v1964 = vcombine.low %v1925, %v1957
        %v1965 = vcombine.high %v1925, %v1957
        %v1966 = vcombine.low %v1958, %v1960
        %v1967 = vcombine.high %v1958, %v1960
        %v1969 = vunpack.c.l.s4 1983009808
        %v1970 = vunpack.c.0.s8 %v1969
        %v1971 = vlaneseq
        %v1972 = vshrl.u32 %v1971, 7
        %v1973 = vsub.s32 %v1970, %v1972
        %v1974 = vrot.slane %v1966, %v1973
        %v1976 = vunpack.c.l.s4 1983009808
        %v1977 = vunpack.c.0.s8 %v1976
        %v1978 = vlaneseq
        %v1979 = vshrl.u32 %v1978, 7
        %v1980 = vsub.s32 %v1977, %v1979
        %v1981 = vrot.slane %v1967, %v1980
        %v1982 = vcombine.low %v1959, %v1961
        %v1983 = vcombine.high %v1959, %v1961
        %v1985 = vunpack.c.l.s4 1983009808
        %v1986 = vunpack.c.0.s8 %v1985
        %v1987 = vlaneseq
        %v1988 = vshrl.u32 %v1987, 7
        %v1989 = vsub.s32 %v1986, %v1988
        %v1990 = vrot.slane %v1982, %v1989
        %v1992 = vunpack.c.l.s4 1983009808
        %v1993 = vunpack.c.0.s8 %v1992
        %v1994 = vlaneseq
        %v1995 = vshrl.u32 %v1994, 7
        %v1996 = vsub.s32 %v1993, %v1995
        %v1997 = vrot.slane %v1983, %v1996
        %v1998 = vcombine.low %v1962, %v1964
        %v1999 = vcombine.high %v1962, %v1964
        %v2001 = vunpack.c.l.s4 1983009808
        %v2002 = vunpack.c.0.s8 %v2001
        %v2003 = vlaneseq
        %v2004 = vshrl.u32 %v2003, 7
        %v2005 = vsub.s32 %v2002, %v2004
        %v2006 = vrot.slane %v1998, %v2005
        %v2008 = vunpack.c.l.s4 1983009808
        %v2009 = vunpack.c.0.s8 %v2008
        %v2010 = vlaneseq
        %v2011 = vshrl.u32 %v2010, 7
        %v2012 = vsub.s32 %v2009, %v2011
        %v2013 = vrot.slane %v1999, %v2012
        %v2014 = vcombine.low %v1963, %v1965
        %v2015 = vcombine.high %v1963, %v1965
        %v2017 = vunpack.c.l.s4 1983009808
        %v2018 = vunpack.c.0.s8 %v2017
        %v2019 = vlaneseq
        %v2020 = vshrl.u32 %v2019, 7
        %v2021 = vsub.s32 %v2018, %v2020
        %v2022 = vrot.slane %v2014, %v2021
        %v2024 = vunpack.c.l.s4 1983009808
        %v2025 = vunpack.c.0.s8 %v2024
        %v2026 = vlaneseq
        %v2027 = vshrl.u32 %v2026, 7
        %v2028 = vsub.s32 %v2025, %v2027
        %v2029 = vrot.slane %v2015, %v2028
        %v2030 = vcombine.low %v1974, %v1990
        %v2031 = vcombine.high %v1974, %v1990
        %v2033 = vunpack.c.l.s4 1934713408
        %v2034 = vunpack.c.0.s8 %v2033
        %v2035 = vlaneseq
        %v2036 = vshrl.u32 %v2035, 7
        %v2037 = vsub.s32 %v2034, %v2036
        %v2038 = vrot.slane %v2030, %v2037
        %v2040 = vunpack.c.l.s4 1934713408
        %v2041 = vunpack.c.0.s8 %v2040
        %v2042 = vlaneseq
        %v2043 = vshrl.u32 %v2042, 7
        %v2044 = vsub.s32 %v2041, %v2043
        %v2045 = vrot.slane %v2031, %v2044
        %v2046 = vcombine.low %v1981, %v1997
        %v2047 = vcombine.high %v1981, %v1997
        %v2049 = vunpack.c.l.s4 1934713408
        %v2050 = vunpack.c.0.s8 %v2049
        %v2051 = vlaneseq
        %v2052 = vshrl.u32 %v2051, 7
        %v2053 = vsub.s32 %v2050, %v2052
        %v2054 = vrot.slane %v2046, %v2053
        %v2056 = vunpack.c.l.s4 1934713408
        %v2057 = vunpack.c.0.s8 %v2056
        %v2058 = vlaneseq
        %v2059 = vshrl.u32 %v2058, 7
        %v2060 = vsub.s32 %v2057, %v2059
        %v2061 = vrot.slane %v2047, %v2060
        %v2062 = vcombine.low %v2006, %v2022
        %v2063 = vcombine.high %v2006, %v2022
        %v2065 = vunpack.c.l.s4 1934713408
        %v2066 = vunpack.c.0.s8 %v2065
        %v2067 = vlaneseq
        %v2068 = vshrl.u32 %v2067, 7
        %v2069 = vsub.s32 %v2066, %v2068
        %v2070 = vrot.slane %v2062, %v2069
        %v2072 = vunpack.c.l.s4 1934713408
        %v2073 = vunpack.c.0.s8 %v2072
        %v2074 = vlaneseq
        %v2075 = vshrl.u32 %v2074, 7
        %v2076 = vsub.s32 %v2073, %v2075
        %v2077 = vrot.slane %v2063, %v2076
        %v2078 = vcombine.low %v2013, %v2029
        %v2079 = vcombine.high %v2013, %v2029
        %v2081 = vunpack.c.l.s4 1934713408
        %v2082 = vunpack.c.0.s8 %v2081
        %v2083 = vlaneseq
        %v2084 = vshrl.u32 %v2083, 7
        %v2085 = vsub.s32 %v2082, %v2084
        %v2086 = vrot.slane %v2078, %v2085
        %v2088 = vunpack.c.l.s4 1934713408
        %v2089 = vunpack.c.0.s8 %v2088
        %v2090 = vlaneseq
        %v2091 = vshrl.u32 %v2090, 7
        %v2092 = vsub.s32 %v2089, %v2091
        %v2093 = vrot.slane %v2079, %v2092
        %v2094 = vcombine.low %v2038, %v2070
        %v2095 = vcombine.high %v2038, %v2070
        %v2096 = vcombine.low %v2045, %v2077
        %v2097 = vcombine.high %v2045, %v2077
        %v2098 = vcombine.low %v2054, %v2086
        %v2099 = vcombine.high %v2054, %v2086
        %v2100 = vcombine.low %v2061, %v2093
        %v2101 = vcombine.high %v2061, %v2093
        %v2102 = vpack.c.bf16 %v2094, %v2094
        %v2103 = vpack.c.bf16 %v2095, %v2095
        %v2104 = vpack.c.bf16 %v2096, %v2096
        %v2105 = vpack.c.bf16 %v2097, %v2097
        %v2106 = vpack.c.bf16 %v2098, %v2098
        %v2107 = vpack.c.bf16 %v2099, %v2099
        %v2108 = vpack.c.bf16 %v2100, %v2100
        %v2109 = vpack.c.bf16 %v2101, %v2101
        %v2110 = vld [vmem:[%s850] sm:$0xf]
        %v2111 = vld [vmem:[%s850 + $0x4] sm:$0xf]
        %v2112 = vld [vmem:[%s850 + $0x8] sm:$0xf]
        %v2113 = vld [vmem:[%s850 + $0xc] sm:$0xf]
        %v2114 = vld [vmem:[%s850 + $0x10] sm:$0xf]
        %v2115 = vld [vmem:[%s850 + $0x14] sm:$0xf]
        %v2116 = vld [vmem:[%s850 + $0x18] sm:$0xf]
        %v2117 = vld [vmem:[%s850 + $0x1c] sm:$0xf]
        %v2118 = vld [vmem:[%s850 + $0x20] sm:$0xf]
        %v2119 = vld [vmem:[%s850 + $0x24] sm:$0xf]
        %v2120 = vld [vmem:[%s850 + $0x28] sm:$0xf]
        %v2121 = vld [vmem:[%s850 + $0x2c] sm:$0xf]
        %v2122 = vld [vmem:[%s850 + $0x30] sm:$0xf]
        %v2123 = vld [vmem:[%s850 + $0x34] sm:$0xf]
        %v2124 = vld [vmem:[%s850 + $0x38] sm:$0xf]
        %v2125 = vld [vmem:[%s850 + $0x3c] sm:$0xf]
        %v2126 = vld [vmem:[%s850 + $0x40] sm:$0xf]
        %v2127 = vld [vmem:[%s850 + $0x44] sm:$0xf]
        %v2128 = vld [vmem:[%s850 + $0x48] sm:$0xf]
        %v2129 = vld [vmem:[%s850 + $0x4c] sm:$0xf]
        %v2130 = vld [vmem:[%s850 + $0x50] sm:$0xf]
        %v2131 = vld [vmem:[%s850 + $0x54] sm:$0xf]
        %v2132 = vld [vmem:[%s850 + $0x58] sm:$0xf]
        %v2133 = vld [vmem:[%s850 + $0x5c] sm:$0xf]
        %v2134 = vld [vmem:[%s850 + $0x60] sm:$0xf]
        %v2135 = vld [vmem:[%s850 + $0x64] sm:$0xf]
        %v2136 = vld [vmem:[%s850 + $0x68] sm:$0xf]
        %v2137 = vld [vmem:[%s850 + $0x6c] sm:$0xf]
        %v2138 = vld [vmem:[%s850 + $0x70] sm:$0xf]
        %v2139 = vld [vmem:[%s850 + $0x74] sm:$0xf]
        %v2140 = vld [vmem:[%s850 + $0x78] sm:$0xf]
        %v2141 = vld [vmem:[%s850 + $0x7c] sm:$0xf]
        %v2142 = vld [vmem:[%s850 + $0x80] sm:$0xf]
        %v2143 = vld [vmem:[%s850 + $0x84] sm:$0xf]
        %v2144 = vld [vmem:[%s850 + $0x88] sm:$0xf]
        %v2145 = vld [vmem:[%s850 + $0x8c] sm:$0xf]
        %v2146 = vld [vmem:[%s850 + $0x90] sm:$0xf]
        %v2147 = vld [vmem:[%s850 + $0x94] sm:$0xf]
        %v2148 = vld [vmem:[%s850 + $0x98] sm:$0xf]
        %v2149 = vld [vmem:[%s850 + $0x9c] sm:$0xf]
        %v2150 = vld [vmem:[%s850 + $0xa0] sm:$0xf]
        %v2151 = vld [vmem:[%s850 + $0xa4] sm:$0xf]
        %v2152 = vld [vmem:[%s850 + $0xa8] sm:$0xf]
        %v2153 = vld [vmem:[%s850 + $0xac] sm:$0xf]
        %v2154 = vld [vmem:[%s850 + $0xb0] sm:$0xf]
        %v2155 = vld [vmem:[%s850 + $0xb4] sm:$0xf]
        %v2156 = vld [vmem:[%s850 + $0xb8] sm:$0xf]
        %v2157 = vld [vmem:[%s850 + $0xbc] sm:$0xf]
        %v2158 = vld [vmem:[%s850 + $0xc0] sm:$0xf]
        %v2159 = vld [vmem:[%s850 + $0xc4] sm:$0xf]
        %v2160 = vld [vmem:[%s850 + $0xc8] sm:$0xf]
        %v2161 = vld [vmem:[%s850 + $0xcc] sm:$0xf]
        %v2162 = vld [vmem:[%s850 + $0xd0] sm:$0xf]
        %v2163 = vld [vmem:[%s850 + $0xd4] sm:$0xf]
        %v2164 = vld [vmem:[%s850 + $0xd8] sm:$0xf]
        %v2165 = vld [vmem:[%s850 + $0xdc] sm:$0xf]
        %v2166 = vld [vmem:[%s850 + $0xe0] sm:$0xf]
        %v2167 = vld [vmem:[%s850 + $0xe4] sm:$0xf]
        %v2168 = vld [vmem:[%s850 + $0xe8] sm:$0xf]
        %v2169 = vld [vmem:[%s850 + $0xec] sm:$0xf]
        %v2170 = vld [vmem:[%s850 + $0xf0] sm:$0xf]
        %v2171 = vld [vmem:[%s850 + $0xf4] sm:$0xf]
        %v2172 = vld [vmem:[%s850 + $0xf8] sm:$0xf]
        %v2173 = vld [vmem:[%s850 + $0xfc] sm:$0xf]
        %v2174 = vld [vmem:[%s718] sm:$0xf]
        %v2175 = vld [vmem:[%s718 + $0x4] sm:$0xf]
        %v2176 = vld [vmem:[%s718 + $0x8] sm:$0xf]
        %v2177 = vld [vmem:[%s718 + $0xc] sm:$0xf]
        %v2178 = vld [vmem:[%s718 + $0x10] sm:$0xf]
        %v2179 = vld [vmem:[%s718 + $0x14] sm:$0xf]
        %v2180 = vld [vmem:[%s718 + $0x18] sm:$0xf]
        %v2181 = vld [vmem:[%s718 + $0x1c] sm:$0xf]
        %v2190 = vunpack.c.l.b16 %v2110
        %v2191 = vunpack.c.l.b16 %v2111
        %v2192 = vunpack.c.l.b16 %v2112
        %v2193 = vunpack.c.l.b16 %v2113
        %v2194 = vunpack.c.l.b16 %v2114
        %v2195 = vunpack.c.l.b16 %v2115
        %v2196 = vunpack.c.l.b16 %v2116
        %v2197 = vunpack.c.l.b16 %v2117
        %v2198 = vpack.c.b16 %v2191, %v2190
        %v2199 = vpack.c.b16 %v2193, %v2192
        %v2200 = vpack.c.b16 %v2195, %v2194
        %v2201 = vpack.c.b16 %v2197, %v2196
        %vm2206 = vcmask 523264
        %v2208 = vsel %vm2206, %v2102, 0
        %2210 = vmatprep.subr.bf16.mxu0 0
        %2211 = vmatpush1.bf16.msra.mxu0 %v2198
        %2212 = vmatprep.subr.bf16.mxu0 0
        %2213 = vmatpush1.bf16.msra.mxu0 %v2199
        %2214 = vmatprep.subr.bf16.mxu0 0
        %2215 = vmatpush1.bf16.msra.mxu0 %v2200
        %2216 = vmatprep.subr.bf16.mxu0 0
        %2217 = vmatpush1.bf16.msra.mxu0 %v2201
        %2218 = vmatprep.subr.bf16.mxu0 0
        %2219 = vmatpush1.bf16.msra.mxu0 0
        %2220 = vmatprep.subr.bf16.mxu0 0
        %2221 = vmatpush1.bf16.msra.mxu0 0
        %2222 = vmatprep.subr.bf16.mxu0 0
        %2223 = vmatpush1.bf16.msra.mxu0 0
        %2224 = vmatprep.subr.bf16.mxu0 0
        %2225 = vmatpush1.bf16.msra.mxu0 0
        %2226 = vmatprep.subr.bf16.mxu0 0
        %2227 = vmatpush1.bf16.msra.mxu0 0
        %2228 = vmatprep.subr.bf16.mxu0 0
        %2229 = vmatpush1.bf16.msra.mxu0 0
        %2230 = vmatprep.subr.bf16.mxu0 0
        %2231 = vmatpush1.bf16.msra.mxu0 0
        %2232 = vmatprep.subr.bf16.mxu0 0
        %2233 = vmatpush1.bf16.msra.mxu0 0
        %2234 = vmatprep.subr.bf16.mxu0 0
        %2235 = vmatpush1.bf16.msra.mxu0 0
        %2236 = vmatprep.subr.bf16.mxu0 0
        %2237 = vmatpush1.bf16.msra.mxu0 0
        %2238 = vmatprep.subr.bf16.mxu0 0
        %2239 = vmatpush1.bf16.msra.mxu0 0
        %2240 = vmatprep.subr.bf16.mxu0 0
        %2241 = vmatpush1.bf16.msra.mxu0 0
        %2242 = vmatprep.mubr.bf16.mxu0 0
        %2243 = vmatmul.mubr.bf16.gmra.mrb[0].mxu0 %v2208
        %v2244 = vpop.f32.mrb[0].mxu0
        %v2245 = vadd.f32 0.0, %v2244
        %v2246 = vpop.f32.mrb[0].mxu0
        %v2247 = vpop.f32.mrb[0].mxu0
        %v2248 = vpop.f32.mrb[0].mxu0
        %2249 = vdwg.mxu0
        %v2258 = vunpack.c.l.b16 %v2118
        %v2259 = vunpack.c.l.b16 %v2119
        %v2260 = vunpack.c.l.b16 %v2120
        %v2261 = vunpack.c.l.b16 %v2121
        %v2262 = vunpack.c.l.b16 %v2122
        %v2263 = vunpack.c.l.b16 %v2123
        %v2264 = vunpack.c.l.b16 %v2124
        %v2265 = vunpack.c.l.b16 %v2125
        %v2266 = vpack.c.b16 %v2259, %v2258
        %v2267 = vpack.c.b16 %v2261, %v2260
        %v2268 = vpack.c.b16 %v2263, %v2262
        %v2269 = vpack.c.b16 %v2265, %v2264
        %v2275 = vsel %vm2206, %v2103, 0
        %2277 = vmatprep.subr.bf16.mxu0 0
        %2278 = vmatpush1.bf16.msra.mxu0 %v2266
        %2279 = vmatprep.subr.bf16.mxu0 0
        %2280 = vmatpush1.bf16.msra.mxu0 %v2267
        %2281 = vmatprep.subr.bf16.mxu0 0
        %2282 = vmatpush1.bf16.msra.mxu0 %v2268
        %2283 = vmatprep.subr.bf16.mxu0 0
        %2284 = vmatpush1.bf16.msra.mxu0 %v2269
        %2285 = vmatprep.subr.bf16.mxu0 0
        %2286 = vmatpush1.bf16.msra.mxu0 0
        %2287 = vmatprep.subr.bf16.mxu0 0
        %2288 = vmatpush1.bf16.msra.mxu0 0
        %2289 = vmatprep.subr.bf16.mxu0 0
        %2290 = vmatpush1.bf16.msra.mxu0 0
        %2291 = vmatprep.subr.bf16.mxu0 0
        %2292 = vmatpush1.bf16.msra.mxu0 0
        %2293 = vmatprep.subr.bf16.mxu0 0
        %2294 = vmatpush1.bf16.msra.mxu0 0
        %2295 = vmatprep.subr.bf16.mxu0 0
        %2296 = vmatpush1.bf16.msra.mxu0 0
        %2297 = vmatprep.subr.bf16.mxu0 0
        %2298 = vmatpush1.bf16.msra.mxu0 0
        %2299 = vmatprep.subr.bf16.mxu0 0
        %2300 = vmatpush1.bf16.msra.mxu0 0
        %2301 = vmatprep.subr.bf16.mxu0 0
        %2302 = vmatpush1.bf16.msra.mxu0 0
        %2303 = vmatprep.subr.bf16.mxu0 0
        %2304 = vmatpush1.bf16.msra.mxu0 0
        %2305 = vmatprep.subr.bf16.mxu0 0
        %2306 = vmatpush1.bf16.msra.mxu0 0
        %2307 = vmatprep.subr.bf16.mxu0 0
        %2308 = vmatpush1.bf16.msra.mxu0 0
        %2309 = vmatprep.mubr.bf16.mxu0 0
        %2310 = vmatmul.mubr.bf16.gmra.mrb[0].mxu0 %v2275
        %v2311 = vpop.f32.mrb[0].mxu0
        %v2312 = vadd.f32 0.0, %v2311
        %v2313 = vpop.f32.mrb[0].mxu0
        %v2314 = vpop.f32.mrb[0].mxu0
        %v2315 = vpop.f32.mrb[0].mxu0
        %2316 = vdwg.mxu0
        %v2325 = vunpack.c.l.b16 %v2126
        %v2326 = vunpack.c.l.b16 %v2127
        %v2327 = vunpack.c.l.b16 %v2128
        %v2328 = vunpack.c.l.b16 %v2129
        %v2329 = vunpack.c.l.b16 %v2130
        %v2330 = vunpack.c.l.b16 %v2131
        %v2331 = vunpack.c.l.b16 %v2132
        %v2332 = vunpack.c.l.b16 %v2133
        %v2333 = vpack.c.b16 %v2326, %v2325
        %v2334 = vpack.c.b16 %v2328, %v2327
        %v2335 = vpack.c.b16 %v2330, %v2329
        %v2336 = vpack.c.b16 %v2332, %v2331
        %v2342 = vsel %vm2206, %v2104, 0
        %2344 = vmatprep.subr.bf16.mxu0 0
        %2345 = vmatpush1.bf16.msra.mxu0 %v2333
        %2346 = vmatprep.subr.bf16.mxu0 0
        %2347 = vmatpush1.bf16.msra.mxu0 %v2334
        %2348 = vmatprep.subr.bf16.mxu0 0
        %2349 = vmatpush1.bf16.msra.mxu0 %v2335
        %2350 = vmatprep.subr.bf16.mxu0 0
        %2351 = vmatpush1.bf16.msra.mxu0 %v2336
        %2352 = vmatprep.subr.bf16.mxu0 0
        %2353 = vmatpush1.bf16.msra.mxu0 0
        %2354 = vmatprep.subr.bf16.mxu0 0
        %2355 = vmatpush1.bf16.msra.mxu0 0
        %2356 = vmatprep.subr.bf16.mxu0 0
        %2357 = vmatpush1.bf16.msra.mxu0 0
        %2358 = vmatprep.subr.bf16.mxu0 0
        %2359 = vmatpush1.bf16.msra.mxu0 0
        %2360 = vmatprep.subr.bf16.mxu0 0
        %2361 = vmatpush1.bf16.msra.mxu0 0
        %2362 = vmatprep.subr.bf16.mxu0 0
        %2363 = vmatpush1.bf16.msra.mxu0 0
        %2364 = vmatprep.subr.bf16.mxu0 0
        %2365 = vmatpush1.bf16.msra.mxu0 0
        %2366 = vmatprep.subr.bf16.mxu0 0
        %2367 = vmatpush1.bf16.msra.mxu0 0
        %2368 = vmatprep.subr.bf16.mxu0 0
        %2369 = vmatpush1.bf16.msra.mxu0 0
        %2370 = vmatprep.subr.bf16.mxu0 0
        %2371 = vmatpush1.bf16.msra.mxu0 0
        %2372 = vmatprep.subr.bf16.mxu0 0
        %2373 = vmatpush1.bf16.msra.mxu0 0
        %2374 = vmatprep.subr.bf16.mxu0 0
        %2375 = vmatpush1.bf16.msra.mxu0 0
        %2376 = vmatprep.mubr.bf16.mxu0 0
        %2377 = vmatmul.mubr.bf16.gmra.mrb[0].mxu0 %v2342
        %v2378 = vpop.f32.mrb[0].mxu0
        %v2379 = vadd.f32 0.0, %v2378
        %v2380 = vpop.f32.mrb[0].mxu0
        %v2381 = vpop.f32.mrb[0].mxu0
        %v2382 = vpop.f32.mrb[0].mxu0
        %2383 = vdwg.mxu0
        %v2392 = vunpack.c.l.b16 %v2134
        %v2393 = vunpack.c.l.b16 %v2135
        %v2394 = vunpack.c.l.b16 %v2136
        %v2395 = vunpack.c.l.b16 %v2137
        %v2396 = vunpack.c.l.b16 %v2138
        %v2397 = vunpack.c.l.b16 %v2139
        %v2398 = vunpack.c.l.b16 %v2140
        %v2399 = vunpack.c.l.b16 %v2141
        %v2400 = vpack.c.b16 %v2393, %v2392
        %v2401 = vpack.c.b16 %v2395, %v2394
        %v2402 = vpack.c.b16 %v2397, %v2396
        %v2403 = vpack.c.b16 %v2399, %v2398
        %v2409 = vsel %vm2206, %v2105, 0
        %2411 = vmatprep.subr.bf16.mxu0 0
        %2412 = vmatpush1.bf16.msra.mxu0 %v2400
        %2413 = vmatprep.subr.bf16.mxu0 0
        %2414 = vmatpush1.bf16.msra.mxu0 %v2401
        %2415 = vmatprep.subr.bf16.mxu0 0
        %2416 = vmatpush1.bf16.msra.mxu0 %v2402
        %2417 = vmatprep.subr.bf16.mxu0 0
        %2418 = vmatpush1.bf16.msra.mxu0 %v2403
        %2419 = vmatprep.subr.bf16.mxu0 0
        %2420 = vmatpush1.bf16.msra.mxu0 0
        %2421 = vmatprep.subr.bf16.mxu0 0
        %2422 = vmatpush1.bf16.msra.mxu0 0
        %2423 = vmatprep.subr.bf16.mxu0 0
        %2424 = vmatpush1.bf16.msra.mxu0 0
        %2425 = vmatprep.subr.bf16.mxu0 0
        %2426 = vmatpush1.bf16.msra.mxu0 0
        %2427 = vmatprep.subr.bf16.mxu0 0
        %2428 = vmatpush1.bf16.msra.mxu0 0
        %2429 = vmatprep.subr.bf16.mxu0 0
        %2430 = vmatpush1.bf16.msra.mxu0 0
        %2431 = vmatprep.subr.bf16.mxu0 0
        %2432 = vmatpush1.bf16.msra.mxu0 0
        %2433 = vmatprep.subr.bf16.mxu0 0
        %2434 = vmatpush1.bf16.msra.mxu0 0
        %2435 = vmatprep.subr.bf16.mxu0 0
        %2436 = vmatpush1.bf16.msra.mxu0 0
        %2437 = vmatprep.subr.bf16.mxu0 0
        %2438 = vmatpush1.bf16.msra.mxu0 0
        %2439 = vmatprep.subr.bf16.mxu0 0
        %2440 = vmatpush1.bf16.msra.mxu0 0
        %2441 = vmatprep.subr.bf16.mxu0 0
        %2442 = vmatpush1.bf16.msra.mxu0 0
        %2443 = vmatprep.mubr.bf16.mxu0 0
        %2444 = vmatmul.mubr.bf16.gmra.mrb[0].mxu0 %v2409
        %v2445 = vpop.f32.mrb[0].mxu0
        %v2446 = vadd.f32 0.0, %v2445
        %v2447 = vpop.f32.mrb[0].mxu0
        %v2448 = vpop.f32.mrb[0].mxu0
        %v2449 = vpop.f32.mrb[0].mxu0
        %2450 = vdwg.mxu0
        %v2459 = vunpack.c.l.b16 %v2142
        %v2460 = vunpack.c.l.b16 %v2143
        %v2461 = vunpack.c.l.b16 %v2144
        %v2462 = vunpack.c.l.b16 %v2145
        %v2463 = vunpack.c.l.b16 %v2146
        %v2464 = vunpack.c.l.b16 %v2147
        %v2465 = vunpack.c.l.b16 %v2148
        %v2466 = vunpack.c.l.b16 %v2149
        %v2467 = vpack.c.b16 %v2460, %v2459
        %v2468 = vpack.c.b16 %v2462, %v2461
        %v2469 = vpack.c.b16 %v2464, %v2463
        %v2470 = vpack.c.b16 %v2466, %v2465
        %v2476 = vsel %vm2206, %v2106, 0
        %2478 = vmatprep.subr.bf16.mxu0 0
        %2479 = vmatpush1.bf16.msra.mxu0 %v2467
        %2480 = vmatprep.subr.bf16.mxu0 0
        %2481 = vmatpush1.bf16.msra.mxu0 %v2468
        %2482 = vmatprep.subr.bf16.mxu0 0
        %2483 = vmatpush1.bf16.msra.mxu0 %v2469
        %2484 = vmatprep.subr.bf16.mxu0 0
        %2485 = vmatpush1.bf16.msra.mxu0 %v2470
        %2486 = vmatprep.subr.bf16.mxu0 0
        %2487 = vmatpush1.bf16.msra.mxu0 0
        %2488 = vmatprep.subr.bf16.mxu0 0
        %2489 = vmatpush1.bf16.msra.mxu0 0
        %2490 = vmatprep.subr.bf16.mxu0 0
        %2491 = vmatpush1.bf16.msra.mxu0 0
        %2492 = vmatprep.subr.bf16.mxu0 0
        %2493 = vmatpush1.bf16.msra.mxu0 0
        %2494 = vmatprep.subr.bf16.mxu0 0
        %2495 = vmatpush1.bf16.msra.mxu0 0
        %2496 = vmatprep.subr.bf16.mxu0 0
        %2497 = vmatpush1.bf16.msra.mxu0 0
        %2498 = vmatprep.subr.bf16.mxu0 0
        %2499 = vmatpush1.bf16.msra.mxu0 0
        %2500 = vmatprep.subr.bf16.mxu0 0
        %2501 = vmatpush1.bf16.msra.mxu0 0
        %2502 = vmatprep.subr.bf16.mxu0 0
        %2503 = vmatpush1.bf16.msra.mxu0 0
        %2504 = vmatprep.subr.bf16.mxu0 0
        %2505 = vmatpush1.bf16.msra.mxu0 0
        %2506 = vmatprep.subr.bf16.mxu0 0
        %2507 = vmatpush1.bf16.msra.mxu0 0
        %2508 = vmatprep.subr.bf16.mxu0 0
        %2509 = vmatpush1.bf16.msra.mxu0 0
        %2510 = vmatprep.mubr.bf16.mxu0 0
        %2511 = vmatmul.mubr.bf16.gmra.mrb[0].mxu0 %v2476
        %v2512 = vpop.f32.mrb[0].mxu0
        %v2513 = vadd.f32 0.0, %v2512
        %v2514 = vpop.f32.mrb[0].mxu0
        %v2515 = vpop.f32.mrb[0].mxu0
        %v2516 = vpop.f32.mrb[0].mxu0
        %2517 = vdwg.mxu0
        %v2526 = vunpack.c.l.b16 %v2150
        %v2527 = vunpack.c.l.b16 %v2151
        %v2528 = vunpack.c.l.b16 %v2152
        %v2529 = vunpack.c.l.b16 %v2153
        %v2530 = vunpack.c.l.b16 %v2154
        %v2531 = vunpack.c.l.b16 %v2155
        %v2532 = vunpack.c.l.b16 %v2156
        %v2533 = vunpack.c.l.b16 %v2157
        %v2534 = vpack.c.b16 %v2527, %v2526
        %v2535 = vpack.c.b16 %v2529, %v2528
        %v2536 = vpack.c.b16 %v2531, %v2530
        %v2537 = vpack.c.b16 %v2533, %v2532
        %v2543 = vsel %vm2206, %v2107, 0
        %2545 = vmatprep.subr.bf16.mxu0 0
        %2546 = vmatpush1.bf16.msra.mxu0 %v2534
        %2547 = vmatprep.subr.bf16.mxu0 0
        %2548 = vmatpush1.bf16.msra.mxu0 %v2535
        %2549 = vmatprep.subr.bf16.mxu0 0
        %2550 = vmatpush1.bf16.msra.mxu0 %v2536
        %2551 = vmatprep.subr.bf16.mxu0 0
        %2552 = vmatpush1.bf16.msra.mxu0 %v2537
        %2553 = vmatprep.subr.bf16.mxu0 0
        %2554 = vmatpush1.bf16.msra.mxu0 0
        %2555 = vmatprep.subr.bf16.mxu0 0
        %2556 = vmatpush1.bf16.msra.mxu0 0
        %2557 = vmatprep.subr.bf16.mxu0 0
        %2558 = vmatpush1.bf16.msra.mxu0 0
        %2559 = vmatprep.subr.bf16.mxu0 0
        %2560 = vmatpush1.bf16.msra.mxu0 0
        %2561 = vmatprep.subr.bf16.mxu0 0
        %2562 = vmatpush1.bf16.msra.mxu0 0
        %2563 = vmatprep.subr.bf16.mxu0 0
        %2564 = vmatpush1.bf16.msra.mxu0 0
        %2565 = vmatprep.subr.bf16.mxu0 0
        %2566 = vmatpush1.bf16.msra.mxu0 0
        %2567 = vmatprep.subr.bf16.mxu0 0
        %2568 = vmatpush1.bf16.msra.mxu0 0
        %2569 = vmatprep.subr.bf16.mxu0 0
        %2570 = vmatpush1.bf16.msra.mxu0 0
        %2571 = vmatprep.subr.bf16.mxu0 0
        %2572 = vmatpush1.bf16.msra.mxu0 0
        %2573 = vmatprep.subr.bf16.mxu0 0
        %2574 = vmatpush1.bf16.msra.mxu0 0
        %2575 = vmatprep.subr.bf16.mxu0 0
        %2576 = vmatpush1.bf16.msra.mxu0 0
        %2577 = vmatprep.mubr.bf16.mxu0 0
        %2578 = vmatmul.mubr.bf16.gmra.mrb[0].mxu0 %v2543
        %v2579 = vpop.f32.mrb[0].mxu0
        %v2580 = vadd.f32 0.0, %v2579
        %v2581 = vpop.f32.mrb[0].mxu0
        %v2582 = vpop.f32.mrb[0].mxu0
        %v2583 = vpop.f32.mrb[0].mxu0
        %2584 = vdwg.mxu0
        %v2593 = vunpack.c.l.b16 %v2158
        %v2594 = vunpack.c.l.b16 %v2159
        %v2595 = vunpack.c.l.b16 %v2160
        %v2596 = vunpack.c.l.b16 %v2161
        %v2597 = vunpack.c.l.b16 %v2162
        %v2598 = vunpack.c.l.b16 %v2163
        %v2599 = vunpack.c.l.b16 %v2164
        %v2600 = vunpack.c.l.b16 %v2165
        %v2601 = vpack.c.b16 %v2594, %v2593
        %v2602 = vpack.c.b16 %v2596, %v2595
        %v2603 = vpack.c.b16 %v2598, %v2597
        %v2604 = vpack.c.b16 %v2600, %v2599
        %v2610 = vsel %vm2206, %v2108, 0
        %2612 = vmatprep.subr.bf16.mxu0 0
        %2613 = vmatpush1.bf16.msra.mxu0 %v2601
        %2614 = vmatprep.subr.bf16.mxu0 0
        %2615 = vmatpush1.bf16.msra.mxu0 %v2602
        %2616 = vmatprep.subr.bf16.mxu0 0
        %2617 = vmatpush1.bf16.msra.mxu0 %v2603
        %2618 = vmatprep.subr.bf16.mxu0 0
        %2619 = vmatpush1.bf16.msra.mxu0 %v2604
        %2620 = vmatprep.subr.bf16.mxu0 0
        %2621 = vmatpush1.bf16.msra.mxu0 0
        %2622 = vmatprep.subr.bf16.mxu0 0
        %2623 = vmatpush1.bf16.msra.mxu0 0
        %2624 = vmatprep.subr.bf16.mxu0 0
        %2625 = vmatpush1.bf16.msra.mxu0 0
        %2626 = vmatprep.subr.bf16.mxu0 0
        %2627 = vmatpush1.bf16.msra.mxu0 0
        %2628 = vmatprep.subr.bf16.mxu0 0
        %2629 = vmatpush1.bf16.msra.mxu0 0
        %2630 = vmatprep.subr.bf16.mxu0 0
        %2631 = vmatpush1.bf16.msra.mxu0 0
        %2632 = vmatprep.subr.bf16.mxu0 0
        %2633 = vmatpush1.bf16.msra.mxu0 0
        %2634 = vmatprep.subr.bf16.mxu0 0
        %2635 = vmatpush1.bf16.msra.mxu0 0
        %2636 = vmatprep.subr.bf16.mxu0 0
        %2637 = vmatpush1.bf16.msra.mxu0 0
        %2638 = vmatprep.subr.bf16.mxu0 0
        %2639 = vmatpush1.bf16.msra.mxu0 0
        %2640 = vmatprep.subr.bf16.mxu0 0
        %2641 = vmatpush1.bf16.msra.mxu0 0
        %2642 = vmatprep.subr.bf16.mxu0 0
        %2643 = vmatpush1.bf16.msra.mxu0 0
        %2644 = vmatprep.mubr.bf16.mxu0 0
        %2645 = vmatmul.mubr.bf16.gmra.mrb[0].mxu0 %v2610
        %v2646 = vpop.f32.mrb[0].mxu0
        %v2647 = vadd.f32 0.0, %v2646
        %v2648 = vpop.f32.mrb[0].mxu0
        %v2649 = vpop.f32.mrb[0].mxu0
        %v2650 = vpop.f32.mrb[0].mxu0
        %2651 = vdwg.mxu0
        %v2660 = vunpack.c.l.b16 %v2166
        %v2661 = vunpack.c.l.b16 %v2167
        %v2662 = vunpack.c.l.b16 %v2168
        %v2663 = vunpack.c.l.b16 %v2169
        %v2664 = vunpack.c.l.b16 %v2170
        %v2665 = vunpack.c.l.b16 %v2171
        %v2666 = vunpack.c.l.b16 %v2172
        %v2667 = vunpack.c.l.b16 %v2173
        %v2668 = vpack.c.b16 %v2661, %v2660
        %v2669 = vpack.c.b16 %v2663, %v2662
        %v2670 = vpack.c.b16 %v2665, %v2664
        %v2671 = vpack.c.b16 %v2667, %v2666
        %v2677 = vsel %vm2206, %v2109, 0
        %2679 = vmatprep.subr.bf16.mxu0 0
        %2680 = vmatpush1.bf16.msra.mxu0 %v2668
        %2681 = vmatprep.subr.bf16.mxu0 0
        %2682 = vmatpush1.bf16.msra.mxu0 %v2669
        %2683 = vmatprep.subr.bf16.mxu0 0
        %2684 = vmatpush1.bf16.msra.mxu0 %v2670
        %2685 = vmatprep.subr.bf16.mxu0 0
        %2686 = vmatpush1.bf16.msra.mxu0 %v2671
        %2687 = vmatprep.subr.bf16.mxu0 0
        %2688 = vmatpush1.bf16.msra.mxu0 0
        %2689 = vmatprep.subr.bf16.mxu0 0
        %2690 = vmatpush1.bf16.msra.mxu0 0
        %2691 = vmatprep.subr.bf16.mxu0 0
        %2692 = vmatpush1.bf16.msra.mxu0 0
        %2693 = vmatprep.subr.bf16.mxu0 0
        %2694 = vmatpush1.bf16.msra.mxu0 0
        %2695 = vmatprep.subr.bf16.mxu0 0
        %2696 = vmatpush1.bf16.msra.mxu0 0
        %2697 = vmatprep.subr.bf16.mxu0 0
        %2698 = vmatpush1.bf16.msra.mxu0 0
        %2699 = vmatprep.subr.bf16.mxu0 0
        %2700 = vmatpush1.bf16.msra.mxu0 0
        %2701 = vmatprep.subr.bf16.mxu0 0
        %2702 = vmatpush1.bf16.msra.mxu0 0
        %2703 = vmatprep.subr.bf16.mxu0 0
        %2704 = vmatpush1.bf16.msra.mxu0 0
        %2705 = vmatprep.subr.bf16.mxu0 0
        %2706 = vmatpush1.bf16.msra.mxu0 0
        %2707 = vmatprep.subr.bf16.mxu0 0
        %2708 = vmatpush1.bf16.msra.mxu0 0
        %2709 = vmatprep.subr.bf16.mxu0 0
        %2710 = vmatpush1.bf16.msra.mxu0 0
        %2711 = vmatprep.mubr.bf16.mxu0 0
        %2712 = vmatmul.mubr.bf16.gmra.mrb[0].mxu0 %v2677
        %v2713 = vpop.f32.mrb[0].mxu0
        %v2714 = vadd.f32 0.0, %v2713
        %v2715 = vpop.f32.mrb[0].mxu0
        %v2716 = vpop.f32.mrb[0].mxu0
        %v2717 = vpop.f32.mrb[0].mxu0
        %2718 = vdwg.mxu0
        %v2719 = vmul.f32 %v2245, 0.125
        %v2720 = vmul.f32 %v2312, 0.125
        %v2721 = vmul.f32 %v2379, 0.125
        %v2722 = vmul.f32 %v2446, 0.125
        %v2723 = vmul.f32 %v2513, 0.125
        %v2724 = vmul.f32 %v2580, 0.125
        %v2725 = vmul.f32 %v2647, 0.125
        %v2726 = vmul.f32 %v2714, 0.125
        %v2727 = vld [vmem:[%s727] sm:$0x3]
        %v2728 = vunpack.c.0.s8 %v2727
        %v2729 = vcvt.s32.f32 %v2728
        %v2730 = vmul.f32 %v2729, -1e+09
        %v2731 = vadd.f32 %v2719, %v2730
        %v2732 = vadd.f32 %v2720, %v2730
        %v2733 = vadd.f32 %v2721, %v2730
        %v2734 = vadd.f32 %v2722, %v2730
        %v2735 = vadd.f32 %v2723, %v2730
        %v2736 = vadd.f32 %v2724, %v2730
        %v2737 = vadd.f32 %v2725, %v2730
        %v2738 = vadd.f32 %v2726, %v2730
        %vm2739 = vcmask 64512
        %v2740 = vsel %vm2739, %v2731, -inf
        %2741 = vmax.xlane.f32.xlu0 %v2740
        %v2742 = vpop.xlane.xlu0 %2741
        %v2743 = vsel %vm2739, %v2732, -inf
        %2744 = vmax.xlane.f32.xlu0 %v2743
        %v2745 = vpop.xlane.xlu0 %2744
        %v2746 = vsel %vm2739, %v2733, -inf
        %2747 = vmax.xlane.f32.xlu0 %v2746
        %v2748 = vpop.xlane.xlu0 %2747
        %v2749 = vsel %vm2739, %v2734, -inf
        %2750 = vmax.xlane.f32.xlu0 %v2749
        %v2751 = vpop.xlane.xlu0 %2750
        %v2752 = vsel %vm2739, %v2735, -inf
        %2753 = vmax.xlane.f32.xlu0 %v2752
        %v2754 = vpop.xlane.xlu0 %2753
        %v2755 = vsel %vm2739, %v2736, -inf
        %2756 = vmax.xlane.f32.xlu0 %v2755
        %v2757 = vpop.xlane.xlu0 %2756
        %v2758 = vsel %vm2739, %v2737, -inf
        %2759 = vmax.xlane.f32.xlu0 %v2758
        %v2760 = vpop.xlane.xlu0 %2759
        %v2761 = vsel %vm2739, %v2738, -inf
        %2762 = vmax.xlane.f32.xlu0 %v2761
        %v2763 = vpop.xlane.xlu0 %2762
        %v2764 = vsub.f32 %v2731, %v2742
        %v2765 = vsub.f32 %v2732, %v2745
        %v2766 = vsub.f32 %v2733, %v2748
        %v2767 = vsub.f32 %v2734, %v2751
        %v2768 = vsub.f32 %v2735, %v2754
        %v2769 = vsub.f32 %v2736, %v2757
        %v2770 = vsub.f32 %v2737, %v2760
        %v2771 = vsub.f32 %v2738, %v2763
        %v2772 = vmul.f32 %v2764, 1.442695
        %v2773 = vpow.pop %v2772
        %v2774 = vmul.f32 %v2765, 1.442695
        %v2775 = vpow.pop %v2774
        %v2776 = vmul.f32 %v2766, 1.442695
        %v2777 = vpow.pop %v2776
        %v2778 = vmul.f32 %v2767, 1.442695
        %v2779 = vpow.pop %v2778
        %v2780 = vmul.f32 %v2768, 1.442695
        %v2781 = vpow.pop %v2780
        %v2782 = vmul.f32 %v2769, 1.442695
        %v2783 = vpow.pop %v2782
        %v2784 = vmul.f32 %v2770, 1.442695
        %v2785 = vpow.pop %v2784
        %v2786 = vmul.f32 %v2771, 1.442695
        %v2787 = vpow.pop %v2786
        %v2788 = vsel %vm2739, %v2773, 0.0
        %2789 = vadd.xlane.f32.xlu0 %v2788
        %v2790 = vpop.xlane.xlu0 %2789
        %v2791 = vsel %vm2739, %v2775, 0.0
        %2792 = vadd.xlane.f32.xlu0 %v2791
        %v2793 = vpop.xlane.xlu0 %2792
        %v2794 = vsel %vm2739, %v2777, 0.0
        %2795 = vadd.xlane.f32.xlu0 %v2794
        %v2796 = vpop.xlane.xlu0 %2795
        %v2797 = vsel %vm2739, %v2779, 0.0
        %2798 = vadd.xlane.f32.xlu0 %v2797
        %v2799 = vpop.xlane.xlu0 %2798
        %v2800 = vsel %vm2739, %v2781, 0.0
        %2801 = vadd.xlane.f32.xlu0 %v2800
        %v2802 = vpop.xlane.xlu0 %2801
        %v2803 = vsel %vm2739, %v2783, 0.0
        %2804 = vadd.xlane.f32.xlu0 %v2803
        %v2805 = vpop.xlane.xlu0 %2804
        %v2806 = vsel %vm2739, %v2785, 0.0
        %2807 = vadd.xlane.f32.xlu0 %v2806
        %v2808 = vpop.xlane.xlu0 %2807
        %v2809 = vsel %vm2739, %v2787, 0.0
        %2810 = vadd.xlane.f32.xlu0 %v2809
        %v2811 = vpop.xlane.xlu0 %2810
        %v2812 = vrcp.pop %v2790
        %v2813 = vrcp.pop %v2793
        %v2814 = vrcp.pop %v2796
        %v2815 = vrcp.pop %v2799
        %v2816 = vrcp.pop %v2802
        %v2817 = vrcp.pop %v2805
        %v2818 = vrcp.pop %v2808
        %v2819 = vrcp.pop %v2811
        %v2820 = vmul.f32 %v2773, %v2812
        %v2821 = vmul.f32 %v2775, %v2813
        %v2822 = vmul.f32 %v2777, %v2814
        %v2823 = vmul.f32 %v2779, %v2815
        %v2824 = vmul.f32 %v2781, %v2816
        %v2825 = vmul.f32 %v2783, %v2817
        %v2826 = vmul.f32 %v2785, %v2818
        %v2827 = vmul.f32 %v2787, %v2819
        %v2828 = vpack.c.bf16 %v2820, %v2820
        %v2829 = vpack.c.bf16 %v2821, %v2821
        %v2830 = vpack.c.bf16 %v2822, %v2822
        %v2831 = vpack.c.bf16 %v2823, %v2823
        %v2832 = vpack.c.bf16 %v2824, %v2824
        %v2833 = vpack.c.bf16 %v2825, %v2825
        %v2834 = vpack.c.bf16 %v2826, %v2826
        %v2835 = vpack.c.bf16 %v2827, %v2827
        %vm2836 = vcmask 60416
        %2837 = vst.msk [vmem:[%s845] sm:$0xf] %vm2836, %v2828
        %2838 = vst.msk [vmem:[%s845 + $0x4] sm:$0xf] %vm2836, %v2829
        %2839 = vst.msk [vmem:[%s845 + $0x8] sm:$0xf] %vm2836, %v2830
        %2840 = vst.msk [vmem:[%s845 + $0xc] sm:$0xf] %vm2836, %v2831
        %2841 = vst.msk [vmem:[%s845 + $0x10] sm:$0xf] %vm2836, %v2832
        %2842 = vst.msk [vmem:[%s845 + $0x14] sm:$0xf] %vm2836, %v2833
        %2843 = vst.msk [vmem:[%s845 + $0x18] sm:$0xf] %vm2836, %v2834
        %2844 = vst.msk [vmem:[%s845 + $0x1c] sm:$0xf] %vm2836, %v2835
        %v2846 = vsel %vm2739, %v2828, 0
        %vm2848 = vcmask 1043456
        %v2850 = vsel %vm2848, %v2174, 0
        %2852 = vmatprep.subr.bf16.mxu0 0
        %2853 = vmatpush1.bf16.msra.mxu0 %v2850
        %2854 = vmatprep.subr.bf16.mxu0 0
        %2855 = vmatpush1.bf16.msra.mxu0 0
        %2856 = vmatprep.subr.bf16.mxu0 0
        %2857 = vmatpush1.bf16.msra.mxu0 0
        %2858 = vmatprep.subr.bf16.mxu0 0
        %2859 = vmatpush1.bf16.msra.mxu0 0
        %2860 = vmatprep.subr.bf16.mxu0 0
        %2861 = vmatpush1.bf16.msra.mxu0 0
        %2862 = vmatprep.subr.bf16.mxu0 0
        %2863 = vmatpush1.bf16.msra.mxu0 0
        %2864 = vmatprep.subr.bf16.mxu0 0
        %2865 = vmatpush1.bf16.msra.mxu0 0
        %2866 = vmatprep.subr.bf16.mxu0 0
        %2867 = vmatpush1.bf16.msra.mxu0 0
        %2868 = vmatprep.subr.bf16.mxu0 0
        %2869 = vmatpush1.bf16.msra.mxu0 0
        %2870 = vmatprep.subr.bf16.mxu0 0
        %2871 = vmatpush1.bf16.msra.mxu0 0
        %2872 = vmatprep.subr.bf16.mxu0 0
        %2873 = vmatpush1.bf16.msra.mxu0 0
        %2874 = vmatprep.subr.bf16.mxu0 0
        %2875 = vmatpush1.bf16.msra.mxu0 0
        %2876 = vmatprep.subr.bf16.mxu0 0
        %2877 = vmatpush1.bf16.msra.mxu0 0
        %2878 = vmatprep.subr.bf16.mxu0 0
        %2879 = vmatpush1.bf16.msra.mxu0 0
        %2880 = vmatprep.subr.bf16.mxu0 0
        %2881 = vmatpush1.bf16.msra.mxu0 0
        %2882 = vmatprep.subr.bf16.mxu0 0
        %2883 = vmatpush1.bf16.msra.mxu0 0
        %2884 = vmatprep.mubr.bf16.mxu0 0
        %2885 = vmatmul.mubr.bf16.gmra.mrb[0].mxu0 %v2846
        %v2886 = vpop.f32.mrb[0].mxu0
        %v2887 = vadd.f32 0.0, %v2886
        %v2888 = vpop.f32.mrb[0].mxu0
        %v2889 = vpop.f32.mrb[0].mxu0
        %v2890 = vpop.f32.mrb[0].mxu0
        %2891 = vdwg.mxu0
        %v2893 = vsel %vm2739, %v2829, 0
        %v2896 = vsel %vm2848, %v2175, 0
        %2898 = vmatprep.subr.bf16.mxu0 0
        %2899 = vmatpush1.bf16.msra.mxu0 %v2896
        %2900 = vmatprep.subr.bf16.mxu0 0
        %2901 = vmatpush1.bf16.msra.mxu0 0
        %2902 = vmatprep.subr.bf16.mxu0 0
        %2903 = vmatpush1.bf16.msra.mxu0 0
        %2904 = vmatprep.subr.bf16.mxu0 0
        %2905 = vmatpush1.bf16.msra.mxu0 0
        %2906 = vmatprep.subr.bf16.mxu0 0
        %2907 = vmatpush1.bf16.msra.mxu0 0
        %2908 = vmatprep.subr.bf16.mxu0 0
        %2909 = vmatpush1.bf16.msra.mxu0 0
        %2910 = vmatprep.subr.bf16.mxu0 0
        %2911 = vmatpush1.bf16.msra.mxu0 0
        %2912 = vmatprep.subr.bf16.mxu0 0
        %2913 = vmatpush1.bf16.msra.mxu0 0
        %2914 = vmatprep.subr.bf16.mxu0 0
        %2915 = vmatpush1.bf16.msra.mxu0 0
        %2916 = vmatprep.subr.bf16.mxu0 0
        %2917 = vmatpush1.bf16.msra.mxu0 0
        %2918 = vmatprep.subr.bf16.mxu0 0
        %2919 = vmatpush1.bf16.msra.mxu0 0
        %2920 = vmatprep.subr.bf16.mxu0 0
        %2921 = vmatpush1.bf16.msra.mxu0 0
        %2922 = vmatprep.subr.bf16.mxu0 0
        %2923 = vmatpush1.bf16.msra.mxu0 0
        %2924 = vmatprep.subr.bf16.mxu0 0
        %2925 = vmatpush1.bf16.msra.mxu0 0
        %2926 = vmatprep.subr.bf16.mxu0 0
        %2927 = vmatpush1.bf16.msra.mxu0 0
        %2928 = vmatprep.subr.bf16.mxu0 0
        %2929 = vmatpush1.bf16.msra.mxu0 0
        %2930 = vmatprep.mubr.bf16.mxu0 0
        %2931 = vmatmul.mubr.bf16.gmra.mrb[0].mxu0 %v2893
        %v2932 = vpop.f32.mrb[0].mxu0
        %v2933 = vadd.f32 0.0, %v2932
        %v2934 = vpop.f32.mrb[0].mxu0
        %v2935 = vpop.f32.mrb[0].mxu0
        %v2936 = vpop.f32.mrb[0].mxu0
        %2937 = vdwg.mxu0
        %v2939 = vsel %vm2739, %v2830, 0
        %v2942 = vsel %vm2848, %v2176, 0
        %2944 = vmatprep.subr.bf16.mxu0 0
        %2945 = vmatpush1.bf16.msra.mxu0 %v2942
        %2946 = vmatprep.subr.bf16.mxu0 0
        %2947 = vmatpush1.bf16.msra.mxu0 0
        %2948 = vmatprep.subr.bf16.mxu0 0
        %2949 = vmatpush1.bf16.msra.mxu0 0
        %2950 = vmatprep.subr.bf16.mxu0 0
        %2951 = vmatpush1.bf16.msra.mxu0 0
        %2952 = vmatprep.subr.bf16.mxu0 0
        %2953 = vmatpush1.bf16.msra.mxu0 0
        %2954 = vmatprep.subr.bf16.mxu0 0
        %2955 = vmatpush1.bf16.msra.mxu0 0
        %2956 = vmatprep.subr.bf16.mxu0 0
        %2957 = vmatpush1.bf16.msra.mxu0 0
        %2958 = vmatprep.subr.bf16.mxu0 0
        %2959 = vmatpush1.bf16.msra.mxu0 0
        %2960 = vmatprep.subr.bf16.mxu0 0
        %2961 = vmatpush1.bf16.msra.mxu0 0
        %2962 = vmatprep.subr.bf16.mxu0 0
        %2963 = vmatpush1.bf16.msra.mxu0 0
        %2964 = vmatprep.subr.bf16.mxu0 0
        %2965 = vmatpush1.bf16.msra.mxu0 0
        %2966 = vmatprep.subr.bf16.mxu0 0
        %2967 = vmatpush1.bf16.msra.mxu0 0
        %2968 = vmatprep.subr.bf16.mxu0 0
        %2969 = vmatpush1.bf16.msra.mxu0 0
        %2970 = vmatprep.subr.bf16.mxu0 0
        %2971 = vmatpush1.bf16.msra.mxu0 0
        %2972 = vmatprep.subr.bf16.mxu0 0
        %2973 = vmatpush1.bf16.msra.mxu0 0
        %2974 = vmatprep.subr.bf16.mxu0 0
        %2975 = vmatpush1.bf16.msra.mxu0 0
        %2976 = vmatprep.mubr.bf16.mxu0 0
        %2977 = vmatmul.mubr.bf16.gmra.mrb[0].mxu0 %v2939
        %v2978 = vpop.f32.mrb[0].mxu0
        %v2979 = vadd.f32 0.0, %v2978
        %v2980 = vpop.f32.mrb[0].mxu0
        %v2981 = vpop.f32.mrb[0].mxu0
        %v2982 = vpop.f32.mrb[0].mxu0
        %2983 = vdwg.mxu0
        %v2985 = vsel %vm2739, %v2831, 0
        %v2988 = vsel %vm2848, %v2177, 0
        %2990 = vmatprep.subr.bf16.mxu0 0
        %2991 = vmatpush1.bf16.msra.mxu0 %v2988
        %2992 = vmatprep.subr.bf16.mxu0 0
        %2993 = vmatpush1.bf16.msra.mxu0 0
        %2994 = vmatprep.subr.bf16.mxu0 0
        %2995 = vmatpush1.bf16.msra.mxu0 0
        %2996 = vmatprep.subr.bf16.mxu0 0
        %2997 = vmatpush1.bf16.msra.mxu0 0
        %2998 = vmatprep.subr.bf16.mxu0 0
        %2999 = vmatpush1.bf16.msra.mxu0 0
        %3000 = vmatprep.subr.bf16.mxu0 0
        %3001 = vmatpush1.bf16.msra.mxu0 0
        %3002 = vmatprep.subr.bf16.mxu0 0
        %3003 = vmatpush1.bf16.msra.mxu0 0
        %3004 = vmatprep.subr.bf16.mxu0 0
        %3005 = vmatpush1.bf16.msra.mxu0 0
        %3006 = vmatprep.subr.bf16.mxu0 0
        %3007 = vmatpush1.bf16.msra.mxu0 0
        %3008 = vmatprep.subr.bf16.mxu0 0
        %3009 = vmatpush1.bf16.msra.mxu0 0
        %3010 = vmatprep.subr.bf16.mxu0 0
        %3011 = vmatpush1.bf16.msra.mxu0 0
        %3012 = vmatprep.subr.bf16.mxu0 0
        %3013 = vmatpush1.bf16.msra.mxu0 0
        %3014 = vmatprep.subr.bf16.mxu0 0
        %3015 = vmatpush1.bf16.msra.mxu0 0
        %3016 = vmatprep.subr.bf16.mxu0 0
        %3017 = vmatpush1.bf16.msra.mxu0 0
        %3018 = vmatprep.subr.bf16.mxu0 0
        %3019 = vmatpush1.bf16.msra.mxu0 0
        %3020 = vmatprep.subr.bf16.mxu0 0
        %3021 = vmatpush1.bf16.msra.mxu0 0
        %3022 = vmatprep.mubr.bf16.mxu0 0
        %3023 = vmatmul.mubr.bf16.gmra.mrb[0].mxu0 %v2985
        %v3024 = vpop.f32.mrb[0].mxu0
        %v3025 = vadd.f32 0.0, %v3024
        %v3026 = vpop.f32.mrb[0].mxu0
        %v3027 = vpop.f32.mrb[0].mxu0
        %v3028 = vpop.f32.mrb[0].mxu0
        %3029 = vdwg.mxu0
        %v3031 = vsel %vm2739, %v2832, 0
        %v3034 = vsel %vm2848, %v2178, 0
        %3036 = vmatprep.subr.bf16.mxu0 0
        %3037 = vmatpush1.bf16.msra.mxu0 %v3034
        %3038 = vmatprep.subr.bf16.mxu0 0
        %3039 = vmatpush1.bf16.msra.mxu0 0
        %3040 = vmatprep.subr.bf16.mxu0 0
        %3041 = vmatpush1.bf16.msra.mxu0 0
        %3042 = vmatprep.subr.bf16.mxu0 0
        %3043 = vmatpush1.bf16.msra.mxu0 0
        %3044 = vmatprep.subr.bf16.mxu0 0
        %3045 = vmatpush1.bf16.msra.mxu0 0
        %3046 = vmatprep.subr.bf16.mxu0 0
        %3047 = vmatpush1.bf16.msra.mxu0 0
        %3048 = vmatprep.subr.bf16.mxu0 0
        %3049 = vmatpush1.bf16.msra.mxu0 0
        %3050 = vmatprep.subr.bf16.mxu0 0
        %3051 = vmatpush1.bf16.msra.mxu0 0
        %3052 = vmatprep.subr.bf16.mxu0 0
        %3053 = vmatpush1.bf16.msra.mxu0 0
        %3054 = vmatprep.subr.bf16.mxu0 0
        %3055 = vmatpush1.bf16.msra.mxu0 0
        %3056 = vmatprep.subr.bf16.mxu0 0
        %3057 = vmatpush1.bf16.msra.mxu0 0
        %3058 = vmatprep.subr.bf16.mxu0 0
        %3059 = vmatpush1.bf16.msra.mxu0 0
        %3060 = vmatprep.subr.bf16.mxu0 0
        %3061 = vmatpush1.bf16.msra.mxu0 0
        %3062 = vmatprep.subr.bf16.mxu0 0
        %3063 = vmatpush1.bf16.msra.mxu0 0
        %3064 = vmatprep.subr.bf16.mxu0 0
        %3065 = vmatpush1.bf16.msra.mxu0 0
        %3066 = vmatprep.subr.bf16.mxu0 0
        %3067 = vmatpush1.bf16.msra.mxu0 0
        %3068 = vmatprep.mubr.bf16.mxu0 0
        %3069 = vmatmul.mubr.bf16.gmra.mrb[0].mxu0 %v3031
        %v3070 = vpop.f32.mrb[0].mxu0
        %v3071 = vadd.f32 0.0, %v3070
        %v3072 = vpop.f32.mrb[0].mxu0
        %v3073 = vpop.f32.mrb[0].mxu0
        %v3074 = vpop.f32.mrb[0].mxu0
        %3075 = vdwg.mxu0
        %v3077 = vsel %vm2739, %v2833, 0
        %v3080 = vsel %vm2848, %v2179, 0
        %3082 = vmatprep.subr.bf16.mxu0 0
        %3083 = vmatpush1.bf16.msra.mxu0 %v3080
        %3084 = vmatprep.subr.bf16.mxu0 0
        %3085 = vmatpush1.bf16.msra.mxu0 0
        %3086 = vmatprep.subr.bf16.mxu0 0
        %3087 = vmatpush1.bf16.msra.mxu0 0
        %3088 = vmatprep.subr.bf16.mxu0 0
        %3089 = vmatpush1.bf16.msra.mxu0 0
        %3090 = vmatprep.subr.bf16.mxu0 0
        %3091 = vmatpush1.bf16.msra.mxu0 0
        %3092 = vmatprep.subr.bf16.mxu0 0
        %3093 = vmatpush1.bf16.msra.mxu0 0
        %3094 = vmatprep.subr.bf16.mxu0 0
        %3095 = vmatpush1.bf16.msra.mxu0 0
        %3096 = vmatprep.subr.bf16.mxu0 0
        %3097 = vmatpush1.bf16.msra.mxu0 0
        %3098 = vmatprep.subr.bf16.mxu0 0
        %3099 = vmatpush1.bf16.msra.mxu0 0
        %3100 = vmatprep.subr.bf16.mxu0 0
        %3101 = vmatpush1.bf16.msra.mxu0 0
        %3102 = vmatprep.subr.bf16.mxu0 0
        %3103 = vmatpush1.bf16.msra.mxu0 0
        %3104 = vmatprep.subr.bf16.mxu0 0
        %3105 = vmatpush1.bf16.msra.mxu0 0
        %3106 = vmatprep.subr.bf16.mxu0 0
        %3107 = vmatpush1.bf16.msra.mxu0 0
        %3108 = vmatprep.subr.bf16.mxu0 0
        %3109 = vmatpush1.bf16.msra.mxu0 0
        %3110 = vmatprep.subr.bf16.mxu0 0
        %3111 = vmatpush1.bf16.msra.mxu0 0
        %3112 = vmatprep.subr.bf16.mxu0 0
        %3113 = vmatpush1.bf16.msra.mxu0 0
        %3114 = vmatprep.mubr.bf16.mxu0 0
        %3115 = vmatmul.mubr.bf16.gmra.mrb[0].mxu0 %v3077
        %v3116 = vpop.f32.mrb[0].mxu0
        %v3117 = vadd.f32 0.0, %v3116
        %v3118 = vpop.f32.mrb[0].mxu0
        %v3119 = vpop.f32.mrb[0].mxu0
        %v3120 = vpop.f32.mrb[0].mxu0
        %3121 = vdwg.mxu0
        %v3123 = vsel %vm2739, %v2834, 0
        %v3126 = vsel %vm2848, %v2180, 0
        %3128 = vmatprep.subr.bf16.mxu0 0
        %3129 = vmatpush1.bf16.msra.mxu0 %v3126
        %3130 = vmatprep.subr.bf16.mxu0 0
        %3131 = vmatpush1.bf16.msra.mxu0 0
        %3132 = vmatprep.subr.bf16.mxu0 0
        %3133 = vmatpush1.bf16.msra.mxu0 0
        %3134 = vmatprep.subr.bf16.mxu0 0
        %3135 = vmatpush1.bf16.msra.mxu0 0
        %3136 = vmatprep.subr.bf16.mxu0 0
        %3137 = vmatpush1.bf16.msra.mxu0 0
        %3138 = vmatprep.subr.bf16.mxu0 0
        %3139 = vmatpush1.bf16.msra.mxu0 0
        %3140 = vmatprep.subr.bf16.mxu0 0
        %3141 = vmatpush1.bf16.msra.mxu0 0
        %3142 = vmatprep.subr.bf16.mxu0 0
        %3143 = vmatpush1.bf16.msra.mxu0 0
        %3144 = vmatprep.subr.bf16.mxu0 0
        %3145 = vmatpush1.bf16.msra.mxu0 0
        %3146 = vmatprep.subr.bf16.mxu0 0
        %3147 = vmatpush1.bf16.msra.mxu0 0
        %3148 = vmatprep.subr.bf16.mxu0 0
        %3149 = vmatpush1.bf16.msra.mxu0 0
        %3150 = vmatprep.subr.bf16.mxu0 0
        %3151 = vmatpush1.bf16.msra.mxu0 0
        %3152 = vmatprep.subr.bf16.mxu0 0
        %3153 = vmatpush1.bf16.msra.mxu0 0
        %3154 = vmatprep.subr.bf16.mxu0 0
        %3155 = vmatpush1.bf16.msra.mxu0 0
        %3156 = vmatprep.subr.bf16.mxu0 0
        %3157 = vmatpush1.bf16.msra.mxu0 0
        %3158 = vmatprep.subr.bf16.mxu0 0
        %3159 = vmatpush1.bf16.msra.mxu0 0
        %3160 = vmatprep.mubr.bf16.mxu0 0
        %3161 = vmatmul.mubr.bf16.gmra.mrb[0].mxu0 %v3123
        %v3162 = vpop.f32.mrb[0].mxu0
        %v3163 = vadd.f32 0.0, %v3162
        %v3164 = vpop.f32.mrb[0].mxu0
        %v3165 = vpop.f32.mrb[0].mxu0
        %v3166 = vpop.f32.mrb[0].mxu0
        %3167 = vdwg.mxu0
        %v3169 = vsel %vm2739, %v2835, 0
        %v3172 = vsel %vm2848, %v2181, 0
        %3174 = vmatprep.subr.bf16.mxu0 0
        %3175 = vmatpush1.bf16.msra.mxu0 %v3172
        %3176 = vmatprep.subr.bf16.mxu0 0
        %3177 = vmatpush1.bf16.msra.mxu0 0
        %3178 = vmatprep.subr.bf16.mxu0 0
        %3179 = vmatpush1.bf16.msra.mxu0 0
        %3180 = vmatprep.subr.bf16.mxu0 0
        %3181 = vmatpush1.bf16.msra.mxu0 0
        %3182 = vmatprep.subr.bf16.mxu0 0
        %3183 = vmatpush1.bf16.msra.mxu0 0
        %3184 = vmatprep.subr.bf16.mxu0 0
        %3185 = vmatpush1.bf16.msra.mxu0 0
        %3186 = vmatprep.subr.bf16.mxu0 0
        %3187 = vmatpush1.bf16.msra.mxu0 0
        %3188 = vmatprep.subr.bf16.mxu0 0
        %3189 = vmatpush1.bf16.msra.mxu0 0
        %3190 = vmatprep.subr.bf16.mxu0 0
        %3191 = vmatpush1.bf16.msra.mxu0 0
        %3192 = vmatprep.subr.bf16.mxu0 0
        %3193 = vmatpush1.bf16.msra.mxu0 0
        %3194 = vmatprep.subr.bf16.mxu0 0
        %3195 = vmatpush1.bf16.msra.mxu0 0
        %3196 = vmatprep.subr.bf16.mxu0 0
        %3197 = vmatpush1.bf16.msra.mxu0 0
        %3198 = vmatprep.subr.bf16.mxu0 0
        %3199 = vmatpush1.bf16.msra.mxu0 0
        %3200 = vmatprep.subr.bf16.mxu0 0
        %3201 = vmatpush1.bf16.msra.mxu0 0
        %3202 = vmatprep.subr.bf16.mxu0 0
        %3203 = vmatpush1.bf16.msra.mxu0 0
        %3204 = vmatprep.subr.bf16.mxu0 0
        %3205 = vmatpush1.bf16.msra.mxu0 0
        %3206 = vmatprep.mubr.bf16.mxu0 0
        %3207 = vmatmul.mubr.bf16.gmra.mrb[0].mxu0 %v3169
        %v3208 = vpop.f32.mrb[0].mxu0
        %v3209 = vadd.f32 0.0, %v3208
        %v3210 = vpop.f32.mrb[0].mxu0
        %v3211 = vpop.f32.mrb[0].mxu0
        %v3212 = vpop.f32.mrb[0].mxu0
        %3213 = vdwg.mxu0
        %v3214 = vcombine.low %v2887, %v2979
        %v3215 = vcombine.high %v2887, %v2979
        %v3217 = vunpack.c.l.s4 1983009808
        %v3218 = vunpack.c.0.s8 %v3217
        %v3219 = vlaneseq
        %v3220 = vshrl.u32 %v3219, 7
        %v3221 = vsub.s32 %v3218, %v3220
        %v3222 = vrot.slane %v3214, %v3221
        %v3224 = vunpack.c.l.s4 1983009808
        %v3225 = vunpack.c.0.s8 %v3224
        %v3226 = vlaneseq
        %v3227 = vshrl.u32 %v3226, 7
        %v3228 = vsub.s32 %v3225, %v3227
        %v3229 = vrot.slane %v3215, %v3228
        %v3230 = vcombine.low %v2933, %v3025
        %v3231 = vcombine.high %v2933, %v3025
        %v3233 = vunpack.c.l.s4 1983009808
        %v3234 = vunpack.c.0.s8 %v3233
        %v3235 = vlaneseq
        %v3236 = vshrl.u32 %v3235, 7
        %v3237 = vsub.s32 %v3234, %v3236
        %v3238 = vrot.slane %v3230, %v3237
        %v3240 = vunpack.c.l.s4 1983009808
        %v3241 = vunpack.c.0.s8 %v3240
        %v3242 = vlaneseq
        %v3243 = vshrl.u32 %v3242, 7
        %v3244 = vsub.s32 %v3241, %v3243
        %v3245 = vrot.slane %v3231, %v3244
        %v3246 = vcombine.low %v3071, %v3163
        %v3247 = vcombine.high %v3071, %v3163
        %v3249 = vunpack.c.l.s4 1983009808
        %v3250 = vunpack.c.0.s8 %v3249
        %v3251 = vlaneseq
        %v3252 = vshrl.u32 %v3251, 7
        %v3253 = vsub.s32 %v3250, %v3252
        %v3254 = vrot.slane %v3246, %v3253
        %v3256 = vunpack.c.l.s4 1983009808
        %v3257 = vunpack.c.0.s8 %v3256
        %v3258 = vlaneseq
        %v3259 = vshrl.u32 %v3258, 7
        %v3260 = vsub.s32 %v3257, %v3259
        %v3261 = vrot.slane %v3247, %v3260
        %v3262 = vcombine.low %v3117, %v3209
        %v3263 = vcombine.high %v3117, %v3209
        %v3265 = vunpack.c.l.s4 1983009808
        %v3266 = vunpack.c.0.s8 %v3265
        %v3267 = vlaneseq
        %v3268 = vshrl.u32 %v3267, 7
        %v3269 = vsub.s32 %v3266, %v3268
        %v3270 = vrot.slane %v3262, %v3269
        %v3272 = vunpack.c.l.s4 1983009808
        %v3273 = vunpack.c.0.s8 %v3272
        %v3274 = vlaneseq
        %v3275 = vshrl.u32 %v3274, 7
        %v3276 = vsub.s32 %v3273, %v3275
        %v3277 = vrot.slane %v3263, %v3276
        %v3278 = vcombine.low %v3222, %v3238
        %v3279 = vcombine.high %v3222, %v3238
        %v3281 = vunpack.c.l.s4 1934713408
        %v3282 = vunpack.c.0.s8 %v3281
        %v3283 = vlaneseq
        %v3284 = vshrl.u32 %v3283, 7
        %v3285 = vsub.s32 %v3282, %v3284
        %v3286 = vrot.slane %v3278, %v3285
        %v3288 = vunpack.c.l.s4 1934713408
        %v3289 = vunpack.c.0.s8 %v3288
        %v3290 = vlaneseq
        %v3291 = vshrl.u32 %v3290, 7
        %v3292 = vsub.s32 %v3289, %v3291
        %v3293 = vrot.slane %v3279, %v3292
        %v3294 = vcombine.low %v3229, %v3245
        %v3295 = vcombine.high %v3229, %v3245
        %v3297 = vunpack.c.l.s4 1934713408
        %v3298 = vunpack.c.0.s8 %v3297
        %v3299 = vlaneseq
        %v3300 = vshrl.u32 %v3299, 7
        %v3301 = vsub.s32 %v3298, %v3300
        %v3302 = vrot.slane %v3294, %v3301
        %v3304 = vunpack.c.l.s4 1934713408
        %v3305 = vunpack.c.0.s8 %v3304
        %v3306 = vlaneseq
        %v3307 = vshrl.u32 %v3306, 7
        %v3308 = vsub.s32 %v3305, %v3307
        %v3309 = vrot.slane %v3295, %v3308
        %v3310 = vcombine.low %v3254, %v3270
        %v3311 = vcombine.high %v3254, %v3270
        %v3313 = vunpack.c.l.s4 1934713408
        %v3314 = vunpack.c.0.s8 %v3313
        %v3315 = vlaneseq
        %v3316 = vshrl.u32 %v3315, 7
        %v3317 = vsub.s32 %v3314, %v3316
        %v3318 = vrot.slane %v3310, %v3317
        %v3320 = vunpack.c.l.s4 1934713408
        %v3321 = vunpack.c.0.s8 %v3320
        %v3322 = vlaneseq
        %v3323 = vshrl.u32 %v3322, 7
        %v3324 = vsub.s32 %v3321, %v3323
        %v3325 = vrot.slane %v3311, %v3324
        %v3326 = vcombine.low %v3261, %v3277
        %v3327 = vcombine.high %v3261, %v3277
        %v3329 = vunpack.c.l.s4 1934713408
        %v3330 = vunpack.c.0.s8 %v3329
        %v3331 = vlaneseq
        %v3332 = vshrl.u32 %v3331, 7
        %v3333 = vsub.s32 %v3330, %v3332
        %v3334 = vrot.slane %v3326, %v3333
        %v3336 = vunpack.c.l.s4 1934713408
        %v3337 = vunpack.c.0.s8 %v3336
        %v3338 = vlaneseq
        %v3339 = vshrl.u32 %v3338, 7
        %v3340 = vsub.s32 %v3337, %v3339
        %v3341 = vrot.slane %v3327, %v3340
        %v3342 = vcombine.low %v3286, %v3318
        %v3343 = vcombine.high %v3286, %v3318
        %v3344 = vcombine.low %v3293, %v3325
        %v3345 = vcombine.high %v3293, %v3325
        %v3346 = vcombine.low %v3302, %v3334
        %v3347 = vcombine.high %v3302, %v3334
        %v3348 = vcombine.low %v3309, %v3341
        %v3349 = vcombine.high %v3309, %v3341
        %v3350 = vcombine.low %v3342, %v3344
        %v3351 = vcombine.high %v3342, %v3344
        %v3353 = vunpack.c.l.s4 1983009808
        %v3354 = vunpack.c.0.s8 %v3353
        %v3355 = vlaneseq
        %v3356 = vshrl.u32 %v3355, 7
        %v3357 = vsub.s32 %v3354, %v3356
        %v3358 = vrot.slane %v3350, %v3357
        %v3360 = vunpack.c.l.s4 1983009808
        %v3361 = vunpack.c.0.s8 %v3360
        %v3362 = vlaneseq
        %v3363 = vshrl.u32 %v3362, 7
        %v3364 = vsub.s32 %v3361, %v3363
        %v3365 = vrot.slane %v3351, %v3364
        %v3366 = vcombine.low %v3343, %v3345
        %v3367 = vcombine.high %v3343, %v3345
        %v3369 = vunpack.c.l.s4 1983009808
        %v3370 = vunpack.c.0.s8 %v3369
        %v3371 = vlaneseq
        %v3372 = vshrl.u32 %v3371, 7
        %v3373 = vsub.s32 %v3370, %v3372
        %v3374 = vrot.slane %v3366, %v3373
        %v3376 = vunpack.c.l.s4 1983009808
        %v3377 = vunpack.c.0.s8 %v3376
        %v3378 = vlaneseq
        %v3379 = vshrl.u32 %v3378, 7
        %v3380 = vsub.s32 %v3377, %v3379
        %v3381 = vrot.slane %v3367, %v3380
        %v3382 = vcombine.low %v3346, %v3348
        %v3383 = vcombine.high %v3346, %v3348
        %v3385 = vunpack.c.l.s4 1983009808
        %v3386 = vunpack.c.0.s8 %v3385
        %v3387 = vlaneseq
        %v3388 = vshrl.u32 %v3387, 7
        %v3389 = vsub.s32 %v3386, %v3388
        %v3390 = vrot.slane %v3382, %v3389
        %v3392 = vunpack.c.l.s4 1983009808
        %v3393 = vunpack.c.0.s8 %v3392
        %v3394 = vlaneseq
        %v3395 = vshrl.u32 %v3394, 7
        %v3396 = vsub.s32 %v3393, %v3395
        %v3397 = vrot.slane %v3383, %v3396
        %v3398 = vcombine.low %v3347, %v3349
        %v3399 = vcombine.high %v3347, %v3349
        %v3401 = vunpack.c.l.s4 1983009808
        %v3402 = vunpack.c.0.s8 %v3401
        %v3403 = vlaneseq
        %v3404 = vshrl.u32 %v3403, 7
        %v3405 = vsub.s32 %v3402, %v3404
        %v3406 = vrot.slane %v3398, %v3405
        %v3408 = vunpack.c.l.s4 1983009808
        %v3409 = vunpack.c.0.s8 %v3408
        %v3410 = vlaneseq
        %v3411 = vshrl.u32 %v3410, 7
        %v3412 = vsub.s32 %v3409, %v3411
        %v3413 = vrot.slane %v3399, %v3412
        %v3414 = vcombine.low %v3358, %v3374
        %v3415 = vcombine.high %v3358, %v3374
        %v3417 = vunpack.c.l.s4 1934713408
        %v3418 = vunpack.c.0.s8 %v3417
        %v3419 = vlaneseq
        %v3420 = vshrl.u32 %v3419, 7
        %v3421 = vsub.s32 %v3418, %v3420
        %v3422 = vrot.slane %v3414, %v3421
        %v3424 = vunpack.c.l.s4 1934713408
        %v3425 = vunpack.c.0.s8 %v3424
        %v3426 = vlaneseq
        %v3427 = vshrl.u32 %v3426, 7
        %v3428 = vsub.s32 %v3425, %v3427
        %v3429 = vrot.slane %v3415, %v3428
        %v3430 = vcombine.low %v3365, %v3381
        %v3431 = vcombine.high %v3365, %v3381
        %v3433 = vunpack.c.l.s4 1934713408
        %v3434 = vunpack.c.0.s8 %v3433
        %v3435 = vlaneseq
        %v3436 = vshrl.u32 %v3435, 7
        %v3437 = vsub.s32 %v3434, %v3436
        %v3438 = vrot.slane %v3430, %v3437
        %v3440 = vunpack.c.l.s4 1934713408
        %v3441 = vunpack.c.0.s8 %v3440
        %v3442 = vlaneseq
        %v3443 = vshrl.u32 %v3442, 7
        %v3444 = vsub.s32 %v3441, %v3443
        %v3445 = vrot.slane %v3431, %v3444
        %v3446 = vcombine.low %v3390, %v3406
        %v3447 = vcombine.high %v3390, %v3406
        %v3449 = vunpack.c.l.s4 1934713408
        %v3450 = vunpack.c.0.s8 %v3449
        %v3451 = vlaneseq
        %v3452 = vshrl.u32 %v3451, 7
        %v3453 = vsub.s32 %v3450, %v3452
        %v3454 = vrot.slane %v3446, %v3453
        %v3456 = vunpack.c.l.s4 1934713408
        %v3457 = vunpack.c.0.s8 %v3456
        %v3458 = vlaneseq
        %v3459 = vshrl.u32 %v3458, 7
        %v3460 = vsub.s32 %v3457, %v3459
        %v3461 = vrot.slane %v3447, %v3460
        %v3462 = vcombine.low %v3397, %v3413
        %v3463 = vcombine.high %v3397, %v3413
        %v3465 = vunpack.c.l.s4 1934713408
        %v3466 = vunpack.c.0.s8 %v3465
        %v3467 = vlaneseq
        %v3468 = vshrl.u32 %v3467, 7
        %v3469 = vsub.s32 %v3466, %v3468
        %v3470 = vrot.slane %v3462, %v3469
        %v3472 = vunpack.c.l.s4 1934713408
        %v3473 = vunpack.c.0.s8 %v3472
        %v3474 = vlaneseq
        %v3475 = vshrl.u32 %v3474, 7
        %v3476 = vsub.s32 %v3473, %v3475
        %v3477 = vrot.slane %v3463, %v3476
        %v3478 = vcombine.low %v3422, %v3454
        %v3479 = vcombine.high %v3422, %v3454
        %v3480 = vcombine.low %v3429, %v3461
        %v3481 = vcombine.high %v3429, %v3461
        %v3482 = vcombine.low %v3438, %v3470
        %v3483 = vcombine.high %v3438, %v3470
        %v3484 = vcombine.low %v3445, %v3477
        %v3485 = vcombine.high %v3445, %v3477
        %3487 = vrot.lane.b32.xlu0 %v3479, 64
        %v3488 = vpop.permute.xlu0 %3487
        %3491 = vrot.lane.b32.xlu0 %v3481, 64
        %v3492 = vpop.permute.xlu0 %3491
        %3495 = vrot.lane.b32.xlu0 %v3483, 64
        %v3496 = vpop.permute.xlu0 %3495
        %3499 = vrot.lane.b32.xlu0 %v3485, 64
        %v3500 = vpop.permute.xlu0 %3499
        %v3502 = vsel %vm2206, %v3478, %v3488
        %v3503 = vsel %vm2206, %v3480, %v3492
        %v3504 = vsel %vm2206, %v3482, %v3496
        %v3505 = vsel %vm2206, %v3484, %v3500
        %v3506 = vpack.c.bf16 %v3502, %v3502
        %v3507 = vpack.c.bf16 %v3503, %v3503
        %v3508 = vpack.c.bf16 %v3504, %v3504
        %v3509 = vpack.c.bf16 %v3505, %v3505
        %v3510 = vld [vmem:[#allocation10] sm:$0xff]
        %v3511 = vld [vmem:[#allocation10 + $0x8] sm:$0xff]
        %v3512 = vld [vmem:[#allocation10 + $0x10] sm:$0xff]
        %v3513 = vld [vmem:[#allocation10 + $0x18] sm:$0xff]
        %v3514 = vld [vmem:[#allocation10 + $0x20] sm:$0xff]
        %v3515 = vld [vmem:[#allocation10 + $0x28] sm:$0xff]
        %v3516 = vld [vmem:[#allocation10 + $0x30] sm:$0xff]
        %v3517 = vld [vmem:[#allocation10 + $0x38] sm:$0xff]
        %v3518 = vld [vmem:[#allocation10 + $0x40] sm:$0xff]
        %v3519 = vld [vmem:[#allocation10 + $0x48] sm:$0xff]
        %v3520 = vld [vmem:[#allocation10 + $0x50] sm:$0xff]
        %v3521 = vld [vmem:[#allocation10 + $0x58] sm:$0xff]
        %v3522 = vld [vmem:[#allocation10 + $0x60] sm:$0xff]
        %v3523 = vld [vmem:[#allocation10 + $0x68] sm:$0xff]
        %v3524 = vld [vmem:[#allocation10 + $0x70] sm:$0xff]
        %v3525 = vld [vmem:[#allocation10 + $0x78] sm:$0xff]
        %v3526 = vld [vmem:[#allocation10 + $0x80] sm:$0xff]
        %v3527 = vld [vmem:[#allocation10 + $0x88] sm:$0xff]
        %v3528 = vld [vmem:[#allocation10 + $0x90] sm:$0xff]
        %v3529 = vld [vmem:[#allocation10 + $0x98] sm:$0xff]
        %v3530 = vld [vmem:[#allocation10 + $0xa0] sm:$0xff]
        %v3531 = vld [vmem:[#allocation10 + $0xa8] sm:$0xff]
        %v3532 = vld [vmem:[#allocation10 + $0xb0] sm:$0xff]
        %v3533 = vld [vmem:[#allocation10 + $0xb8] sm:$0xff]
        %v3534 = vld [vmem:[#allocation10 + $0xc0] sm:$0xff]
        %v3535 = vld [vmem:[#allocation10 + $0xc8] sm:$0xff]
        %v3536 = vld [vmem:[#allocation10 + $0xd0] sm:$0xff]
        %v3537 = vld [vmem:[#allocation10 + $0xd8] sm:$0xff]
        %v3538 = vld [vmem:[#allocation10 + $0xe0] sm:$0xff]
        %v3539 = vld [vmem:[#allocation10 + $0xe8] sm:$0xff]
        %v3540 = vld [vmem:[#allocation10 + $0xf0] sm:$0xff]
        %v3541 = vld [vmem:[#allocation10 + $0xf8] sm:$0xff]
        %v3542 = vld [vmem:[#allocation10 + $0x100] sm:$0xff]
        %v3543 = vld [vmem:[#allocation10 + $0x108] sm:$0xff]
        %v3544 = vld [vmem:[#allocation10 + $0x110] sm:$0xff]
        %v3545 = vld [vmem:[#allocation10 + $0x118] sm:$0xff]
        %v3546 = vld [vmem:[#allocation10 + $0x120] sm:$0xff]
        %v3547 = vld [vmem:[#allocation10 + $0x128] sm:$0xff]
        %v3548 = vld [vmem:[#allocation10 + $0x130] sm:$0xff]
        %v3549 = vld [vmem:[#allocation10 + $0x138] sm:$0xff]
        %v3550 = vld [vmem:[#allocation10 + $0x140] sm:$0xff]
        %v3551 = vld [vmem:[#allocation10 + $0x148] sm:$0xff]
        %v3552 = vld [vmem:[#allocation10 + $0x150] sm:$0xff]
        %v3553 = vld [vmem:[#allocation10 + $0x158] sm:$0xff]
        %v3554 = vld [vmem:[#allocation10 + $0x160] sm:$0xff]
        %v3555 = vld [vmem:[#allocation10 + $0x168] sm:$0xff]
        %v3556 = vld [vmem:[#allocation10 + $0x170] sm:$0xff]
        %v3557 = vld [vmem:[#allocation10 + $0x178] sm:$0xff]
        %v3558 = vld [vmem:[#allocation10 + $0x180] sm:$0xff]
        %v3559 = vld [vmem:[#allocation10 + $0x188] sm:$0xff]
        %v3560 = vld [vmem:[#allocation10 + $0x190] sm:$0xff]
        %v3561 = vld [vmem:[#allocation10 + $0x198] sm:$0xff]
        %v3562 = vld [vmem:[#allocation10 + $0x1a0] sm:$0xff]
        %v3563 = vld [vmem:[#allocation10 + $0x1a8] sm:$0xff]
        %v3564 = vld [vmem:[#allocation10 + $0x1b0] sm:$0xff]
        %v3565 = vld [vmem:[#allocation10 + $0x1b8] sm:$0xff]
        %v3566 = vld [vmem:[#allocation10 + $0x1c0] sm:$0xff]
        %v3567 = vld [vmem:[#allocation10 + $0x1c8] sm:$0xff]
        %v3568 = vld [vmem:[#allocation10 + $0x1d0] sm:$0xff]
        %v3569 = vld [vmem:[#allocation10 + $0x1d8] sm:$0xff]
        %v3570 = vld [vmem:[#allocation10 + $0x1e0] sm:$0xff]
        %v3571 = vld [vmem:[#allocation10 + $0x1e8] sm:$0xff]
        %v3572 = vld [vmem:[#allocation10 + $0x1f0] sm:$0xff]
        %v3573 = vld [vmem:[#allocation10 + $0x1f8] sm:$0xff]
        %v3574 = vld [vmem:[#allocation10 + $0x200] sm:$0xff]
        %v3575 = vld [vmem:[#allocation10 + $0x208] sm:$0xff]
        %v3576 = vld [vmem:[#allocation10 + $0x210] sm:$0xff]
        %v3577 = vld [vmem:[#allocation10 + $0x218] sm:$0xff]
        %v3578 = vld [vmem:[#allocation10 + $0x220] sm:$0xff]
        %v3579 = vld [vmem:[#allocation10 + $0x228] sm:$0xff]
        %v3580 = vld [vmem:[#allocation10 + $0x230] sm:$0xff]
        %v3581 = vld [vmem:[#allocation10 + $0x238] sm:$0xff]
        %v3582 = vld [vmem:[#allocation10 + $0x240] sm:$0xff]
        %v3583 = vld [vmem:[#allocation10 + $0x248] sm:$0xff]
        %v3584 = vld [vmem:[#allocation10 + $0x250] sm:$0xff]
        %v3585 = vld [vmem:[#allocation10 + $0x258] sm:$0xff]
        %v3586 = vld [vmem:[#allocation10 + $0x260] sm:$0xff]
        %v3587 = vld [vmem:[#allocation10 + $0x268] sm:$0xff]
        %v3588 = vld [vmem:[#allocation10 + $0x270] sm:$0xff]
        %v3589 = vld [vmem:[#allocation10 + $0x278] sm:$0xff]
        %v3590 = vld [vmem:[#allocation10 + $0x280] sm:$0xff]
        %v3591 = vld [vmem:[#allocation10 + $0x288] sm:$0xff]
        %v3592 = vld [vmem:[#allocation10 + $0x290] sm:$0xff]
        %v3593 = vld [vmem:[#allocation10 + $0x298] sm:$0xff]
        %v3594 = vld [vmem:[#allocation10 + $0x2a0] sm:$0xff]
        %v3595 = vld [vmem:[#allocation10 + $0x2a8] sm:$0xff]
        %v3596 = vld [vmem:[#allocation10 + $0x2b0] sm:$0xff]
        %v3597 = vld [vmem:[#allocation10 + $0x2b8] sm:$0xff]
        %v3598 = vld [vmem:[#allocation10 + $0x2c0] sm:$0xff]
        %v3599 = vld [vmem:[#allocation10 + $0x2c8] sm:$0xff]
        %v3600 = vld [vmem:[#allocation10 + $0x2d0] sm:$0xff]
        %v3601 = vld [vmem:[#allocation10 + $0x2d8] sm:$0xff]
        %v3602 = vld [vmem:[#allocation10 + $0x2e0] sm:$0xff]
        %v3603 = vld [vmem:[#allocation10 + $0x2e8] sm:$0xff]
        %v3604 = vld [vmem:[#allocation10 + $0x2f0] sm:$0xff]
        %v3605 = vld [vmem:[#allocation10 + $0x2f8] sm:$0xff]
        %v3606 = vld [vmem:[#allocation10 + $0x300] sm:$0xff]
        %v3607 = vld [vmem:[#allocation10 + $0x308] sm:$0xff]
        %v3608 = vld [vmem:[#allocation10 + $0x310] sm:$0xff]
        %v3609 = vld [vmem:[#allocation10 + $0x318] sm:$0xff]
        %v3610 = vld [vmem:[#allocation10 + $0x320] sm:$0xff]
        %v3611 = vld [vmem:[#allocation10 + $0x328] sm:$0xff]
        %v3612 = vld [vmem:[#allocation10 + $0x330] sm:$0xff]
        %v3613 = vld [vmem:[#allocation10 + $0x338] sm:$0xff]
        %v3614 = vld [vmem:[#allocation10 + $0x340] sm:$0xff]
        %v3615 = vld [vmem:[#allocation10 + $0x348] sm:$0xff]
        %v3616 = vld [vmem:[#allocation10 + $0x350] sm:$0xff]
        %v3617 = vld [vmem:[#allocation10 + $0x358] sm:$0xff]
        %v3618 = vld [vmem:[#allocation10 + $0x360] sm:$0xff]
        %v3619 = vld [vmem:[#allocation10 + $0x368] sm:$0xff]
        %v3620 = vld [vmem:[#allocation10 + $0x370] sm:$0xff]
        %v3621 = vld [vmem:[#allocation10 + $0x378] sm:$0xff]
        %v3622 = vld [vmem:[#allocation10 + $0x380] sm:$0xff]
        %v3623 = vld [vmem:[#allocation10 + $0x388] sm:$0xff]
        %v3624 = vld [vmem:[#allocation10 + $0x390] sm:$0xff]
        %v3625 = vld [vmem:[#allocation10 + $0x398] sm:$0xff]
        %v3626 = vld [vmem:[#allocation10 + $0x3a0] sm:$0xff]
        %v3627 = vld [vmem:[#allocation10 + $0x3a8] sm:$0xff]
        %v3628 = vld [vmem:[#allocation10 + $0x3b0] sm:$0xff]
        %v3629 = vld [vmem:[#allocation10 + $0x3b8] sm:$0xff]
        %v3630 = vld [vmem:[#allocation10 + $0x3c0] sm:$0xff]
        %v3631 = vld [vmem:[#allocation10 + $0x3c8] sm:$0xff]
        %v3632 = vld [vmem:[#allocation10 + $0x3d0] sm:$0xff]
        %v3633 = vld [vmem:[#allocation10 + $0x3d8] sm:$0xff]
        %v3634 = vld [vmem:[#allocation10 + $0x3e0] sm:$0xff]
        %v3635 = vld [vmem:[#allocation10 + $0x3e8] sm:$0xff]
        %v3636 = vld [vmem:[#allocation10 + $0x3f0] sm:$0xff]
        %v3637 = vld [vmem:[#allocation10 + $0x3f8] sm:$0xff]
        %v3638 = vld [vmem:[#allocation13] sm:$0xf]
        %v3640 = vlaneseq
        %v3641 = vshrl.u32 %v3640, 7
        %v3642 = vsub.s32 0, %v3641
        %v3643 = vrot.slane %v3638, %v3642
        %v3644 = vlaneseq
        %v3645 = vshrl.u32 %v3644, 7
        %v3646 = vsub.s32 1, %v3645
        %v3647 = vrot.slane %v3638, %v3646
        %v3648 = vlaneseq
        %v3649 = vshrl.u32 %v3648, 7
        %v3650 = vsub.s32 2, %v3649
        %v3651 = vrot.slane %v3638, %v3650
        %v3652 = vlaneseq
        %v3653 = vshrl.u32 %v3652, 7
        %v3654 = vsub.s32 3, %v3653
        %v3655 = vrot.slane %v3638, %v3654
        %v3788 = vunpack.c.l.b16 %v3510
        %v3789 = vunpack.c.h.b16 %v3510
        %v3790 = vunpack.c.l.b16 %v3511
        %v3791 = vunpack.c.h.b16 %v3511
        %v3792 = vunpack.c.l.b16 %v3512
        %v3793 = vunpack.c.h.b16 %v3512
        %v3794 = vunpack.c.l.b16 %v3513
        %v3795 = vunpack.c.h.b16 %v3513
        %v3796 = vunpack.c.l.b16 %v3514
        %v3797 = vunpack.c.h.b16 %v3514
        %v3798 = vunpack.c.l.b16 %v3515
        %v3799 = vunpack.c.h.b16 %v3515
        %v3800 = vunpack.c.l.b16 %v3516
        %v3801 = vunpack.c.h.b16 %v3516
        %v3802 = vunpack.c.l.b16 %v3517
        %v3803 = vunpack.c.h.b16 %v3517
        %v3804 = vunpack.c.l.b16 %v3518
        %v3805 = vunpack.c.h.b16 %v3518
        %v3806 = vunpack.c.l.b16 %v3519
        %v3807 = vunpack.c.h.b16 %v3519
        %v3808 = vunpack.c.l.b16 %v3520
        %v3809 = vunpack.c.h.b16 %v3520
        %v3810 = vunpack.c.l.b16 %v3521
        %v3811 = vunpack.c.h.b16 %v3521
        %v3812 = vunpack.c.l.b16 %v3522
        %v3813 = vunpack.c.h.b16 %v3522
        %v3814 = vunpack.c.l.b16 %v3523
        %v3815 = vunpack.c.h.b16 %v3523
        %v3816 = vunpack.c.l.b16 %v3524
        %v3817 = vunpack.c.h.b16 %v3524
        %v3818 = vunpack.c.l.b16 %v3525
        %v3819 = vunpack.c.h.b16 %v3525
        %v3820 = vunpack.c.l.b16 %v3526
        %v3821 = vunpack.c.h.b16 %v3526
        %v3822 = vunpack.c.l.b16 %v3527
        %v3823 = vunpack.c.h.b16 %v3527
        %v3824 = vunpack.c.l.b16 %v3528
        %v3825 = vunpack.c.h.b16 %v3528
        %v3826 = vunpack.c.l.b16 %v3529
        %v3827 = vunpack.c.h.b16 %v3529
        %v3828 = vunpack.c.l.b16 %v3530
        %v3829 = vunpack.c.h.b16 %v3530
        %v3830 = vunpack.c.l.b16 %v3531
        %v3831 = vunpack.c.h.b16 %v3531
        %v3832 = vunpack.c.l.b16 %v3532
        %v3833 = vunpack.c.h.b16 %v3532
        %v3834 = vunpack.c.l.b16 %v3533
        %v3835 = vunpack.c.h.b16 %v3533
        %v3836 = vunpack.c.l.b16 %v3534
        %v3837 = vunpack.c.h.b16 %v3534
        %v3838 = vunpack.c.l.b16 %v3535
        %v3839 = vunpack.c.h.b16 %v3535
        %v3840 = vunpack.c.l.b16 %v3536
        %v3841 = vunpack.c.h.b16 %v3536
        %v3842 = vunpack.c.l.b16 %v3537
        %v3843 = vunpack.c.h.b16 %v3537
        %v3844 = vunpack.c.l.b16 %v3538
        %v3845 = vunpack.c.h.b16 %v3538
        %v3846 = vunpack.c.l.b16 %v3539
        %v3847 = vunpack.c.h.b16 %v3539
        %v3848 = vunpack.c.l.b16 %v3540
        %v3849 = vunpack.c.h.b16 %v3540
        %v3850 = vunpack.c.l.b16 %v3541
        %v3851 = vunpack.c.h.b16 %v3541
        %v3852 = vunpack.c.l.b16 %v3542
        %v3853 = vunpack.c.h.b16 %v3542
        %v3854 = vunpack.c.l.b16 %v3543
        %v3855 = vunpack.c.h.b16 %v3543
        %v3856 = vunpack.c.l.b16 %v3544
        %v3857 = vunpack.c.h.b16 %v3544
        %v3858 = vunpack.c.l.b16 %v3545
        %v3859 = vunpack.c.h.b16 %v3545
        %v3860 = vunpack.c.l.b16 %v3546
        %v3861 = vunpack.c.h.b16 %v3546
        %v3862 = vunpack.c.l.b16 %v3547
        %v3863 = vunpack.c.h.b16 %v3547
        %v3864 = vunpack.c.l.b16 %v3548
        %v3865 = vunpack.c.h.b16 %v3548
        %v3866 = vunpack.c.l.b16 %v3549
        %v3867 = vunpack.c.h.b16 %v3549
        %v3868 = vunpack.c.l.b16 %v3550
        %v3869 = vunpack.c.h.b16 %v3550
        %v3870 = vunpack.c.l.b16 %v3551
        %v3871 = vunpack.c.h.b16 %v3551
        %v3872 = vunpack.c.l.b16 %v3552
        %v3873 = vunpack.c.h.b16 %v3552
        %v3874 = vunpack.c.l.b16 %v3553
        %v3875 = vunpack.c.h.b16 %v3553
        %v3876 = vunpack.c.l.b16 %v3554
        %v3877 = vunpack.c.h.b16 %v3554
        %v3878 = vunpack.c.l.b16 %v3555
        %v3879 = vunpack.c.h.b16 %v3555
        %v3880 = vunpack.c.l.b16 %v3556
        %v3881 = vunpack.c.h.b16 %v3556
        %v3882 = vunpack.c.l.b16 %v3557
        %v3883 = vunpack.c.h.b16 %v3557
        %v3884 = vunpack.c.l.b16 %v3558
        %v3885 = vunpack.c.h.b16 %v3558
        %v3886 = vunpack.c.l.b16 %v3559
        %v3887 = vunpack.c.h.b16 %v3559
        %v3888 = vunpack.c.l.b16 %v3560
        %v3889 = vunpack.c.h.b16 %v3560
        %v3890 = vunpack.c.l.b16 %v3561
        %v3891 = vunpack.c.h.b16 %v3561
        %v3892 = vunpack.c.l.b16 %v3562
        %v3893 = vunpack.c.h.b16 %v3562
        %v3894 = vunpack.c.l.b16 %v3563
        %v3895 = vunpack.c.h.b16 %v3563
        %v3896 = vunpack.c.l.b16 %v3564
        %v3897 = vunpack.c.h.b16 %v3564
        %v3898 = vunpack.c.l.b16 %v3565
        %v3899 = vunpack.c.h.b16 %v3565
        %v3900 = vunpack.c.l.b16 %v3566
        %v3901 = vunpack.c.h.b16 %v3566
        %v3902 = vunpack.c.l.b16 %v3567
        %v3903 = vunpack.c.h.b16 %v3567
        %v3904 = vunpack.c.l.b16 %v3568
        %v3905 = vunpack.c.h.b16 %v3568
        %v3906 = vunpack.c.l.b16 %v3569
        %v3907 = vunpack.c.h.b16 %v3569
        %v3908 = vunpack.c.l.b16 %v3570
        %v3909 = vunpack.c.h.b16 %v3570
        %v3910 = vunpack.c.l.b16 %v3571
        %v3911 = vunpack.c.h.b16 %v3571
        %v3912 = vunpack.c.l.b16 %v3572
        %v3913 = vunpack.c.h.b16 %v3572
        %v3914 = vunpack.c.l.b16 %v3573
        %v3915 = vunpack.c.h.b16 %v3573
        %v3916 = vunpack.c.l.b16 %v3574
        %v3917 = vunpack.c.h.b16 %v3574
        %v3918 = vunpack.c.l.b16 %v3575
        %v3919 = vunpack.c.h.b16 %v3575
        %v3920 = vunpack.c.l.b16 %v3576
        %v3921 = vunpack.c.h.b16 %v3576
        %v3922 = vunpack.c.l.b16 %v3577
        %v3923 = vunpack.c.h.b16 %v3577
        %v3924 = vunpack.c.l.b16 %v3578
        %v3925 = vunpack.c.h.b16 %v3578
        %v3926 = vunpack.c.l.b16 %v3579
        %v3927 = vunpack.c.h.b16 %v3579
        %v3928 = vunpack.c.l.b16 %v3580
        %v3929 = vunpack.c.h.b16 %v3580
        %v3930 = vunpack.c.l.b16 %v3581
        %v3931 = vunpack.c.h.b16 %v3581
        %v3932 = vunpack.c.l.b16 %v3582
        %v3933 = vunpack.c.h.b16 %v3582
        %v3934 = vunpack.c.l.b16 %v3583
        %v3935 = vunpack.c.h.b16 %v3583
        %v3936 = vunpack.c.l.b16 %v3584
        %v3937 = vunpack.c.h.b16 %v3584
        %v3938 = vunpack.c.l.b16 %v3585
        %v3939 = vunpack.c.h.b16 %v3585
        %v3940 = vunpack.c.l.b16 %v3586
        %v3941 = vunpack.c.h.b16 %v3586
        %v3942 = vunpack.c.l.b16 %v3587
        %v3943 = vunpack.c.h.b16 %v3587
        %v3944 = vunpack.c.l.b16 %v3588
        %v3945 = vunpack.c.h.b16 %v3588
        %v3946 = vunpack.c.l.b16 %v3589
        %v3947 = vunpack.c.h.b16 %v3589
        %v3948 = vunpack.c.l.b16 %v3590
        %v3949 = vunpack.c.h.b16 %v3590
        %v3950 = vunpack.c.l.b16 %v3591
        %v3951 = vunpack.c.h.b16 %v3591
        %v3952 = vunpack.c.l.b16 %v3592
        %v3953 = vunpack.c.h.b16 %v3592
        %v3954 = vunpack.c.l.b16 %v3593
        %v3955 = vunpack.c.h.b16 %v3593
        %v3956 = vunpack.c.l.b16 %v3594
        %v3957 = vunpack.c.h.b16 %v3594
        %v3958 = vunpack.c.l.b16 %v3595
        %v3959 = vunpack.c.h.b16 %v3595
        %v3960 = vunpack.c.l.b16 %v3596
        %v3961 = vunpack.c.h.b16 %v3596
        %v3962 = vunpack.c.l.b16 %v3597
        %v3963 = vunpack.c.h.b16 %v3597
        %v3964 = vunpack.c.l.b16 %v3598
        %v3965 = vunpack.c.h.b16 %v3598
        %v3966 = vunpack.c.l.b16 %v3599
        %v3967 = vunpack.c.h.b16 %v3599
        %v3968 = vunpack.c.l.b16 %v3600
        %v3969 = vunpack.c.h.b16 %v3600
        %v3970 = vunpack.c.l.b16 %v3601
        %v3971 = vunpack.c.h.b16 %v3601
        %v3972 = vunpack.c.l.b16 %v3602
        %v3973 = vunpack.c.h.b16 %v3602
        %v3974 = vunpack.c.l.b16 %v3603
        %v3975 = vunpack.c.h.b16 %v3603
        %v3976 = vunpack.c.l.b16 %v3604
        %v3977 = vunpack.c.h.b16 %v3604
        %v3978 = vunpack.c.l.b16 %v3605
        %v3979 = vunpack.c.h.b16 %v3605
        %v3980 = vunpack.c.l.b16 %v3606
        %v3981 = vunpack.c.h.b16 %v3606
        %v3982 = vunpack.c.l.b16 %v3607
        %v3983 = vunpack.c.h.b16 %v3607
        %v3984 = vunpack.c.l.b16 %v3608
        %v3985 = vunpack.c.h.b16 %v3608
        %v3986 = vunpack.c.l.b16 %v3609
        %v3987 = vunpack.c.h.b16 %v3609
        %v3988 = vunpack.c.l.b16 %v3610
        %v3989 = vunpack.c.h.b16 %v3610
        %v3990 = vunpack.c.l.b16 %v3611
        %v3991 = vunpack.c.h.b16 %v3611
        %v3992 = vunpack.c.l.b16 %v3612
        %v3993 = vunpack.c.h.b16 %v3612
        %v3994 = vunpack.c.l.b16 %v3613
        %v3995 = vunpack.c.h.b16 %v3613
        %v3996 = vunpack.c.l.b16 %v3614
        %v3997 = vunpack.c.h.b16 %v3614
        %v3998 = vunpack.c.l.b16 %v3615
        %v3999 = vunpack.c.h.b16 %v3615
        %v4000 = vunpack.c.l.b16 %v3616
        %v4001 = vunpack.c.h.b16 %v3616
        %v4002 = vunpack.c.l.b16 %v3617
        %v4003 = vunpack.c.h.b16 %v3617
        %v4004 = vunpack.c.l.b16 %v3618
        %v4005 = vunpack.c.h.b16 %v3618
        %v4006 = vunpack.c.l.b16 %v3619
        %v4007 = vunpack.c.h.b16 %v3619
        %v4008 = vunpack.c.l.b16 %v3620
        %v4009 = vunpack.c.h.b16 %v3620
        %v4010 = vunpack.c.l.b16 %v3621
        %v4011 = vunpack.c.h.b16 %v3621
        %v4012 = vunpack.c.l.b16 %v3622
        %v4013 = vunpack.c.h.b16 %v3622
        %v4014 = vunpack.c.l.b16 %v3623
        %v4015 = vunpack.c.h.b16 %v3623
        %v4016 = vunpack.c.l.b16 %v3624
        %v4017 = vunpack.c.h.b16 %v3624
        %v4018 = vunpack.c.l.b16 %v3625
        %v4019 = vunpack.c.h.b16 %v3625
        %v4020 = vunpack.c.l.b16 %v3626
        %v4021 = vunpack.c.h.b16 %v3626
        %v4022 = vunpack.c.l.b16 %v3627
        %v4023 = vunpack.c.h.b16 %v3627
        %v4024 = vunpack.c.l.b16 %v3628
        %v4025 = vunpack.c.h.b16 %v3628
        %v4026 = vunpack.c.l.b16 %v3629
        %v4027 = vunpack.c.h.b16 %v3629
        %v4028 = vunpack.c.l.b16 %v3630
        %v4029 = vunpack.c.h.b16 %v3630
        %v4030 = vunpack.c.l.b16 %v3631
        %v4031 = vunpack.c.h.b16 %v3631
        %v4032 = vunpack.c.l.b16 %v3632
        %v4033 = vunpack.c.h.b16 %v3632
        %v4034 = vunpack.c.l.b16 %v3633
        %v4035 = vunpack.c.h.b16 %v3633
        %v4036 = vunpack.c.l.b16 %v3634
        %v4037 = vunpack.c.h.b16 %v3634
        %v4038 = vunpack.c.l.b16 %v3635
        %v4039 = vunpack.c.h.b16 %v3635
        %v4040 = vunpack.c.l.b16 %v3636
        %v4041 = vunpack.c.h.b16 %v3636
        %v4042 = vunpack.c.l.b16 %v3637
        %v4043 = vunpack.c.h.b16 %v3637
        %v4044 = vpack.c.b16 %v3792, %v3788
        %v4045 = vpack.c.b16 %v3793, %v3789
        %v4046 = vpack.c.b16 %v3794, %v3790
        %v4047 = vpack.c.b16 %v3795, %v3791
        %v4048 = vpack.c.b16 %v3800, %v3796
        %v4049 = vpack.c.b16 %v3801, %v3797
        %v4050 = vpack.c.b16 %v3802, %v3798
        %v4051 = vpack.c.b16 %v3803, %v3799
        %v4052 = vpack.c.b16 %v3808, %v3804
        %v4053 = vpack.c.b16 %v3809, %v3805
        %v4054 = vpack.c.b16 %v3810, %v3806
        %v4055 = vpack.c.b16 %v3811, %v3807
        %v4056 = vpack.c.b16 %v3816, %v3812
        %v4057 = vpack.c.b16 %v3817, %v3813
        %v4058 = vpack.c.b16 %v3818, %v3814
        %v4059 = vpack.c.b16 %v3819, %v3815
        %v4060 = vpack.c.b16 %v3824, %v3820
        %v4061 = vpack.c.b16 %v3825, %v3821
        %v4062 = vpack.c.b16 %v3826, %v3822
        %v4063 = vpack.c.b16 %v3827, %v3823
        %v4064 = vpack.c.b16 %v3832, %v3828
        %v4065 = vpack.c.b16 %v3833, %v3829
        %v4066 = vpack.c.b16 %v3834, %v3830
        %v4067 = vpack.c.b16 %v3835, %v3831
        %v4068 = vpack.c.b16 %v3840, %v3836
        %v4069 = vpack.c.b16 %v3841, %v3837
        %v4070 = vpack.c.b16 %v3842, %v3838
        %v4071 = vpack.c.b16 %v3843, %v3839
        %v4072 = vpack.c.b16 %v3848, %v3844
        %v4073 = vpack.c.b16 %v3849, %v3845
        %v4074 = vpack.c.b16 %v3850, %v3846
        %v4075 = vpack.c.b16 %v3851, %v3847
        %v4076 = vpack.c.b16 %v3856, %v3852
        %v4077 = vpack.c.b16 %v3857, %v3853
        %v4078 = vpack.c.b16 %v3858, %v3854
        %v4079 = vpack.c.b16 %v3859, %v3855
        %v4080 = vpack.c.b16 %v3864, %v3860
        %v4081 = vpack.c.b16 %v3865, %v3861
        %v4082 = vpack.c.b16 %v3866, %v3862
        %v4083 = vpack.c.b16 %v3867, %v3863
        %v4084 = vpack.c.b16 %v3872, %v3868
        %v4085 = vpack.c.b16 %v3873, %v3869
        %v4086 = vpack.c.b16 %v3874, %v3870
        %v4087 = vpack.c.b16 %v3875, %v3871
        %v4088 = vpack.c.b16 %v3880, %v3876
        %v4089 = vpack.c.b16 %v3881, %v3877
        %v4090 = vpack.c.b16 %v3882, %v3878
        %v4091 = vpack.c.b16 %v3883, %v3879
        %v4092 = vpack.c.b16 %v3888, %v3884
        %v4093 = vpack.c.b16 %v3889, %v3885
        %v4094 = vpack.c.b16 %v3890, %v3886
        %v4095 = vpack.c.b16 %v3891, %v3887
        %v4096 = vpack.c.b16 %v3896, %v3892
        %v4097 = vpack.c.b16 %v3897, %v3893
        %v4098 = vpack.c.b16 %v3898, %v3894
        %v4099 = vpack.c.b16 %v3899, %v3895
        %v4100 = vpack.c.b16 %v3904, %v3900
        %v4101 = vpack.c.b16 %v3905, %v3901
        %v4102 = vpack.c.b16 %v3906, %v3902
        %v4103 = vpack.c.b16 %v3907, %v3903
        %v4104 = vpack.c.b16 %v3912, %v3908
        %v4105 = vpack.c.b16 %v3913, %v3909
        %v4106 = vpack.c.b16 %v3914, %v3910
        %v4107 = vpack.c.b16 %v3915, %v3911
        %v4108 = vpack.c.b16 %v3920, %v3916
        %v4109 = vpack.c.b16 %v3921, %v3917
        %v4110 = vpack.c.b16 %v3922, %v3918
        %v4111 = vpack.c.b16 %v3923, %v3919
        %v4112 = vpack.c.b16 %v3928, %v3924
        %v4113 = vpack.c.b16 %v3929, %v3925
        %v4114 = vpack.c.b16 %v3930, %v3926
        %v4115 = vpack.c.b16 %v3931, %v3927
        %v4116 = vpack.c.b16 %v3936, %v3932
        %v4117 = vpack.c.b16 %v3937, %v3933
        %v4118 = vpack.c.b16 %v3938, %v3934
        %v4119 = vpack.c.b16 %v3939, %v3935
        %v4120 = vpack.c.b16 %v3944, %v3940
        %v4121 = vpack.c.b16 %v3945, %v3941
        %v4122 = vpack.c.b16 %v3946, %v3942
        %v4123 = vpack.c.b16 %v3947, %v3943
        %v4124 = vpack.c.b16 %v3952, %v3948
        %v4125 = vpack.c.b16 %v3953, %v3949
        %v4126 = vpack.c.b16 %v3954, %v3950
        %v4127 = vpack.c.b16 %v3955, %v3951
        %v4128 = vpack.c.b16 %v3960, %v3956
        %v4129 = vpack.c.b16 %v3961, %v3957
        %v4130 = vpack.c.b16 %v3962, %v3958
        %v4131 = vpack.c.b16 %v3963, %v3959
        %v4132 = vpack.c.b16 %v3968, %v3964
        %v4133 = vpack.c.b16 %v3969, %v3965
        %v4134 = vpack.c.b16 %v3970, %v3966
        %v4135 = vpack.c.b16 %v3971, %v3967
        %v4136 = vpack.c.b16 %v3976, %v3972
        %v4137 = vpack.c.b16 %v3977, %v3973
        %v4138 = vpack.c.b16 %v3978, %v3974
        %v4139 = vpack.c.b16 %v3979, %v3975
        %v4140 = vpack.c.b16 %v3984, %v3980
        %v4141 = vpack.c.b16 %v3985, %v3981
        %v4142 = vpack.c.b16 %v3986, %v3982
        %v4143 = vpack.c.b16 %v3987, %v3983
        %v4144 = vpack.c.b16 %v3992, %v3988
        %v4145 = vpack.c.b16 %v3993, %v3989
        %v4146 = vpack.c.b16 %v3994, %v3990
        %v4147 = vpack.c.b16 %v3995, %v3991
        %v4148 = vpack.c.b16 %v4000, %v3996
        %v4149 = vpack.c.b16 %v4001, %v3997
        %v4150 = vpack.c.b16 %v4002, %v3998
        %v4151 = vpack.c.b16 %v4003, %v3999
        %v4152 = vpack.c.b16 %v4008, %v4004
        %v4153 = vpack.c.b16 %v4009, %v4005
        %v4154 = vpack.c.b16 %v4010, %v4006
        %v4155 = vpack.c.b16 %v4011, %v4007
        %v4156 = vpack.c.b16 %v4016, %v4012
        %v4157 = vpack.c.b16 %v4017, %v4013
        %v4158 = vpack.c.b16 %v4018, %v4014
        %v4159 = vpack.c.b16 %v4019, %v4015
        %v4160 = vpack.c.b16 %v4024, %v4020
        %v4161 = vpack.c.b16 %v4025, %v4021
        %v4162 = vpack.c.b16 %v4026, %v4022
        %v4163 = vpack.c.b16 %v4027, %v4023
        %v4164 = vpack.c.b16 %v4032, %v4028
        %v4165 = vpack.c.b16 %v4033, %v4029
        %v4166 = vpack.c.b16 %v4034, %v4030
        %v4167 = vpack.c.b16 %v4035, %v4031
        %v4168 = vpack.c.b16 %v4040, %v4036
        %v4169 = vpack.c.b16 %v4041, %v4037
        %v4170 = vpack.c.b16 %v4042, %v4038
        %v4171 = vpack.c.b16 %v4043, %v4039
        %4300 = vmatprep.subr.bf16.mxu0 %v4045
        %4301 = vmatpush1.bf16.msra.mxu0 %v4044
        %4302 = vmatprep.subr.bf16.mxu0 %v4049
        %4303 = vmatpush1.bf16.msra.mxu0 %v4048
        %4304 = vmatprep.subr.bf16.mxu0 %v4053
        %4305 = vmatpush1.bf16.msra.mxu0 %v4052
        %4306 = vmatprep.subr.bf16.mxu0 %v4057
        %4307 = vmatpush1.bf16.msra.mxu0 %v4056
        %4308 = vmatprep.subr.bf16.mxu0 %v4061
        %4309 = vmatpush1.bf16.msra.mxu0 %v4060
        %4310 = vmatprep.subr.bf16.mxu0 %v4065
        %4311 = vmatpush1.bf16.msra.mxu0 %v4064
        %4312 = vmatprep.subr.bf16.mxu0 %v4069
        %4313 = vmatpush1.bf16.msra.mxu0 %v4068
        %4314 = vmatprep.subr.bf16.mxu0 %v4073
        %4315 = vmatpush1.bf16.msra.mxu0 %v4072
        %4316 = vmatprep.subr.bf16.mxu0 %v4077
        %4317 = vmatpush1.bf16.msra.mxu0 %v4076
        %4318 = vmatprep.subr.bf16.mxu0 %v4081
        %4319 = vmatpush1.bf16.msra.mxu0 %v4080
        %4320 = vmatprep.subr.bf16.mxu0 %v4085
        %4321 = vmatpush1.bf16.msra.mxu0 %v4084
        %4322 = vmatprep.subr.bf16.mxu0 %v4089
        %4323 = vmatpush1.bf16.msra.mxu0 %v4088
        %4324 = vmatprep.subr.bf16.mxu0 %v4093
        %4325 = vmatpush1.bf16.msra.mxu0 %v4092
        %4326 = vmatprep.subr.bf16.mxu0 %v4097
        %4327 = vmatpush1.bf16.msra.mxu0 %v4096
        %4328 = vmatprep.subr.bf16.mxu0 %v4101
        %4329 = vmatpush1.bf16.msra.mxu0 %v4100
        %4330 = vmatprep.subr.bf16.mxu0 %v4105
        %4331 = vmatpush1.bf16.msra.mxu0 %v4104
        %4332 = vmatprep.mubr.bf16.mxu0 %v3507
        %4333 = vmatmul.mubr.bf16.gmra.mrb[0].mxu0 %v3506
        %v4334 = vpop.f32.mrb[0].mxu0
        %v4335 = vadd.f32 %v3643, %v4334
        %v4336 = vpop.f32.mrb[0].mxu0
        %v4337 = vadd.f32 %v3647, %v4336
        %v4338 = vpop.f32.mrb[0].mxu0
        %v4339 = vpop.f32.mrb[0].mxu0
        %4340 = vdwg.mxu0
        %4341 = vmatprep.subr.bf16.mxu0 %v4109
        %4342 = vmatpush1.bf16.msra.mxu0 %v4108
        %4343 = vmatprep.subr.bf16.mxu0 %v4113
        %4344 = vmatpush1.bf16.msra.mxu0 %v4112
        %4345 = vmatprep.subr.bf16.mxu0 %v4117
        %4346 = vmatpush1.bf16.msra.mxu0 %v4116
        %4347 = vmatprep.subr.bf16.mxu0 %v4121
        %4348 = vmatpush1.bf16.msra.mxu0 %v4120
        %4349 = vmatprep.subr.bf16.mxu0 %v4125
        %4350 = vmatpush1.bf16.msra.mxu0 %v4124
        %4351 = vmatprep.subr.bf16.mxu0 %v4129
        %4352 = vmatpush1.bf16.msra.mxu0 %v4128
        %4353 = vmatprep.subr.bf16.mxu0 %v4133
        %4354 = vmatpush1.bf16.msra.mxu0 %v4132
        %4355 = vmatprep.subr.bf16.mxu0 %v4137
        %4356 = vmatpush1.bf16.msra.mxu0 %v4136
        %4357 = vmatprep.subr.bf16.mxu0 %v4141
        %4358 = vmatpush1.bf16.msra.mxu0 %v4140
        %4359 = vmatprep.subr.bf16.mxu0 %v4145
        %4360 = vmatpush1.bf16.msra.mxu0 %v4144
        %4361 = vmatprep.subr.bf16.mxu0 %v4149
        %4362 = vmatpush1.bf16.msra.mxu0 %v4148
        %4363 = vmatprep.subr.bf16.mxu0 %v4153
        %4364 = vmatpush1.bf16.msra.mxu0 %v4152
        %4365 = vmatprep.subr.bf16.mxu0 %v4157
        %4366 = vmatpush1.bf16.msra.mxu0 %v4156
        %4367 = vmatprep.subr.bf16.mxu0 %v4161
        %4368 = vmatpush1.bf16.msra.mxu0 %v4160
        %4369 = vmatprep.subr.bf16.mxu0 %v4165
        %4370 = vmatpush1.bf16.msra.mxu0 %v4164
        %4371 = vmatprep.subr.bf16.mxu0 %v4169
        %4372 = vmatpush1.bf16.msra.mxu0 %v4168
        %4373 = vmatprep.mubr.bf16.mxu0 %v3509
        %4374 = vmatmul.mubr.bf16.gmra.mrb[0].mxu0 %v3508
        %v4375 = vpop.f32.mrb[0].mxu0
        %v4376 = vadd.f32 %v4335, %v4375
        %v4377 = vpop.f32.mrb[0].mxu0
        %v4378 = vadd.f32 %v4337, %v4377
        %v4379 = vpop.f32.mrb[0].mxu0
        %v4380 = vpop.f32.mrb[0].mxu0
        %4381 = vdwg.mxu0
        %4382 = vmatprep.subr.bf16.mxu0 %v4047
        %4383 = vmatpush1.bf16.msra.mxu0 %v4046
        %4384 = vmatprep.subr.bf16.mxu0 %v4051
        %4385 = vmatpush1.bf16.msra.mxu0 %v4050
        %4386 = vmatprep.subr.bf16.mxu0 %v4055
        %4387 = vmatpush1.bf16.msra.mxu0 %v4054
        %4388 = vmatprep.subr.bf16.mxu0 %v4059
        %4389 = vmatpush1.bf16.msra.mxu0 %v4058
        %4390 = vmatprep.subr.bf16.mxu0 %v4063
        %4391 = vmatpush1.bf16.msra.mxu0 %v4062
        %4392 = vmatprep.subr.bf16.mxu0 %v4067
        %4393 = vmatpush1.bf16.msra.mxu0 %v4066
        %4394 = vmatprep.subr.bf16.mxu0 %v4071
        %4395 = vmatpush1.bf16.msra.mxu0 %v4070
        %4396 = vmatprep.subr.bf16.mxu0 %v4075
        %4397 = vmatpush1.bf16.msra.mxu0 %v4074
        %4398 = vmatprep.subr.bf16.mxu0 %v4079
        %4399 = vmatpush1.bf16.msra.mxu0 %v4078
        %4400 = vmatprep.subr.bf16.mxu0 %v4083
        %4401 = vmatpush1.bf16.msra.mxu0 %v4082
        %4402 = vmatprep.subr.bf16.mxu0 %v4087
        %4403 = vmatpush1.bf16.msra.mxu0 %v4086
        %4404 = vmatprep.subr.bf16.mxu0 %v4091
        %4405 = vmatpush1.bf16.msra.mxu0 %v4090
        %4406 = vmatprep.subr.bf16.mxu0 %v4095
        %4407 = vmatpush1.bf16.msra.mxu0 %v4094
        %4408 = vmatprep.subr.bf16.mxu0 %v4099
        %4409 = vmatpush1.bf16.msra.mxu0 %v4098
        %4410 = vmatprep.subr.bf16.mxu0 %v4103
        %4411 = vmatpush1.bf16.msra.mxu0 %v4102
        %4412 = vmatprep.subr.bf16.mxu0 %v4107
        %4413 = vmatpush1.bf16.msra.mxu0 %v4106
        %4414 = vmatprep.mubr.bf16.mxu0 %v3507
        %4415 = vmatmul.mubr.bf16.gmra.mrb[0].mxu0 %v3506
        %v4416 = vpop.f32.mrb[0].mxu0
        %v4417 = vadd.f32 %v3651, %v4416
        %v4418 = vpop.f32.mrb[0].mxu0
        %v4419 = vadd.f32 %v3655, %v4418
        %v4420 = vpop.f32.mrb[0].mxu0
        %v4421 = vpop.f32.mrb[0].mxu0
        %4422 = vdwg.mxu0
        %4423 = vmatprep.subr.bf16.mxu0 %v4111
        %4424 = vmatpush1.bf16.msra.mxu0 %v4110
        %4425 = vmatprep.subr.bf16.mxu0 %v4115
        %4426 = vmatpush1.bf16.msra.mxu0 %v4114
        %4427 = vmatprep.subr.bf16.mxu0 %v4119
        %4428 = vmatpush1.bf16.msra.mxu0 %v4118
        %4429 = vmatprep.subr.bf16.mxu0 %v4123
        %4430 = vmatpush1.bf16.msra.mxu0 %v4122
        %4431 = vmatprep.subr.bf16.mxu0 %v4127
        %4432 = vmatpush1.bf16.msra.mxu0 %v4126
        %4433 = vmatprep.subr.bf16.mxu0 %v4131
        %4434 = vmatpush1.bf16.msra.mxu0 %v4130
        %4435 = vmatprep.subr.bf16.mxu0 %v4135
        %4436 = vmatpush1.bf16.msra.mxu0 %v4134
        %4437 = vmatprep.subr.bf16.mxu0 %v4139
        %4438 = vmatpush1.bf16.msra.mxu0 %v4138
        %4439 = vmatprep.subr.bf16.mxu0 %v4143
        %4440 = vmatpush1.bf16.msra.mxu0 %v4142
        %4441 = vmatprep.subr.bf16.mxu0 %v4147
        %4442 = vmatpush1.bf16.msra.mxu0 %v4146
        %4443 = vmatprep.subr.bf16.mxu0 %v4151
        %4444 = vmatpush1.bf16.msra.mxu0 %v4150
        %4445 = vmatprep.subr.bf16.mxu0 %v4155
        %4446 = vmatpush1.bf16.msra.mxu0 %v4154
        %4447 = vmatprep.subr.bf16.mxu0 %v4159
        %4448 = vmatpush1.bf16.msra.mxu0 %v4158
        %4449 = vmatprep.subr.bf16.mxu0 %v4163
        %4450 = vmatpush1.bf16.msra.mxu0 %v4162
        %4451 = vmatprep.subr.bf16.mxu0 %v4167
        %4452 = vmatpush1.bf16.msra.mxu0 %v4166
        %4453 = vmatprep.subr.bf16.mxu0 %v4171
        %4454 = vmatpush1.bf16.msra.mxu0 %v4170
        %4455 = vmatprep.mubr.bf16.mxu0 %v3509
        %4456 = vmatmul.mubr.bf16.gmra.mrb[0].mxu0 %v3508
        %v4457 = vpop.f32.mrb[0].mxu0
        %v4458 = vadd.f32 %v4417, %v4457
        %v4459 = vpop.f32.mrb[0].mxu0
        %v4460 = vadd.f32 %v4419, %v4459
        %v4461 = vpop.f32.mrb[0].mxu0
        %v4462 = vpop.f32.mrb[0].mxu0
        %4463 = vdwg.mxu0
        %v4464 = vadd.f32 %v4376, %v852
        %v4465 = vadd.f32 %v4378, %v853
        %v4466 = vadd.f32 %v4458, %v854
        %v4467 = vadd.f32 %v4460, %v855
        %v4468 = vadd.f32 %v4464, %v4465
        %v4469 = vadd.f32 %v4468, %v4466
        %v4470 = vadd.f32 %v4469, %v4467
        %4471 = vadd.xlane.f32.xlu0 %v4470
        %v4472 = vpop.xlane.xlu0 %4471
        %v4473 = vrcp.pop 512.0
        %v4474 = vmul.f32 %v4472, %v4473
        %v4475 = vsub.f32 %v4464, %v4474
        %v4476 = vsub.f32 %v4465, %v4474
        %v4477 = vsub.f32 %v4466, %v4474
        %v4478 = vsub.f32 %v4467, %v4474
        %v4479 = vmul.f32 %v4475, %v4475
        %v4480 = vmul.f32 %v4476, %v4476
        %v4481 = vmul.f32 %v4477, %v4477
        %v4482 = vmul.f32 %v4478, %v4478
        %v4483 = vadd.f32 %v4479, %v4480
        %v4484 = vadd.f32 %v4483, %v4481
        %v4485 = vadd.f32 %v4484, %v4482
        %4486 = vadd.xlane.f32.xlu0 %v4485
        %v4487 = vpop.xlane.xlu0 %4486
        %v4488 = vmul.f32 %v4487, %v4473
        %v4489 = vadd.f32 %v4488, 1e-05
        %v4490 = vrsqrt.pop %v4489
        %v4491 = vmul.f32 %v4475, %v4490
        %v4492 = vmul.f32 %v4476, %v4490
        %v4493 = vmul.f32 %v4477, %v4490
        %v4494 = vmul.f32 %v4478, %v4490
        %v4495 = vld [vmem:[#allocation14] sm:$0xf]
        %v4497 = vlaneseq
        %v4498 = vshrl.u32 %v4497, 7
        %v4499 = vsub.s32 0, %v4498
        %v4500 = vrot.slane %v4495, %v4499
        %v4501 = vlaneseq
        %v4502 = vshrl.u32 %v4501, 7
        %v4503 = vsub.s32 1, %v4502
        %v4504 = vrot.slane %v4495, %v4503
        %v4505 = vlaneseq
        %v4506 = vshrl.u32 %v4505, 7
        %v4507 = vsub.s32 2, %v4506
        %v4508 = vrot.slane %v4495, %v4507
        %v4509 = vlaneseq
        %v4510 = vshrl.u32 %v4509, 7
        %v4511 = vsub.s32 3, %v4510
        %v4512 = vrot.slane %v4495, %v4511
        %v4517 = vmul.f32 %v4491, %v4500
        %v4518 = vmul.f32 %v4492, %v4504
        %v4519 = vmul.f32 %v4493, %v4508
        %v4520 = vmul.f32 %v4494, %v4512
        %v4521 = vld [vmem:[#allocation16] sm:$0xf]
        %v4523 = vlaneseq
        %v4524 = vshrl.u32 %v4523, 7
        %v4525 = vsub.s32 0, %v4524
        %v4526 = vrot.slane %v4521, %v4525
        %v4527 = vlaneseq
        %v4528 = vshrl.u32 %v4527, 7
        %v4529 = vsub.s32 1, %v4528
        %v4530 = vrot.slane %v4521, %v4529
        %v4531 = vlaneseq
        %v4532 = vshrl.u32 %v4531, 7
        %v4533 = vsub.s32 2, %v4532
        %v4534 = vrot.slane %v4521, %v4533
        %v4535 = vlaneseq
        %v4536 = vshrl.u32 %v4535, 7
        %v4537 = vsub.s32 3, %v4536
        %v4538 = vrot.slane %v4521, %v4537
        %v4543 = vadd.f32 %v4517, %v4526
        %v4544 = vadd.f32 %v4518, %v4530
        %v4545 = vadd.f32 %v4519, %v4534
        %v4546 = vadd.f32 %v4520, %v4538
        %v4547 = vpack.c.bf16 %v4543, %v4543
        %v4548 = vpack.c.bf16 %v4544, %v4544
        %v4549 = vpack.c.bf16 %v4545, %v4545
        %v4550 = vpack.c.bf16 %v4546, %v4546
        %v4551 = vld [vmem:[#allocation17] sm:$0xff]
        %v4552 = vld [vmem:[#allocation17 + $0x8] sm:$0xff]
        %v4553 = vld [vmem:[#allocation17 + $0x10] sm:$0xff]
        %v4554 = vld [vmem:[#allocation17 + $0x18] sm:$0xff]
        %v4555 = vld [vmem:[#allocation17 + $0x20] sm:$0xff]
        %v4556 = vld [vmem:[#allocation17 + $0x28] sm:$0xff]
        %v4557 = vld [vmem:[#allocation17 + $0x30] sm:$0xff]
        %v4558 = vld [vmem:[#allocation17 + $0x38] sm:$0xff]
        %v4559 = vld [vmem:[#allocation17 + $0x40] sm:$0xff]
        %v4560 = vld [vmem:[#allocation17 + $0x48] sm:$0xff]
        %v4561 = vld [vmem:[#allocation17 + $0x50] sm:$0xff]
        %v4562 = vld [vmem:[#allocation17 + $0x58] sm:$0xff]
        %v4563 = vld [vmem:[#allocation17 + $0x60] sm:$0xff]
        %v4564 = vld [vmem:[#allocation17 + $0x68] sm:$0xff]
        %v4565 = vld [vmem:[#allocation17 + $0x70] sm:$0xff]
        %v4566 = vld [vmem:[#allocation17 + $0x78] sm:$0xff]
        %v4567 = vld [vmem:[#allocation17 + $0x80] sm:$0xff]
        %v4568 = vld [vmem:[#allocation17 + $0x88] sm:$0xff]
        %v4569 = vld [vmem:[#allocation17 + $0x90] sm:$0xff]
        %v4570 = vld [vmem:[#allocation17 + $0x98] sm:$0xff]
        %v4571 = vld [vmem:[#allocation17 + $0xa0] sm:$0xff]
        %v4572 = vld [vmem:[#allocation17 + $0xa8] sm:$0xff]
        %v4573 = vld [vmem:[#allocation17 + $0xb0] sm:$0xff]
        %v4574 = vld [vmem:[#allocation17 + $0xb8] sm:$0xff]
        %v4575 = vld [vmem:[#allocation17 + $0xc0] sm:$0xff]
        %v4576 = vld [vmem:[#allocation17 + $0xc8] sm:$0xff]
        %v4577 = vld [vmem:[#allocation17 + $0xd0] sm:$0xff]
        %v4578 = vld [vmem:[#allocation17 + $0xd8] sm:$0xff]
        %v4579 = vld [vmem:[#allocation17 + $0xe0] sm:$0xff]
        %v4580 = vld [vmem:[#allocation17 + $0xe8] sm:$0xff]
        %v4581 = vld [vmem:[#allocation17 + $0xf0] sm:$0xff]
        %v4582 = vld [vmem:[#allocation17 + $0xf8] sm:$0xff]
        %v4583 = vld [vmem:[#allocation17 + $0x100] sm:$0xff]
        %v4584 = vld [vmem:[#allocation17 + $0x108] sm:$0xff]
        %v4585 = vld [vmem:[#allocation17 + $0x110] sm:$0xff]
        %v4586 = vld [vmem:[#allocation17 + $0x118] sm:$0xff]
        %v4587 = vld [vmem:[#allocation17 + $0x120] sm:$0xff]
        %v4588 = vld [vmem:[#allocation17 + $0x128] sm:$0xff]
        %v4589 = vld [vmem:[#allocation17 + $0x130] sm:$0xff]
        %v4590 = vld [vmem:[#allocation17 + $0x138] sm:$0xff]
        %v4591 = vld [vmem:[#allocation17 + $0x140] sm:$0xff]
        %v4592 = vld [vmem:[#allocation17 + $0x148] sm:$0xff]
        %v4593 = vld [vmem:[#allocation17 + $0x150] sm:$0xff]
        %v4594 = vld [vmem:[#allocation17 + $0x158] sm:$0xff]
        %v4595 = vld [vmem:[#allocation17 + $0x160] sm:$0xff]
        %v4596 = vld [vmem:[#allocation17 + $0x168] sm:$0xff]
        %v4597 = vld [vmem:[#allocation17 + $0x170] sm:$0xff]
        %v4598 = vld [vmem:[#allocation17 + $0x178] sm:$0xff]
        %v4599 = vld [vmem:[#allocation17 + $0x180] sm:$0xff]
        %v4600 = vld [vmem:[#allocation17 + $0x188] sm:$0xff]
        %v4601 = vld [vmem:[#allocation17 + $0x190] sm:$0xff]
        %v4602 = vld [vmem:[#allocation17 + $0x198] sm:$0xff]
        %v4603 = vld [vmem:[#allocation17 + $0x1a0] sm:$0xff]
        %v4604 = vld [vmem:[#allocation17 + $0x1a8] sm:$0xff]
        %v4605 = vld [vmem:[#allocation17 + $0x1b0] sm:$0xff]
        %v4606 = vld [vmem:[#allocation17 + $0x1b8] sm:$0xff]
        %v4607 = vld [vmem:[#allocation17 + $0x1c0] sm:$0xff]
        %v4608 = vld [vmem:[#allocation17 + $0x1c8] sm:$0xff]
        %v4609 = vld [vmem:[#allocation17 + $0x1d0] sm:$0xff]
        %v4610 = vld [vmem:[#allocation17 + $0x1d8] sm:$0xff]
        %v4611 = vld [vmem:[#allocation17 + $0x1e0] sm:$0xff]
        %v4612 = vld [vmem:[#allocation17 + $0x1e8] sm:$0xff]
        %v4613 = vld [vmem:[#allocation17 + $0x1f0] sm:$0xff]
        %v4614 = vld [vmem:[#allocation17 + $0x1f8] sm:$0xff]
        %v4615 = vld [vmem:[#allocation17 + $0x200] sm:$0xff]
        %v4616 = vld [vmem:[#allocation17 + $0x208] sm:$0xff]
        %v4617 = vld [vmem:[#allocation17 + $0x210] sm:$0xff]
        %v4618 = vld [vmem:[#allocation17 + $0x218] sm:$0xff]
        %v4619 = vld [vmem:[#allocation17 + $0x220] sm:$0xff]
        %v4620 = vld [vmem:[#allocation17 + $0x228] sm:$0xff]
        %v4621 = vld [vmem:[#allocation17 + $0x230] sm:$0xff]
        %v4622 = vld [vmem:[#allocation17 + $0x238] sm:$0xff]
        %v4623 = vld [vmem:[#allocation17 + $0x240] sm:$0xff]
        %v4624 = vld [vmem:[#allocation17 + $0x248] sm:$0xff]
        %v4625 = vld [vmem:[#allocation17 + $0x250] sm:$0xff]
        %v4626 = vld [vmem:[#allocation17 + $0x258] sm:$0xff]
        %v4627 = vld [vmem:[#allocation17 + $0x260] sm:$0xff]
        %v4628 = vld [vmem:[#allocation17 + $0x268] sm:$0xff]
        %v4629 = vld [vmem:[#allocation17 + $0x270] sm:$0xff]
        %v4630 = vld [vmem:[#allocation17 + $0x278] sm:$0xff]
        %v4631 = vld [vmem:[#allocation17 + $0x280] sm:$0xff]
        %v4632 = vld [vmem:[#allocation17 + $0x288] sm:$0xff]
        %v4633 = vld [vmem:[#allocation17 + $0x290] sm:$0xff]
        %v4634 = vld [vmem:[#allocation17 + $0x298] sm:$0xff]
        %v4635 = vld [vmem:[#allocation17 + $0x2a0] sm:$0xff]
        %v4636 = vld [vmem:[#allocation17 + $0x2a8] sm:$0xff]
        %v4637 = vld [vmem:[#allocation17 + $0x2b0] sm:$0xff]
        %v4638 = vld [vmem:[#allocation17 + $0x2b8] sm:$0xff]
        %v4639 = vld [vmem:[#allocation17 + $0x2c0] sm:$0xff]
        %v4640 = vld [vmem:[#allocation17 + $0x2c8] sm:$0xff]
        %v4641 = vld [vmem:[#allocation17 + $0x2d0] sm:$0xff]
        %v4642 = vld [vmem:[#allocation17 + $0x2d8] sm:$0xff]
        %v4643 = vld [vmem:[#allocation17 + $0x2e0] sm:$0xff]
        %v4644 = vld [vmem:[#allocation17 + $0x2e8] sm:$0xff]
        %v4645 = vld [vmem:[#allocation17 + $0x2f0] sm:$0xff]
        %v4646 = vld [vmem:[#allocation17 + $0x2f8] sm:$0xff]
        %v4647 = vld [vmem:[#allocation17 + $0x300] sm:$0xff]
        %v4648 = vld [vmem:[#allocation17 + $0x308] sm:$0xff]
        %v4649 = vld [vmem:[#allocation17 + $0x310] sm:$0xff]
        %v4650 = vld [vmem:[#allocation17 + $0x318] sm:$0xff]
        %v4651 = vld [vmem:[#allocation17 + $0x320] sm:$0xff]
        %v4652 = vld [vmem:[#allocation17 + $0x328] sm:$0xff]
        %v4653 = vld [vmem:[#allocation17 + $0x330] sm:$0xff]
        %v4654 = vld [vmem:[#allocation17 + $0x338] sm:$0xff]
        %v4655 = vld [vmem:[#allocation17 + $0x340] sm:$0xff]
        %v4656 = vld [vmem:[#allocation17 + $0x348] sm:$0xff]
        %v4657 = vld [vmem:[#allocation17 + $0x350] sm:$0xff]
        %v4658 = vld [vmem:[#allocation17 + $0x358] sm:$0xff]
        %v4659 = vld [vmem:[#allocation17 + $0x360] sm:$0xff]
        %v4660 = vld [vmem:[#allocation17 + $0x368] sm:$0xff]
        %v4661 = vld [vmem:[#allocation17 + $0x370] sm:$0xff]
        %v4662 = vld [vmem:[#allocation17 + $0x378] sm:$0xff]
        %v4663 = vld [vmem:[#allocation17 + $0x380] sm:$0xff]
        %v4664 = vld [vmem:[#allocation17 + $0x388] sm:$0xff]
        %v4665 = vld [vmem:[#allocation17 + $0x390] sm:$0xff]
        %v4666 = vld [vmem:[#allocation17 + $0x398] sm:$0xff]
        %v4667 = vld [vmem:[#allocation17 + $0x3a0] sm:$0xff]
        %v4668 = vld [vmem:[#allocation17 + $0x3a8] sm:$0xff]
        %v4669 = vld [vmem:[#allocation17 + $0x3b0] sm:$0xff]
        %v4670 = vld [vmem:[#allocation17 + $0x3b8] sm:$0xff]
        %v4671 = vld [vmem:[#allocation17 + $0x3c0] sm:$0xff]
        %v4672 = vld [vmem:[#allocation17 + $0x3c8] sm:$0xff]
        %v4673 = vld [vmem:[#allocation17 + $0x3d0] sm:$0xff]
        %v4674 = vld [vmem:[#allocation17 + $0x3d8] sm:$0xff]
        %v4675 = vld [vmem:[#allocation17 + $0x3e0] sm:$0xff]
        %v4676 = vld [vmem:[#allocation17 + $0x3e8] sm:$0xff]
        %v4677 = vld [vmem:[#allocation17 + $0x3f0] sm:$0xff]
        %v4678 = vld [vmem:[#allocation17 + $0x3f8] sm:$0xff]
        %v4679 = vld [vmem:[#allocation17 + $0x400] sm:$0xff]
        %v4680 = vld [vmem:[#allocation17 + $0x408] sm:$0xff]
        %v4681 = vld [vmem:[#allocation17 + $0x410] sm:$0xff]
        %v4682 = vld [vmem:[#allocation17 + $0x418] sm:$0xff]
        %v4683 = vld [vmem:[#allocation17 + $0x420] sm:$0xff]
        %v4684 = vld [vmem:[#allocation17 + $0x428] sm:$0xff]
        %v4685 = vld [vmem:[#allocation17 + $0x430] sm:$0xff]
        %v4686 = vld [vmem:[#allocation17 + $0x438] sm:$0xff]
        %v4687 = vld [vmem:[#allocation17 + $0x440] sm:$0xff]
        %v4688 = vld [vmem:[#allocation17 + $0x448] sm:$0xff]
        %v4689 = vld [vmem:[#allocation17 + $0x450] sm:$0xff]
        %v4690 = vld [vmem:[#allocation17 + $0x458] sm:$0xff]
        %v4691 = vld [vmem:[#allocation17 + $0x460] sm:$0xff]
        %v4692 = vld [vmem:[#allocation17 + $0x468] sm:$0xff]
        %v4693 = vld [vmem:[#allocation17 + $0x470] sm:$0xff]
        %v4694 = vld [vmem:[#allocation17 + $0x478] sm:$0xff]
        %v4695 = vld [vmem:[#allocation17 + $0x480] sm:$0xff]
        %v4696 = vld [vmem:[#allocation17 + $0x488] sm:$0xff]
        %v4697 = vld [vmem:[#allocation17 + $0x490] sm:$0xff]
        %v4698 = vld [vmem:[#allocation17 + $0x498] sm:$0xff]
        %v4699 = vld [vmem:[#allocation17 + $0x4a0] sm:$0xff]
        %v4700 = vld [vmem:[#allocation17 + $0x4a8] sm:$0xff]
        %v4701 = vld [vmem:[#allocation17 + $0x4b0] sm:$0xff]
        %v4702 = vld [vmem:[#allocation17 + $0x4b8] sm:$0xff]
        %v4703 = vld [vmem:[#allocation17 + $0x4c0] sm:$0xff]
        %v4704 = vld [vmem:[#allocation17 + $0x4c8] sm:$0xff]
        %v4705 = vld [vmem:[#allocation17 + $0x4d0] sm:$0xff]
        %v4706 = vld [vmem:[#allocation17 + $0x4d8] sm:$0xff]
        %v4707 = vld [vmem:[#allocation17 + $0x4e0] sm:$0xff]
        %v4708 = vld [vmem:[#allocation17 + $0x4e8] sm:$0xff]
        %v4709 = vld [vmem:[#allocation17 + $0x4f0] sm:$0xff]
        %v4710 = vld [vmem:[#allocation17 + $0x4f8] sm:$0xff]
        %v4711 = vld [vmem:[#allocation17 + $0x500] sm:$0xff]
        %v4712 = vld [vmem:[#allocation17 + $0x508] sm:$0xff]
        %v4713 = vld [vmem:[#allocation17 + $0x510] sm:$0xff]
        %v4714 = vld [vmem:[#allocation17 + $0x518] sm:$0xff]
        %v4715 = vld [vmem:[#allocation17 + $0x520] sm:$0xff]
        %v4716 = vld [vmem:[#allocation17 + $0x528] sm:$0xff]
        %v4717 = vld [vmem:[#allocation17 + $0x530] sm:$0xff]
        %v4718 = vld [vmem:[#allocation17 + $0x538] sm:$0xff]
        %v4719 = vld [vmem:[#allocation17 + $0x540] sm:$0xff]
        %v4720 = vld [vmem:[#allocation17 + $0x548] sm:$0xff]
        %v4721 = vld [vmem:[#allocation17 + $0x550] sm:$0xff]
        %v4722 = vld [vmem:[#allocation17 + $0x558] sm:$0xff]
        %v4723 = vld [vmem:[#allocation17 + $0x560] sm:$0xff]
        %v4724 = vld [vmem:[#allocation17 + $0x568] sm:$0xff]
        %v4725 = vld [vmem:[#allocation17 + $0x570] sm:$0xff]
        %v4726 = vld [vmem:[#allocation17 + $0x578] sm:$0xff]
        %v4727 = vld [vmem:[#allocation17 + $0x580] sm:$0xff]
        %v4728 = vld [vmem:[#allocation17 + $0x588] sm:$0xff]
        %v4729 = vld [vmem:[#allocation17 + $0x590] sm:$0xff]
        %v4730 = vld [vmem:[#allocation17 + $0x598] sm:$0xff]
        %v4731 = vld [vmem:[#allocation17 + $0x5a0] sm:$0xff]
        %v4732 = vld [vmem:[#allocation17 + $0x5a8] sm:$0xff]
        %v4733 = vld [vmem:[#allocation17 + $0x5b0] sm:$0xff]
        %v4734 = vld [vmem:[#allocation17 + $0x5b8] sm:$0xff]
        %v4735 = vld [vmem:[#allocation17 + $0x5c0] sm:$0xff]
        %v4736 = vld [vmem:[#allocation17 + $0x5c8] sm:$0xff]
        %v4737 = vld [vmem:[#allocation17 + $0x5d0] sm:$0xff]
        %v4738 = vld [vmem:[#allocation17 + $0x5d8] sm:$0xff]
        %v4739 = vld [vmem:[#allocation17 + $0x5e0] sm:$0xff]
        %v4740 = vld [vmem:[#allocation17 + $0x5e8] sm:$0xff]
        %v4741 = vld [vmem:[#allocation17 + $0x5f0] sm:$0xff]
        %v4742 = vld [vmem:[#allocation17 + $0x5f8] sm:$0xff]
        %v4743 = vld [vmem:[#allocation17 + $0x600] sm:$0xff]
        %v4744 = vld [vmem:[#allocation17 + $0x608] sm:$0xff]
        %v4745 = vld [vmem:[#allocation17 + $0x610] sm:$0xff]
        %v4746 = vld [vmem:[#allocation17 + $0x618] sm:$0xff]
        %v4747 = vld [vmem:[#allocation17 + $0x620] sm:$0xff]
        %v4748 = vld [vmem:[#allocation17 + $0x628] sm:$0xff]
        %v4749 = vld [vmem:[#allocation17 + $0x630] sm:$0xff]
        %v4750 = vld [vmem:[#allocation17 + $0x638] sm:$0xff]
        %v4751 = vld [vmem:[#allocation17 + $0x640] sm:$0xff]
        %v4752 = vld [vmem:[#allocation17 + $0x648] sm:$0xff]
        %v4753 = vld [vmem:[#allocation17 + $0x650] sm:$0xff]
        %v4754 = vld [vmem:[#allocation17 + $0x658] sm:$0xff]
        %v4755 = vld [vmem:[#allocation17 + $0x660] sm:$0xff]
        %v4756 = vld [vmem:[#allocation17 + $0x668] sm:$0xff]
        %v4757 = vld [vmem:[#allocation17 + $0x670] sm:$0xff]
        %v4758 = vld [vmem:[#allocation17 + $0x678] sm:$0xff]
        %v4759 = vld [vmem:[#allocation17 + $0x680] sm:$0xff]
        %v4760 = vld [vmem:[#allocation17 + $0x688] sm:$0xff]
        %v4761 = vld [vmem:[#allocation17 + $0x690] sm:$0xff]
        %v4762 = vld [vmem:[#allocation17 + $0x698] sm:$0xff]
        %v4763 = vld [vmem:[#allocation17 + $0x6a0] sm:$0xff]
        %v4764 = vld [vmem:[#allocation17 + $0x6a8] sm:$0xff]
        %v4765 = vld [vmem:[#allocation17 + $0x6b0] sm:$0xff]
        %v4766 = vld [vmem:[#allocation17 + $0x6b8] sm:$0xff]
        %v4767 = vld [vmem:[#allocation17 + $0x6c0] sm:$0xff]
        %v4768 = vld [vmem:[#allocation17 + $0x6c8] sm:$0xff]
        %v4769 = vld [vmem:[#allocation17 + $0x6d0] sm:$0xff]
        %v4770 = vld [vmem:[#allocation17 + $0x6d8] sm:$0xff]
        %v4771 = vld [vmem:[#allocation17 + $0x6e0] sm:$0xff]
        %v4772 = vld [vmem:[#allocation17 + $0x6e8] sm:$0xff]
        %v4773 = vld [vmem:[#allocation17 + $0x6f0] sm:$0xff]
        %v4774 = vld [vmem:[#allocation17 + $0x6f8] sm:$0xff]
        %v4775 = vld [vmem:[#allocation17 + $0x700] sm:$0xff]
        %v4776 = vld [vmem:[#allocation17 + $0x708] sm:$0xff]
        %v4777 = vld [vmem:[#allocation17 + $0x710] sm:$0xff]
        %v4778 = vld [vmem:[#allocation17 + $0x718] sm:$0xff]
        %v4779 = vld [vmem:[#allocation17 + $0x720] sm:$0xff]
        %v4780 = vld [vmem:[#allocation17 + $0x728] sm:$0xff]
        %v4781 = vld [vmem:[#allocation17 + $0x730] sm:$0xff]
        %v4782 = vld [vmem:[#allocation17 + $0x738] sm:$0xff]
        %v4783 = vld [vmem:[#allocation17 + $0x740] sm:$0xff]
        %v4784 = vld [vmem:[#allocation17 + $0x748] sm:$0xff]
        %v4785 = vld [vmem:[#allocation17 + $0x750] sm:$0xff]
        %v4786 = vld [vmem:[#allocation17 + $0x758] sm:$0xff]
        %v4787 = vld [vmem:[#allocation17 + $0x760] sm:$0xff]
        %v4788 = vld [vmem:[#allocation17 + $0x768] sm:$0xff]
        %v4789 = vld [vmem:[#allocation17 + $0x770] sm:$0xff]
        %v4790 = vld [vmem:[#allocation17 + $0x778] sm:$0xff]
        %v4791 = vld [vmem:[#allocation17 + $0x780] sm:$0xff]
        %v4792 = vld [vmem:[#allocation17 + $0x788] sm:$0xff]
        %v4793 = vld [vmem:[#allocation17 + $0x790] sm:$0xff]
        %v4794 = vld [vmem:[#allocation17 + $0x798] sm:$0xff]
        %v4795 = vld [vmem:[#allocation17 + $0x7a0] sm:$0xff]
        %v4796 = vld [vmem:[#allocation17 + $0x7a8] sm:$0xff]
        %v4797 = vld [vmem:[#allocation17 + $0x7b0] sm:$0xff]
        %v4798 = vld [vmem:[#allocation17 + $0x7b8] sm:$0xff]
        %v4799 = vld [vmem:[#allocation17 + $0x7c0] sm:$0xff]
        %v4800 = vld [vmem:[#allocation17 + $0x7c8] sm:$0xff]
        %v4801 = vld [vmem:[#allocation17 + $0x7d0] sm:$0xff]
        %v4802 = vld [vmem:[#allocation17 + $0x7d8] sm:$0xff]
        %v4803 = vld [vmem:[#allocation17 + $0x7e0] sm:$0xff]
        %v4804 = vld [vmem:[#allocation17 + $0x7e8] sm:$0xff]
        %v4805 = vld [vmem:[#allocation17 + $0x7f0] sm:$0xff]
        %v4806 = vld [vmem:[#allocation17 + $0x7f8] sm:$0xff]
        %v4807 = vld [vmem:[#allocation17 + $0x800] sm:$0xff]
        %v4808 = vld [vmem:[#allocation17 + $0x808] sm:$0xff]
        %v4809 = vld [vmem:[#allocation17 + $0x810] sm:$0xff]
        %v4810 = vld [vmem:[#allocation17 + $0x818] sm:$0xff]
        %v4811 = vld [vmem:[#allocation17 + $0x820] sm:$0xff]
        %v4812 = vld [vmem:[#allocation17 + $0x828] sm:$0xff]
        %v4813 = vld [vmem:[#allocation17 + $0x830] sm:$0xff]
        %v4814 = vld [vmem:[#allocation17 + $0x838] sm:$0xff]
        %v4815 = vld [vmem:[#allocation17 + $0x840] sm:$0xff]
        %v4816 = vld [vmem:[#allocation17 + $0x848] sm:$0xff]
        %v4817 = vld [vmem:[#allocation17 + $0x850] sm:$0xff]
        %v4818 = vld [vmem:[#allocation17 + $0x858] sm:$0xff]
        %v4819 = vld [vmem:[#allocation17 + $0x860] sm:$0xff]
        %v4820 = vld [vmem:[#allocation17 + $0x868] sm:$0xff]
        %v4821 = vld [vmem:[#allocation17 + $0x870] sm:$0xff]
        %v4822 = vld [vmem:[#allocation17 + $0x878] sm:$0xff]
        %v4823 = vld [vmem:[#allocation17 + $0x880] sm:$0xff]
        %v4824 = vld [vmem:[#allocation17 + $0x888] sm:$0xff]
        %v4825 = vld [vmem:[#allocation17 + $0x890] sm:$0xff]
        %v4826 = vld [vmem:[#allocation17 + $0x898] sm:$0xff]
        %v4827 = vld [vmem:[#allocation17 + $0x8a0] sm:$0xff]
        %v4828 = vld [vmem:[#allocation17 + $0x8a8] sm:$0xff]
        %v4829 = vld [vmem:[#allocation17 + $0x8b0] sm:$0xff]
        %v4830 = vld [vmem:[#allocation17 + $0x8b8] sm:$0xff]
        %v4831 = vld [vmem:[#allocation17 + $0x8c0] sm:$0xff]
        %v4832 = vld [vmem:[#allocation17 + $0x8c8] sm:$0xff]
        %v4833 = vld [vmem:[#allocation17 + $0x8d0] sm:$0xff]
        %v4834 = vld [vmem:[#allocation17 + $0x8d8] sm:$0xff]
        %v4835 = vld [vmem:[#allocation17 + $0x8e0] sm:$0xff]
        %v4836 = vld [vmem:[#allocation17 + $0x8e8] sm:$0xff]
        %v4837 = vld [vmem:[#allocation17 + $0x8f0] sm:$0xff]
        %v4838 = vld [vmem:[#allocation17 + $0x8f8] sm:$0xff]
        %v4839 = vld [vmem:[#allocation17 + $0x900] sm:$0xff]
        %v4840 = vld [vmem:[#allocation17 + $0x908] sm:$0xff]
        %v4841 = vld [vmem:[#allocation17 + $0x910] sm:$0xff]
        %v4842 = vld [vmem:[#allocation17 + $0x918] sm:$0xff]
        %v4843 = vld [vmem:[#allocation17 + $0x920] sm:$0xff]
        %v4844 = vld [vmem:[#allocation17 + $0x928] sm:$0xff]
        %v4845 = vld [vmem:[#allocation17 + $0x930] sm:$0xff]
        %v4846 = vld [vmem:[#allocation17 + $0x938] sm:$0xff]
        %v4847 = vld [vmem:[#allocation17 + $0x940] sm:$0xff]
        %v4848 = vld [vmem:[#allocation17 + $0x948] sm:$0xff]
        %v4849 = vld [vmem:[#allocation17 + $0x950] sm:$0xff]
        %v4850 = vld [vmem:[#allocation17 + $0x958] sm:$0xff]
        %v4851 = vld [vmem:[#allocation17 + $0x960] sm:$0xff]
        %v4852 = vld [vmem:[#allocation17 + $0x968] sm:$0xff]
        %v4853 = vld [vmem:[#allocation17 + $0x970] sm:$0xff]
        %v4854 = vld [vmem:[#allocation17 + $0x978] sm:$0xff]
        %v4855 = vld [vmem:[#allocation17 + $0x980] sm:$0xff]
        %v4856 = vld [vmem:[#allocation17 + $0x988] sm:$0xff]
        %v4857 = vld [vmem:[#allocation17 + $0x990] sm:$0xff]
        %v4858 = vld [vmem:[#allocation17 + $0x998] sm:$0xff]
        %v4859 = vld [vmem:[#allocation17 + $0x9a0] sm:$0xff]
        %v4860 = vld [vmem:[#allocation17 + $0x9a8] sm:$0xff]
        %v4861 = vld [vmem:[#allocation17 + $0x9b0] sm:$0xff]
        %v4862 = vld [vmem:[#allocation17 + $0x9b8] sm:$0xff]
        %v4863 = vld [vmem:[#allocation17 + $0x9c0] sm:$0xff]
        %v4864 = vld [vmem:[#allocation17 + $0x9c8] sm:$0xff]
        %v4865 = vld [vmem:[#allocation17 + $0x9d0] sm:$0xff]
        %v4866 = vld [vmem:[#allocation17 + $0x9d8] sm:$0xff]
        %v4867 = vld [vmem:[#allocation17 + $0x9e0] sm:$0xff]
        %v4868 = vld [vmem:[#allocation17 + $0x9e8] sm:$0xff]
        %v4869 = vld [vmem:[#allocation17 + $0x9f0] sm:$0xff]
        %v4870 = vld [vmem:[#allocation17 + $0x9f8] sm:$0xff]
        %v4871 = vld [vmem:[#allocation17 + $0xa00] sm:$0xff]
        %v4872 = vld [vmem:[#allocation17 + $0xa08] sm:$0xff]
        %v4873 = vld [vmem:[#allocation17 + $0xa10] sm:$0xff]
        %v4874 = vld [vmem:[#allocation17 + $0xa18] sm:$0xff]
        %v4875 = vld [vmem:[#allocation17 + $0xa20] sm:$0xff]
        %v4876 = vld [vmem:[#allocation17 + $0xa28] sm:$0xff]
        %v4877 = vld [vmem:[#allocation17 + $0xa30] sm:$0xff]
        %v4878 = vld [vmem:[#allocation17 + $0xa38] sm:$0xff]
        %v4879 = vld [vmem:[#allocation17 + $0xa40] sm:$0xff]
        %v4880 = vld [vmem:[#allocation17 + $0xa48] sm:$0xff]
        %v4881 = vld [vmem:[#allocation17 + $0xa50] sm:$0xff]
        %v4882 = vld [vmem:[#allocation17 + $0xa58] sm:$0xff]
        %v4883 = vld [vmem:[#allocation17 + $0xa60] sm:$0xff]
        %v4884 = vld [vmem:[#allocation17 + $0xa68] sm:$0xff]
        %v4885 = vld [vmem:[#allocation17 + $0xa70] sm:$0xff]
        %v4886 = vld [vmem:[#allocation17 + $0xa78] sm:$0xff]
        %v4887 = vld [vmem:[#allocation17 + $0xa80] sm:$0xff]
        %v4888 = vld [vmem:[#allocation17 + $0xa88] sm:$0xff]
        %v4889 = vld [vmem:[#allocation17 + $0xa90] sm:$0xff]
        %v4890 = vld [vmem:[#allocation17 + $0xa98] sm:$0xff]
        %v4891 = vld [vmem:[#allocation17 + $0xaa0] sm:$0xff]
        %v4892 = vld [vmem:[#allocation17 + $0xaa8] sm:$0xff]
        %v4893 = vld [vmem:[#allocation17 + $0xab0] sm:$0xff]
        %v4894 = vld [vmem:[#allocation17 + $0xab8] sm:$0xff]
        %v4895 = vld [vmem:[#allocation17 + $0xac0] sm:$0xff]
        %v4896 = vld [vmem:[#allocation17 + $0xac8] sm:$0xff]
        %v4897 = vld [vmem:[#allocation17 + $0xad0] sm:$0xff]
        %v4898 = vld [vmem:[#allocation17 + $0xad8] sm:$0xff]
        %v4899 = vld [vmem:[#allocation17 + $0xae0] sm:$0xff]
        %v4900 = vld [vmem:[#allocation17 + $0xae8] sm:$0xff]
        %v4901 = vld [vmem:[#allocation17 + $0xaf0] sm:$0xff]
        %v4902 = vld [vmem:[#allocation17 + $0xaf8] sm:$0xff]
        %v4903 = vld [vmem:[#allocation17 + $0xb00] sm:$0xff]
        %v4904 = vld [vmem:[#allocation17 + $0xb08] sm:$0xff]
        %v4905 = vld [vmem:[#allocation17 + $0xb10] sm:$0xff]
        %v4906 = vld [vmem:[#allocation17 + $0xb18] sm:$0xff]
        %v4907 = vld [vmem:[#allocation17 + $0xb20] sm:$0xff]
        %v4908 = vld [vmem:[#allocation17 + $0xb28] sm:$0xff]
        %v4909 = vld [vmem:[#allocation17 + $0xb30] sm:$0xff]
        %v4910 = vld [vmem:[#allocation17 + $0xb38] sm:$0xff]
        %v4911 = vld [vmem:[#allocation17 + $0xb40] sm:$0xff]
        %v4912 = vld [vmem:[#allocation17 + $0xb48] sm:$0xff]
        %v4913 = vld [vmem:[#allocation17 + $0xb50] sm:$0xff]
        %v4914 = vld [vmem:[#allocation17 + $0xb58] sm:$0xff]
        %v4915 = vld [vmem:[#allocation17 + $0xb60] sm:$0xff]
        %v4916 = vld [vmem:[#allocation17 + $0xb68] sm:$0xff]
        %v4917 = vld [vmem:[#allocation17 + $0xb70] sm:$0xff]
        %v4918 = vld [vmem:[#allocation17 + $0xb78] sm:$0xff]
        %v4919 = vld [vmem:[#allocation17 + $0xb80] sm:$0xff]
        %v4920 = vld [vmem:[#allocation17 + $0xb88] sm:$0xff]
        %v4921 = vld [vmem:[#allocation17 + $0xb90] sm:$0xff]
        %v4922 = vld [vmem:[#allocation17 + $0xb98] sm:$0xff]
        %v4923 = vld [vmem:[#allocation17 + $0xba0] sm:$0xff]
        %v4924 = vld [vmem:[#allocation17 + $0xba8] sm:$0xff]
        %v4925 = vld [vmem:[#allocation17 + $0xbb0] sm:$0xff]
        %v4926 = vld [vmem:[#allocation17 + $0xbb8] sm:$0xff]
        %v4927 = vld [vmem:[#allocation17 + $0xbc0] sm:$0xff]
        %v4928 = vld [vmem:[#allocation17 + $0xbc8] sm:$0xff]
        %v4929 = vld [vmem:[#allocation17 + $0xbd0] sm:$0xff]
        %v4930 = vld [vmem:[#allocation17 + $0xbd8] sm:$0xff]
        %v4931 = vld [vmem:[#allocation17 + $0xbe0] sm:$0xff]
        %v4932 = vld [vmem:[#allocation17 + $0xbe8] sm:$0xff]
        %v4933 = vld [vmem:[#allocation17 + $0xbf0] sm:$0xff]
        %v4934 = vld [vmem:[#allocation17 + $0xbf8] sm:$0xff]
        %v4935 = vld [vmem:[#allocation17 + $0xc00] sm:$0xff]
        %v4936 = vld [vmem:[#allocation17 + $0xc08] sm:$0xff]
        %v4937 = vld [vmem:[#allocation17 + $0xc10] sm:$0xff]
        %v4938 = vld [vmem:[#allocation17 + $0xc18] sm:$0xff]
        %v4939 = vld [vmem:[#allocation17 + $0xc20] sm:$0xff]
        %v4940 = vld [vmem:[#allocation17 + $0xc28] sm:$0xff]
        %v4941 = vld [vmem:[#allocation17 + $0xc30] sm:$0xff]
        %v4942 = vld [vmem:[#allocation17 + $0xc38] sm:$0xff]
        %v4943 = vld [vmem:[#allocation17 + $0xc40] sm:$0xff]
        %v4944 = vld [vmem:[#allocation17 + $0xc48] sm:$0xff]
        %v4945 = vld [vmem:[#allocation17 + $0xc50] sm:$0xff]
        %v4946 = vld [vmem:[#allocation17 + $0xc58] sm:$0xff]
        %v4947 = vld [vmem:[#allocation17 + $0xc60] sm:$0xff]
        %v4948 = vld [vmem:[#allocation17 + $0xc68] sm:$0xff]
        %v4949 = vld [vmem:[#allocation17 + $0xc70] sm:$0xff]
        %v4950 = vld [vmem:[#allocation17 + $0xc78] sm:$0xff]
        %v4951 = vld [vmem:[#allocation17 + $0xc80] sm:$0xff]
        %v4952 = vld [vmem:[#allocation17 + $0xc88] sm:$0xff]
        %v4953 = vld [vmem:[#allocation17 + $0xc90] sm:$0xff]
        %v4954 = vld [vmem:[#allocation17 + $0xc98] sm:$0xff]
        %v4955 = vld [vmem:[#allocation17 + $0xca0] sm:$0xff]
        %v4956 = vld [vmem:[#allocation17 + $0xca8] sm:$0xff]
        %v4957 = vld [vmem:[#allocation17 + $0xcb0] sm:$0xff]
        %v4958 = vld [vmem:[#allocation17 + $0xcb8] sm:$0xff]
        %v4959 = vld [vmem:[#allocation17 + $0xcc0] sm:$0xff]
        %v4960 = vld [vmem:[#allocation17 + $0xcc8] sm:$0xff]
        %v4961 = vld [vmem:[#allocation17 + $0xcd0] sm:$0xff]
        %v4962 = vld [vmem:[#allocation17 + $0xcd8] sm:$0xff]
        %v4963 = vld [vmem:[#allocation17 + $0xce0] sm:$0xff]
        %v4964 = vld [vmem:[#allocation17 + $0xce8] sm:$0xff]
        %v4965 = vld [vmem:[#allocation17 + $0xcf0] sm:$0xff]
        %v4966 = vld [vmem:[#allocation17 + $0xcf8] sm:$0xff]
        %v4967 = vld [vmem:[#allocation17 + $0xd00] sm:$0xff]
        %v4968 = vld [vmem:[#allocation17 + $0xd08] sm:$0xff]
        %v4969 = vld [vmem:[#allocation17 + $0xd10] sm:$0xff]
        %v4970 = vld [vmem:[#allocation17 + $0xd18] sm:$0xff]
        %v4971 = vld [vmem:[#allocation17 + $0xd20] sm:$0xff]
        %v4972 = vld [vmem:[#allocation17 + $0xd28] sm:$0xff]
        %v4973 = vld [vmem:[#allocation17 + $0xd30] sm:$0xff]
        %v4974 = vld [vmem:[#allocation17 + $0xd38] sm:$0xff]
        %v4975 = vld [vmem:[#allocation17 + $0xd40] sm:$0xff]
        %v4976 = vld [vmem:[#allocation17 + $0xd48] sm:$0xff]
        %v4977 = vld [vmem:[#allocation17 + $0xd50] sm:$0xff]
        %v4978 = vld [vmem:[#allocation17 + $0xd58] sm:$0xff]
        %v4979 = vld [vmem:[#allocation17 + $0xd60] sm:$0xff]
        %v4980 = vld [vmem:[#allocation17 + $0xd68] sm:$0xff]
        %v4981 = vld [vmem:[#allocation17 + $0xd70] sm:$0xff]
        %v4982 = vld [vmem:[#allocation17 + $0xd78] sm:$0xff]
        %v4983 = vld [vmem:[#allocation17 + $0xd80] sm:$0xff]
        %v4984 = vld [vmem:[#allocation17 + $0xd88] sm:$0xff]
        %v4985 = vld [vmem:[#allocation17 + $0xd90] sm:$0xff]
        %v4986 = vld [vmem:[#allocation17 + $0xd98] sm:$0xff]
        %v4987 = vld [vmem:[#allocation17 + $0xda0] sm:$0xff]
        %v4988 = vld [vmem:[#allocation17 + $0xda8] sm:$0xff]
        %v4989 = vld [vmem:[#allocation17 + $0xdb0] sm:$0xff]
        %v4990 = vld [vmem:[#allocation17 + $0xdb8] sm:$0xff]
        %v4991 = vld [vmem:[#allocation17 + $0xdc0] sm:$0xff]
        %v4992 = vld [vmem:[#allocation17 + $0xdc8] sm:$0xff]
        %v4993 = vld [vmem:[#allocation17 + $0xdd0] sm:$0xff]
        %v4994 = vld [vmem:[#allocation17 + $0xdd8] sm:$0xff]
        %v4995 = vld [vmem:[#allocation17 + $0xde0] sm:$0xff]
        %v4996 = vld [vmem:[#allocation17 + $0xde8] sm:$0xff]
        %v4997 = vld [vmem:[#allocation17 + $0xdf0] sm:$0xff]
        %v4998 = vld [vmem:[#allocation17 + $0xdf8] sm:$0xff]
        %v4999 = vld [vmem:[#allocation17 + $0xe00] sm:$0xff]
        %v5000 = vld [vmem:[#allocation17 + $0xe08] sm:$0xff]
        %v5001 = vld [vmem:[#allocation17 + $0xe10] sm:$0xff]
        %v5002 = vld [vmem:[#allocation17 + $0xe18] sm:$0xff]
        %v5003 = vld [vmem:[#allocation17 + $0xe20] sm:$0xff]
        %v5004 = vld [vmem:[#allocation17 + $0xe28] sm:$0xff]
        %v5005 = vld [vmem:[#allocation17 + $0xe30] sm:$0xff]
        %v5006 = vld [vmem:[#allocation17 + $0xe38] sm:$0xff]
        %v5007 = vld [vmem:[#allocation17 + $0xe40] sm:$0xff]
        %v5008 = vld [vmem:[#allocation17 + $0xe48] sm:$0xff]
        %v5009 = vld [vmem:[#allocation17 + $0xe50] sm:$0xff]
        %v5010 = vld [vmem:[#allocation17 + $0xe58] sm:$0xff]
        %v5011 = vld [vmem:[#allocation17 + $0xe60] sm:$0xff]
        %v5012 = vld [vmem:[#allocation17 + $0xe68] sm:$0xff]
        %v5013 = vld [vmem:[#allocation17 + $0xe70] sm:$0xff]
        %v5014 = vld [vmem:[#allocation17 + $0xe78] sm:$0xff]
        %v5015 = vld [vmem:[#allocation17 + $0xe80] sm:$0xff]
        %v5016 = vld [vmem:[#allocation17 + $0xe88] sm:$0xff]
        %v5017 = vld [vmem:[#allocation17 + $0xe90] sm:$0xff]
        %v5018 = vld [vmem:[#allocation17 + $0xe98] sm:$0xff]
        %v5019 = vld [vmem:[#allocation17 + $0xea0] sm:$0xff]
        %v5020 = vld [vmem:[#allocation17 + $0xea8] sm:$0xff]
        %v5021 = vld [vmem:[#allocation17 + $0xeb0] sm:$0xff]
        %v5022 = vld [vmem:[#allocation17 + $0xeb8] sm:$0xff]
        %v5023 = vld [vmem:[#allocation17 + $0xec0] sm:$0xff]
        %v5024 = vld [vmem:[#allocation17 + $0xec8] sm:$0xff]
        %v5025 = vld [vmem:[#allocation17 + $0xed0] sm:$0xff]
        %v5026 = vld [vmem:[#allocation17 + $0xed8] sm:$0xff]
        %v5027 = vld [vmem:[#allocation17 + $0xee0] sm:$0xff]
        %v5028 = vld [vmem:[#allocation17 + $0xee8] sm:$0xff]
        %v5029 = vld [vmem:[#allocation17 + $0xef0] sm:$0xff]
        %v5030 = vld [vmem:[#allocation17 + $0xef8] sm:$0xff]
        %v5031 = vld [vmem:[#allocation17 + $0xf00] sm:$0xff]
        %v5032 = vld [vmem:[#allocation17 + $0xf08] sm:$0xff]
        %v5033 = vld [vmem:[#allocation17 + $0xf10] sm:$0xff]
        %v5034 = vld [vmem:[#allocation17 + $0xf18] sm:$0xff]
        %v5035 = vld [vmem:[#allocation17 + $0xf20] sm:$0xff]
        %v5036 = vld [vmem:[#allocation17 + $0xf28] sm:$0xff]
        %v5037 = vld [vmem:[#allocation17 + $0xf30] sm:$0xff]
        %v5038 = vld [vmem:[#allocation17 + $0xf38] sm:$0xff]
        %v5039 = vld [vmem:[#allocation17 + $0xf40] sm:$0xff]
        %v5040 = vld [vmem:[#allocation17 + $0xf48] sm:$0xff]
        %v5041 = vld [vmem:[#allocation17 + $0xf50] sm:$0xff]
        %v5042 = vld [vmem:[#allocation17 + $0xf58] sm:$0xff]
        %v5043 = vld [vmem:[#allocation17 + $0xf60] sm:$0xff]
        %v5044 = vld [vmem:[#allocation17 + $0xf68] sm:$0xff]
        %v5045 = vld [vmem:[#allocation17 + $0xf70] sm:$0xff]
        %v5046 = vld [vmem:[#allocation17 + $0xf78] sm:$0xff]
        %v5047 = vld [vmem:[#allocation17 + $0xf80] sm:$0xff]
        %v5048 = vld [vmem:[#allocation17 + $0xf88] sm:$0xff]
        %v5049 = vld [vmem:[#allocation17 + $0xf90] sm:$0xff]
        %v5050 = vld [vmem:[#allocation17 + $0xf98] sm:$0xff]
        %v5051 = vld [vmem:[#allocation17 + $0xfa0] sm:$0xff]
        %v5052 = vld [vmem:[#allocation17 + $0xfa8] sm:$0xff]
        %v5053 = vld [vmem:[#allocation17 + $0xfb0] sm:$0xff]
        %v5054 = vld [vmem:[#allocation17 + $0xfb8] sm:$0xff]
        %v5055 = vld [vmem:[#allocation17 + $0xfc0] sm:$0xff]
        %v5056 = vld [vmem:[#allocation17 + $0xfc8] sm:$0xff]
        %v5057 = vld [vmem:[#allocation17 + $0xfd0] sm:$0xff]
        %v5058 = vld [vmem:[#allocation17 + $0xfd8] sm:$0xff]
        %v5059 = vld [vmem:[#allocation17 + $0xfe0] sm:$0xff]
        %v5060 = vld [vmem:[#allocation17 + $0xfe8] sm:$0xff]
        %v5061 = vld [vmem:[#allocation17 + $0xff0] sm:$0xff]
        %v5062 = vld [vmem:[#allocation17 + $0xff8] sm:$0xff]
        %v5063 = vld [vmem:[#allocation19] sm:$0xff]
        %v5064 = vld [vmem:[#allocation19 + $0x8] sm:$0xff]
        %v5067 = vlaneseq
        %v5068 = vshrl.u32 %v5067, 7
        %v5069 = vsub.s32 0, %v5068
        %v5070 = vrot.slane %v5063, %v5069
        %v5071 = vlaneseq
        %v5072 = vshrl.u32 %v5071, 7
        %v5073 = vsub.s32 1, %v5072
        %v5074 = vrot.slane %v5063, %v5073
        %v5075 = vlaneseq
        %v5076 = vshrl.u32 %v5075, 7
        %v5077 = vsub.s32 2, %v5076
        %v5078 = vrot.slane %v5063, %v5077
        %v5079 = vlaneseq
        %v5080 = vshrl.u32 %v5079, 7
        %v5081 = vsub.s32 3, %v5080
        %v5082 = vrot.slane %v5063, %v5081
        %v5083 = vlaneseq
        %v5084 = vshrl.u32 %v5083, 7
        %v5085 = vsub.s32 4, %v5084
        %v5086 = vrot.slane %v5063, %v5085
        %v5087 = vlaneseq
        %v5088 = vshrl.u32 %v5087, 7
        %v5089 = vsub.s32 5, %v5088
        %v5090 = vrot.slane %v5063, %v5089
        %v5091 = vlaneseq
        %v5092 = vshrl.u32 %v5091, 7
        %v5093 = vsub.s32 6, %v5092
        %v5094 = vrot.slane %v5063, %v5093
        %v5095 = vlaneseq
        %v5096 = vshrl.u32 %v5095, 7
        %v5097 = vsub.s32 7, %v5096
        %v5098 = vrot.slane %v5063, %v5097
        %v5099 = vlaneseq
        %v5100 = vshrl.u32 %v5099, 7
        %v5101 = vsub.s32 0, %v5100
        %v5102 = vrot.slane %v5064, %v5101
        %v5103 = vlaneseq
        %v5104 = vshrl.u32 %v5103, 7
        %v5105 = vsub.s32 1, %v5104
        %v5106 = vrot.slane %v5064, %v5105
        %v5107 = vlaneseq
        %v5108 = vshrl.u32 %v5107, 7
        %v5109 = vsub.s32 2, %v5108
        %v5110 = vrot.slane %v5064, %v5109
        %v5111 = vlaneseq
        %v5112 = vshrl.u32 %v5111, 7
        %v5113 = vsub.s32 3, %v5112
        %v5114 = vrot.slane %v5064, %v5113
        %v5115 = vlaneseq
        %v5116 = vshrl.u32 %v5115, 7
        %v5117 = vsub.s32 4, %v5116
        %v5118 = vrot.slane %v5064, %v5117
        %v5119 = vlaneseq
        %v5120 = vshrl.u32 %v5119, 7
        %v5121 = vsub.s32 5, %v5120
        %v5122 = vrot.slane %v5064, %v5121
        %v5123 = vlaneseq
        %v5124 = vshrl.u32 %v5123, 7
        %v5125 = vsub.s32 6, %v5124
        %v5126 = vrot.slane %v5064, %v5125
        %v5127 = vlaneseq
        %v5128 = vshrl.u32 %v5127, 7
        %v5129 = vsub.s32 7, %v5128
        %v5130 = vrot.slane %v5064, %v5129
        %v5659 = vunpack.c.l.b16 %v4551
        %v5660 = vunpack.c.h.b16 %v4551
        %v5661 = vunpack.c.l.b16 %v4552
        %v5662 = vunpack.c.h.b16 %v4552
        %v5663 = vunpack.c.l.b16 %v4553
        %v5664 = vunpack.c.h.b16 %v4553
        %v5665 = vunpack.c.l.b16 %v4554
        %v5666 = vunpack.c.h.b16 %v4554
        %v5667 = vunpack.c.l.b16 %v4555
        %v5668 = vunpack.c.h.b16 %v4555
        %v5669 = vunpack.c.l.b16 %v4556
        %v5670 = vunpack.c.h.b16 %v4556
        %v5671 = vunpack.c.l.b16 %v4557
        %v5672 = vunpack.c.h.b16 %v4557
        %v5673 = vunpack.c.l.b16 %v4558
        %v5674 = vunpack.c.h.b16 %v4558
        %v5675 = vunpack.c.l.b16 %v4559
        %v5676 = vunpack.c.h.b16 %v4559
        %v5677 = vunpack.c.l.b16 %v4560
        %v5678 = vunpack.c.h.b16 %v4560
        %v5679 = vunpack.c.l.b16 %v4561
        %v5680 = vunpack.c.h.b16 %v4561
        %v5681 = vunpack.c.l.b16 %v4562
        %v5682 = vunpack.c.h.b16 %v4562
        %v5683 = vunpack.c.l.b16 %v4563
        %v5684 = vunpack.c.h.b16 %v4563
        %v5685 = vunpack.c.l.b16 %v4564
        %v5686 = vunpack.c.h.b16 %v4564
        %v5687 = vunpack.c.l.b16 %v4565
        %v5688 = vunpack.c.h.b16 %v4565
        %v5689 = vunpack.c.l.b16 %v4566
        %v5690 = vunpack.c.h.b16 %v4566
        %v5691 = vunpack.c.l.b16 %v4567
        %v5692 = vunpack.c.h.b16 %v4567
        %v5693 = vunpack.c.l.b16 %v4568
        %v5694 = vunpack.c.h.b16 %v4568
        %v5695 = vunpack.c.l.b16 %v4569
        %v5696 = vunpack.c.h.b16 %v4569
        %v5697 = vunpack.c.l.b16 %v4570
        %v5698 = vunpack.c.h.b16 %v4570
        %v5699 = vunpack.c.l.b16 %v4571
        %v5700 = vunpack.c.h.b16 %v4571
        %v5701 = vunpack.c.l.b16 %v4572
        %v5702 = vunpack.c.h.b16 %v4572
        %v5703 = vunpack.c.l.b16 %v4573
        %v5704 = vunpack.c.h.b16 %v4573
        %v5705 = vunpack.c.l.b16 %v4574
        %v5706 = vunpack.c.h.b16 %v4574
        %v5707 = vunpack.c.l.b16 %v4575
        %v5708 = vunpack.c.h.b16 %v4575
        %v5709 = vunpack.c.l.b16 %v4576
        %v5710 = vunpack.c.h.b16 %v4576
        %v5711 = vunpack.c.l.b16 %v4577
        %v5712 = vunpack.c.h.b16 %v4577
        %v5713 = vunpack.c.l.b16 %v4578
        %v5714 = vunpack.c.h.b16 %v4578
        %v5715 = vunpack.c.l.b16 %v4579
        %v5716 = vunpack.c.h.b16 %v4579
        %v5717 = vunpack.c.l.b16 %v4580
        %v5718 = vunpack.c.h.b16 %v4580
        %v5719 = vunpack.c.l.b16 %v4581
        %v5720 = vunpack.c.h.b16 %v4581
        %v5721 = vunpack.c.l.b16 %v4582
        %v5722 = vunpack.c.h.b16 %v4582
        %v5723 = vunpack.c.l.b16 %v4583
        %v5724 = vunpack.c.h.b16 %v4583
        %v5725 = vunpack.c.l.b16 %v4584
        %v5726 = vunpack.c.h.b16 %v4584
        %v5727 = vunpack.c.l.b16 %v4585
        %v5728 = vunpack.c.h.b16 %v4585
        %v5729 = vunpack.c.l.b16 %v4586
        %v5730 = vunpack.c.h.b16 %v4586
        %v5731 = vunpack.c.l.b16 %v4587
        %v5732 = vunpack.c.h.b16 %v4587
        %v5733 = vunpack.c.l.b16 %v4588
        %v5734 = vunpack.c.h.b16 %v4588
        %v5735 = vunpack.c.l.b16 %v4589
        %v5736 = vunpack.c.h.b16 %v4589
        %v5737 = vunpack.c.l.b16 %v4590
        %v5738 = vunpack.c.h.b16 %v4590
        %v5739 = vunpack.c.l.b16 %v4591
        %v5740 = vunpack.c.h.b16 %v4591
        %v5741 = vunpack.c.l.b16 %v4592
        %v5742 = vunpack.c.h.b16 %v4592
        %v5743 = vunpack.c.l.b16 %v4593
        %v5744 = vunpack.c.h.b16 %v4593
        %v5745 = vunpack.c.l.b16 %v4594
        %v5746 = vunpack.c.h.b16 %v4594
        %v5747 = vunpack.c.l.b16 %v4595
        %v5748 = vunpack.c.h.b16 %v4595
        %v5749 = vunpack.c.l.b16 %v4596
        %v5750 = vunpack.c.h.b16 %v4596
        %v5751 = vunpack.c.l.b16 %v4597
        %v5752 = vunpack.c.h.b16 %v4597
        %v5753 = vunpack.c.l.b16 %v4598
        %v5754 = vunpack.c.h.b16 %v4598
        %v5755 = vunpack.c.l.b16 %v4599
        %v5756 = vunpack.c.h.b16 %v4599
        %v5757 = vunpack.c.l.b16 %v4600
        %v5758 = vunpack.c.h.b16 %v4600
        %v5759 = vunpack.c.l.b16 %v4601
        %v5760 = vunpack.c.h.b16 %v4601
        %v5761 = vunpack.c.l.b16 %v4602
        %v5762 = vunpack.c.h.b16 %v4602
        %v5763 = vunpack.c.l.b16 %v4603
        %v5764 = vunpack.c.h.b16 %v4603
        %v5765 = vunpack.c.l.b16 %v4604
        %v5766 = vunpack.c.h.b16 %v4604
        %v5767 = vunpack.c.l.b16 %v4605
        %v5768 = vunpack.c.h.b16 %v4605
        %v5769 = vunpack.c.l.b16 %v4606
        %v5770 = vunpack.c.h.b16 %v4606
        %v5771 = vunpack.c.l.b16 %v4607
        %v5772 = vunpack.c.h.b16 %v4607
        %v5773 = vunpack.c.l.b16 %v4608
        %v5774 = vunpack.c.h.b16 %v4608
        %v5775 = vunpack.c.l.b16 %v4609
        %v5776 = vunpack.c.h.b16 %v4609
        %v5777 = vunpack.c.l.b16 %v4610
        %v5778 = vunpack.c.h.b16 %v4610
        %v5779 = vunpack.c.l.b16 %v4611
        %v5780 = vunpack.c.h.b16 %v4611
        %v5781 = vunpack.c.l.b16 %v4612
        %v5782 = vunpack.c.h.b16 %v4612
        %v5783 = vunpack.c.l.b16 %v4613
        %v5784 = vunpack.c.h.b16 %v4613
        %v5785 = vunpack.c.l.b16 %v4614
        %v5786 = vunpack.c.h.b16 %v4614
        %v5787 = vunpack.c.l.b16 %v4615
        %v5788 = vunpack.c.h.b16 %v4615
        %v5789 = vunpack.c.l.b16 %v4616
        %v5790 = vunpack.c.h.b16 %v4616
        %v5791 = vunpack.c.l.b16 %v4617
        %v5792 = vunpack.c.h.b16 %v4617
        %v5793 = vunpack.c.l.b16 %v4618
        %v5794 = vunpack.c.h.b16 %v4618
        %v5795 = vunpack.c.l.b16 %v4619
        %v5796 = vunpack.c.h.b16 %v4619
        %v5797 = vunpack.c.l.b16 %v4620
        %v5798 = vunpack.c.h.b16 %v4620
        %v5799 = vunpack.c.l.b16 %v4621
        %v5800 = vunpack.c.h.b16 %v4621
        %v5801 = vunpack.c.l.b16 %v4622
        %v5802 = vunpack.c.h.b16 %v4622
        %v5803 = vunpack.c.l.b16 %v4623
        %v5804 = vunpack.c.h.b16 %v4623
        %v5805 = vunpack.c.l.b16 %v4624
        %v5806 = vunpack.c.h.b16 %v4624
        %v5807 = vunpack.c.l.b16 %v4625
        %v5808 = vunpack.c.h.b16 %v4625
        %v5809 = vunpack.c.l.b16 %v4626
        %v5810 = vunpack.c.h.b16 %v4626
        %v5811 = vunpack.c.l.b16 %v4627
        %v5812 = vunpack.c.h.b16 %v4627
        %v5813 = vunpack.c.l.b16 %v4628
        %v5814 = vunpack.c.h.b16 %v4628
        %v5815 = vunpack.c.l.b16 %v4629
        %v5816 = vunpack.c.h.b16 %v4629
        %v5817 = vunpack.c.l.b16 %v4630
        %v5818 = vunpack.c.h.b16 %v4630
        %v5819 = vunpack.c.l.b16 %v4631
        %v5820 = vunpack.c.h.b16 %v4631
        %v5821 = vunpack.c.l.b16 %v4632
        %v5822 = vunpack.c.h.b16 %v4632
        %v5823 = vunpack.c.l.b16 %v4633
        %v5824 = vunpack.c.h.b16 %v4633
        %v5825 = vunpack.c.l.b16 %v4634
        %v5826 = vunpack.c.h.b16 %v4634
        %v5827 = vunpack.c.l.b16 %v4635
        %v5828 = vunpack.c.h.b16 %v4635
        %v5829 = vunpack.c.l.b16 %v4636
        %v5830 = vunpack.c.h.b16 %v4636
        %v5831 = vunpack.c.l.b16 %v4637
        %v5832 = vunpack.c.h.b16 %v4637
        %v5833 = vunpack.c.l.b16 %v4638
        %v5834 = vunpack.c.h.b16 %v4638
        %v5835 = vunpack.c.l.b16 %v4639
        %v5836 = vunpack.c.h.b16 %v4639
        %v5837 = vunpack.c.l.b16 %v4640
        %v5838 = vunpack.c.h.b16 %v4640
        %v5839 = vunpack.c.l.b16 %v4641
        %v5840 = vunpack.c.h.b16 %v4641
        %v5841 = vunpack.c.l.b16 %v4642
        %v5842 = vunpack.c.h.b16 %v4642
        %v5843 = vunpack.c.l.b16 %v4643
        %v5844 = vunpack.c.h.b16 %v4643
        %v5845 = vunpack.c.l.b16 %v4644
        %v5846 = vunpack.c.h.b16 %v4644
        %v5847 = vunpack.c.l.b16 %v4645
        %v5848 = vunpack.c.h.b16 %v4645
        %v5849 = vunpack.c.l.b16 %v4646
        %v5850 = vunpack.c.h.b16 %v4646
        %v5851 = vunpack.c.l.b16 %v4647
        %v5852 = vunpack.c.h.b16 %v4647
        %v5853 = vunpack.c.l.b16 %v4648
        %v5854 = vunpack.c.h.b16 %v4648
        %v5855 = vunpack.c.l.b16 %v4649
        %v5856 = vunpack.c.h.b16 %v4649
        %v5857 = vunpack.c.l.b16 %v4650
        %v5858 = vunpack.c.h.b16 %v4650
        %v5859 = vunpack.c.l.b16 %v4651
        %v5860 = vunpack.c.h.b16 %v4651
        %v5861 = vunpack.c.l.b16 %v4652
        %v5862 = vunpack.c.h.b16 %v4652
        %v5863 = vunpack.c.l.b16 %v4653
        %v5864 = vunpack.c.h.b16 %v4653
        %v5865 = vunpack.c.l.b16 %v4654
        %v5866 = vunpack.c.h.b16 %v4654
        %v5867 = vunpack.c.l.b16 %v4655
        %v5868 = vunpack.c.h.b16 %v4655
        %v5869 = vunpack.c.l.b16 %v4656
        %v5870 = vunpack.c.h.b16 %v4656
        %v5871 = vunpack.c.l.b16 %v4657
        %v5872 = vunpack.c.h.b16 %v4657
        %v5873 = vunpack.c.l.b16 %v4658
        %v5874 = vunpack.c.h.b16 %v4658
        %v5875 = vunpack.c.l.b16 %v4659
        %v5876 = vunpack.c.h.b16 %v4659
        %v5877 = vunpack.c.l.b16 %v4660
        %v5878 = vunpack.c.h.b16 %v4660
        %v5879 = vunpack.c.l.b16 %v4661
        %v5880 = vunpack.c.h.b16 %v4661
        %v5881 = vunpack.c.l.b16 %v4662
        %v5882 = vunpack.c.h.b16 %v4662
        %v5883 = vunpack.c.l.b16 %v4663
        %v5884 = vunpack.c.h.b16 %v4663
        %v5885 = vunpack.c.l.b16 %v4664
        %v5886 = vunpack.c.h.b16 %v4664
        %v5887 = vunpack.c.l.b16 %v4665
        %v5888 = vunpack.c.h.b16 %v4665
        %v5889 = vunpack.c.l.b16 %v4666
        %v5890 = vunpack.c.h.b16 %v4666
        %v5891 = vunpack.c.l.b16 %v4667
        %v5892 = vunpack.c.h.b16 %v4667
        %v5893 = vunpack.c.l.b16 %v4668
        %v5894 = vunpack.c.h.b16 %v4668
        %v5895 = vunpack.c.l.b16 %v4669
        %v5896 = vunpack.c.h.b16 %v4669
        %v5897 = vunpack.c.l.b16 %v4670
        %v5898 = vunpack.c.h.b16 %v4670
        %v5899 = vunpack.c.l.b16 %v4671
        %v5900 = vunpack.c.h.b16 %v4671
        %v5901 = vunpack.c.l.b16 %v4672
        %v5902 = vunpack.c.h.b16 %v4672
        %v5903 = vunpack.c.l.b16 %v4673
        %v5904 = vunpack.c.h.b16 %v4673
        %v5905 = vunpack.c.l.b16 %v4674
        %v5906 = vunpack.c.h.b16 %v4674
        %v5907 = vunpack.c.l.b16 %v4675
        %v5908 = vunpack.c.h.b16 %v4675
        %v5909 = vunpack.c.l.b16 %v4676
        %v5910 = vunpack.c.h.b16 %v4676
        %v5911 = vunpack.c.l.b16 %v4677
        %v5912 = vunpack.c.h.b16 %v4677
        %v5913 = vunpack.c.l.b16 %v4678
        %v5914 = vunpack.c.h.b16 %v4678
        %v5915 = vunpack.c.l.b16 %v4679
        %v5916 = vunpack.c.h.b16 %v4679
        %v5917 = vunpack.c.l.b16 %v4680
        %v5918 = vunpack.c.h.b16 %v4680
        %v5919 = vunpack.c.l.b16 %v4681
        %v5920 = vunpack.c.h.b16 %v4681
        %v5921 = vunpack.c.l.b16 %v4682
        %v5922 = vunpack.c.h.b16 %v4682
        %v5923 = vunpack.c.l.b16 %v4683
        %v5924 = vunpack.c.h.b16 %v4683
        %v5925 = vunpack.c.l.b16 %v4684
        %v5926 = vunpack.c.h.b16 %v4684
        %v5927 = vunpack.c.l.b16 %v4685
        %v5928 = vunpack.c.h.b16 %v4685
        %v5929 = vunpack.c.l.b16 %v4686
        %v5930 = vunpack.c.h.b16 %v4686
        %v5931 = vunpack.c.l.b16 %v4687
        %v5932 = vunpack.c.h.b16 %v4687
        %v5933 = vunpack.c.l.b16 %v4688
        %v5934 = vunpack.c.h.b16 %v4688
        %v5935 = vunpack.c.l.b16 %v4689
        %v5936 = vunpack.c.h.b16 %v4689
        %v5937 = vunpack.c.l.b16 %v4690
        %v5938 = vunpack.c.h.b16 %v4690
        %v5939 = vunpack.c.l.b16 %v4691
        %v5940 = vunpack.c.h.b16 %v4691
        %v5941 = vunpack.c.l.b16 %v4692
        %v5942 = vunpack.c.h.b16 %v4692
        %v5943 = vunpack.c.l.b16 %v4693
        %v5944 = vunpack.c.h.b16 %v4693
        %v5945 = vunpack.c.l.b16 %v4694
        %v5946 = vunpack.c.h.b16 %v4694
        %v5947 = vunpack.c.l.b16 %v4695
        %v5948 = vunpack.c.h.b16 %v4695
        %v5949 = vunpack.c.l.b16 %v4696
        %v5950 = vunpack.c.h.b16 %v4696
        %v5951 = vunpack.c.l.b16 %v4697
        %v5952 = vunpack.c.h.b16 %v4697
        %v5953 = vunpack.c.l.b16 %v4698
        %v5954 = vunpack.c.h.b16 %v4698
        %v5955 = vunpack.c.l.b16 %v4699
        %v5956 = vunpack.c.h.b16 %v4699
        %v5957 = vunpack.c.l.b16 %v4700
        %v5958 = vunpack.c.h.b16 %v4700
        %v5959 = vunpack.c.l.b16 %v4701
        %v5960 = vunpack.c.h.b16 %v4701
        %v5961 = vunpack.c.l.b16 %v4702
        %v5962 = vunpack.c.h.b16 %v4702
        %v5963 = vunpack.c.l.b16 %v4703
        %v5964 = vunpack.c.h.b16 %v4703
        %v5965 = vunpack.c.l.b16 %v4704
        %v5966 = vunpack.c.h.b16 %v4704
        %v5967 = vunpack.c.l.b16 %v4705
        %v5968 = vunpack.c.h.b16 %v4705
        %v5969 = vunpack.c.l.b16 %v4706
        %v5970 = vunpack.c.h.b16 %v4706
        %v5971 = vunpack.c.l.b16 %v4707
        %v5972 = vunpack.c.h.b16 %v4707
        %v5973 = vunpack.c.l.b16 %v4708
        %v5974 = vunpack.c.h.b16 %v4708
        %v5975 = vunpack.c.l.b16 %v4709
        %v5976 = vunpack.c.h.b16 %v4709
        %v5977 = vunpack.c.l.b16 %v4710
        %v5978 = vunpack.c.h.b16 %v4710
        %v5979 = vunpack.c.l.b16 %v4711
        %v5980 = vunpack.c.h.b16 %v4711
        %v5981 = vunpack.c.l.b16 %v4712
        %v5982 = vunpack.c.h.b16 %v4712
        %v5983 = vunpack.c.l.b16 %v4713
        %v5984 = vunpack.c.h.b16 %v4713
        %v5985 = vunpack.c.l.b16 %v4714
        %v5986 = vunpack.c.h.b16 %v4714
        %v5987 = vunpack.c.l.b16 %v4715
        %v5988 = vunpack.c.h.b16 %v4715
        %v5989 = vunpack.c.l.b16 %v4716
        %v5990 = vunpack.c.h.b16 %v4716
        %v5991 = vunpack.c.l.b16 %v4717
        %v5992 = vunpack.c.h.b16 %v4717
        %v5993 = vunpack.c.l.b16 %v4718
        %v5994 = vunpack.c.h.b16 %v4718
        %v5995 = vunpack.c.l.b16 %v4719
        %v5996 = vunpack.c.h.b16 %v4719
        %v5997 = vunpack.c.l.b16 %v4720
        %v5998 = vunpack.c.h.b16 %v4720
        %v5999 = vunpack.c.l.b16 %v4721
        %v6000 = vunpack.c.h.b16 %v4721
        %v6001 = vunpack.c.l.b16 %v4722
        %v6002 = vunpack.c.h.b16 %v4722
        %v6003 = vunpack.c.l.b16 %v4723
        %v6004 = vunpack.c.h.b16 %v4723
        %v6005 = vunpack.c.l.b16 %v4724
        %v6006 = vunpack.c.h.b16 %v4724
        %v6007 = vunpack.c.l.b16 %v4725
        %v6008 = vunpack.c.h.b16 %v4725
        %v6009 = vunpack.c.l.b16 %v4726
        %v6010 = vunpack.c.h.b16 %v4726
        %v6011 = vunpack.c.l.b16 %v4727
        %v6012 = vunpack.c.h.b16 %v4727
        %v6013 = vunpack.c.l.b16 %v4728
        %v6014 = vunpack.c.h.b16 %v4728
        %v6015 = vunpack.c.l.b16 %v4729
        %v6016 = vunpack.c.h.b16 %v4729
        %v6017 = vunpack.c.l.b16 %v4730
        %v6018 = vunpack.c.h.b16 %v4730
        %v6019 = vunpack.c.l.b16 %v4731
        %v6020 = vunpack.c.h.b16 %v4731
        %v6021 = vunpack.c.l.b16 %v4732
        %v6022 = vunpack.c.h.b16 %v4732
        %v6023 = vunpack.c.l.b16 %v4733
        %v6024 = vunpack.c.h.b16 %v4733
        %v6025 = vunpack.c.l.b16 %v4734
        %v6026 = vunpack.c.h.b16 %v4734
        %v6027 = vunpack.c.l.b16 %v4735
        %v6028 = vunpack.c.h.b16 %v4735
        %v6029 = vunpack.c.l.b16 %v4736
        %v6030 = vunpack.c.h.b16 %v4736
        %v6031 = vunpack.c.l.b16 %v4737
        %v6032 = vunpack.c.h.b16 %v4737
        %v6033 = vunpack.c.l.b16 %v4738
        %v6034 = vunpack.c.h.b16 %v4738
        %v6035 = vunpack.c.l.b16 %v4739
        %v6036 = vunpack.c.h.b16 %v4739
        %v6037 = vunpack.c.l.b16 %v4740
        %v6038 = vunpack.c.h.b16 %v4740
        %v6039 = vunpack.c.l.b16 %v4741
        %v6040 = vunpack.c.h.b16 %v4741
        %v6041 = vunpack.c.l.b16 %v4742
        %v6042 = vunpack.c.h.b16 %v4742
        %v6043 = vunpack.c.l.b16 %v4743
        %v6044 = vunpack.c.h.b16 %v4743
        %v6045 = vunpack.c.l.b16 %v4744
        %v6046 = vunpack.c.h.b16 %v4744
        %v6047 = vunpack.c.l.b16 %v4745
        %v6048 = vunpack.c.h.b16 %v4745
        %v6049 = vunpack.c.l.b16 %v4746
        %v6050 = vunpack.c.h.b16 %v4746
        %v6051 = vunpack.c.l.b16 %v4747
        %v6052 = vunpack.c.h.b16 %v4747
        %v6053 = vunpack.c.l.b16 %v4748
        %v6054 = vunpack.c.h.b16 %v4748
        %v6055 = vunpack.c.l.b16 %v4749
        %v6056 = vunpack.c.h.b16 %v4749
        %v6057 = vunpack.c.l.b16 %v4750
        %v6058 = vunpack.c.h.b16 %v4750
        %v6059 = vunpack.c.l.b16 %v4751
        %v6060 = vunpack.c.h.b16 %v4751
        %v6061 = vunpack.c.l.b16 %v4752
        %v6062 = vunpack.c.h.b16 %v4752
        %v6063 = vunpack.c.l.b16 %v4753
        %v6064 = vunpack.c.h.b16 %v4753
        %v6065 = vunpack.c.l.b16 %v4754
        %v6066 = vunpack.c.h.b16 %v4754
        %v6067 = vunpack.c.l.b16 %v4755
        %v6068 = vunpack.c.h.b16 %v4755
        %v6069 = vunpack.c.l.b16 %v4756
        %v6070 = vunpack.c.h.b16 %v4756
        %v6071 = vunpack.c.l.b16 %v4757
        %v6072 = vunpack.c.h.b16 %v4757
        %v6073 = vunpack.c.l.b16 %v4758
        %v6074 = vunpack.c.h.b16 %v4758
        %v6075 = vunpack.c.l.b16 %v4759
        %v6076 = vunpack.c.h.b16 %v4759
        %v6077 = vunpack.c.l.b16 %v4760
        %v6078 = vunpack.c.h.b16 %v4760
        %v6079 = vunpack.c.l.b16 %v4761
        %v6080 = vunpack.c.h.b16 %v4761
        %v6081 = vunpack.c.l.b16 %v4762
        %v6082 = vunpack.c.h.b16 %v4762
        %v6083 = vunpack.c.l.b16 %v4763
        %v6084 = vunpack.c.h.b16 %v4763
        %v6085 = vunpack.c.l.b16 %v4764
        %v6086 = vunpack.c.h.b16 %v4764
        %v6087 = vunpack.c.l.b16 %v4765
        %v6088 = vunpack.c.h.b16 %v4765
        %v6089 = vunpack.c.l.b16 %v4766
        %v6090 = vunpack.c.h.b16 %v4766
        %v6091 = vunpack.c.l.b16 %v4767
        %v6092 = vunpack.c.h.b16 %v4767
        %v6093 = vunpack.c.l.b16 %v4768
        %v6094 = vunpack.c.h.b16 %v4768
        %v6095 = vunpack.c.l.b16 %v4769
        %v6096 = vunpack.c.h.b16 %v4769
        %v6097 = vunpack.c.l.b16 %v4770
        %v6098 = vunpack.c.h.b16 %v4770
        %v6099 = vunpack.c.l.b16 %v4771
        %v6100 = vunpack.c.h.b16 %v4771
        %v6101 = vunpack.c.l.b16 %v4772
        %v6102 = vunpack.c.h.b16 %v4772
        %v6103 = vunpack.c.l.b16 %v4773
        %v6104 = vunpack.c.h.b16 %v4773
        %v6105 = vunpack.c.l.b16 %v4774
        %v6106 = vunpack.c.h.b16 %v4774
        %v6107 = vunpack.c.l.b16 %v4775
        %v6108 = vunpack.c.h.b16 %v4775
        %v6109 = vunpack.c.l.b16 %v4776
        %v6110 = vunpack.c.h.b16 %v4776
        %v6111 = vunpack.c.l.b16 %v4777
        %v6112 = vunpack.c.h.b16 %v4777
        %v6113 = vunpack.c.l.b16 %v4778
        %v6114 = vunpack.c.h.b16 %v4778
        %v6115 = vunpack.c.l.b16 %v4779
        %v6116 = vunpack.c.h.b16 %v4779
        %v6117 = vunpack.c.l.b16 %v4780
        %v6118 = vunpack.c.h.b16 %v4780
        %v6119 = vunpack.c.l.b16 %v4781
        %v6120 = vunpack.c.h.b16 %v4781
        %v6121 = vunpack.c.l.b16 %v4782
        %v6122 = vunpack.c.h.b16 %v4782
        %v6123 = vunpack.c.l.b16 %v4783
        %v6124 = vunpack.c.h.b16 %v4783
        %v6125 = vunpack.c.l.b16 %v4784
        %v6126 = vunpack.c.h.b16 %v4784
        %v6127 = vunpack.c.l.b16 %v4785
        %v6128 = vunpack.c.h.b16 %v4785
        %v6129 = vunpack.c.l.b16 %v4786
        %v6130 = vunpack.c.h.b16 %v4786
        %v6131 = vunpack.c.l.b16 %v4787
        %v6132 = vunpack.c.h.b16 %v4787
        %v6133 = vunpack.c.l.b16 %v4788
        %v6134 = vunpack.c.h.b16 %v4788
        %v6135 = vunpack.c.l.b16 %v4789
        %v6136 = vunpack.c.h.b16 %v4789
        %v6137 = vunpack.c.l.b16 %v4790
        %v6138 = vunpack.c.h.b16 %v4790
        %v6139 = vunpack.c.l.b16 %v4791
        %v6140 = vunpack.c.h.b16 %v4791
        %v6141 = vunpack.c.l.b16 %v4792
        %v6142 = vunpack.c.h.b16 %v4792
        %v6143 = vunpack.c.l.b16 %v4793
        %v6144 = vunpack.c.h.b16 %v4793
        %v6145 = vunpack.c.l.b16 %v4794
        %v6146 = vunpack.c.h.b16 %v4794
        %v6147 = vunpack.c.l.b16 %v4795
        %v6148 = vunpack.c.h.b16 %v4795
        %v6149 = vunpack.c.l.b16 %v4796
        %v6150 = vunpack.c.h.b16 %v4796
        %v6151 = vunpack.c.l.b16 %v4797
        %v6152 = vunpack.c.h.b16 %v4797
        %v6153 = vunpack.c.l.b16 %v4798
        %v6154 = vunpack.c.h.b16 %v4798
        %v6155 = vunpack.c.l.b16 %v4799
        %v6156 = vunpack.c.h.b16 %v4799
        %v6157 = vunpack.c.l.b16 %v4800
        %v6158 = vunpack.c.h.b16 %v4800
        %v6159 = vunpack.c.l.b16 %v4801
        %v6160 = vunpack.c.h.b16 %v4801
        %v6161 = vunpack.c.l.b16 %v4802
        %v6162 = vunpack.c.h.b16 %v4802
        %v6163 = vunpack.c.l.b16 %v4803
        %v6164 = vunpack.c.h.b16 %v4803
        %v6165 = vunpack.c.l.b16 %v4804
        %v6166 = vunpack.c.h.b16 %v4804
        %v6167 = vunpack.c.l.b16 %v4805
        %v6168 = vunpack.c.h.b16 %v4805
        %v6169 = vunpack.c.l.b16 %v4806
        %v6170 = vunpack.c.h.b16 %v4806
        %v6171 = vunpack.c.l.b16 %v4807
        %v6172 = vunpack.c.h.b16 %v4807
        %v6173 = vunpack.c.l.b16 %v4808
        %v6174 = vunpack.c.h.b16 %v4808
        %v6175 = vunpack.c.l.b16 %v4809
        %v6176 = vunpack.c.h.b16 %v4809
        %v6177 = vunpack.c.l.b16 %v4810
        %v6178 = vunpack.c.h.b16 %v4810
        %v6179 = vunpack.c.l.b16 %v4811
        %v6180 = vunpack.c.h.b16 %v4811
        %v6181 = vunpack.c.l.b16 %v4812
        %v6182 = vunpack.c.h.b16 %v4812
        %v6183 = vunpack.c.l.b16 %v4813
        %v6184 = vunpack.c.h.b16 %v4813
        %v6185 = vunpack.c.l.b16 %v4814
        %v6186 = vunpack.c.h.b16 %v4814
        %v6187 = vunpack.c.l.b16 %v4815
        %v6188 = vunpack.c.h.b16 %v4815
        %v6189 = vunpack.c.l.b16 %v4816
        %v6190 = vunpack.c.h.b16 %v4816
        %v6191 = vunpack.c.l.b16 %v4817
        %v6192 = vunpack.c.h.b16 %v4817
        %v6193 = vunpack.c.l.b16 %v4818
        %v6194 = vunpack.c.h.b16 %v4818
        %v6195 = vunpack.c.l.b16 %v4819
        %v6196 = vunpack.c.h.b16 %v4819
        %v6197 = vunpack.c.l.b16 %v4820
        %v6198 = vunpack.c.h.b16 %v4820
        %v6199 = vunpack.c.l.b16 %v4821
        %v6200 = vunpack.c.h.b16 %v4821
        %v6201 = vunpack.c.l.b16 %v4822
        %v6202 = vunpack.c.h.b16 %v4822
        %v6203 = vunpack.c.l.b16 %v4823
        %v6204 = vunpack.c.h.b16 %v4823
        %v6205 = vunpack.c.l.b16 %v4824
        %v6206 = vunpack.c.h.b16 %v4824
        %v6207 = vunpack.c.l.b16 %v4825
        %v6208 = vunpack.c.h.b16 %v4825
        %v6209 = vunpack.c.l.b16 %v4826
        %v6210 = vunpack.c.h.b16 %v4826
        %v6211 = vunpack.c.l.b16 %v4827
        %v6212 = vunpack.c.h.b16 %v4827
        %v6213 = vunpack.c.l.b16 %v4828
        %v6214 = vunpack.c.h.b16 %v4828
        %v6215 = vunpack.c.l.b16 %v4829
        %v6216 = vunpack.c.h.b16 %v4829
        %v6217 = vunpack.c.l.b16 %v4830
        %v6218 = vunpack.c.h.b16 %v4830
        %v6219 = vunpack.c.l.b16 %v4831
        %v6220 = vunpack.c.h.b16 %v4831
        %v6221 = vunpack.c.l.b16 %v4832
        %v6222 = vunpack.c.h.b16 %v4832
        %v6223 = vunpack.c.l.b16 %v4833
        %v6224 = vunpack.c.h.b16 %v4833
        %v6225 = vunpack.c.l.b16 %v4834
        %v6226 = vunpack.c.h.b16 %v4834
        %v6227 = vunpack.c.l.b16 %v4835
        %v6228 = vunpack.c.h.b16 %v4835
        %v6229 = vunpack.c.l.b16 %v4836
        %v6230 = vunpack.c.h.b16 %v4836
        %v6231 = vunpack.c.l.b16 %v4837
        %v6232 = vunpack.c.h.b16 %v4837
        %v6233 = vunpack.c.l.b16 %v4838
        %v6234 = vunpack.c.h.b16 %v4838
        %v6235 = vunpack.c.l.b16 %v4839
        %v6236 = vunpack.c.h.b16 %v4839
        %v6237 = vunpack.c.l.b16 %v4840
        %v6238 = vunpack.c.h.b16 %v4840
        %v6239 = vunpack.c.l.b16 %v4841
        %v6240 = vunpack.c.h.b16 %v4841
        %v6241 = vunpack.c.l.b16 %v4842
        %v6242 = vunpack.c.h.b16 %v4842
        %v6243 = vunpack.c.l.b16 %v4843
        %v6244 = vunpack.c.h.b16 %v4843
        %v6245 = vunpack.c.l.b16 %v4844
        %v6246 = vunpack.c.h.b16 %v4844
        %v6247 = vunpack.c.l.b16 %v4845
        %v6248 = vunpack.c.h.b16 %v4845
        %v6249 = vunpack.c.l.b16 %v4846
        %v6250 = vunpack.c.h.b16 %v4846
        %v6251 = vunpack.c.l.b16 %v4847
        %v6252 = vunpack.c.h.b16 %v4847
        %v6253 = vunpack.c.l.b16 %v4848
        %v6254 = vunpack.c.h.b16 %v4848
        %v6255 = vunpack.c.l.b16 %v4849
        %v6256 = vunpack.c.h.b16 %v4849
        %v6257 = vunpack.c.l.b16 %v4850
        %v6258 = vunpack.c.h.b16 %v4850
        %v6259 = vunpack.c.l.b16 %v4851
        %v6260 = vunpack.c.h.b16 %v4851
        %v6261 = vunpack.c.l.b16 %v4852
        %v6262 = vunpack.c.h.b16 %v4852
        %v6263 = vunpack.c.l.b16 %v4853
        %v6264 = vunpack.c.h.b16 %v4853
        %v6265 = vunpack.c.l.b16 %v4854
        %v6266 = vunpack.c.h.b16 %v4854
        %v6267 = vunpack.c.l.b16 %v4855
        %v6268 = vunpack.c.h.b16 %v4855
        %v6269 = vunpack.c.l.b16 %v4856
        %v6270 = vunpack.c.h.b16 %v4856
        %v6271 = vunpack.c.l.b16 %v4857
        %v6272 = vunpack.c.h.b16 %v4857
        %v6273 = vunpack.c.l.b16 %v4858
        %v6274 = vunpack.c.h.b16 %v4858
        %v6275 = vunpack.c.l.b16 %v4859
        %v6276 = vunpack.c.h.b16 %v4859
        %v6277 = vunpack.c.l.b16 %v4860
        %v6278 = vunpack.c.h.b16 %v4860
        %v6279 = vunpack.c.l.b16 %v4861
        %v6280 = vunpack.c.h.b16 %v4861
        %v6281 = vunpack.c.l.b16 %v4862
        %v6282 = vunpack.c.h.b16 %v4862
        %v6283 = vunpack.c.l.b16 %v4863
        %v6284 = vunpack.c.h.b16 %v4863
        %v6285 = vunpack.c.l.b16 %v4864
        %v6286 = vunpack.c.h.b16 %v4864
        %v6287 = vunpack.c.l.b16 %v4865
        %v6288 = vunpack.c.h.b16 %v4865
        %v6289 = vunpack.c.l.b16 %v4866
        %v6290 = vunpack.c.h.b16 %v4866
        %v6291 = vunpack.c.l.b16 %v4867
        %v6292 = vunpack.c.h.b16 %v4867
        %v6293 = vunpack.c.l.b16 %v4868
        %v6294 = vunpack.c.h.b16 %v4868
        %v6295 = vunpack.c.l.b16 %v4869
        %v6296 = vunpack.c.h.b16 %v4869
        %v6297 = vunpack.c.l.b16 %v4870
        %v6298 = vunpack.c.h.b16 %v4870
        %v6299 = vunpack.c.l.b16 %v4871
        %v6300 = vunpack.c.h.b16 %v4871
        %v6301 = vunpack.c.l.b16 %v4872
        %v6302 = vunpack.c.h.b16 %v4872
        %v6303 = vunpack.c.l.b16 %v4873
        %v6304 = vunpack.c.h.b16 %v4873
        %v6305 = vunpack.c.l.b16 %v4874
        %v6306 = vunpack.c.h.b16 %v4874
        %v6307 = vunpack.c.l.b16 %v4875
        %v6308 = vunpack.c.h.b16 %v4875
        %v6309 = vunpack.c.l.b16 %v4876
        %v6310 = vunpack.c.h.b16 %v4876
        %v6311 = vunpack.c.l.b16 %v4877
        %v6312 = vunpack.c.h.b16 %v4877
        %v6313 = vunpack.c.l.b16 %v4878
        %v6314 = vunpack.c.h.b16 %v4878
        %v6315 = vunpack.c.l.b16 %v4879
        %v6316 = vunpack.c.h.b16 %v4879
        %v6317 = vunpack.c.l.b16 %v4880
        %v6318 = vunpack.c.h.b16 %v4880
        %v6319 = vunpack.c.l.b16 %v4881
        %v6320 = vunpack.c.h.b16 %v4881
        %v6321 = vunpack.c.l.b16 %v4882
        %v6322 = vunpack.c.h.b16 %v4882
        %v6323 = vunpack.c.l.b16 %v4883
        %v6324 = vunpack.c.h.b16 %v4883
        %v6325 = vunpack.c.l.b16 %v4884
        %v6326 = vunpack.c.h.b16 %v4884
        %v6327 = vunpack.c.l.b16 %v4885
        %v6328 = vunpack.c.h.b16 %v4885
        %v6329 = vunpack.c.l.b16 %v4886
        %v6330 = vunpack.c.h.b16 %v4886
        %v6331 = vunpack.c.l.b16 %v4887
        %v6332 = vunpack.c.h.b16 %v4887
        %v6333 = vunpack.c.l.b16 %v4888
        %v6334 = vunpack.c.h.b16 %v4888
        %v6335 = vunpack.c.l.b16 %v4889
        %v6336 = vunpack.c.h.b16 %v4889
        %v6337 = vunpack.c.l.b16 %v4890
        %v6338 = vunpack.c.h.b16 %v4890
        %v6339 = vunpack.c.l.b16 %v4891
        %v6340 = vunpack.c.h.b16 %v4891
        %v6341 = vunpack.c.l.b16 %v4892
        %v6342 = vunpack.c.h.b16 %v4892
        %v6343 = vunpack.c.l.b16 %v4893
        %v6344 = vunpack.c.h.b16 %v4893
        %v6345 = vunpack.c.l.b16 %v4894
        %v6346 = vunpack.c.h.b16 %v4894
        %v6347 = vunpack.c.l.b16 %v4895
        %v6348 = vunpack.c.h.b16 %v4895
        %v6349 = vunpack.c.l.b16 %v4896
        %v6350 = vunpack.c.h.b16 %v4896
        %v6351 = vunpack.c.l.b16 %v4897
        %v6352 = vunpack.c.h.b16 %v4897
        %v6353 = vunpack.c.l.b16 %v4898
        %v6354 = vunpack.c.h.b16 %v4898
        %v6355 = vunpack.c.l.b16 %v4899
        %v6356 = vunpack.c.h.b16 %v4899
        %v6357 = vunpack.c.l.b16 %v4900
        %v6358 = vunpack.c.h.b16 %v4900
        %v6359 = vunpack.c.l.b16 %v4901
        %v6360 = vunpack.c.h.b16 %v4901
        %v6361 = vunpack.c.l.b16 %v4902
        %v6362 = vunpack.c.h.b16 %v4902
        %v6363 = vunpack.c.l.b16 %v4903
        %v6364 = vunpack.c.h.b16 %v4903
        %v6365 = vunpack.c.l.b16 %v4904
        %v6366 = vunpack.c.h.b16 %v4904
        %v6367 = vunpack.c.l.b16 %v4905
        %v6368 = vunpack.c.h.b16 %v4905
        %v6369 = vunpack.c.l.b16 %v4906
        %v6370 = vunpack.c.h.b16 %v4906
        %v6371 = vunpack.c.l.b16 %v4907
        %v6372 = vunpack.c.h.b16 %v4907
        %v6373 = vunpack.c.l.b16 %v4908
        %v6374 = vunpack.c.h.b16 %v4908
        %v6375 = vunpack.c.l.b16 %v4909
        %v6376 = vunpack.c.h.b16 %v4909
        %v6377 = vunpack.c.l.b16 %v4910
        %v6378 = vunpack.c.h.b16 %v4910
        %v6379 = vunpack.c.l.b16 %v4911
        %v6380 = vunpack.c.h.b16 %v4911
        %v6381 = vunpack.c.l.b16 %v4912
        %v6382 = vunpack.c.h.b16 %v4912
        %v6383 = vunpack.c.l.b16 %v4913
        %v6384 = vunpack.c.h.b16 %v4913
        %v6385 = vunpack.c.l.b16 %v4914
        %v6386 = vunpack.c.h.b16 %v4914
        %v6387 = vunpack.c.l.b16 %v4915
        %v6388 = vunpack.c.h.b16 %v4915
        %v6389 = vunpack.c.l.b16 %v4916
        %v6390 = vunpack.c.h.b16 %v4916
        %v6391 = vunpack.c.l.b16 %v4917
        %v6392 = vunpack.c.h.b16 %v4917
        %v6393 = vunpack.c.l.b16 %v4918
        %v6394 = vunpack.c.h.b16 %v4918
        %v6395 = vunpack.c.l.b16 %v4919
        %v6396 = vunpack.c.h.b16 %v4919
        %v6397 = vunpack.c.l.b16 %v4920
        %v6398 = vunpack.c.h.b16 %v4920
        %v6399 = vunpack.c.l.b16 %v4921
        %v6400 = vunpack.c.h.b16 %v4921
        %v6401 = vunpack.c.l.b16 %v4922
        %v6402 = vunpack.c.h.b16 %v4922
        %v6403 = vunpack.c.l.b16 %v4923
        %v6404 = vunpack.c.h.b16 %v4923
        %v6405 = vunpack.c.l.b16 %v4924
        %v6406 = vunpack.c.h.b16 %v4924
        %v6407 = vunpack.c.l.b16 %v4925
        %v6408 = vunpack.c.h.b16 %v4925
        %v6409 = vunpack.c.l.b16 %v4926
        %v6410 = vunpack.c.h.b16 %v4926
        %v6411 = vunpack.c.l.b16 %v4927
        %v6412 = vunpack.c.h.b16 %v4927
        %v6413 = vunpack.c.l.b16 %v4928
        %v6414 = vunpack.c.h.b16 %v4928
        %v6415 = vunpack.c.l.b16 %v4929
        %v6416 = vunpack.c.h.b16 %v4929
        %v6417 = vunpack.c.l.b16 %v4930
        %v6418 = vunpack.c.h.b16 %v4930
        %v6419 = vunpack.c.l.b16 %v4931
        %v6420 = vunpack.c.h.b16 %v4931
        %v6421 = vunpack.c.l.b16 %v4932
        %v6422 = vunpack.c.h.b16 %v4932
        %v6423 = vunpack.c.l.b16 %v4933
        %v6424 = vunpack.c.h.b16 %v4933
        %v6425 = vunpack.c.l.b16 %v4934
        %v6426 = vunpack.c.h.b16 %v4934
        %v6427 = vunpack.c.l.b16 %v4935
        %v6428 = vunpack.c.h.b16 %v4935
        %v6429 = vunpack.c.l.b16 %v4936
        %v6430 = vunpack.c.h.b16 %v4936
        %v6431 = vunpack.c.l.b16 %v4937
        %v6432 = vunpack.c.h.b16 %v4937
        %v6433 = vunpack.c.l.b16 %v4938
        %v6434 = vunpack.c.h.b16 %v4938
        %v6435 = vunpack.c.l.b16 %v4939
        %v6436 = vunpack.c.h.b16 %v4939
        %v6437 = vunpack.c.l.b16 %v4940
        %v6438 = vunpack.c.h.b16 %v4940
        %v6439 = vunpack.c.l.b16 %v4941
        %v6440 = vunpack.c.h.b16 %v4941
        %v6441 = vunpack.c.l.b16 %v4942
        %v6442 = vunpack.c.h.b16 %v4942
        %v6443 = vunpack.c.l.b16 %v4943
        %v6444 = vunpack.c.h.b16 %v4943
        %v6445 = vunpack.c.l.b16 %v4944
        %v6446 = vunpack.c.h.b16 %v4944
        %v6447 = vunpack.c.l.b16 %v4945
        %v6448 = vunpack.c.h.b16 %v4945
        %v6449 = vunpack.c.l.b16 %v4946
        %v6450 = vunpack.c.h.b16 %v4946
        %v6451 = vunpack.c.l.b16 %v4947
        %v6452 = vunpack.c.h.b16 %v4947
        %v6453 = vunpack.c.l.b16 %v4948
        %v6454 = vunpack.c.h.b16 %v4948
        %v6455 = vunpack.c.l.b16 %v4949
        %v6456 = vunpack.c.h.b16 %v4949
        %v6457 = vunpack.c.l.b16 %v4950
        %v6458 = vunpack.c.h.b16 %v4950
        %v6459 = vunpack.c.l.b16 %v4951
        %v6460 = vunpack.c.h.b16 %v4951
        %v6461 = vunpack.c.l.b16 %v4952
        %v6462 = vunpack.c.h.b16 %v4952
        %v6463 = vunpack.c.l.b16 %v4953
        %v6464 = vunpack.c.h.b16 %v4953
        %v6465 = vunpack.c.l.b16 %v4954
        %v6466 = vunpack.c.h.b16 %v4954
        %v6467 = vunpack.c.l.b16 %v4955
        %v6468 = vunpack.c.h.b16 %v4955
        %v6469 = vunpack.c.l.b16 %v4956
        %v6470 = vunpack.c.h.b16 %v4956
        %v6471 = vunpack.c.l.b16 %v4957
        %v6472 = vunpack.c.h.b16 %v4957
        %v6473 = vunpack.c.l.b16 %v4958
        %v6474 = vunpack.c.h.b16 %v4958
        %v6475 = vunpack.c.l.b16 %v4959
        %v6476 = vunpack.c.h.b16 %v4959
        %v6477 = vunpack.c.l.b16 %v4960
        %v6478 = vunpack.c.h.b16 %v4960
        %v6479 = vunpack.c.l.b16 %v4961
        %v6480 = vunpack.c.h.b16 %v4961
        %v6481 = vunpack.c.l.b16 %v4962
        %v6482 = vunpack.c.h.b16 %v4962
        %v6483 = vunpack.c.l.b16 %v4963
        %v6484 = vunpack.c.h.b16 %v4963
        %v6485 = vunpack.c.l.b16 %v4964
        %v6486 = vunpack.c.h.b16 %v4964
        %v6487 = vunpack.c.l.b16 %v4965
        %v6488 = vunpack.c.h.b16 %v4965
        %v6489 = vunpack.c.l.b16 %v4966
        %v6490 = vunpack.c.h.b16 %v4966
        %v6491 = vunpack.c.l.b16 %v4967
        %v6492 = vunpack.c.h.b16 %v4967
        %v6493 = vunpack.c.l.b16 %v4968
        %v6494 = vunpack.c.h.b16 %v4968
        %v6495 = vunpack.c.l.b16 %v4969
        %v6496 = vunpack.c.h.b16 %v4969
        %v6497 = vunpack.c.l.b16 %v4970
        %v6498 = vunpack.c.h.b16 %v4970
        %v6499 = vunpack.c.l.b16 %v4971
        %v6500 = vunpack.c.h.b16 %v4971
        %v6501 = vunpack.c.l.b16 %v4972
        %v6502 = vunpack.c.h.b16 %v4972
        %v6503 = vunpack.c.l.b16 %v4973
        %v6504 = vunpack.c.h.b16 %v4973
        %v6505 = vunpack.c.l.b16 %v4974
        %v6506 = vunpack.c.h.b16 %v4974
        %v6507 = vunpack.c.l.b16 %v4975
        %v6508 = vunpack.c.h.b16 %v4975
        %v6509 = vunpack.c.l.b16 %v4976
        %v6510 = vunpack.c.h.b16 %v4976
        %v6511 = vunpack.c.l.b16 %v4977
        %v6512 = vunpack.c.h.b16 %v4977
        %v6513 = vunpack.c.l.b16 %v4978
        %v6514 = vunpack.c.h.b16 %v4978
        %v6515 = vunpack.c.l.b16 %v4979
        %v6516 = vunpack.c.h.b16 %v4979
        %v6517 = vunpack.c.l.b16 %v4980
        %v6518 = vunpack.c.h.b16 %v4980
        %v6519 = vunpack.c.l.b16 %v4981
        %v6520 = vunpack.c.h.b16 %v4981
        %v6521 = vunpack.c.l.b16 %v4982
        %v6522 = vunpack.c.h.b16 %v4982
        %v6523 = vunpack.c.l.b16 %v4983
        %v6524 = vunpack.c.h.b16 %v4983
        %v6525 = vunpack.c.l.b16 %v4984
        %v6526 = vunpack.c.h.b16 %v4984
        %v6527 = vunpack.c.l.b16 %v4985
        %v6528 = vunpack.c.h.b16 %v4985
        %v6529 = vunpack.c.l.b16 %v4986
        %v6530 = vunpack.c.h.b16 %v4986
        %v6531 = vunpack.c.l.b16 %v4987
        %v6532 = vunpack.c.h.b16 %v4987
        %v6533 = vunpack.c.l.b16 %v4988
        %v6534 = vunpack.c.h.b16 %v4988
        %v6535 = vunpack.c.l.b16 %v4989
        %v6536 = vunpack.c.h.b16 %v4989
        %v6537 = vunpack.c.l.b16 %v4990
        %v6538 = vunpack.c.h.b16 %v4990
        %v6539 = vunpack.c.l.b16 %v4991
        %v6540 = vunpack.c.h.b16 %v4991
        %v6541 = vunpack.c.l.b16 %v4992
        %v6542 = vunpack.c.h.b16 %v4992
        %v6543 = vunpack.c.l.b16 %v4993
        %v6544 = vunpack.c.h.b16 %v4993
        %v6545 = vunpack.c.l.b16 %v4994
        %v6546 = vunpack.c.h.b16 %v4994
        %v6547 = vunpack.c.l.b16 %v4995
        %v6548 = vunpack.c.h.b16 %v4995
        %v6549 = vunpack.c.l.b16 %v4996
        %v6550 = vunpack.c.h.b16 %v4996
        %v6551 = vunpack.c.l.b16 %v4997
        %v6552 = vunpack.c.h.b16 %v4997
        %v6553 = vunpack.c.l.b16 %v4998
        %v6554 = vunpack.c.h.b16 %v4998
        %v6555 = vunpack.c.l.b16 %v4999
        %v6556 = vunpack.c.h.b16 %v4999
        %v6557 = vunpack.c.l.b16 %v5000
        %v6558 = vunpack.c.h.b16 %v5000
        %v6559 = vunpack.c.l.b16 %v5001
        %v6560 = vunpack.c.h.b16 %v5001
        %v6561 = vunpack.c.l.b16 %v5002
        %v6562 = vunpack.c.h.b16 %v5002
        %v6563 = vunpack.c.l.b16 %v5003
        %v6564 = vunpack.c.h.b16 %v5003
        %v6565 = vunpack.c.l.b16 %v5004
        %v6566 = vunpack.c.h.b16 %v5004
        %v6567 = vunpack.c.l.b16 %v5005
        %v6568 = vunpack.c.h.b16 %v5005
        %v6569 = vunpack.c.l.b16 %v5006
        %v6570 = vunpack.c.h.b16 %v5006
        %v6571 = vunpack.c.l.b16 %v5007
        %v6572 = vunpack.c.h.b16 %v5007
        %v6573 = vunpack.c.l.b16 %v5008
        %v6574 = vunpack.c.h.b16 %v5008
        %v6575 = vunpack.c.l.b16 %v5009
        %v6576 = vunpack.c.h.b16 %v5009
        %v6577 = vunpack.c.l.b16 %v5010
        %v6578 = vunpack.c.h.b16 %v5010
        %v6579 = vunpack.c.l.b16 %v5011
        %v6580 = vunpack.c.h.b16 %v5011
        %v6581 = vunpack.c.l.b16 %v5012
        %v6582 = vunpack.c.h.b16 %v5012
        %v6583 = vunpack.c.l.b16 %v5013
        %v6584 = vunpack.c.h.b16 %v5013
        %v6585 = vunpack.c.l.b16 %v5014
        %v6586 = vunpack.c.h.b16 %v5014
        %v6587 = vunpack.c.l.b16 %v5015
        %v6588 = vunpack.c.h.b16 %v5015
        %v6589 = vunpack.c.l.b16 %v5016
        %v6590 = vunpack.c.h.b16 %v5016
        %v6591 = vunpack.c.l.b16 %v5017
        %v6592 = vunpack.c.h.b16 %v5017
        %v6593 = vunpack.c.l.b16 %v5018
        %v6594 = vunpack.c.h.b16 %v5018
        %v6595 = vunpack.c.l.b16 %v5019
        %v6596 = vunpack.c.h.b16 %v5019
        %v6597 = vunpack.c.l.b16 %v5020
        %v6598 = vunpack.c.h.b16 %v5020
        %v6599 = vunpack.c.l.b16 %v5021
        %v6600 = vunpack.c.h.b16 %v5021
        %v6601 = vunpack.c.l.b16 %v5022
        %v6602 = vunpack.c.h.b16 %v5022
        %v6603 = vunpack.c.l.b16 %v5023
        %v6604 = vunpack.c.h.b16 %v5023
        %v6605 = vunpack.c.l.b16 %v5024
        %v6606 = vunpack.c.h.b16 %v5024
        %v6607 = vunpack.c.l.b16 %v5025
        %v6608 = vunpack.c.h.b16 %v5025
        %v6609 = vunpack.c.l.b16 %v5026
        %v6610 = vunpack.c.h.b16 %v5026
        %v6611 = vunpack.c.l.b16 %v5027
        %v6612 = vunpack.c.h.b16 %v5027
        %v6613 = vunpack.c.l.b16 %v5028
        %v6614 = vunpack.c.h.b16 %v5028
        %v6615 = vunpack.c.l.b16 %v5029
        %v6616 = vunpack.c.h.b16 %v5029
        %v6617 = vunpack.c.l.b16 %v5030
        %v6618 = vunpack.c.h.b16 %v5030
        %v6619 = vunpack.c.l.b16 %v5031
        %v6620 = vunpack.c.h.b16 %v5031
        %v6621 = vunpack.c.l.b16 %v5032
        %v6622 = vunpack.c.h.b16 %v5032
        %v6623 = vunpack.c.l.b16 %v5033
        %v6624 = vunpack.c.h.b16 %v5033
        %v6625 = vunpack.c.l.b16 %v5034
        %v6626 = vunpack.c.h.b16 %v5034
        %v6627 = vunpack.c.l.b16 %v5035
        %v6628 = vunpack.c.h.b16 %v5035
        %v6629 = vunpack.c.l.b16 %v5036
        %v6630 = vunpack.c.h.b16 %v5036
        %v6631 = vunpack.c.l.b16 %v5037
        %v6632 = vunpack.c.h.b16 %v5037
        %v6633 = vunpack.c.l.b16 %v5038
        %v6634 = vunpack.c.h.b16 %v5038
        %v6635 = vunpack.c.l.b16 %v5039
        %v6636 = vunpack.c.h.b16 %v5039
        %v6637 = vunpack.c.l.b16 %v5040
        %v6638 = vunpack.c.h.b16 %v5040
        %v6639 = vunpack.c.l.b16 %v5041
        %v6640 = vunpack.c.h.b16 %v5041
        %v6641 = vunpack.c.l.b16 %v5042
        %v6642 = vunpack.c.h.b16 %v5042
        %v6643 = vunpack.c.l.b16 %v5043
        %v6644 = vunpack.c.h.b16 %v5043
        %v6645 = vunpack.c.l.b16 %v5044
        %v6646 = vunpack.c.h.b16 %v5044
        %v6647 = vunpack.c.l.b16 %v5045
        %v6648 = vunpack.c.h.b16 %v5045
        %v6649 = vunpack.c.l.b16 %v5046
        %v6650 = vunpack.c.h.b16 %v5046
        %v6651 = vunpack.c.l.b16 %v5047
        %v6652 = vunpack.c.h.b16 %v5047
        %v6653 = vunpack.c.l.b16 %v5048
        %v6654 = vunpack.c.h.b16 %v5048
        %v6655 = vunpack.c.l.b16 %v5049
        %v6656 = vunpack.c.h.b16 %v5049
        %v6657 = vunpack.c.l.b16 %v5050
        %v6658 = vunpack.c.h.b16 %v5050
        %v6659 = vunpack.c.l.b16 %v5051
        %v6660 = vunpack.c.h.b16 %v5051
        %v6661 = vunpack.c.l.b16 %v5052
        %v6662 = vunpack.c.h.b16 %v5052
        %v6663 = vunpack.c.l.b16 %v5053
        %v6664 = vunpack.c.h.b16 %v5053
        %v6665 = vunpack.c.l.b16 %v5054
        %v6666 = vunpack.c.h.b16 %v5054
        %v6667 = vunpack.c.l.b16 %v5055
        %v6668 = vunpack.c.h.b16 %v5055
        %v6669 = vunpack.c.l.b16 %v5056
        %v6670 = vunpack.c.h.b16 %v5056
        %v6671 = vunpack.c.l.b16 %v5057
        %v6672 = vunpack.c.h.b16 %v5057
        %v6673 = vunpack.c.l.b16 %v5058
        %v6674 = vunpack.c.h.b16 %v5058
        %v6675 = vunpack.c.l.b16 %v5059
        %v6676 = vunpack.c.h.b16 %v5059
        %v6677 = vunpack.c.l.b16 %v5060
        %v6678 = vunpack.c.h.b16 %v5060
        %v6679 = vunpack.c.l.b16 %v5061
        %v6680 = vunpack.c.h.b16 %v5061
        %v6681 = vunpack.c.l.b16 %v5062
        %v6682 = vunpack.c.h.b16 %v5062
        %v6683 = vpack.c.b16 %v5675, %v5659
        %v6684 = vpack.c.b16 %v5676, %v5660
        %v6685 = vpack.c.b16 %v5677, %v5661
        %v6686 = vpack.c.b16 %v5678, %v5662
        %v6687 = vpack.c.b16 %v5679, %v5663
        %v6688 = vpack.c.b16 %v5680, %v5664
        %v6689 = vpack.c.b16 %v5681, %v5665
        %v6690 = vpack.c.b16 %v5682, %v5666
        %v6691 = vpack.c.b16 %v5683, %v5667
        %v6692 = vpack.c.b16 %v5684, %v5668
        %v6693 = vpack.c.b16 %v5685, %v5669
        %v6694 = vpack.c.b16 %v5686, %v5670
        %v6695 = vpack.c.b16 %v5687, %v5671
        %v6696 = vpack.c.b16 %v5688, %v5672
        %v6697 = vpack.c.b16 %v5689, %v5673
        %v6698 = vpack.c.b16 %v5690, %v5674
        %v6699 = vpack.c.b16 %v5707, %v5691
        %v6700 = vpack.c.b16 %v5708, %v5692
        %v6701 = vpack.c.b16 %v5709, %v5693
        %v6702 = vpack.c.b16 %v5710, %v5694
        %v6703 = vpack.c.b16 %v5711, %v5695
        %v6704 = vpack.c.b16 %v5712, %v5696
        %v6705 = vpack.c.b16 %v5713, %v5697
        %v6706 = vpack.c.b16 %v5714, %v5698
        %v6707 = vpack.c.b16 %v5715, %v5699
        %v6708 = vpack.c.b16 %v5716, %v5700
        %v6709 = vpack.c.b16 %v5717, %v5701
        %v6710 = vpack.c.b16 %v5718, %v5702
        %v6711 = vpack.c.b16 %v5719, %v5703
        %v6712 = vpack.c.b16 %v5720, %v5704
        %v6713 = vpack.c.b16 %v5721, %v5705
        %v6714 = vpack.c.b16 %v5722, %v5706
        %v6715 = vpack.c.b16 %v5739, %v5723
        %v6716 = vpack.c.b16 %v5740, %v5724
        %v6717 = vpack.c.b16 %v5741, %v5725
        %v6718 = vpack.c.b16 %v5742, %v5726
        %v6719 = vpack.c.b16 %v5743, %v5727
        %v6720 = vpack.c.b16 %v5744, %v5728
        %v6721 = vpack.c.b16 %v5745, %v5729
        %v6722 = vpack.c.b16 %v5746, %v5730
        %v6723 = vpack.c.b16 %v5747, %v5731
        %v6724 = vpack.c.b16 %v5748, %v5732
        %v6725 = vpack.c.b16 %v5749, %v5733
        %v6726 = vpack.c.b16 %v5750, %v5734
        %v6727 = vpack.c.b16 %v5751, %v5735
        %v6728 = vpack.c.b16 %v5752, %v5736
        %v6729 = vpack.c.b16 %v5753, %v5737
        %v6730 = vpack.c.b16 %v5754, %v5738
        %v6731 = vpack.c.b16 %v5771, %v5755
        %v6732 = vpack.c.b16 %v5772, %v5756
        %v6733 = vpack.c.b16 %v5773, %v5757
        %v6734 = vpack.c.b16 %v5774, %v5758
        %v6735 = vpack.c.b16 %v5775, %v5759
        %v6736 = vpack.c.b16 %v5776, %v5760
        %v6737 = vpack.c.b16 %v5777, %v5761
        %v6738 = vpack.c.b16 %v5778, %v5762
        %v6739 = vpack.c.b16 %v5779, %v5763
        %v6740 = vpack.c.b16 %v5780, %v5764
        %v6741 = vpack.c.b16 %v5781, %v5765
        %v6742 = vpack.c.b16 %v5782, %v5766
        %v6743 = vpack.c.b16 %v5783, %v5767
        %v6744 = vpack.c.b16 %v5784, %v5768
        %v6745 = vpack.c.b16 %v5785, %v5769
        %v6746 = vpack.c.b16 %v5786, %v5770
        %v6747 = vpack.c.b16 %v5803, %v5787
        %v6748 = vpack.c.b16 %v5804, %v5788
        %v6749 = vpack.c.b16 %v5805, %v5789
        %v6750 = vpack.c.b16 %v5806, %v5790
        %v6751 = vpack.c.b16 %v5807, %v5791
        %v6752 = vpack.c.b16 %v5808, %v5792
        %v6753 = vpack.c.b16 %v5809, %v5793
        %v6754 = vpack.c.b16 %v5810, %v5794
        %v6755 = vpack.c.b16 %v5811, %v5795
        %v6756 = vpack.c.b16 %v5812, %v5796
        %v6757 = vpack.c.b16 %v5813, %v5797
        %v6758 = vpack.c.b16 %v5814, %v5798
        %v6759 = vpack.c.b16 %v5815, %v5799
        %v6760 = vpack.c.b16 %v5816, %v5800
        %v6761 = vpack.c.b16 %v5817, %v5801
        %v6762 = vpack.c.b16 %v5818, %v5802
        %v6763 = vpack.c.b16 %v5835, %v5819
        %v6764 = vpack.c.b16 %v5836, %v5820
        %v6765 = vpack.c.b16 %v5837, %v5821
        %v6766 = vpack.c.b16 %v5838, %v5822
        %v6767 = vpack.c.b16 %v5839, %v5823
        %v6768 = vpack.c.b16 %v5840, %v5824
        %v6769 = vpack.c.b16 %v5841, %v5825
        %v6770 = vpack.c.b16 %v5842, %v5826
        %v6771 = vpack.c.b16 %v5843, %v5827
        %v6772 = vpack.c.b16 %v5844, %v5828
        %v6773 = vpack.c.b16 %v5845, %v5829
        %v6774 = vpack.c.b16 %v5846, %v5830
        %v6775 = vpack.c.b16 %v5847, %v5831
        %v6776 = vpack.c.b16 %v5848, %v5832
        %v6777 = vpack.c.b16 %v5849, %v5833
        %v6778 = vpack.c.b16 %v5850, %v5834
        %v6779 = vpack.c.b16 %v5867, %v5851
        %v6780 = vpack.c.b16 %v5868, %v5852
        %v6781 = vpack.c.b16 %v5869, %v5853
        %v6782 = vpack.c.b16 %v5870, %v5854
        %v6783 = vpack.c.b16 %v5871, %v5855
        %v6784 = vpack.c.b16 %v5872, %v5856
        %v6785 = vpack.c.b16 %v5873, %v5857
        %v6786 = vpack.c.b16 %v5874, %v5858
        %v6787 = vpack.c.b16 %v5875, %v5859
        %v6788 = vpack.c.b16 %v5876, %v5860
        %v6789 = vpack.c.b16 %v5877, %v5861
        %v6790 = vpack.c.b16 %v5878, %v5862
        %v6791 = vpack.c.b16 %v5879, %v5863
        %v6792 = vpack.c.b16 %v5880, %v5864
        %v6793 = vpack.c.b16 %v5881, %v5865
        %v6794 = vpack.c.b16 %v5882, %v5866
        %v6795 = vpack.c.b16 %v5899, %v5883
        %v6796 = vpack.c.b16 %v5900, %v5884
        %v6797 = vpack.c.b16 %v5901, %v5885
        %v6798 = vpack.c.b16 %v5902, %v5886
        %v6799 = vpack.c.b16 %v5903, %v5887
        %v6800 = vpack.c.b16 %v5904, %v5888
        %v6801 = vpack.c.b16 %v5905, %v5889
        %v6802 = vpack.c.b16 %v5906, %v5890
        %v6803 = vpack.c.b16 %v5907, %v5891
        %v6804 = vpack.c.b16 %v5908, %v5892
        %v6805 = vpack.c.b16 %v5909, %v5893
        %v6806 = vpack.c.b16 %v5910, %v5894
        %v6807 = vpack.c.b16 %v5911, %v5895
        %v6808 = vpack.c.b16 %v5912, %v5896
        %v6809 = vpack.c.b16 %v5913, %v5897
        %v6810 = vpack.c.b16 %v5914, %v5898
        %v6811 = vpack.c.b16 %v5931, %v5915
        %v6812 = vpack.c.b16 %v5932, %v5916
        %v6813 = vpack.c.b16 %v5933, %v5917
        %v6814 = vpack.c.b16 %v5934, %v5918
        %v6815 = vpack.c.b16 %v5935, %v5919
        %v6816 = vpack.c.b16 %v5936, %v5920
        %v6817 = vpack.c.b16 %v5937, %v5921
        %v6818 = vpack.c.b16 %v5938, %v5922
        %v6819 = vpack.c.b16 %v5939, %v5923
        %v6820 = vpack.c.b16 %v5940, %v5924
        %v6821 = vpack.c.b16 %v5941, %v5925
        %v6822 = vpack.c.b16 %v5942, %v5926
        %v6823 = vpack.c.b16 %v5943, %v5927
        %v6824 = vpack.c.b16 %v5944, %v5928
        %v6825 = vpack.c.b16 %v5945, %v5929
        %v6826 = vpack.c.b16 %v5946, %v5930
        %v6827 = vpack.c.b16 %v5963, %v5947
        %v6828 = vpack.c.b16 %v5964, %v5948
        %v6829 = vpack.c.b16 %v5965, %v5949
        %v6830 = vpack.c.b16 %v5966, %v5950
        %v6831 = vpack.c.b16 %v5967, %v5951
        %v6832 = vpack.c.b16 %v5968, %v5952
        %v6833 = vpack.c.b16 %v5969, %v5953
        %v6834 = vpack.c.b16 %v5970, %v5954
        %v6835 = vpack.c.b16 %v5971, %v5955
        %v6836 = vpack.c.b16 %v5972, %v5956
        %v6837 = vpack.c.b16 %v5973, %v5957
        %v6838 = vpack.c.b16 %v5974, %v5958
        %v6839 = vpack.c.b16 %v5975, %v5959
        %v6840 = vpack.c.b16 %v5976, %v5960
        %v6841 = vpack.c.b16 %v5977, %v5961
        %v6842 = vpack.c.b16 %v5978, %v5962
        %v6843 = vpack.c.b16 %v5995, %v5979
        %v6844 = vpack.c.b16 %v5996, %v5980
        %v6845 = vpack.c.b16 %v5997, %v5981
        %v6846 = vpack.c.b16 %v5998, %v5982
        %v6847 = vpack.c.b16 %v5999, %v5983
        %v6848 = vpack.c.b16 %v6000, %v5984
        %v6849 = vpack.c.b16 %v6001, %v5985
        %v6850 = vpack.c.b16 %v6002, %v5986
        %v6851 = vpack.c.b16 %v6003, %v5987
        %v6852 = vpack.c.b16 %v6004, %v5988
        %v6853 = vpack.c.b16 %v6005, %v5989
        %v6854 = vpack.c.b16 %v6006, %v5990
        %v6855 = vpack.c.b16 %v6007, %v5991
        %v6856 = vpack.c.b16 %v6008, %v5992
        %v6857 = vpack.c.b16 %v6009, %v5993
        %v6858 = vpack.c.b16 %v6010, %v5994
        %v6859 = vpack.c.b16 %v6027, %v6011
        %v6860 = vpack.c.b16 %v6028, %v6012
        %v6861 = vpack.c.b16 %v6029, %v6013
        %v6862 = vpack.c.b16 %v6030, %v6014
        %v6863 = vpack.c.b16 %v6031, %v6015
        %v6864 = vpack.c.b16 %v6032, %v6016
        %v6865 = vpack.c.b16 %v6033, %v6017
        %v6866 = vpack.c.b16 %v6034, %v6018
        %v6867 = vpack.c.b16 %v6035, %v6019
        %v6868 = vpack.c.b16 %v6036, %v6020
        %v6869 = vpack.c.b16 %v6037, %v6021
        %v6870 = vpack.c.b16 %v6038, %v6022
        %v6871 = vpack.c.b16 %v6039, %v6023
        %v6872 = vpack.c.b16 %v6040, %v6024
        %v6873 = vpack.c.b16 %v6041, %v6025
        %v6874 = vpack.c.b16 %v6042, %v6026
        %v6875 = vpack.c.b16 %v6059, %v6043
        %v6876 = vpack.c.b16 %v6060, %v6044
        %v6877 = vpack.c.b16 %v6061, %v6045
        %v6878 = vpack.c.b16 %v6062, %v6046
        %v6879 = vpack.c.b16 %v6063, %v6047
        %v6880 = vpack.c.b16 %v6064, %v6048
        %v6881 = vpack.c.b16 %v6065, %v6049
        %v6882 = vpack.c.b16 %v6066, %v6050
        %v6883 = vpack.c.b16 %v6067, %v6051
        %v6884 = vpack.c.b16 %v6068, %v6052
        %v6885 = vpack.c.b16 %v6069, %v6053
        %v6886 = vpack.c.b16 %v6070, %v6054
        %v6887 = vpack.c.b16 %v6071, %v6055
        %v6888 = vpack.c.b16 %v6072, %v6056
        %v6889 = vpack.c.b16 %v6073, %v6057
        %v6890 = vpack.c.b16 %v6074, %v6058
        %v6891 = vpack.c.b16 %v6091, %v6075
        %v6892 = vpack.c.b16 %v6092, %v6076
        %v6893 = vpack.c.b16 %v6093, %v6077
        %v6894 = vpack.c.b16 %v6094, %v6078
        %v6895 = vpack.c.b16 %v6095, %v6079
        %v6896 = vpack.c.b16 %v6096, %v6080
        %v6897 = vpack.c.b16 %v6097, %v6081
        %v6898 = vpack.c.b16 %v6098, %v6082
        %v6899 = vpack.c.b16 %v6099, %v6083
        %v6900 = vpack.c.b16 %v6100, %v6084
        %v6901 = vpack.c.b16 %v6101, %v6085
        %v6902 = vpack.c.b16 %v6102, %v6086
        %v6903 = vpack.c.b16 %v6103, %v6087
        %v6904 = vpack.c.b16 %v6104, %v6088
        %v6905 = vpack.c.b16 %v6105, %v6089
        %v6906 = vpack.c.b16 %v6106, %v6090
        %v6907 = vpack.c.b16 %v6123, %v6107
        %v6908 = vpack.c.b16 %v6124, %v6108
        %v6909 = vpack.c.b16 %v6125, %v6109
        %v6910 = vpack.c.b16 %v6126, %v6110
        %v6911 = vpack.c.b16 %v6127, %v6111
        %v6912 = vpack.c.b16 %v6128, %v6112
        %v6913 = vpack.c.b16 %v6129, %v6113
        %v6914 = vpack.c.b16 %v6130, %v6114
        %v6915 = vpack.c.b16 %v6131, %v6115
        %v6916 = vpack.c.b16 %v6132, %v6116
        %v6917 = vpack.c.b16 %v6133, %v6117
        %v6918 = vpack.c.b16 %v6134, %v6118
        %v6919 = vpack.c.b16 %v6135, %v6119
        %v6920 = vpack.c.b16 %v6136, %v6120
        %v6921 = vpack.c.b16 %v6137, %v6121
        %v6922 = vpack.c.b16 %v6138, %v6122
        %v6923 = vpack.c.b16 %v6155, %v6139
        %v6924 = vpack.c.b16 %v6156, %v6140
        %v6925 = vpack.c.b16 %v6157, %v6141
        %v6926 = vpack.c.b16 %v6158, %v6142
        %v6927 = vpack.c.b16 %v6159, %v6143
        %v6928 = vpack.c.b16 %v6160, %v6144
        %v6929 = vpack.c.b16 %v6161, %v6145
        %v6930 = vpack.c.b16 %v6162, %v6146
        %v6931 = vpack.c.b16 %v6163, %v6147
        %v6932 = vpack.c.b16 %v6164, %v6148
        %v6933 = vpack.c.b16 %v6165, %v6149
        %v6934 = vpack.c.b16 %v6166, %v6150
        %v6935 = vpack.c.b16 %v6167, %v6151
        %v6936 = vpack.c.b16 %v6168, %v6152
        %v6937 = vpack.c.b16 %v6169, %v6153
        %v6938 = vpack.c.b16 %v6170, %v6154
        %v6939 = vpack.c.b16 %v6187, %v6171
        %v6940 = vpack.c.b16 %v6188, %v6172
        %v6941 = vpack.c.b16 %v6189, %v6173
        %v6942 = vpack.c.b16 %v6190, %v6174
        %v6943 = vpack.c.b16 %v6191, %v6175
        %v6944 = vpack.c.b16 %v6192, %v6176
        %v6945 = vpack.c.b16 %v6193, %v6177
        %v6946 = vpack.c.b16 %v6194, %v6178
        %v6947 = vpack.c.b16 %v6195, %v6179
        %v6948 = vpack.c.b16 %v6196, %v6180
        %v6949 = vpack.c.b16 %v6197, %v6181
        %v6950 = vpack.c.b16 %v6198, %v6182
        %v6951 = vpack.c.b16 %v6199, %v6183
        %v6952 = vpack.c.b16 %v6200, %v6184
        %v6953 = vpack.c.b16 %v6201, %v6185
        %v6954 = vpack.c.b16 %v6202, %v6186
        %v6955 = vpack.c.b16 %v6219, %v6203
        %v6956 = vpack.c.b16 %v6220, %v6204
        %v6957 = vpack.c.b16 %v6221, %v6205
        %v6958 = vpack.c.b16 %v6222, %v6206
        %v6959 = vpack.c.b16 %v6223, %v6207
        %v6960 = vpack.c.b16 %v6224, %v6208
        %v6961 = vpack.c.b16 %v6225, %v6209
        %v6962 = vpack.c.b16 %v6226, %v6210
        %v6963 = vpack.c.b16 %v6227, %v6211
        %v6964 = vpack.c.b16 %v6228, %v6212
        %v6965 = vpack.c.b16 %v6229, %v6213
        %v6966 = vpack.c.b16 %v6230, %v6214
        %v6967 = vpack.c.b16 %v6231, %v6215
        %v6968 = vpack.c.b16 %v6232, %v6216
        %v6969 = vpack.c.b16 %v6233, %v6217
        %v6970 = vpack.c.b16 %v6234, %v6218
        %v6971 = vpack.c.b16 %v6251, %v6235
        %v6972 = vpack.c.b16 %v6252, %v6236
        %v6973 = vpack.c.b16 %v6253, %v6237
        %v6974 = vpack.c.b16 %v6254, %v6238
        %v6975 = vpack.c.b16 %v6255, %v6239
        %v6976 = vpack.c.b16 %v6256, %v6240
        %v6977 = vpack.c.b16 %v6257, %v6241
        %v6978 = vpack.c.b16 %v6258, %v6242
        %v6979 = vpack.c.b16 %v6259, %v6243
        %v6980 = vpack.c.b16 %v6260, %v6244
        %v6981 = vpack.c.b16 %v6261, %v6245
        %v6982 = vpack.c.b16 %v6262, %v6246
        %v6983 = vpack.c.b16 %v6263, %v6247
        %v6984 = vpack.c.b16 %v6264, %v6248
        %v6985 = vpack.c.b16 %v6265, %v6249
        %v6986 = vpack.c.b16 %v6266, %v6250
        %v6987 = vpack.c.b16 %v6283, %v6267
        %v6988 = vpack.c.b16 %v6284, %v6268
        %v6989 = vpack.c.b16 %v6285, %v6269
        %v6990 = vpack.c.b16 %v6286, %v6270
        %v6991 = vpack.c.b16 %v6287, %v6271
        %v6992 = vpack.c.b16 %v6288, %v6272
        %v6993 = vpack.c.b16 %v6289, %v6273
        %v6994 = vpack.c.b16 %v6290, %v6274
        %v6995 = vpack.c.b16 %v6291, %v6275
        %v6996 = vpack.c.b16 %v6292, %v6276
        %v6997 = vpack.c.b16 %v6293, %v6277
        %v6998 = vpack.c.b16 %v6294, %v6278
        %v6999 = vpack.c.b16 %v6295, %v6279
        %v7000 = vpack.c.b16 %v6296, %v6280
        %v7001 = vpack.c.b16 %v6297, %v6281
        %v7002 = vpack.c.b16 %v6298, %v6282
        %v7003 = vpack.c.b16 %v6315, %v6299
        %v7004 = vpack.c.b16 %v6316, %v6300
        %v7005 = vpack.c.b16 %v6317, %v6301
        %v7006 = vpack.c.b16 %v6318, %v6302
        %v7007 = vpack.c.b16 %v6319, %v6303
        %v7008 = vpack.c.b16 %v6320, %v6304
        %v7009 = vpack.c.b16 %v6321, %v6305
        %v7010 = vpack.c.b16 %v6322, %v6306
        %v7011 = vpack.c.b16 %v6323, %v6307
        %v7012 = vpack.c.b16 %v6324, %v6308
        %v7013 = vpack.c.b16 %v6325, %v6309
        %v7014 = vpack.c.b16 %v6326, %v6310
        %v7015 = vpack.c.b16 %v6327, %v6311
        %v7016 = vpack.c.b16 %v6328, %v6312
        %v7017 = vpack.c.b16 %v6329, %v6313
        %v7018 = vpack.c.b16 %v6330, %v6314
        %v7019 = vpack.c.b16 %v6347, %v6331
        %v7020 = vpack.c.b16 %v6348, %v6332
        %v7021 = vpack.c.b16 %v6349, %v6333
        %v7022 = vpack.c.b16 %v6350, %v6334
        %v7023 = vpack.c.b16 %v6351, %v6335
        %v7024 = vpack.c.b16 %v6352, %v6336
        %v7025 = vpack.c.b16 %v6353, %v6337
        %v7026 = vpack.c.b16 %v6354, %v6338
        %v7027 = vpack.c.b16 %v6355, %v6339
        %v7028 = vpack.c.b16 %v6356, %v6340
        %v7029 = vpack.c.b16 %v6357, %v6341
        %v7030 = vpack.c.b16 %v6358, %v6342
        %v7031 = vpack.c.b16 %v6359, %v6343
        %v7032 = vpack.c.b16 %v6360, %v6344
        %v7033 = vpack.c.b16 %v6361, %v6345
        %v7034 = vpack.c.b16 %v6362, %v6346
        %v7035 = vpack.c.b16 %v6379, %v6363
        %v7036 = vpack.c.b16 %v6380, %v6364
        %v7037 = vpack.c.b16 %v6381, %v6365
        %v7038 = vpack.c.b16 %v6382, %v6366
        %v7039 = vpack.c.b16 %v6383, %v6367
        %v7040 = vpack.c.b16 %v6384, %v6368
        %v7041 = vpack.c.b16 %v6385, %v6369
        %v7042 = vpack.c.b16 %v6386, %v6370
        %v7043 = vpack.c.b16 %v6387, %v6371
        %v7044 = vpack.c.b16 %v6388, %v6372
        %v7045 = vpack.c.b16 %v6389, %v6373
        %v7046 = vpack.c.b16 %v6390, %v6374
        %v7047 = vpack.c.b16 %v6391, %v6375
        %v7048 = vpack.c.b16 %v6392, %v6376
        %v7049 = vpack.c.b16 %v6393, %v6377
        %v7050 = vpack.c.b16 %v6394, %v6378
        %v7051 = vpack.c.b16 %v6411, %v6395
        %v7052 = vpack.c.b16 %v6412, %v6396
        %v7053 = vpack.c.b16 %v6413, %v6397
        %v7054 = vpack.c.b16 %v6414, %v6398
        %v7055 = vpack.c.b16 %v6415, %v6399
        %v7056 = vpack.c.b16 %v6416, %v6400
        %v7057 = vpack.c.b16 %v6417, %v6401
        %v7058 = vpack.c.b16 %v6418, %v6402
        %v7059 = vpack.c.b16 %v6419, %v6403
        %v7060 = vpack.c.b16 %v6420, %v6404
        %v7061 = vpack.c.b16 %v6421, %v6405
        %v7062 = vpack.c.b16 %v6422, %v6406
        %v7063 = vpack.c.b16 %v6423, %v6407
        %v7064 = vpack.c.b16 %v6424, %v6408
        %v7065 = vpack.c.b16 %v6425, %v6409
        %v7066 = vpack.c.b16 %v6426, %v6410
        %v7067 = vpack.c.b16 %v6443, %v6427
        %v7068 = vpack.c.b16 %v6444, %v6428
        %v7069 = vpack.c.b16 %v6445, %v6429
        %v7070 = vpack.c.b16 %v6446, %v6430
        %v7071 = vpack.c.b16 %v6447, %v6431
        %v7072 = vpack.c.b16 %v6448, %v6432
        %v7073 = vpack.c.b16 %v6449, %v6433
        %v7074 = vpack.c.b16 %v6450, %v6434
        %v7075 = vpack.c.b16 %v6451, %v6435
        %v7076 = vpack.c.b16 %v6452, %v6436
        %v7077 = vpack.c.b16 %v6453, %v6437
        %v7078 = vpack.c.b16 %v6454, %v6438
        %v7079 = vpack.c.b16 %v6455, %v6439
        %v7080 = vpack.c.b16 %v6456, %v6440
        %v7081 = vpack.c.b16 %v6457, %v6441
        %v7082 = vpack.c.b16 %v6458, %v6442
        %v7083 = vpack.c.b16 %v6475, %v6459
        %v7084 = vpack.c.b16 %v6476, %v6460
        %v7085 = vpack.c.b16 %v6477, %v6461
        %v7086 = vpack.c.b16 %v6478, %v6462
        %v7087 = vpack.c.b16 %v6479, %v6463
        %v7088 = vpack.c.b16 %v6480, %v6464
        %v7089 = vpack.c.b16 %v6481, %v6465
        %v7090 = vpack.c.b16 %v6482, %v6466
        %v7091 = vpack.c.b16 %v6483, %v6467
        %v7092 = vpack.c.b16 %v6484, %v6468
        %v7093 = vpack.c.b16 %v6485, %v6469
        %v7094 = vpack.c.b16 %v6486, %v6470
        %v7095 = vpack.c.b16 %v6487, %v6471
        %v7096 = vpack.c.b16 %v6488, %v6472
        %v7097 = vpack.c.b16 %v6489, %v6473
        %v7098 = vpack.c.b16 %v6490, %v6474
        %v7099 = vpack.c.b16 %v6507, %v6491
        %v7100 = vpack.c.b16 %v6508, %v6492
        %v7101 = vpack.c.b16 %v6509, %v6493
        %v7102 = vpack.c.b16 %v6510, %v6494
        %v7103 = vpack.c.b16 %v6511, %v6495
        %v7104 = vpack.c.b16 %v6512, %v6496
        %v7105 = vpack.c.b16 %v6513, %v6497
        %v7106 = vpack.c.b16 %v6514, %v6498
        %v7107 = vpack.c.b16 %v6515, %v6499
        %v7108 = vpack.c.b16 %v6516, %v6500
        %v7109 = vpack.c.b16 %v6517, %v6501
        %v7110 = vpack.c.b16 %v6518, %v6502
        %v7111 = vpack.c.b16 %v6519, %v6503
        %v7112 = vpack.c.b16 %v6520, %v6504
        %v7113 = vpack.c.b16 %v6521, %v6505
        %v7114 = vpack.c.b16 %v6522, %v6506
        %v7115 = vpack.c.b16 %v6539, %v6523
        %v7116 = vpack.c.b16 %v6540, %v6524
        %v7117 = vpack.c.b16 %v6541, %v6525
        %v7118 = vpack.c.b16 %v6542, %v6526
        %v7119 = vpack.c.b16 %v6543, %v6527
        %v7120 = vpack.c.b16 %v6544, %v6528
        %v7121 = vpack.c.b16 %v6545, %v6529
        %v7122 = vpack.c.b16 %v6546, %v6530
        %v7123 = vpack.c.b16 %v6547, %v6531
        %v7124 = vpack.c.b16 %v6548, %v6532
        %v7125 = vpack.c.b16 %v6549, %v6533
        %v7126 = vpack.c.b16 %v6550, %v6534
        %v7127 = vpack.c.b16 %v6551, %v6535
        %v7128 = vpack.c.b16 %v6552, %v6536
        %v7129 = vpack.c.b16 %v6553, %v6537
        %v7130 = vpack.c.b16 %v6554, %v6538
        %v7131 = vpack.c.b16 %v6571, %v6555
        %v7132 = vpack.c.b16 %v6572, %v6556
        %v7133 = vpack.c.b16 %v6573, %v6557
        %v7134 = vpack.c.b16 %v6574, %v6558
        %v7135 = vpack.c.b16 %v6575, %v6559
        %v7136 = vpack.c.b16 %v6576, %v6560
        %v7137 = vpack.c.b16 %v6577, %v6561
        %v7138 = vpack.c.b16 %v6578, %v6562
        %v7139 = vpack.c.b16 %v6579, %v6563
        %v7140 = vpack.c.b16 %v6580, %v6564
        %v7141 = vpack.c.b16 %v6581, %v6565
        %v7142 = vpack.c.b16 %v6582, %v6566
        %v7143 = vpack.c.b16 %v6583, %v6567
        %v7144 = vpack.c.b16 %v6584, %v6568
        %v7145 = vpack.c.b16 %v6585, %v6569
        %v7146 = vpack.c.b16 %v6586, %v6570
        %v7147 = vpack.c.b16 %v6603, %v6587
        %v7148 = vpack.c.b16 %v6604, %v6588
        %v7149 = vpack.c.b16 %v6605, %v6589
        %v7150 = vpack.c.b16 %v6606, %v6590
        %v7151 = vpack.c.b16 %v6607, %v6591
        %v7152 = vpack.c.b16 %v6608, %v6592
        %v7153 = vpack.c.b16 %v6609, %v6593
        %v7154 = vpack.c.b16 %v6610, %v6594
        %v7155 = vpack.c.b16 %v6611, %v6595
        %v7156 = vpack.c.b16 %v6612, %v6596
        %v7157 = vpack.c.b16 %v6613, %v6597
        %v7158 = vpack.c.b16 %v6614, %v6598
        %v7159 = vpack.c.b16 %v6615, %v6599
        %v7160 = vpack.c.b16 %v6616, %v6600
        %v7161 = vpack.c.b16 %v6617, %v6601
        %v7162 = vpack.c.b16 %v6618, %v6602
        %v7163 = vpack.c.b16 %v6635, %v6619
        %v7164 = vpack.c.b16 %v6636, %v6620
        %v7165 = vpack.c.b16 %v6637, %v6621
        %v7166 = vpack.c.b16 %v6638, %v6622
        %v7167 = vpack.c.b16 %v6639, %v6623
        %v7168 = vpack.c.b16 %v6640, %v6624
        %v7169 = vpack.c.b16 %v6641, %v6625
        %v7170 = vpack.c.b16 %v6642, %v6626
        %v7171 = vpack.c.b16 %v6643, %v6627
        %v7172 = vpack.c.b16 %v6644, %v6628
        %v7173 = vpack.c.b16 %v6645, %v6629
        %v7174 = vpack.c.b16 %v6646, %v6630
        %v7175 = vpack.c.b16 %v6647, %v6631
        %v7176 = vpack.c.b16 %v6648, %v6632
        %v7177 = vpack.c.b16 %v6649, %v6633
        %v7178 = vpack.c.b16 %v6650, %v6634
        %v7179 = vpack.c.b16 %v6667, %v6651
        %v7180 = vpack.c.b16 %v6668, %v6652
        %v7181 = vpack.c.b16 %v6669, %v6653
        %v7182 = vpack.c.b16 %v6670, %v6654
        %v7183 = vpack.c.b16 %v6671, %v6655
        %v7184 = vpack.c.b16 %v6672, %v6656
        %v7185 = vpack.c.b16 %v6673, %v6657
        %v7186 = vpack.c.b16 %v6674, %v6658
        %v7187 = vpack.c.b16 %v6675, %v6659
        %v7188 = vpack.c.b16 %v6676, %v6660
        %v7189 = vpack.c.b16 %v6677, %v6661
        %v7190 = vpack.c.b16 %v6678, %v6662
        %v7191 = vpack.c.b16 %v6679, %v6663
        %v7192 = vpack.c.b16 %v6680, %v6664
        %v7193 = vpack.c.b16 %v6681, %v6665
        %v7194 = vpack.c.b16 %v6682, %v6666
        %7707 = vmatprep.subr.bf16.mxu0 %v6684
        %7708 = vmatpush1.bf16.msra.mxu0 %v6683
        %7709 = vmatprep.subr.bf16.mxu0 %v6700
        %7710 = vmatpush1.bf16.msra.mxu0 %v6699
        %7711 = vmatprep.subr.bf16.mxu0 %v6716
        %7712 = vmatpush1.bf16.msra.mxu0 %v6715
        %7713 = vmatprep.subr.bf16.mxu0 %v6732
        %7714 = vmatpush1.bf16.msra.mxu0 %v6731
        %7715 = vmatprep.subr.bf16.mxu0 %v6748
        %7716 = vmatpush1.bf16.msra.mxu0 %v6747
        %7717 = vmatprep.subr.bf16.mxu0 %v6764
        %7718 = vmatpush1.bf16.msra.mxu0 %v6763
        %7719 = vmatprep.subr.bf16.mxu0 %v6780
        %7720 = vmatpush1.bf16.msra.mxu0 %v6779
        %7721 = vmatprep.subr.bf16.mxu0 %v6796
        %7722 = vmatpush1.bf16.msra.mxu0 %v6795
        %7723 = vmatprep.subr.bf16.mxu0 %v6812
        %7724 = vmatpush1.bf16.msra.mxu0 %v6811
        %7725 = vmatprep.subr.bf16.mxu0 %v6828
        %7726 = vmatpush1.bf16.msra.mxu0 %v6827
        %7727 = vmatprep.subr.bf16.mxu0 %v6844
        %7728 = vmatpush1.bf16.msra.mxu0 %v6843
        %7729 = vmatprep.subr.bf16.mxu0 %v6860
        %7730 = vmatpush1.bf16.msra.mxu0 %v6859
        %7731 = vmatprep.subr.bf16.mxu0 %v6876
        %7732 = vmatpush1.bf16.msra.mxu0 %v6875
        %7733 = vmatprep.subr.bf16.mxu0 %v6892
        %7734 = vmatpush1.bf16.msra.mxu0 %v6891
        %7735 = vmatprep.subr.bf16.mxu0 %v6908
        %7736 = vmatpush1.bf16.msra.mxu0 %v6907
        %7737 = vmatprep.subr.bf16.mxu0 %v6924
        %7738 = vmatpush1.bf16.msra.mxu0 %v6923
        %7739 = vmatprep.mubr.bf16.mxu0 %v4548
        %7740 = vmatmul.mubr.bf16.gmra.mrb[0].mxu0 %v4547
        %v7741 = vpop.f32.mrb[0].mxu0
        %v7742 = vadd.f32 %v5070, %v7741
        %v7743 = vpop.f32.mrb[0].mxu0
        %v7744 = vadd.f32 %v5074, %v7743
        %v7745 = vpop.f32.mrb[0].mxu0
        %v7746 = vpop.f32.mrb[0].mxu0
        %7747 = vdwg.mxu0
        %7748 = vmatprep.subr.bf16.mxu0 %v6940
        %7749 = vmatpush1.bf16.msra.mxu0 %v6939
        %7750 = vmatprep.subr.bf16.mxu0 %v6956
        %7751 = vmatpush1.bf16.msra.mxu0 %v6955
        %7752 = vmatprep.subr.bf16.mxu0 %v6972
        %7753 = vmatpush1.bf16.msra.mxu0 %v6971
        %7754 = vmatprep.subr.bf16.mxu0 %v6988
        %7755 = vmatpush1.bf16.msra.mxu0 %v6987
        %7756 = vmatprep.subr.bf16.mxu0 %v7004
        %7757 = vmatpush1.bf16.msra.mxu0 %v7003
        %7758 = vmatprep.subr.bf16.mxu0 %v7020
        %7759 = vmatpush1.bf16.msra.mxu0 %v7019
        %7760 = vmatprep.subr.bf16.mxu0 %v7036
        %7761 = vmatpush1.bf16.msra.mxu0 %v7035
        %7762 = vmatprep.subr.bf16.mxu0 %v7052
        %7763 = vmatpush1.bf16.msra.mxu0 %v7051
        %7764 = vmatprep.subr.bf16.mxu0 %v7068
        %7765 = vmatpush1.bf16.msra.mxu0 %v7067
        %7766 = vmatprep.subr.bf16.mxu0 %v7084
        %7767 = vmatpush1.bf16.msra.mxu0 %v7083
        %7768 = vmatprep.subr.bf16.mxu0 %v7100
        %7769 = vmatpush1.bf16.msra.mxu0 %v7099
        %7770 = vmatprep.subr.bf16.mxu0 %v7116
        %7771 = vmatpush1.bf16.msra.mxu0 %v7115
        %7772 = vmatprep.subr.bf16.mxu0 %v7132
        %7773 = vmatpush1.bf16.msra.mxu0 %v7131
        %7774 = vmatprep.subr.bf16.mxu0 %v7148
        %7775 = vmatpush1.bf16.msra.mxu0 %v7147
        %7776 = vmatprep.subr.bf16.mxu0 %v7164
        %7777 = vmatpush1.bf16.msra.mxu0 %v7163
        %7778 = vmatprep.subr.bf16.mxu0 %v7180
        %7779 = vmatpush1.bf16.msra.mxu0 %v7179
        %7780 = vmatprep.mubr.bf16.mxu0 %v4550
        %7781 = vmatmul.mubr.bf16.gmra.mrb[0].mxu0 %v4549
        %v7782 = vpop.f32.mrb[0].mxu0
        %v7783 = vadd.f32 %v7742, %v7782
        %v7784 = vpop.f32.mrb[0].mxu0
        %v7785 = vadd.f32 %v7744, %v7784
        %v7786 = vpop.f32.mrb[0].mxu0
        %v7787 = vpop.f32.mrb[0].mxu0
        %7788 = vdwg.mxu0
        %7789 = vmatprep.subr.bf16.mxu0 %v6686
        %7790 = vmatpush1.bf16.msra.mxu0 %v6685
        %7791 = vmatprep.subr.bf16.mxu0 %v6702
        %7792 = vmatpush1.bf16.msra.mxu0 %v6701
        %7793 = vmatprep.subr.bf16.mxu0 %v6718
        %7794 = vmatpush1.bf16.msra.mxu0 %v6717
        %7795 = vmatprep.subr.bf16.mxu0 %v6734
        %7796 = vmatpush1.bf16.msra.mxu0 %v6733
        %7797 = vmatprep.subr.bf16.mxu0 %v6750
        %7798 = vmatpush1.bf16.msra.mxu0 %v6749
        %7799 = vmatprep.subr.bf16.mxu0 %v6766
        %7800 = vmatpush1.bf16.msra.mxu0 %v6765
        %7801 = vmatprep.subr.bf16.mxu0 %v6782
        %7802 = vmatpush1.bf16.msra.mxu0 %v6781
        %7803 = vmatprep.subr.bf16.mxu0 %v6798
        %7804 = vmatpush1.bf16.msra.mxu0 %v6797
        %7805 = vmatprep.subr.bf16.mxu0 %v6814
        %7806 = vmatpush1.bf16.msra.mxu0 %v6813
        %7807 = vmatprep.subr.bf16.mxu0 %v6830
        %7808 = vmatpush1.bf16.msra.mxu0 %v6829
        %7809 = vmatprep.subr.bf16.mxu0 %v6846
        %7810 = vmatpush1.bf16.msra.mxu0 %v6845
        %7811 = vmatprep.subr.bf16.mxu0 %v6862
        %7812 = vmatpush1.bf16.msra.mxu0 %v6861
        %7813 = vmatprep.subr.bf16.mxu0 %v6878
        %7814 = vmatpush1.bf16.msra.mxu0 %v6877
        %7815 = vmatprep.subr.bf16.mxu0 %v6894
        %7816 = vmatpush1.bf16.msra.mxu0 %v6893
        %7817 = vmatprep.subr.bf16.mxu0 %v6910
        %7818 = vmatpush1.bf16.msra.mxu0 %v6909
        %7819 = vmatprep.subr.bf16.mxu0 %v6926
        %7820 = vmatpush1.bf16.msra.mxu0 %v6925
        %7821 = vmatprep.mubr.bf16.mxu0 %v4548
        %7822 = vmatmul.mubr.bf16.gmra.mrb[0].mxu0 %v4547
        %v7823 = vpop.f32.mrb[0].mxu0
        %v7824 = vadd.f32 %v5078, %v7823
        %v7825 = vpop.f32.mrb[0].mxu0
        %v7826 = vadd.f32 %v5082, %v7825
        %v7827 = vpop.f32.mrb[0].mxu0
        %v7828 = vpop.f32.mrb[0].mxu0
        %7829 = vdwg.mxu0
        %7830 = vmatprep.subr.bf16.mxu0 %v6942
        %7831 = vmatpush1.bf16.msra.mxu0 %v6941
        %7832 = vmatprep.subr.bf16.mxu0 %v6958
        %7833 = vmatpush1.bf16.msra.mxu0 %v6957
        %7834 = vmatprep.subr.bf16.mxu0 %v6974
        %7835 = vmatpush1.bf16.msra.mxu0 %v6973
        %7836 = vmatprep.subr.bf16.mxu0 %v6990
        %7837 = vmatpush1.bf16.msra.mxu0 %v6989
        %7838 = vmatprep.subr.bf16.mxu0 %v7006
        %7839 = vmatpush1.bf16.msra.mxu0 %v7005
        %7840 = vmatprep.subr.bf16.mxu0 %v7022
        %7841 = vmatpush1.bf16.msra.mxu0 %v7021
        %7842 = vmatprep.subr.bf16.mxu0 %v7038
        %7843 = vmatpush1.bf16.msra.mxu0 %v7037
        %7844 = vmatprep.subr.bf16.mxu0 %v7054
        %7845 = vmatpush1.bf16.msra.mxu0 %v7053
        %7846 = vmatprep.subr.bf16.mxu0 %v7070
        %7847 = vmatpush1.bf16.msra.mxu0 %v7069
        %7848 = vmatprep.subr.bf16.mxu0 %v7086
        %7849 = vmatpush1.bf16.msra.mxu0 %v7085
        %7850 = vmatprep.subr.bf16.mxu0 %v7102
        %7851 = vmatpush1.bf16.msra.mxu0 %v7101
        %7852 = vmatprep.subr.bf16.mxu0 %v7118
        %7853 = vmatpush1.bf16.msra.mxu0 %v7117
        %7854 = vmatprep.subr.bf16.mxu0 %v7134
        %7855 = vmatpush1.bf16.msra.mxu0 %v7133
        %7856 = vmatprep.subr.bf16.mxu0 %v7150
        %7857 = vmatpush1.bf16.msra.mxu0 %v7149
        %7858 = vmatprep.subr.bf16.mxu0 %v7166
        %7859 = vmatpush1.bf16.msra.mxu0 %v7165
        %7860 = vmatprep.subr.bf16.mxu0 %v7182
        %7861 = vmatpush1.bf16.msra.mxu0 %v7181
        %7862 = vmatprep.mubr.bf16.mxu0 %v4550
        %7863 = vmatmul.mubr.bf16.gmra.mrb[0].mxu0 %v4549
        %v7864 = vpop.f32.mrb[0].mxu0
        %v7865 = vadd.f32 %v7824, %v7864
        %v7866 = vpop.f32.mrb[0].mxu0
        %v7867 = vadd.f32 %v7826, %v7866
        %v7868 = vpop.f32.mrb[0].mxu0
        %v7869 = vpop.f32.mrb[0].mxu0
        %7870 = vdwg.mxu0
        %7871 = vmatprep.subr.bf16.mxu0 %v6688
        %7872 = vmatpush1.bf16.msra.mxu0 %v6687
        %7873 = vmatprep.subr.bf16.mxu0 %v6704
        %7874 = vmatpush1.bf16.msra.mxu0 %v6703
        %7875 = vmatprep.subr.bf16.mxu0 %v6720
        %7876 = vmatpush1.bf16.msra.mxu0 %v6719
        %7877 = vmatprep.subr.bf16.mxu0 %v6736
        %7878 = vmatpush1.bf16.msra.mxu0 %v6735
        %7879 = vmatprep.subr.bf16.mxu0 %v6752
        %7880 = vmatpush1.bf16.msra.mxu0 %v6751
        %7881 = vmatprep.subr.bf16.mxu0 %v6768
        %7882 = vmatpush1.bf16.msra.mxu0 %v6767
        %7883 = vmatprep.subr.bf16.mxu0 %v6784
        %7884 = vmatpush1.bf16.msra.mxu0 %v6783
        %7885 = vmatprep.subr.bf16.mxu0 %v6800
        %7886 = vmatpush1.bf16.msra.mxu0 %v6799
        %7887 = vmatprep.subr.bf16.mxu0 %v6816
        %7888 = vmatpush1.bf16.msra.mxu0 %v6815
        %7889 = vmatprep.subr.bf16.mxu0 %v6832
        %7890 = vmatpush1.bf16.msra.mxu0 %v6831
        %7891 = vmatprep.subr.bf16.mxu0 %v6848
        %7892 = vmatpush1.bf16.msra.mxu0 %v6847
        %7893 = vmatprep.subr.bf16.mxu0 %v6864
        %7894 = vmatpush1.bf16.msra.mxu0 %v6863
        %7895 = vmatprep.subr.bf16.mxu0 %v6880
        %7896 = vmatpush1.bf16.msra.mxu0 %v6879
        %7897 = vmatprep.subr.bf16.mxu0 %v6896
        %7898 = vmatpush1.bf16.msra.mxu0 %v6895
        %7899 = vmatprep.subr.bf16.mxu0 %v6912
        %7900 = vmatpush1.bf16.msra.mxu0 %v6911
        %7901 = vmatprep.subr.bf16.mxu0 %v6928
        %7902 = vmatpush1.bf16.msra.mxu0 %v6927
        %7903 = vmatprep.mubr.bf16.mxu0 %v4548
        %7904 = vmatmul.mubr.bf16.gmra.mrb[0].mxu0 %v4547
        %v7905 = vpop.f32.mrb[0].mxu0
        %v7906 = vadd.f32 %v5086, %v7905
        %v7907 = vpop.f32.mrb[0].mxu0
        %v7908 = vadd.f32 %v5090, %v7907
        %v7909 = vpop.f32.mrb[0].mxu0
        %v7910 = vpop.f32.mrb[0].mxu0
        %7911 = vdwg.mxu0
        %7912 = vmatprep.subr.bf16.mxu0 %v6944
        %7913 = vmatpush1.bf16.msra.mxu0 %v6943
        %7914 = vmatprep.subr.bf16.mxu0 %v6960
        %7915 = vmatpush1.bf16.msra.mxu0 %v6959
        %7916 = vmatprep.subr.bf16.mxu0 %v6976
        %7917 = vmatpush1.bf16.msra.mxu0 %v6975
        %7918 = vmatprep.subr.bf16.mxu0 %v6992
        %7919 = vmatpush1.bf16.msra.mxu0 %v6991
        %7920 = vmatprep.subr.bf16.mxu0 %v7008
        %7921 = vmatpush1.bf16.msra.mxu0 %v7007
        %7922 = vmatprep.subr.bf16.mxu0 %v7024
        %7923 = vmatpush1.bf16.msra.mxu0 %v7023
        %7924 = vmatprep.subr.bf16.mxu0 %v7040
        %7925 = vmatpush1.bf16.msra.mxu0 %v7039
        %7926 = vmatprep.subr.bf16.mxu0 %v7056
        %7927 = vmatpush1.bf16.msra.mxu0 %v7055
        %7928 = vmatprep.subr.bf16.mxu0 %v7072
        %7929 = vmatpush1.bf16.msra.mxu0 %v7071
        %7930 = vmatprep.subr.bf16.mxu0 %v7088
        %7931 = vmatpush1.bf16.msra.mxu0 %v7087
        %7932 = vmatprep.subr.bf16.mxu0 %v7104
        %7933 = vmatpush1.bf16.msra.mxu0 %v7103
        %7934 = vmatprep.subr.bf16.mxu0 %v7120
        %7935 = vmatpush1.bf16.msra.mxu0 %v7119
        %7936 = vmatprep.subr.bf16.mxu0 %v7136
        %7937 = vmatpush1.bf16.msra.mxu0 %v7135
        %7938 = vmatprep.subr.bf16.mxu0 %v7152
        %7939 = vmatpush1.bf16.msra.mxu0 %v7151
        %7940 = vmatprep.subr.bf16.mxu0 %v7168
        %7941 = vmatpush1.bf16.msra.mxu0 %v7167
        %7942 = vmatprep.subr.bf16.mxu0 %v7184
        %7943 = vmatpush1.bf16.msra.mxu0 %v7183
        %7944 = vmatprep.mubr.bf16.mxu0 %v4550
        %7945 = vmatmul.mubr.bf16.gmra.mrb[0].mxu0 %v4549
        %v7946 = vpop.f32.mrb[0].mxu0
        %v7947 = vadd.f32 %v7906, %v7946
        %v7948 = vpop.f32.mrb[0].mxu0
        %v7949 = vadd.f32 %v7908, %v7948
        %v7950 = vpop.f32.mrb[0].mxu0
        %v7951 = vpop.f32.mrb[0].mxu0
        %7952 = vdwg.mxu0
        %7953 = vmatprep.subr.bf16.mxu0 %v6690
        %7954 = vmatpush1.bf16.msra.mxu0 %v6689
        %7955 = vmatprep.subr.bf16.mxu0 %v6706
        %7956 = vmatpush1.bf16.msra.mxu0 %v6705
        %7957 = vmatprep.subr.bf16.mxu0 %v6722
        %7958 = vmatpush1.bf16.msra.mxu0 %v6721
        %7959 = vmatprep.subr.bf16.mxu0 %v6738
        %7960 = vmatpush1.bf16.msra.mxu0 %v6737
        %7961 = vmatprep.subr.bf16.mxu0 %v6754
        %7962 = vmatpush1.bf16.msra.mxu0 %v6753
        %7963 = vmatprep.subr.bf16.mxu0 %v6770
        %7964 = vmatpush1.bf16.msra.mxu0 %v6769
        %7965 = vmatprep.subr.bf16.mxu0 %v6786
        %7966 = vmatpush1.bf16.msra.mxu0 %v6785
        %7967 = vmatprep.subr.bf16.mxu0 %v6802
        %7968 = vmatpush1.bf16.msra.mxu0 %v6801
        %7969 = vmatprep.subr.bf16.mxu0 %v6818
        %7970 = vmatpush1.bf16.msra.mxu0 %v6817
        %7971 = vmatprep.subr.bf16.mxu0 %v6834
        %7972 = vmatpush1.bf16.msra.mxu0 %v6833
        %7973 = vmatprep.subr.bf16.mxu0 %v6850
        %7974 = vmatpush1.bf16.msra.mxu0 %v6849
        %7975 = vmatprep.subr.bf16.mxu0 %v6866
        %7976 = vmatpush1.bf16.msra.mxu0 %v6865
        %7977 = vmatprep.subr.bf16.mxu0 %v6882
        %7978 = vmatpush1.bf16.msra.mxu0 %v6881
        %7979 = vmatprep.subr.bf16.mxu0 %v6898
        %7980 = vmatpush1.bf16.msra.mxu0 %v6897
        %7981 = vmatprep.subr.bf16.mxu0 %v6914
        %7982 = vmatpush1.bf16.msra.mxu0 %v6913
        %7983 = vmatprep.subr.bf16.mxu0 %v6930
        %7984 = vmatpush1.bf16.msra.mxu0 %v6929
        %7985 = vmatprep.mubr.bf16.mxu0 %v4548
        %7986 = vmatmul.mubr.bf16.gmra.mrb[0].mxu0 %v4547
        %v7987 = vpop.f32.mrb[0].mxu0
        %v7988 = vadd.f32 %v5094, %v7987
        %v7989 = vpop.f32.mrb[0].mxu0
        %v7990 = vadd.f32 %v5098, %v7989
        %v7991 = vpop.f32.mrb[0].mxu0
        %v7992 = vpop.f32.mrb[0].mxu0
        %7993 = vdwg.mxu0
        %7994 = vmatprep.subr.bf16.mxu0 %v6946
        %7995 = vmatpush1.bf16.msra.mxu0 %v6945
        %7996 = vmatprep.subr.bf16.mxu0 %v6962
        %7997 = vmatpush1.bf16.msra.mxu0 %v6961
        %7998 = vmatprep.subr.bf16.mxu0 %v6978
        %7999 = vmatpush1.bf16.msra.mxu0 %v6977
        %8000 = vmatprep.subr.bf16.mxu0 %v6994
        %8001 = vmatpush1.bf16.msra.mxu0 %v6993
        %8002 = vmatprep.subr.bf16.mxu0 %v7010
        %8003 = vmatpush1.bf16.msra.mxu0 %v7009
        %8004 = vmatprep.subr.bf16.mxu0 %v7026
        %8005 = vmatpush1.bf16.msra.mxu0 %v7025
        %8006 = vmatprep.subr.bf16.mxu0 %v7042
        %8007 = vmatpush1.bf16.msra.mxu0 %v7041
        %8008 = vmatprep.subr.bf16.mxu0 %v7058
        %8009 = vmatpush1.bf16.msra.mxu0 %v7057
        %8010 = vmatprep.subr.bf16.mxu0 %v7074
        %8011 = vmatpush1.bf16.msra.mxu0 %v7073
        %8012 = vmatprep.subr.bf16.mxu0 %v7090
        %8013 = vmatpush1.bf16.msra.mxu0 %v7089
        %8014 = vmatprep.subr.bf16.mxu0 %v7106
        %8015 = vmatpush1.bf16.msra.mxu0 %v7105
        %8016 = vmatprep.subr.bf16.mxu0 %v7122
        %8017 = vmatpush1.bf16.msra.mxu0 %v7121
        %8018 = vmatprep.subr.bf16.mxu0 %v7138
        %8019 = vmatpush1.bf16.msra.mxu0 %v7137
        %8020 = vmatprep.subr.bf16.mxu0 %v7154
        %8021 = vmatpush1.bf16.msra.mxu0 %v7153
        %8022 = vmatprep.subr.bf16.mxu0 %v7170
        %8023 = vmatpush1.bf16.msra.mxu0 %v7169
        %8024 = vmatprep.subr.bf16.mxu0 %v7186
        %8025 = vmatpush1.bf16.msra.mxu0 %v7185
        %8026 = vmatprep.mubr.bf16.mxu0 %v4550
        %8027 = vmatmul.mubr.bf16.gmra.mrb[0].mxu0 %v4549
        %v8028 = vpop.f32.mrb[0].mxu0
        %v8029 = vadd.f32 %v7988, %v8028
        %v8030 = vpop.f32.mrb[0].mxu0
        %v8031 = vadd.f32 %v7990, %v8030
        %v8032 = vpop.f32.mrb[0].mxu0
        %v8033 = vpop.f32.mrb[0].mxu0
        %8034 = vdwg.mxu0
        %8035 = vmatprep.subr.bf16.mxu0 %v6692
        %8036 = vmatpush1.bf16.msra.mxu0 %v6691
        %8037 = vmatprep.subr.bf16.mxu0 %v6708
        %8038 = vmatpush1.bf16.msra.mxu0 %v6707
        %8039 = vmatprep.subr.bf16.mxu0 %v6724
        %8040 = vmatpush1.bf16.msra.mxu0 %v6723
        %8041 = vmatprep.subr.bf16.mxu0 %v6740
        %8042 = vmatpush1.bf16.msra.mxu0 %v6739
        %8043 = vmatprep.subr.bf16.mxu0 %v6756
        %8044 = vmatpush1.bf16.msra.mxu0 %v6755
        %8045 = vmatprep.subr.bf16.mxu0 %v6772
        %8046 = vmatpush1.bf16.msra.mxu0 %v6771
        %8047 = vmatprep.subr.bf16.mxu0 %v6788
        %8048 = vmatpush1.bf16.msra.mxu0 %v6787
        %8049 = vmatprep.subr.bf16.mxu0 %v6804
        %8050 = vmatpush1.bf16.msra.mxu0 %v6803
        %8051 = vmatprep.subr.bf16.mxu0 %v6820
        %8052 = vmatpush1.bf16.msra.mxu0 %v6819
        %8053 = vmatprep.subr.bf16.mxu0 %v6836
        %8054 = vmatpush1.bf16.msra.mxu0 %v6835
        %8055 = vmatprep.subr.bf16.mxu0 %v6852
        %8056 = vmatpush1.bf16.msra.mxu0 %v6851
        %8057 = vmatprep.subr.bf16.mxu0 %v6868
        %8058 = vmatpush1.bf16.msra.mxu0 %v6867
        %8059 = vmatprep.subr.bf16.mxu0 %v6884
        %8060 = vmatpush1.bf16.msra.mxu0 %v6883
        %8061 = vmatprep.subr.bf16.mxu0 %v6900
        %8062 = vmatpush1.bf16.msra.mxu0 %v6899
        %8063 = vmatprep.subr.bf16.mxu0 %v6916
        %8064 = vmatpush1.bf16.msra.mxu0 %v6915
        %8065 = vmatprep.subr.bf16.mxu0 %v6932
        %8066 = vmatpush1.bf16.msra.mxu0 %v6931
        %8067 = vmatprep.mubr.bf16.mxu0 %v4548
        %8068 = vmatmul.mubr.bf16.gmra.mrb[0].mxu0 %v4547
        %v8069 = vpop.f32.mrb[0].mxu0
        %v8070 = vadd.f32 %v5102, %v8069
        %v8071 = vpop.f32.mrb[0].mxu0
        %v8072 = vadd.f32 %v5106, %v8071
        %v8073 = vpop.f32.mrb[0].mxu0
        %v8074 = vpop.f32.mrb[0].mxu0
        %8075 = vdwg.mxu0
        %8076 = vmatprep.subr.bf16.mxu0 %v6948
        %8077 = vmatpush1.bf16.msra.mxu0 %v6947
        %8078 = vmatprep.subr.bf16.mxu0 %v6964
        %8079 = vmatpush1.bf16.msra.mxu0 %v6963
        %8080 = vmatprep.subr.bf16.mxu0 %v6980
        %8081 = vmatpush1.bf16.msra.mxu0 %v6979
        %8082 = vmatprep.subr.bf16.mxu0 %v6996
        %8083 = vmatpush1.bf16.msra.mxu0 %v6995
        %8084 = vmatprep.subr.bf16.mxu0 %v7012
        %8085 = vmatpush1.bf16.msra.mxu0 %v7011
        %8086 = vmatprep.subr.bf16.mxu0 %v7028
        %8087 = vmatpush1.bf16.msra.mxu0 %v7027
        %8088 = vmatprep.subr.bf16.mxu0 %v7044
        %8089 = vmatpush1.bf16.msra.mxu0 %v7043
        %8090 = vmatprep.subr.bf16.mxu0 %v7060
        %8091 = vmatpush1.bf16.msra.mxu0 %v7059
        %8092 = vmatprep.subr.bf16.mxu0 %v7076
        %8093 = vmatpush1.bf16.msra.mxu0 %v7075
        %8094 = vmatprep.subr.bf16.mxu0 %v7092
        %8095 = vmatpush1.bf16.msra.mxu0 %v7091
        %8096 = vmatprep.subr.bf16.mxu0 %v7108
        %8097 = vmatpush1.bf16.msra.mxu0 %v7107
        %8098 = vmatprep.subr.bf16.mxu0 %v7124
        %8099 = vmatpush1.bf16.msra.mxu0 %v7123
        %8100 = vmatprep.subr.bf16.mxu0 %v7140
        %8101 = vmatpush1.bf16.msra.mxu0 %v7139
        %8102 = vmatprep.subr.bf16.mxu0 %v7156
        %8103 = vmatpush1.bf16.msra.mxu0 %v7155
        %8104 = vmatprep.subr.bf16.mxu0 %v7172
        %8105 = vmatpush1.bf16.msra.mxu0 %v7171
        %8106 = vmatprep.subr.bf16.mxu0 %v7188
        %8107 = vmatpush1.bf16.msra.mxu0 %v7187
        %8108 = vmatprep.mubr.bf16.mxu0 %v4550
        %8109 = vmatmul.mubr.bf16.gmra.mrb[0].mxu0 %v4549
        %v8110 = vpop.f32.mrb[0].mxu0
        %v8111 = vadd.f32 %v8070, %v8110
        %v8112 = vpop.f32.mrb[0].mxu0
        %v8113 = vadd.f32 %v8072, %v8112
        %v8114 = vpop.f32.mrb[0].mxu0
        %v8115 = vpop.f32.mrb[0].mxu0
        %8116 = vdwg.mxu0
        %8117 = vmatprep.subr.bf16.mxu0 %v6694
        %8118 = vmatpush1.bf16.msra.mxu0 %v6693
        %8119 = vmatprep.subr.bf16.mxu0 %v6710
        %8120 = vmatpush1.bf16.msra.mxu0 %v6709
        %8121 = vmatprep.subr.bf16.mxu0 %v6726
        %8122 = vmatpush1.bf16.msra.mxu0 %v6725
        %8123 = vmatprep.subr.bf16.mxu0 %v6742
        %8124 = vmatpush1.bf16.msra.mxu0 %v6741
        %8125 = vmatprep.subr.bf16.mxu0 %v6758
        %8126 = vmatpush1.bf16.msra.mxu0 %v6757
        %8127 = vmatprep.subr.bf16.mxu0 %v6774
        %8128 = vmatpush1.bf16.msra.mxu0 %v6773
        %8129 = vmatprep.subr.bf16.mxu0 %v6790
        %8130 = vmatpush1.bf16.msra.mxu0 %v6789
        %8131 = vmatprep.subr.bf16.mxu0 %v6806
        %8132 = vmatpush1.bf16.msra.mxu0 %v6805
        %8133 = vmatprep.subr.bf16.mxu0 %v6822
        %8134 = vmatpush1.bf16.msra.mxu0 %v6821
        %8135 = vmatprep.subr.bf16.mxu0 %v6838
        %8136 = vmatpush1.bf16.msra.mxu0 %v6837
        %8137 = vmatprep.subr.bf16.mxu0 %v6854
        %8138 = vmatpush1.bf16.msra.mxu0 %v6853
        %8139 = vmatprep.subr.bf16.mxu0 %v6870
        %8140 = vmatpush1.bf16.msra.mxu0 %v6869
        %8141 = vmatprep.subr.bf16.mxu0 %v6886
        %8142 = vmatpush1.bf16.msra.mxu0 %v6885
        %8143 = vmatprep.subr.bf16.mxu0 %v6902
        %8144 = vmatpush1.bf16.msra.mxu0 %v6901
        %8145 = vmatprep.subr.bf16.mxu0 %v6918
        %8146 = vmatpush1.bf16.msra.mxu0 %v6917
        %8147 = vmatprep.subr.bf16.mxu0 %v6934
        %8148 = vmatpush1.bf16.msra.mxu0 %v6933
        %8149 = vmatprep.mubr.bf16.mxu0 %v4548
        %8150 = vmatmul.mubr.bf16.gmra.mrb[0].mxu0 %v4547
        %v8151 = vpop.f32.mrb[0].mxu0
        %v8152 = vadd.f32 %v5110, %v8151
        %v8153 = vpop.f32.mrb[0].mxu0
        %v8154 = vadd.f32 %v5114, %v8153
        %v8155 = vpop.f32.mrb[0].mxu0
        %v8156 = vpop.f32.mrb[0].mxu0
        %8157 = vdwg.mxu0
        %8158 = vmatprep.subr.bf16.mxu0 %v6950
        %8159 = vmatpush1.bf16.msra.mxu0 %v6949
        %8160 = vmatprep.subr.bf16.mxu0 %v6966
        %8161 = vmatpush1.bf16.msra.mxu0 %v6965
        %8162 = vmatprep.subr.bf16.mxu0 %v6982
        %8163 = vmatpush1.bf16.msra.mxu0 %v6981
        %8164 = vmatprep.subr.bf16.mxu0 %v6998
        %8165 = vmatpush1.bf16.msra.mxu0 %v6997
        %8166 = vmatprep.subr.bf16.mxu0 %v7014
        %8167 = vmatpush1.bf16.msra.mxu0 %v7013
        %8168 = vmatprep.subr.bf16.mxu0 %v7030
        %8169 = vmatpush1.bf16.msra.mxu0 %v7029
        %8170 = vmatprep.subr.bf16.mxu0 %v7046
        %8171 = vmatpush1.bf16.msra.mxu0 %v7045
        %8172 = vmatprep.subr.bf16.mxu0 %v7062
        %8173 = vmatpush1.bf16.msra.mxu0 %v7061
        %8174 = vmatprep.subr.bf16.mxu0 %v7078
        %8175 = vmatpush1.bf16.msra.mxu0 %v7077
        %8176 = vmatprep.subr.bf16.mxu0 %v7094
        %8177 = vmatpush1.bf16.msra.mxu0 %v7093
        %8178 = vmatprep.subr.bf16.mxu0 %v7110
        %8179 = vmatpush1.bf16.msra.mxu0 %v7109
        %8180 = vmatprep.subr.bf16.mxu0 %v7126
        %8181 = vmatpush1.bf16.msra.mxu0 %v7125
        %8182 = vmatprep.subr.bf16.mxu0 %v7142
        %8183 = vmatpush1.bf16.msra.mxu0 %v7141
        %8184 = vmatprep.subr.bf16.mxu0 %v7158
        %8185 = vmatpush1.bf16.msra.mxu0 %v7157
        %8186 = vmatprep.subr.bf16.mxu0 %v7174
        %8187 = vmatpush1.bf16.msra.mxu0 %v7173
        %8188 = vmatprep.subr.bf16.mxu0 %v7190
        %8189 = vmatpush1.bf16.msra.mxu0 %v7189
        %8190 = vmatprep.mubr.bf16.mxu0 %v4550
        %8191 = vmatmul.mubr.bf16.gmra.mrb[0].mxu0 %v4549
        %v8192 = vpop.f32.mrb[0].mxu0
        %v8193 = vadd.f32 %v8152, %v8192
        %v8194 = vpop.f32.mrb[0].mxu0
        %v8195 = vadd.f32 %v8154, %v8194
        %v8196 = vpop.f32.mrb[0].mxu0
        %v8197 = vpop.f32.mrb[0].mxu0
        %8198 = vdwg.mxu0
        %8199 = vmatprep.subr.bf16.mxu0 %v6696
        %8200 = vmatpush1.bf16.msra.mxu0 %v6695
        %8201 = vmatprep.subr.bf16.mxu0 %v6712
        %8202 = vmatpush1.bf16.msra.mxu0 %v6711
        %8203 = vmatprep.subr.bf16.mxu0 %v6728
        %8204 = vmatpush1.bf16.msra.mxu0 %v6727
        %8205 = vmatprep.subr.bf16.mxu0 %v6744
        %8206 = vmatpush1.bf16.msra.mxu0 %v6743
        %8207 = vmatprep.subr.bf16.mxu0 %v6760
        %8208 = vmatpush1.bf16.msra.mxu0 %v6759
        %8209 = vmatprep.subr.bf16.mxu0 %v6776
        %8210 = vmatpush1.bf16.msra.mxu0 %v6775
        %8211 = vmatprep.subr.bf16.mxu0 %v6792
        %8212 = vmatpush1.bf16.msra.mxu0 %v6791
        %8213 = vmatprep.subr.bf16.mxu0 %v6808
        %8214 = vmatpush1.bf16.msra.mxu0 %v6807
        %8215 = vmatprep.subr.bf16.mxu0 %v6824
        %8216 = vmatpush1.bf16.msra.mxu0 %v6823
        %8217 = vmatprep.subr.bf16.mxu0 %v6840
        %8218 = vmatpush1.bf16.msra.mxu0 %v6839
        %8219 = vmatprep.subr.bf16.mxu0 %v6856
        %8220 = vmatpush1.bf16.msra.mxu0 %v6855
        %8221 = vmatprep.subr.bf16.mxu0 %v6872
        %8222 = vmatpush1.bf16.msra.mxu0 %v6871
        %8223 = vmatprep.subr.bf16.mxu0 %v6888
        %8224 = vmatpush1.bf16.msra.mxu0 %v6887
        %8225 = vmatprep.subr.bf16.mxu0 %v6904
        %8226 = vmatpush1.bf16.msra.mxu0 %v6903
        %8227 = vmatprep.subr.bf16.mxu0 %v6920
        %8228 = vmatpush1.bf16.msra.mxu0 %v6919
        %8229 = vmatprep.subr.bf16.mxu0 %v6936
        %8230 = vmatpush1.bf16.msra.mxu0 %v6935
        %8231 = vmatprep.mubr.bf16.mxu0 %v4548
        %8232 = vmatmul.mubr.bf16.gmra.mrb[0].mxu0 %v4547
        %v8233 = vpop.f32.mrb[0].mxu0
        %v8234 = vadd.f32 %v5118, %v8233
        %v8235 = vpop.f32.mrb[0].mxu0
        %v8236 = vadd.f32 %v5122, %v8235
        %v8237 = vpop.f32.mrb[0].mxu0
        %v8238 = vpop.f32.mrb[0].mxu0
        %8239 = vdwg.mxu0
        %8240 = vmatprep.subr.bf16.mxu0 %v6952
        %8241 = vmatpush1.bf16.msra.mxu0 %v6951
        %8242 = vmatprep.subr.bf16.mxu0 %v6968
        %8243 = vmatpush1.bf16.msra.mxu0 %v6967
        %8244 = vmatprep.subr.bf16.mxu0 %v6984
        %8245 = vmatpush1.bf16.msra.mxu0 %v6983
        %8246 = vmatprep.subr.bf16.mxu0 %v7000
        %8247 = vmatpush1.bf16.msra.mxu0 %v6999
        %8248 = vmatprep.subr.bf16.mxu0 %v7016
        %8249 = vmatpush1.bf16.msra.mxu0 %v7015
        %8250 = vmatprep.subr.bf16.mxu0 %v7032
        %8251 = vmatpush1.bf16.msra.mxu0 %v7031
        %8252 = vmatprep.subr.bf16.mxu0 %v7048
        %8253 = vmatpush1.bf16.msra.mxu0 %v7047
        %8254 = vmatprep.subr.bf16.mxu0 %v7064
        %8255 = vmatpush1.bf16.msra.mxu0 %v7063
        %8256 = vmatprep.subr.bf16.mxu0 %v7080
        %8257 = vmatpush1.bf16.msra.mxu0 %v7079
        %8258 = vmatprep.subr.bf16.mxu0 %v7096
        %8259 = vmatpush1.bf16.msra.mxu0 %v7095
        %8260 = vmatprep.subr.bf16.mxu0 %v7112
        %8261 = vmatpush1.bf16.msra.mxu0 %v7111
        %8262 = vmatprep.subr.bf16.mxu0 %v7128
        %8263 = vmatpush1.bf16.msra.mxu0 %v7127
        %8264 = vmatprep.subr.bf16.mxu0 %v7144
        %8265 = vmatpush1.bf16.msra.mxu0 %v7143
        %8266 = vmatprep.subr.bf16.mxu0 %v7160
        %8267 = vmatpush1.bf16.msra.mxu0 %v7159
        %8268 = vmatprep.subr.bf16.mxu0 %v7176
        %8269 = vmatpush1.bf16.msra.mxu0 %v7175
        %8270 = vmatprep.subr.bf16.mxu0 %v7192
        %8271 = vmatpush1.bf16.msra.mxu0 %v7191
        %8272 = vmatprep.mubr.bf16.mxu0 %v4550
        %8273 = vmatmul.mubr.bf16.gmra.mrb[0].mxu0 %v4549
        %v8274 = vpop.f32.mrb[0].mxu0
        %v8275 = vadd.f32 %v8234, %v8274
        %v8276 = vpop.f32.mrb[0].mxu0
        %v8277 = vadd.f32 %v8236, %v8276
        %v8278 = vpop.f32.mrb[0].mxu0
        %v8279 = vpop.f32.mrb[0].mxu0
        %8280 = vdwg.mxu0
        %8281 = vmatprep.subr.bf16.mxu0 %v6698
        %8282 = vmatpush1.bf16.msra.mxu0 %v6697
        %8283 = vmatprep.subr.bf16.mxu0 %v6714
        %8284 = vmatpush1.bf16.msra.mxu0 %v6713
        %8285 = vmatprep.subr.bf16.mxu0 %v6730
        %8286 = vmatpush1.bf16.msra.mxu0 %v6729
        %8287 = vmatprep.subr.bf16.mxu0 %v6746
        %8288 = vmatpush1.bf16.msra.mxu0 %v6745
        %8289 = vmatprep.subr.bf16.mxu0 %v6762
        %8290 = vmatpush1.bf16.msra.mxu0 %v6761
        %8291 = vmatprep.subr.bf16.mxu0 %v6778
        %8292 = vmatpush1.bf16.msra.mxu0 %v6777
        %8293 = vmatprep.subr.bf16.mxu0 %v6794
        %8294 = vmatpush1.bf16.msra.mxu0 %v6793
        %8295 = vmatprep.subr.bf16.mxu0 %v6810
        %8296 = vmatpush1.bf16.msra.mxu0 %v6809
        %8297 = vmatprep.subr.bf16.mxu0 %v6826
        %8298 = vmatpush1.bf16.msra.mxu0 %v6825
        %8299 = vmatprep.subr.bf16.mxu0 %v6842
        %8300 = vmatpush1.bf16.msra.mxu0 %v6841
        %8301 = vmatprep.subr.bf16.mxu0 %v6858
        %8302 = vmatpush1.bf16.msra.mxu0 %v6857
        %8303 = vmatprep.subr.bf16.mxu0 %v6874
        %8304 = vmatpush1.bf16.msra.mxu0 %v6873
        %8305 = vmatprep.subr.bf16.mxu0 %v6890
        %8306 = vmatpush1.bf16.msra.mxu0 %v6889
        %8307 = vmatprep.subr.bf16.mxu0 %v6906
        %8308 = vmatpush1.bf16.msra.mxu0 %v6905
        %8309 = vmatprep.subr.bf16.mxu0 %v6922
        %8310 = vmatpush1.bf16.msra.mxu0 %v6921
        %8311 = vmatprep.subr.bf16.mxu0 %v6938
        %8312 = vmatpush1.bf16.msra.mxu0 %v6937
        %8313 = vmatprep.mubr.bf16.mxu0 %v4548
        %8314 = vmatmul.mubr.bf16.gmra.mrb[0].mxu0 %v4547
        %v8315 = vpop.f32.mrb[0].mxu0
        %v8316 = vadd.f32 %v5126, %v8315
        %v8317 = vpop.f32.mrb[0].mxu0
        %v8318 = vadd.f32 %v5130, %v8317
        %v8319 = vpop.f32.mrb[0].mxu0
        %v8320 = vpop.f32.mrb[0].mxu0
        %8321 = vdwg.mxu0
        %8322 = vmatprep.subr.bf16.mxu0 %v6954
        %8323 = vmatpush1.bf16.msra.mxu0 %v6953
        %8324 = vmatprep.subr.bf16.mxu0 %v6970
        %8325 = vmatpush1.bf16.msra.mxu0 %v6969
        %8326 = vmatprep.subr.bf16.mxu0 %v6986
        %8327 = vmatpush1.bf16.msra.mxu0 %v6985
        %8328 = vmatprep.subr.bf16.mxu0 %v7002
        %8329 = vmatpush1.bf16.msra.mxu0 %v7001
        %8330 = vmatprep.subr.bf16.mxu0 %v7018
        %8331 = vmatpush1.bf16.msra.mxu0 %v7017
        %8332 = vmatprep.subr.bf16.mxu0 %v7034
        %8333 = vmatpush1.bf16.msra.mxu0 %v7033
        %8334 = vmatprep.subr.bf16.mxu0 %v7050
        %8335 = vmatpush1.bf16.msra.mxu0 %v7049
        %8336 = vmatprep.subr.bf16.mxu0 %v7066
        %8337 = vmatpush1.bf16.msra.mxu0 %v7065
        %8338 = vmatprep.subr.bf16.mxu0 %v7082
        %8339 = vmatpush1.bf16.msra.mxu0 %v7081
        %8340 = vmatprep.subr.bf16.mxu0 %v7098
        %8341 = vmatpush1.bf16.msra.mxu0 %v7097
        %8342 = vmatprep.subr.bf16.mxu0 %v7114
        %8343 = vmatpush1.bf16.msra.mxu0 %v7113
        %8344 = vmatprep.subr.bf16.mxu0 %v7130
        %8345 = vmatpush1.bf16.msra.mxu0 %v7129
        %8346 = vmatprep.subr.bf16.mxu0 %v7146
        %8347 = vmatpush1.bf16.msra.mxu0 %v7145
        %8348 = vmatprep.subr.bf16.mxu0 %v7162
        %8349 = vmatpush1.bf16.msra.mxu0 %v7161
        %8350 = vmatprep.subr.bf16.mxu0 %v7178
        %8351 = vmatpush1.bf16.msra.mxu0 %v7177
        %8352 = vmatprep.subr.bf16.mxu0 %v7194
        %8353 = vmatpush1.bf16.msra.mxu0 %v7193
        %8354 = vmatprep.mubr.bf16.mxu0 %v4550
        %8355 = vmatmul.mubr.bf16.gmra.mrb[0].mxu0 %v4549
        %v8356 = vpop.f32.mrb[0].mxu0
        %v8357 = vadd.f32 %v8316, %v8356
        %v8358 = vpop.f32.mrb[0].mxu0
        %v8359 = vadd.f32 %v8318, %v8358
        %v8360 = vpop.f32.mrb[0].mxu0
        %v8361 = vpop.f32.mrb[0].mxu0
        %8362 = vdwg.mxu0
        %v8363 = vmax.f32 %v7783, 0.0
        %v8364 = vmax.f32 %v7785, 0.0
        %v8365 = vmax.f32 %v7865, 0.0
        %v8366 = vmax.f32 %v7867, 0.0
        %v8367 = vmax.f32 %v7947, 0.0
        %v8368 = vmax.f32 %v7949, 0.0
        %v8369 = vmax.f32 %v8029, 0.0
        %v8370 = vmax.f32 %v8031, 0.0
        %v8371 = vmax.f32 %v8111, 0.0
        %v8372 = vmax.f32 %v8113, 0.0
        %v8373 = vmax.f32 %v8193, 0.0
        %v8374 = vmax.f32 %v8195, 0.0
        %v8375 = vmax.f32 %v8275, 0.0
        %v8376 = vmax.f32 %v8277, 0.0
        %v8377 = vmax.f32 %v8357, 0.0
        %v8378 = vmax.f32 %v8359, 0.0
        %v8379 = vpack.c.bf16 %v8363, %v8363
        %v8380 = vpack.c.bf16 %v8364, %v8364
        %v8381 = vpack.c.bf16 %v8365, %v8365
        %v8382 = vpack.c.bf16 %v8366, %v8366
        %v8383 = vpack.c.bf16 %v8367, %v8367
        %v8384 = vpack.c.bf16 %v8368, %v8368
        %v8385 = vpack.c.bf16 %v8369, %v8369
        %v8386 = vpack.c.bf16 %v8370, %v8370
        %v8387 = vpack.c.bf16 %v8371, %v8371
        %v8388 = vpack.c.bf16 %v8372, %v8372
        %v8389 = vpack.c.bf16 %v8373, %v8373
        %v8390 = vpack.c.bf16 %v8374, %v8374
        %v8391 = vpack.c.bf16 %v8375, %v8375
        %v8392 = vpack.c.bf16 %v8376, %v8376
        %v8393 = vpack.c.bf16 %v8377, %v8377
        %v8394 = vpack.c.bf16 %v8378, %v8378
        %v8395 = vld [vmem:[#allocation20] sm:$0xff]
        %v8396 = vld [vmem:[#allocation20 + $0x8] sm:$0xff]
        %v8397 = vld [vmem:[#allocation20 + $0x10] sm:$0xff]
        %v8398 = vld [vmem:[#allocation20 + $0x18] sm:$0xff]
        %v8399 = vld [vmem:[#allocation20 + $0x20] sm:$0xff]
        %v8400 = vld [vmem:[#allocation20 + $0x28] sm:$0xff]
        %v8401 = vld [vmem:[#allocation20 + $0x30] sm:$0xff]
        %v8402 = vld [vmem:[#allocation20 + $0x38] sm:$0xff]
        %v8403 = vld [vmem:[#allocation20 + $0x40] sm:$0xff]
        %v8404 = vld [vmem:[#allocation20 + $0x48] sm:$0xff]
        %v8405 = vld [vmem:[#allocation20 + $0x50] sm:$0xff]
        %v8406 = vld [vmem:[#allocation20 + $0x58] sm:$0xff]
        %v8407 = vld [vmem:[#allocation20 + $0x60] sm:$0xff]
        %v8408 = vld [vmem:[#allocation20 + $0x68] sm:$0xff]
        %v8409 = vld [vmem:[#allocation20 + $0x70] sm:$0xff]
        %v8410 = vld [vmem:[#allocation20 + $0x78] sm:$0xff]
        %v8411 = vld [vmem:[#allocation20 + $0x80] sm:$0xff]
        %v8412 = vld [vmem:[#allocation20 + $0x88] sm:$0xff]
        %v8413 = vld [vmem:[#allocation20 + $0x90] sm:$0xff]
        %v8414 = vld [vmem:[#allocation20 + $0x98] sm:$0xff]
        %v8415 = vld [vmem:[#allocation20 + $0xa0] sm:$0xff]
        %v8416 = vld [vmem:[#allocation20 + $0xa8] sm:$0xff]
        %v8417 = vld [vmem:[#allocation20 + $0xb0] sm:$0xff]
        %v8418 = vld [vmem:[#allocation20 + $0xb8] sm:$0xff]
        %v8419 = vld [vmem:[#allocation20 + $0xc0] sm:$0xff]
        %v8420 = vld [vmem:[#allocation20 + $0xc8] sm:$0xff]
        %v8421 = vld [vmem:[#allocation20 + $0xd0] sm:$0xff]
        %v8422 = vld [vmem:[#allocation20 + $0xd8] sm:$0xff]
        %v8423 = vld [vmem:[#allocation20 + $0xe0] sm:$0xff]
        %v8424 = vld [vmem:[#allocation20 + $0xe8] sm:$0xff]
        %v8425 = vld [vmem:[#allocation20 + $0xf0] sm:$0xff]
        %v8426 = vld [vmem:[#allocation20 + $0xf8] sm:$0xff]
        %v8427 = vld [vmem:[#allocation20 + $0x100] sm:$0xff]
        %v8428 = vld [vmem:[#allocation20 + $0x108] sm:$0xff]
        %v8429 = vld [vmem:[#allocation20 + $0x110] sm:$0xff]
        %v8430 = vld [vmem:[#allocation20 + $0x118] sm:$0xff]
        %v8431 = vld [vmem:[#allocation20 + $0x120] sm:$0xff]
        %v8432 = vld [vmem:[#allocation20 + $0x128] sm:$0xff]
        %v8433 = vld [vmem:[#allocation20 + $0x130] sm:$0xff]
        %v8434 = vld [vmem:[#allocation20 + $0x138] sm:$0xff]
        %v8435 = vld [vmem:[#allocation20 + $0x140] sm:$0xff]
        %v8436 = vld [vmem:[#allocation20 + $0x148] sm:$0xff]
        %v8437 = vld [vmem:[#allocation20 + $0x150] sm:$0xff]
        %v8438 = vld [vmem:[#allocation20 + $0x158] sm:$0xff]
        %v8439 = vld [vmem:[#allocation20 + $0x160] sm:$0xff]
        %v8440 = vld [vmem:[#allocation20 + $0x168] sm:$0xff]
        %v8441 = vld [vmem:[#allocation20 + $0x170] sm:$0xff]
        %v8442 = vld [vmem:[#allocation20 + $0x178] sm:$0xff]
        %v8443 = vld [vmem:[#allocation20 + $0x180] sm:$0xff]
        %v8444 = vld [vmem:[#allocation20 + $0x188] sm:$0xff]
        %v8445 = vld [vmem:[#allocation20 + $0x190] sm:$0xff]
        %v8446 = vld [vmem:[#allocation20 + $0x198] sm:$0xff]
        %v8447 = vld [vmem:[#allocation20 + $0x1a0] sm:$0xff]
        %v8448 = vld [vmem:[#allocation20 + $0x1a8] sm:$0xff]
        %v8449 = vld [vmem:[#allocation20 + $0x1b0] sm:$0xff]
        %v8450 = vld [vmem:[#allocation20 + $0x1b8] sm:$0xff]
        %v8451 = vld [vmem:[#allocation20 + $0x1c0] sm:$0xff]
        %v8452 = vld [vmem:[#allocation20 + $0x1c8] sm:$0xff]
        %v8453 = vld [vmem:[#allocation20 + $0x1d0] sm:$0xff]
        %v8454 = vld [vmem:[#allocation20 + $0x1d8] sm:$0xff]
        %v8455 = vld [vmem:[#allocation20 + $0x1e0] sm:$0xff]
        %v8456 = vld [vmem:[#allocation20 + $0x1e8] sm:$0xff]
        %v8457 = vld [vmem:[#allocation20 + $0x1f0] sm:$0xff]
        %v8458 = vld [vmem:[#allocation20 + $0x1f8] sm:$0xff]
        %v8459 = vld [vmem:[#allocation20 + $0x200] sm:$0xff]
        %v8460 = vld [vmem:[#allocation20 + $0x208] sm:$0xff]
        %v8461 = vld [vmem:[#allocation20 + $0x210] sm:$0xff]
        %v8462 = vld [vmem:[#allocation20 + $0x218] sm:$0xff]
        %v8463 = vld [vmem:[#allocation20 + $0x220] sm:$0xff]
        %v8464 = vld [vmem:[#allocation20 + $0x228] sm:$0xff]
        %v8465 = vld [vmem:[#allocation20 + $0x230] sm:$0xff]
        %v8466 = vld [vmem:[#allocation20 + $0x238] sm:$0xff]
        %v8467 = vld [vmem:[#allocation20 + $0x240] sm:$0xff]
        %v8468 = vld [vmem:[#allocation20 + $0x248] sm:$0xff]
        %v8469 = vld [vmem:[#allocation20 + $0x250] sm:$0xff]
        %v8470 = vld [vmem:[#allocation20 + $0x258] sm:$0xff]
        %v8471 = vld [vmem:[#allocation20 + $0x260] sm:$0xff]
        %v8472 = vld [vmem:[#allocation20 + $0x268] sm:$0xff]
        %v8473 = vld [vmem:[#allocation20 + $0x270] sm:$0xff]
        %v8474 = vld [vmem:[#allocation20 + $0x278] sm:$0xff]
        %v8475 = vld [vmem:[#allocation20 + $0x280] sm:$0xff]
        %v8476 = vld [vmem:[#allocation20 + $0x288] sm:$0xff]
        %v8477 = vld [vmem:[#allocation20 + $0x290] sm:$0xff]
        %v8478 = vld [vmem:[#allocation20 + $0x298] sm:$0xff]
        %v8479 = vld [vmem:[#allocation20 + $0x2a0] sm:$0xff]
        %v8480 = vld [vmem:[#allocation20 + $0x2a8] sm:$0xff]
        %v8481 = vld [vmem:[#allocation20 + $0x2b0] sm:$0xff]
        %v8482 = vld [vmem:[#allocation20 + $0x2b8] sm:$0xff]
        %v8483 = vld [vmem:[#allocation20 + $0x2c0] sm:$0xff]
        %v8484 = vld [vmem:[#allocation20 + $0x2c8] sm:$0xff]
        %v8485 = vld [vmem:[#allocation20 + $0x2d0] sm:$0xff]
        %v8486 = vld [vmem:[#allocation20 + $0x2d8] sm:$0xff]
        %v8487 = vld [vmem:[#allocation20 + $0x2e0] sm:$0xff]
        %v8488 = vld [vmem:[#allocation20 + $0x2e8] sm:$0xff]
        %v8489 = vld [vmem:[#allocation20 + $0x2f0] sm:$0xff]
        %v8490 = vld [vmem:[#allocation20 + $0x2f8] sm:$0xff]
        %v8491 = vld [vmem:[#allocation20 + $0x300] sm:$0xff]
        %v8492 = vld [vmem:[#allocation20 + $0x308] sm:$0xff]
        %v8493 = vld [vmem:[#allocation20 + $0x310] sm:$0xff]
        %v8494 = vld [vmem:[#allocation20 + $0x318] sm:$0xff]
        %v8495 = vld [vmem:[#allocation20 + $0x320] sm:$0xff]
        %v8496 = vld [vmem:[#allocation20 + $0x328] sm:$0xff]
        %v8497 = vld [vmem:[#allocation20 + $0x330] sm:$0xff]
        %v8498 = vld [vmem:[#allocation20 + $0x338] sm:$0xff]
        %v8499 = vld [vmem:[#allocation20 + $0x340] sm:$0xff]
        %v8500 = vld [vmem:[#allocation20 + $0x348] sm:$0xff]
        %v8501 = vld [vmem:[#allocation20 + $0x350] sm:$0xff]
        %v8502 = vld [vmem:[#allocation20 + $0x358] sm:$0xff]
        %v8503 = vld [vmem:[#allocation20 + $0x360] sm:$0xff]
        %v8504 = vld [vmem:[#allocation20 + $0x368] sm:$0xff]
        %v8505 = vld [vmem:[#allocation20 + $0x370] sm:$0xff]
        %v8506 = vld [vmem:[#allocation20 + $0x378] sm:$0xff]
        %v8507 = vld [vmem:[#allocation20 + $0x380] sm:$0xff]
        %v8508 = vld [vmem:[#allocation20 + $0x388] sm:$0xff]
        %v8509 = vld [vmem:[#allocation20 + $0x390] sm:$0xff]
        %v8510 = vld [vmem:[#allocation20 + $0x398] sm:$0xff]
        %v8511 = vld [vmem:[#allocation20 + $0x3a0] sm:$0xff]
        %v8512 = vld [vmem:[#allocation20 + $0x3a8] sm:$0xff]
        %v8513 = vld [vmem:[#allocation20 + $0x3b0] sm:$0xff]
        %v8514 = vld [vmem:[#allocation20 + $0x3b8] sm:$0xff]
        %v8515 = vld [vmem:[#allocation20 + $0x3c0] sm:$0xff]
        %v8516 = vld [vmem:[#allocation20 + $0x3c8] sm:$0xff]
        %v8517 = vld [vmem:[#allocation20 + $0x3d0] sm:$0xff]
        %v8518 = vld [vmem:[#allocation20 + $0x3d8] sm:$0xff]
        %v8519 = vld [vmem:[#allocation20 + $0x3e0] sm:$0xff]
        %v8520 = vld [vmem:[#allocation20 + $0x3e8] sm:$0xff]
        %v8521 = vld [vmem:[#allocation20 + $0x3f0] sm:$0xff]
        %v8522 = vld [vmem:[#allocation20 + $0x3f8] sm:$0xff]
        %v8523 = vld [vmem:[#allocation20 + $0x400] sm:$0xff]
        %v8524 = vld [vmem:[#allocation20 + $0x408] sm:$0xff]
        %v8525 = vld [vmem:[#allocation20 + $0x410] sm:$0xff]
        %v8526 = vld [vmem:[#allocation20 + $0x418] sm:$0xff]
        %v8527 = vld [vmem:[#allocation20 + $0x420] sm:$0xff]
        %v8528 = vld [vmem:[#allocation20 + $0x428] sm:$0xff]
        %v8529 = vld [vmem:[#allocation20 + $0x430] sm:$0xff]
        %v8530 = vld [vmem:[#allocation20 + $0x438] sm:$0xff]
        %v8531 = vld [vmem:[#allocation20 + $0x440] sm:$0xff]
        %v8532 = vld [vmem:[#allocation20 + $0x448] sm:$0xff]
        %v8533 = vld [vmem:[#allocation20 + $0x450] sm:$0xff]
        %v8534 = vld [vmem:[#allocation20 + $0x458] sm:$0xff]
        %v8535 = vld [vmem:[#allocation20 + $0x460] sm:$0xff]
        %v8536 = vld [vmem:[#allocation20 + $0x468] sm:$0xff]
        %v8537 = vld [vmem:[#allocation20 + $0x470] sm:$0xff]
        %v8538 = vld [vmem:[#allocation20 + $0x478] sm:$0xff]
        %v8539 = vld [vmem:[#allocation20 + $0x480] sm:$0xff]
        %v8540 = vld [vmem:[#allocation20 + $0x488] sm:$0xff]
        %v8541 = vld [vmem:[#allocation20 + $0x490] sm:$0xff]
        %v8542 = vld [vmem:[#allocation20 + $0x498] sm:$0xff]
        %v8543 = vld [vmem:[#allocation20 + $0x4a0] sm:$0xff]
        %v8544 = vld [vmem:[#allocation20 + $0x4a8] sm:$0xff]
        %v8545 = vld [vmem:[#allocation20 + $0x4b0] sm:$0xff]
        %v8546 = vld [vmem:[#allocation20 + $0x4b8] sm:$0xff]
        %v8547 = vld [vmem:[#allocation20 + $0x4c0] sm:$0xff]
        %v8548 = vld [vmem:[#allocation20 + $0x4c8] sm:$0xff]
        %v8549 = vld [vmem:[#allocation20 + $0x4d0] sm:$0xff]
        %v8550 = vld [vmem:[#allocation20 + $0x4d8] sm:$0xff]
        %v8551 = vld [vmem:[#allocation20 + $0x4e0] sm:$0xff]
        %v8552 = vld [vmem:[#allocation20 + $0x4e8] sm:$0xff]
        %v8553 = vld [vmem:[#allocation20 + $0x4f0] sm:$0xff]
        %v8554 = vld [vmem:[#allocation20 + $0x4f8] sm:$0xff]
        %v8555 = vld [vmem:[#allocation20 + $0x500] sm:$0xff]
        %v8556 = vld [vmem:[#allocation20 + $0x508] sm:$0xff]
        %v8557 = vld [vmem:[#allocation20 + $0x510] sm:$0xff]
        %v8558 = vld [vmem:[#allocation20 + $0x518] sm:$0xff]
        %v8559 = vld [vmem:[#allocation20 + $0x520] sm:$0xff]
        %v8560 = vld [vmem:[#allocation20 + $0x528] sm:$0xff]
        %v8561 = vld [vmem:[#allocation20 + $0x530] sm:$0xff]
        %v8562 = vld [vmem:[#allocation20 + $0x538] sm:$0xff]
        %v8563 = vld [vmem:[#allocation20 + $0x540] sm:$0xff]
        %v8564 = vld [vmem:[#allocation20 + $0x548] sm:$0xff]
        %v8565 = vld [vmem:[#allocation20 + $0x550] sm:$0xff]
        %v8566 = vld [vmem:[#allocation20 + $0x558] sm:$0xff]
        %v8567 = vld [vmem:[#allocation20 + $0x560] sm:$0xff]
        %v8568 = vld [vmem:[#allocation20 + $0x568] sm:$0xff]
        %v8569 = vld [vmem:[#allocation20 + $0x570] sm:$0xff]
        %v8570 = vld [vmem:[#allocation20 + $0x578] sm:$0xff]
        %v8571 = vld [vmem:[#allocation20 + $0x580] sm:$0xff]
        %v8572 = vld [vmem:[#allocation20 + $0x588] sm:$0xff]
        %v8573 = vld [vmem:[#allocation20 + $0x590] sm:$0xff]
        %v8574 = vld [vmem:[#allocation20 + $0x598] sm:$0xff]
        %v8575 = vld [vmem:[#allocation20 + $0x5a0] sm:$0xff]
        %v8576 = vld [vmem:[#allocation20 + $0x5a8] sm:$0xff]
        %v8577 = vld [vmem:[#allocation20 + $0x5b0] sm:$0xff]
        %v8578 = vld [vmem:[#allocation20 + $0x5b8] sm:$0xff]
        %v8579 = vld [vmem:[#allocation20 + $0x5c0] sm:$0xff]
        %v8580 = vld [vmem:[#allocation20 + $0x5c8] sm:$0xff]
        %v8581 = vld [vmem:[#allocation20 + $0x5d0] sm:$0xff]
        %v8582 = vld [vmem:[#allocation20 + $0x5d8] sm:$0xff]
        %v8583 = vld [vmem:[#allocation20 + $0x5e0] sm:$0xff]
        %v8584 = vld [vmem:[#allocation20 + $0x5e8] sm:$0xff]
        %v8585 = vld [vmem:[#allocation20 + $0x5f0] sm:$0xff]
        %v8586 = vld [vmem:[#allocation20 + $0x5f8] sm:$0xff]
        %v8587 = vld [vmem:[#allocation20 + $0x600] sm:$0xff]
        %v8588 = vld [vmem:[#allocation20 + $0x608] sm:$0xff]
        %v8589 = vld [vmem:[#allocation20 + $0x610] sm:$0xff]
        %v8590 = vld [vmem:[#allocation20 + $0x618] sm:$0xff]
        %v8591 = vld [vmem:[#allocation20 + $0x620] sm:$0xff]
        %v8592 = vld [vmem:[#allocation20 + $0x628] sm:$0xff]
        %v8593 = vld [vmem:[#allocation20 + $0x630] sm:$0xff]
        %v8594 = vld [vmem:[#allocation20 + $0x638] sm:$0xff]
        %v8595 = vld [vmem:[#allocation20 + $0x640] sm:$0xff]
        %v8596 = vld [vmem:[#allocation20 + $0x648] sm:$0xff]
        %v8597 = vld [vmem:[#allocation20 + $0x650] sm:$0xff]
        %v8598 = vld [vmem:[#allocation20 + $0x658] sm:$0xff]
        %v8599 = vld [vmem:[#allocation20 + $0x660] sm:$0xff]
        %v8600 = vld [vmem:[#allocation20 + $0x668] sm:$0xff]
        %v8601 = vld [vmem:[#allocation20 + $0x670] sm:$0xff]
        %v8602 = vld [vmem:[#allocation20 + $0x678] sm:$0xff]
        %v8603 = vld [vmem:[#allocation20 + $0x680] sm:$0xff]
        %v8604 = vld [vmem:[#allocation20 + $0x688] sm:$0xff]
        %v8605 = vld [vmem:[#allocation20 + $0x690] sm:$0xff]
        %v8606 = vld [vmem:[#allocation20 + $0x698] sm:$0xff]
        %v8607 = vld [vmem:[#allocation20 + $0x6a0] sm:$0xff]
        %v8608 = vld [vmem:[#allocation20 + $0x6a8] sm:$0xff]
        %v8609 = vld [vmem:[#allocation20 + $0x6b0] sm:$0xff]
        %v8610 = vld [vmem:[#allocation20 + $0x6b8] sm:$0xff]
        %v8611 = vld [vmem:[#allocation20 + $0x6c0] sm:$0xff]
        %v8612 = vld [vmem:[#allocation20 + $0x6c8] sm:$0xff]
        %v8613 = vld [vmem:[#allocation20 + $0x6d0] sm:$0xff]
        %v8614 = vld [vmem:[#allocation20 + $0x6d8] sm:$0xff]
        %v8615 = vld [vmem:[#allocation20 + $0x6e0] sm:$0xff]
        %v8616 = vld [vmem:[#allocation20 + $0x6e8] sm:$0xff]
        %v8617 = vld [vmem:[#allocation20 + $0x6f0] sm:$0xff]
        %v8618 = vld [vmem:[#allocation20 + $0x6f8] sm:$0xff]
        %v8619 = vld [vmem:[#allocation20 + $0x700] sm:$0xff]
        %v8620 = vld [vmem:[#allocation20 + $0x708] sm:$0xff]
        %v8621 = vld [vmem:[#allocation20 + $0x710] sm:$0xff]
        %v8622 = vld [vmem:[#allocation20 + $0x718] sm:$0xff]
        %v8623 = vld [vmem:[#allocation20 + $0x720] sm:$0xff]
        %v8624 = vld [vmem:[#allocation20 + $0x728] sm:$0xff]
        %v8625 = vld [vmem:[#allocation20 + $0x730] sm:$0xff]
        %v8626 = vld [vmem:[#allocation20 + $0x738] sm:$0xff]
        %v8627 = vld [vmem:[#allocation20 + $0x740] sm:$0xff]
        %v8628 = vld [vmem:[#allocation20 + $0x748] sm:$0xff]
        %v8629 = vld [vmem:[#allocation20 + $0x750] sm:$0xff]
        %v8630 = vld [vmem:[#allocation20 + $0x758] sm:$0xff]
        %v8631 = vld [vmem:[#allocation20 + $0x760] sm:$0xff]
        %v8632 = vld [vmem:[#allocation20 + $0x768] sm:$0xff]
        %v8633 = vld [vmem:[#allocation20 + $0x770] sm:$0xff]
        %v8634 = vld [vmem:[#allocation20 + $0x778] sm:$0xff]
        %v8635 = vld [vmem:[#allocation20 + $0x780] sm:$0xff]
        %v8636 = vld [vmem:[#allocation20 + $0x788] sm:$0xff]
        %v8637 = vld [vmem:[#allocation20 + $0x790] sm:$0xff]
        %v8638 = vld [vmem:[#allocation20 + $0x798] sm:$0xff]
        %v8639 = vld [vmem:[#allocation20 + $0x7a0] sm:$0xff]
        %v8640 = vld [vmem:[#allocation20 + $0x7a8] sm:$0xff]
        %v8641 = vld [vmem:[#allocation20 + $0x7b0] sm:$0xff]
        %v8642 = vld [vmem:[#allocation20 + $0x7b8] sm:$0xff]
        %v8643 = vld [vmem:[#allocation20 + $0x7c0] sm:$0xff]
        %v8644 = vld [vmem:[#allocation20 + $0x7c8] sm:$0xff]
        %v8645 = vld [vmem:[#allocation20 + $0x7d0] sm:$0xff]
        %v8646 = vld [vmem:[#allocation20 + $0x7d8] sm:$0xff]
        %v8647 = vld [vmem:[#allocation20 + $0x7e0] sm:$0xff]
        %v8648 = vld [vmem:[#allocation20 + $0x7e8] sm:$0xff]
        %v8649 = vld [vmem:[#allocation20 + $0x7f0] sm:$0xff]
        %v8650 = vld [vmem:[#allocation20 + $0x7f8] sm:$0xff]
        %v8651 = vld [vmem:[#allocation20 + $0x800] sm:$0xff]
        %v8652 = vld [vmem:[#allocation20 + $0x808] sm:$0xff]
        %v8653 = vld [vmem:[#allocation20 + $0x810] sm:$0xff]
        %v8654 = vld [vmem:[#allocation20 + $0x818] sm:$0xff]
        %v8655 = vld [vmem:[#allocation20 + $0x820] sm:$0xff]
        %v8656 = vld [vmem:[#allocation20 + $0x828] sm:$0xff]
        %v8657 = vld [vmem:[#allocation20 + $0x830] sm:$0xff]
        %v8658 = vld [vmem:[#allocation20 + $0x838] sm:$0xff]
        %v8659 = vld [vmem:[#allocation20 + $0x840] sm:$0xff]
        %v8660 = vld [vmem:[#allocation20 + $0x848] sm:$0xff]
        %v8661 = vld [vmem:[#allocation20 + $0x850] sm:$0xff]
        %v8662 = vld [vmem:[#allocation20 + $0x858] sm:$0xff]
        %v8663 = vld [vmem:[#allocation20 + $0x860] sm:$0xff]
        %v8664 = vld [vmem:[#allocation20 + $0x868] sm:$0xff]
        %v8665 = vld [vmem:[#allocation20 + $0x870] sm:$0xff]
        %v8666 = vld [vmem:[#allocation20 + $0x878] sm:$0xff]
        %v8667 = vld [vmem:[#allocation20 + $0x880] sm:$0xff]
        %v8668 = vld [vmem:[#allocation20 + $0x888] sm:$0xff]
        %v8669 = vld [vmem:[#allocation20 + $0x890] sm:$0xff]
        %v8670 = vld [vmem:[#allocation20 + $0x898] sm:$0xff]
        %v8671 = vld [vmem:[#allocation20 + $0x8a0] sm:$0xff]
        %v8672 = vld [vmem:[#allocation20 + $0x8a8] sm:$0xff]
        %v8673 = vld [vmem:[#allocation20 + $0x8b0] sm:$0xff]
        %v8674 = vld [vmem:[#allocation20 + $0x8b8] sm:$0xff]
        %v8675 = vld [vmem:[#allocation20 + $0x8c0] sm:$0xff]
        %v8676 = vld [vmem:[#allocation20 + $0x8c8] sm:$0xff]
        %v8677 = vld [vmem:[#allocation20 + $0x8d0] sm:$0xff]
        %v8678 = vld [vmem:[#allocation20 + $0x8d8] sm:$0xff]
        %v8679 = vld [vmem:[#allocation20 + $0x8e0] sm:$0xff]
        %v8680 = vld [vmem:[#allocation20 + $0x8e8] sm:$0xff]
        %v8681 = vld [vmem:[#allocation20 + $0x8f0] sm:$0xff]
        %v8682 = vld [vmem:[#allocation20 + $0x8f8] sm:$0xff]
        %v8683 = vld [vmem:[#allocation20 + $0x900] sm:$0xff]
        %v8684 = vld [vmem:[#allocation20 + $0x908] sm:$0xff]
        %v8685 = vld [vmem:[#allocation20 + $0x910] sm:$0xff]
        %v8686 = vld [vmem:[#allocation20 + $0x918] sm:$0xff]
        %v8687 = vld [vmem:[#allocation20 + $0x920] sm:$0xff]
        %v8688 = vld [vmem:[#allocation20 + $0x928] sm:$0xff]
        %v8689 = vld [vmem:[#allocation20 + $0x930] sm:$0xff]
        %v8690 = vld [vmem:[#allocation20 + $0x938] sm:$0xff]
        %v8691 = vld [vmem:[#allocation20 + $0x940] sm:$0xff]
        %v8692 = vld [vmem:[#allocation20 + $0x948] sm:$0xff]
        %v8693 = vld [vmem:[#allocation20 + $0x950] sm:$0xff]
        %v8694 = vld [vmem:[#allocation20 + $0x958] sm:$0xff]
        %v8695 = vld [vmem:[#allocation20 + $0x960] sm:$0xff]
        %v8696 = vld [vmem:[#allocation20 + $0x968] sm:$0xff]
        %v8697 = vld [vmem:[#allocation20 + $0x970] sm:$0xff]
        %v8698 = vld [vmem:[#allocation20 + $0x978] sm:$0xff]
        %v8699 = vld [vmem:[#allocation20 + $0x980] sm:$0xff]
        %v8700 = vld [vmem:[#allocation20 + $0x988] sm:$0xff]
        %v8701 = vld [vmem:[#allocation20 + $0x990] sm:$0xff]
        %v8702 = vld [vmem:[#allocation20 + $0x998] sm:$0xff]
        %v8703 = vld [vmem:[#allocation20 + $0x9a0] sm:$0xff]
        %v8704 = vld [vmem:[#allocation20 + $0x9a8] sm:$0xff]
        %v8705 = vld [vmem:[#allocation20 + $0x9b0] sm:$0xff]
        %v8706 = vld [vmem:[#allocation20 + $0x9b8] sm:$0xff]
        %v8707 = vld [vmem:[#allocation20 + $0x9c0] sm:$0xff]
        %v8708 = vld [vmem:[#allocation20 + $0x9c8] sm:$0xff]
        %v8709 = vld [vmem:[#allocation20 + $0x9d0] sm:$0xff]
        %v8710 = vld [vmem:[#allocation20 + $0x9d8] sm:$0xff]
        %v8711 = vld [vmem:[#allocation20 + $0x9e0] sm:$0xff]
        %v8712 = vld [vmem:[#allocation20 + $0x9e8] sm:$0xff]
        %v8713 = vld [vmem:[#allocation20 + $0x9f0] sm:$0xff]
        %v8714 = vld [vmem:[#allocation20 + $0x9f8] sm:$0xff]
        %v8715 = vld [vmem:[#allocation20 + $0xa00] sm:$0xff]
        %v8716 = vld [vmem:[#allocation20 + $0xa08] sm:$0xff]
        %v8717 = vld [vmem:[#allocation20 + $0xa10] sm:$0xff]
        %v8718 = vld [vmem:[#allocation20 + $0xa18] sm:$0xff]
        %v8719 = vld [vmem:[#allocation20 + $0xa20] sm:$0xff]
        %v8720 = vld [vmem:[#allocation20 + $0xa28] sm:$0xff]
        %v8721 = vld [vmem:[#allocation20 + $0xa30] sm:$0xff]
        %v8722 = vld [vmem:[#allocation20 + $0xa38] sm:$0xff]
        %v8723 = vld [vmem:[#allocation20 + $0xa40] sm:$0xff]
        %v8724 = vld [vmem:[#allocation20 + $0xa48] sm:$0xff]
        %v8725 = vld [vmem:[#allocation20 + $0xa50] sm:$0xff]
        %v8726 = vld [vmem:[#allocation20 + $0xa58] sm:$0xff]
        %v8727 = vld [vmem:[#allocation20 + $0xa60] sm:$0xff]
        %v8728 = vld [vmem:[#allocation20 + $0xa68] sm:$0xff]
        %v8729 = vld [vmem:[#allocation20 + $0xa70] sm:$0xff]
        %v8730 = vld [vmem:[#allocation20 + $0xa78] sm:$0xff]
        %v8731 = vld [vmem:[#allocation20 + $0xa80] sm:$0xff]
        %v8732 = vld [vmem:[#allocation20 + $0xa88] sm:$0xff]
        %v8733 = vld [vmem:[#allocation20 + $0xa90] sm:$0xff]
        %v8734 = vld [vmem:[#allocation20 + $0xa98] sm:$0xff]
        %v8735 = vld [vmem:[#allocation20 + $0xaa0] sm:$0xff]
        %v8736 = vld [vmem:[#allocation20 + $0xaa8] sm:$0xff]
        %v8737 = vld [vmem:[#allocation20 + $0xab0] sm:$0xff]
        %v8738 = vld [vmem:[#allocation20 + $0xab8] sm:$0xff]
        %v8739 = vld [vmem:[#allocation20 + $0xac0] sm:$0xff]
        %v8740 = vld [vmem:[#allocation20 + $0xac8] sm:$0xff]
        %v8741 = vld [vmem:[#allocation20 + $0xad0] sm:$0xff]
        %v8742 = vld [vmem:[#allocation20 + $0xad8] sm:$0xff]
        %v8743 = vld [vmem:[#allocation20 + $0xae0] sm:$0xff]
        %v8744 = vld [vmem:[#allocation20 + $0xae8] sm:$0xff]
        %v8745 = vld [vmem:[#allocation20 + $0xaf0] sm:$0xff]
        %v8746 = vld [vmem:[#allocation20 + $0xaf8] sm:$0xff]
        %v8747 = vld [vmem:[#allocation20 + $0xb00] sm:$0xff]
        %v8748 = vld [vmem:[#allocation20 + $0xb08] sm:$0xff]
        %v8749 = vld [vmem:[#allocation20 + $0xb10] sm:$0xff]
        %v8750 = vld [vmem:[#allocation20 + $0xb18] sm:$0xff]
        %v8751 = vld [vmem:[#allocation20 + $0xb20] sm:$0xff]
        %v8752 = vld [vmem:[#allocation20 + $0xb28] sm:$0xff]
        %v8753 = vld [vmem:[#allocation20 + $0xb30] sm:$0xff]
        %v8754 = vld [vmem:[#allocation20 + $0xb38] sm:$0xff]
        %v8755 = vld [vmem:[#allocation20 + $0xb40] sm:$0xff]
        %v8756 = vld [vmem:[#allocation20 + $0xb48] sm:$0xff]
        %v8757 = vld [vmem:[#allocation20 + $0xb50] sm:$0xff]
        %v8758 = vld [vmem:[#allocation20 + $0xb58] sm:$0xff]
        %v8759 = vld [vmem:[#allocation20 + $0xb60] sm:$0xff]
        %v8760 = vld [vmem:[#allocation20 + $0xb68] sm:$0xff]
        %v8761 = vld [vmem:[#allocation20 + $0xb70] sm:$0xff]
        %v8762 = vld [vmem:[#allocation20 + $0xb78] sm:$0xff]
        %v8763 = vld [vmem:[#allocation20 + $0xb80] sm:$0xff]
        %v8764 = vld [vmem:[#allocation20 + $0xb88] sm:$0xff]
        %v8765 = vld [vmem:[#allocation20 + $0xb90] sm:$0xff]
        %v8766 = vld [vmem:[#allocation20 + $0xb98] sm:$0xff]
        %v8767 = vld [vmem:[#allocation20 + $0xba0] sm:$0xff]
        %v8768 = vld [vmem:[#allocation20 + $0xba8] sm:$0xff]
        %v8769 = vld [vmem:[#allocation20 + $0xbb0] sm:$0xff]
        %v8770 = vld [vmem:[#allocation20 + $0xbb8] sm:$0xff]
        %v8771 = vld [vmem:[#allocation20 + $0xbc0] sm:$0xff]
        %v8772 = vld [vmem:[#allocation20 + $0xbc8] sm:$0xff]
        %v8773 = vld [vmem:[#allocation20 + $0xbd0] sm:$0xff]
        %v8774 = vld [vmem:[#allocation20 + $0xbd8] sm:$0xff]
        %v8775 = vld [vmem:[#allocation20 + $0xbe0] sm:$0xff]
        %v8776 = vld [vmem:[#allocation20 + $0xbe8] sm:$0xff]
        %v8777 = vld [vmem:[#allocation20 + $0xbf0] sm:$0xff]
        %v8778 = vld [vmem:[#allocation20 + $0xbf8] sm:$0xff]
        %v8779 = vld [vmem:[#allocation20 + $0xc00] sm:$0xff]
        %v8780 = vld [vmem:[#allocation20 + $0xc08] sm:$0xff]
        %v8781 = vld [vmem:[#allocation20 + $0xc10] sm:$0xff]
        %v8782 = vld [vmem:[#allocation20 + $0xc18] sm:$0xff]
        %v8783 = vld [vmem:[#allocation20 + $0xc20] sm:$0xff]
        %v8784 = vld [vmem:[#allocation20 + $0xc28] sm:$0xff]
        %v8785 = vld [vmem:[#allocation20 + $0xc30] sm:$0xff]
        %v8786 = vld [vmem:[#allocation20 + $0xc38] sm:$0xff]
        %v8787 = vld [vmem:[#allocation20 + $0xc40] sm:$0xff]
        %v8788 = vld [vmem:[#allocation20 + $0xc48] sm:$0xff]
        %v8789 = vld [vmem:[#allocation20 + $0xc50] sm:$0xff]
        %v8790 = vld [vmem:[#allocation20 + $0xc58] sm:$0xff]
        %v8791 = vld [vmem:[#allocation20 + $0xc60] sm:$0xff]
        %v8792 = vld [vmem:[#allocation20 + $0xc68] sm:$0xff]
        %v8793 = vld [vmem:[#allocation20 + $0xc70] sm:$0xff]
        %v8794 = vld [vmem:[#allocation20 + $0xc78] sm:$0xff]
        %v8795 = vld [vmem:[#allocation20 + $0xc80] sm:$0xff]
        %v8796 = vld [vmem:[#allocation20 + $0xc88] sm:$0xff]
        %v8797 = vld [vmem:[#allocation20 + $0xc90] sm:$0xff]
        %v8798 = vld [vmem:[#allocation20 + $0xc98] sm:$0xff]
        %v8799 = vld [vmem:[#allocation20 + $0xca0] sm:$0xff]
        %v8800 = vld [vmem:[#allocation20 + $0xca8] sm:$0xff]
        %v8801 = vld [vmem:[#allocation20 + $0xcb0] sm:$0xff]
        %v8802 = vld [vmem:[#allocation20 + $0xcb8] sm:$0xff]
        %v8803 = vld [vmem:[#allocation20 + $0xcc0] sm:$0xff]
        %v8804 = vld [vmem:[#allocation20 + $0xcc8] sm:$0xff]
        %v8805 = vld [vmem:[#allocation20 + $0xcd0] sm:$0xff]
        %v8806 = vld [vmem:[#allocation20 + $0xcd8] sm:$0xff]
        %v8807 = vld [vmem:[#allocation20 + $0xce0] sm:$0xff]
        %v8808 = vld [vmem:[#allocation20 + $0xce8] sm:$0xff]
        %v8809 = vld [vmem:[#allocation20 + $0xcf0] sm:$0xff]
        %v8810 = vld [vmem:[#allocation20 + $0xcf8] sm:$0xff]
        %v8811 = vld [vmem:[#allocation20 + $0xd00] sm:$0xff]
        %v8812 = vld [vmem:[#allocation20 + $0xd08] sm:$0xff]
        %v8813 = vld [vmem:[#allocation20 + $0xd10] sm:$0xff]
        %v8814 = vld [vmem:[#allocation20 + $0xd18] sm:$0xff]
        %v8815 = vld [vmem:[#allocation20 + $0xd20] sm:$0xff]
        %v8816 = vld [vmem:[#allocation20 + $0xd28] sm:$0xff]
        %v8817 = vld [vmem:[#allocation20 + $0xd30] sm:$0xff]
        %v8818 = vld [vmem:[#allocation20 + $0xd38] sm:$0xff]
        %v8819 = vld [vmem:[#allocation20 + $0xd40] sm:$0xff]
        %v8820 = vld [vmem:[#allocation20 + $0xd48] sm:$0xff]
        %v8821 = vld [vmem:[#allocation20 + $0xd50] sm:$0xff]
        %v8822 = vld [vmem:[#allocation20 + $0xd58] sm:$0xff]
        %v8823 = vld [vmem:[#allocation20 + $0xd60] sm:$0xff]
        %v8824 = vld [vmem:[#allocation20 + $0xd68] sm:$0xff]
        %v8825 = vld [vmem:[#allocation20 + $0xd70] sm:$0xff]
        %v8826 = vld [vmem:[#allocation20 + $0xd78] sm:$0xff]
        %v8827 = vld [vmem:[#allocation20 + $0xd80] sm:$0xff]
        %v8828 = vld [vmem:[#allocation20 + $0xd88] sm:$0xff]
        %v8829 = vld [vmem:[#allocation20 + $0xd90] sm:$0xff]
        %v8830 = vld [vmem:[#allocation20 + $0xd98] sm:$0xff]
        %v8831 = vld [vmem:[#allocation20 + $0xda0] sm:$0xff]
        %v8832 = vld [vmem:[#allocation20 + $0xda8] sm:$0xff]
        %v8833 = vld [vmem:[#allocation20 + $0xdb0] sm:$0xff]
        %v8834 = vld [vmem:[#allocation20 + $0xdb8] sm:$0xff]
        %v8835 = vld [vmem:[#allocation20 + $0xdc0] sm:$0xff]
        %v8836 = vld [vmem:[#allocation20 + $0xdc8] sm:$0xff]
        %v8837 = vld [vmem:[#allocation20 + $0xdd0] sm:$0xff]
        %v8838 = vld [vmem:[#allocation20 + $0xdd8] sm:$0xff]
        %v8839 = vld [vmem:[#allocation20 + $0xde0] sm:$0xff]
        %v8840 = vld [vmem:[#allocation20 + $0xde8] sm:$0xff]
        %v8841 = vld [vmem:[#allocation20 + $0xdf0] sm:$0xff]
        %v8842 = vld [vmem:[#allocation20 + $0xdf8] sm:$0xff]
        %v8843 = vld [vmem:[#allocation20 + $0xe00] sm:$0xff]
        %v8844 = vld [vmem:[#allocation20 + $0xe08] sm:$0xff]
        %v8845 = vld [vmem:[#allocation20 + $0xe10] sm:$0xff]
        %v8846 = vld [vmem:[#allocation20 + $0xe18] sm:$0xff]
        %v8847 = vld [vmem:[#allocation20 + $0xe20] sm:$0xff]
        %v8848 = vld [vmem:[#allocation20 + $0xe28] sm:$0xff]
        %v8849 = vld [vmem:[#allocation20 + $0xe30] sm:$0xff]
        %v8850 = vld [vmem:[#allocation20 + $0xe38] sm:$0xff]
        %v8851 = vld [vmem:[#allocation20 + $0xe40] sm:$0xff]
        %v8852 = vld [vmem:[#allocation20 + $0xe48] sm:$0xff]
        %v8853 = vld [vmem:[#allocation20 + $0xe50] sm:$0xff]
        %v8854 = vld [vmem:[#allocation20 + $0xe58] sm:$0xff]
        %v8855 = vld [vmem:[#allocation20 + $0xe60] sm:$0xff]
        %v8856 = vld [vmem:[#allocation20 + $0xe68] sm:$0xff]
        %v8857 = vld [vmem:[#allocation20 + $0xe70] sm:$0xff]
        %v8858 = vld [vmem:[#allocation20 + $0xe78] sm:$0xff]
        %v8859 = vld [vmem:[#allocation20 + $0xe80] sm:$0xff]
        %v8860 = vld [vmem:[#allocation20 + $0xe88] sm:$0xff]
        %v8861 = vld [vmem:[#allocation20 + $0xe90] sm:$0xff]
        %v8862 = vld [vmem:[#allocation20 + $0xe98] sm:$0xff]
        %v8863 = vld [vmem:[#allocation20 + $0xea0] sm:$0xff]
        %v8864 = vld [vmem:[#allocation20 + $0xea8] sm:$0xff]
        %v8865 = vld [vmem:[#allocation20 + $0xeb0] sm:$0xff]
        %v8866 = vld [vmem:[#allocation20 + $0xeb8] sm:$0xff]
        %v8867 = vld [vmem:[#allocation20 + $0xec0] sm:$0xff]
        %v8868 = vld [vmem:[#allocation20 + $0xec8] sm:$0xff]
        %v8869 = vld [vmem:[#allocation20 + $0xed0] sm:$0xff]
        %v8870 = vld [vmem:[#allocation20 + $0xed8] sm:$0xff]
        %v8871 = vld [vmem:[#allocation20 + $0xee0] sm:$0xff]
        %v8872 = vld [vmem:[#allocation20 + $0xee8] sm:$0xff]
        %v8873 = vld [vmem:[#allocation20 + $0xef0] sm:$0xff]
        %v8874 = vld [vmem:[#allocation20 + $0xef8] sm:$0xff]
        %v8875 = vld [vmem:[#allocation20 + $0xf00] sm:$0xff]
        %v8876 = vld [vmem:[#allocation20 + $0xf08] sm:$0xff]
        %v8877 = vld [vmem:[#allocation20 + $0xf10] sm:$0xff]
        %v8878 = vld [vmem:[#allocation20 + $0xf18] sm:$0xff]
        %v8879 = vld [vmem:[#allocation20 + $0xf20] sm:$0xff]
        %v8880 = vld [vmem:[#allocation20 + $0xf28] sm:$0xff]
        %v8881 = vld [vmem:[#allocation20 + $0xf30] sm:$0xff]
        %v8882 = vld [vmem:[#allocation20 + $0xf38] sm:$0xff]
        %v8883 = vld [vmem:[#allocation20 + $0xf40] sm:$0xff]
        %v8884 = vld [vmem:[#allocation20 + $0xf48] sm:$0xff]
        %v8885 = vld [vmem:[#allocation20 + $0xf50] sm:$0xff]
        %v8886 = vld [vmem:[#allocation20 + $0xf58] sm:$0xff]
        %v8887 = vld [vmem:[#allocation20 + $0xf60] sm:$0xff]
        %v8888 = vld [vmem:[#allocation20 + $0xf68] sm:$0xff]
        %v8889 = vld [vmem:[#allocation20 + $0xf70] sm:$0xff]
        %v8890 = vld [vmem:[#allocation20 + $0xf78] sm:$0xff]
        %v8891 = vld [vmem:[#allocation20 + $0xf80] sm:$0xff]
        %v8892 = vld [vmem:[#allocation20 + $0xf88] sm:$0xff]
        %v8893 = vld [vmem:[#allocation20 + $0xf90] sm:$0xff]
        %v8894 = vld [vmem:[#allocation20 + $0xf98] sm:$0xff]
        %v8895 = vld [vmem:[#allocation20 + $0xfa0] sm:$0xff]
        %v8896 = vld [vmem:[#allocation20 + $0xfa8] sm:$0xff]
        %v8897 = vld [vmem:[#allocation20 + $0xfb0] sm:$0xff]
        %v8898 = vld [vmem:[#allocation20 + $0xfb8] sm:$0xff]
        %v8899 = vld [vmem:[#allocation20 + $0xfc0] sm:$0xff]
        %v8900 = vld [vmem:[#allocation20 + $0xfc8] sm:$0xff]
        %v8901 = vld [vmem:[#allocation20 + $0xfd0] sm:$0xff]
        %v8902 = vld [vmem:[#allocation20 + $0xfd8] sm:$0xff]
        %v8903 = vld [vmem:[#allocation20 + $0xfe0] sm:$0xff]
        %v8904 = vld [vmem:[#allocation20 + $0xfe8] sm:$0xff]
        %v8905 = vld [vmem:[#allocation20 + $0xff0] sm:$0xff]
        %v8906 = vld [vmem:[#allocation20 + $0xff8] sm:$0xff]
        %v8907 = vld [vmem:[#allocation22] sm:$0xf]
        %v8909 = vlaneseq
        %v8910 = vshrl.u32 %v8909, 7
        %v8911 = vsub.s32 0, %v8910
        %v8912 = vrot.slane %v8907, %v8911
        %v8913 = vlaneseq
        %v8914 = vshrl.u32 %v8913, 7
        %v8915 = vsub.s32 1, %v8914
        %v8916 = vrot.slane %v8907, %v8915
        %v8917 = vlaneseq
        %v8918 = vshrl.u32 %v8917, 7
        %v8919 = vsub.s32 2, %v8918
        %v8920 = vrot.slane %v8907, %v8919
        %v8921 = vlaneseq
        %v8922 = vshrl.u32 %v8921, 7
        %v8923 = vsub.s32 3, %v8922
        %v8924 = vrot.slane %v8907, %v8923
        %v9441 = vunpack.c.l.b16 %v8395
        %v9442 = vunpack.c.h.b16 %v8395
        %v9443 = vunpack.c.l.b16 %v8396
        %v9444 = vunpack.c.h.b16 %v8396
        %v9445 = vunpack.c.l.b16 %v8397
        %v9446 = vunpack.c.h.b16 %v8397
        %v9447 = vunpack.c.l.b16 %v8398
        %v9448 = vunpack.c.h.b16 %v8398
        %v9449 = vunpack.c.l.b16 %v8399
        %v9450 = vunpack.c.h.b16 %v8399
        %v9451 = vunpack.c.l.b16 %v8400
        %v9452 = vunpack.c.h.b16 %v8400
        %v9453 = vunpack.c.l.b16 %v8401
        %v9454 = vunpack.c.h.b16 %v8401
        %v9455 = vunpack.c.l.b16 %v8402
        %v9456 = vunpack.c.h.b16 %v8402
        %v9457 = vunpack.c.l.b16 %v8403
        %v9458 = vunpack.c.h.b16 %v8403
        %v9459 = vunpack.c.l.b16 %v8404
        %v9460 = vunpack.c.h.b16 %v8404
        %v9461 = vunpack.c.l.b16 %v8405
        %v9462 = vunpack.c.h.b16 %v8405
        %v9463 = vunpack.c.l.b16 %v8406
        %v9464 = vunpack.c.h.b16 %v8406
        %v9465 = vunpack.c.l.b16 %v8407
        %v9466 = vunpack.c.h.b16 %v8407
        %v9467 = vunpack.c.l.b16 %v8408
        %v9468 = vunpack.c.h.b16 %v8408
        %v9469 = vunpack.c.l.b16 %v8409
        %v9470 = vunpack.c.h.b16 %v8409
        %v9471 = vunpack.c.l.b16 %v8410
        %v9472 = vunpack.c.h.b16 %v8410
        %v9473 = vunpack.c.l.b16 %v8411
        %v9474 = vunpack.c.h.b16 %v8411
        %v9475 = vunpack.c.l.b16 %v8412
        %v9476 = vunpack.c.h.b16 %v8412
        %v9477 = vunpack.c.l.b16 %v8413
        %v9478 = vunpack.c.h.b16 %v8413
        %v9479 = vunpack.c.l.b16 %v8414
        %v9480 = vunpack.c.h.b16 %v8414
        %v9481 = vunpack.c.l.b16 %v8415
        %v9482 = vunpack.c.h.b16 %v8415
        %v9483 = vunpack.c.l.b16 %v8416
        %v9484 = vunpack.c.h.b16 %v8416
        %v9485 = vunpack.c.l.b16 %v8417
        %v9486 = vunpack.c.h.b16 %v8417
        %v9487 = vunpack.c.l.b16 %v8418
        %v9488 = vunpack.c.h.b16 %v8418
        %v9489 = vunpack.c.l.b16 %v8419
        %v9490 = vunpack.c.h.b16 %v8419
        %v9491 = vunpack.c.l.b16 %v8420
        %v9492 = vunpack.c.h.b16 %v8420
        %v9493 = vunpack.c.l.b16 %v8421
        %v9494 = vunpack.c.h.b16 %v8421
        %v9495 = vunpack.c.l.b16 %v8422
        %v9496 = vunpack.c.h.b16 %v8422
        %v9497 = vunpack.c.l.b16 %v8423
        %v9498 = vunpack.c.h.b16 %v8423
        %v9499 = vunpack.c.l.b16 %v8424
        %v9500 = vunpack.c.h.b16 %v8424
        %v9501 = vunpack.c.l.b16 %v8425
        %v9502 = vunpack.c.h.b16 %v8425
        %v9503 = vunpack.c.l.b16 %v8426
        %v9504 = vunpack.c.h.b16 %v8426
        %v9505 = vunpack.c.l.b16 %v8427
        %v9506 = vunpack.c.h.b16 %v8427
        %v9507 = vunpack.c.l.b16 %v8428
        %v9508 = vunpack.c.h.b16 %v8428
        %v9509 = vunpack.c.l.b16 %v8429
        %v9510 = vunpack.c.h.b16 %v8429
        %v9511 = vunpack.c.l.b16 %v8430
        %v9512 = vunpack.c.h.b16 %v8430
        %v9513 = vunpack.c.l.b16 %v8431
        %v9514 = vunpack.c.h.b16 %v8431
        %v9515 = vunpack.c.l.b16 %v8432
        %v9516 = vunpack.c.h.b16 %v8432
        %v9517 = vunpack.c.l.b16 %v8433
        %v9518 = vunpack.c.h.b16 %v8433
        %v9519 = vunpack.c.l.b16 %v8434
        %v9520 = vunpack.c.h.b16 %v8434
        %v9521 = vunpack.c.l.b16 %v8435
        %v9522 = vunpack.c.h.b16 %v8435
        %v9523 = vunpack.c.l.b16 %v8436
        %v9524 = vunpack.c.h.b16 %v8436
        %v9525 = vunpack.c.l.b16 %v8437
        %v9526 = vunpack.c.h.b16 %v8437
        %v9527 = vunpack.c.l.b16 %v8438
        %v9528 = vunpack.c.h.b16 %v8438
        %v9529 = vunpack.c.l.b16 %v8439
        %v9530 = vunpack.c.h.b16 %v8439
        %v9531 = vunpack.c.l.b16 %v8440
        %v9532 = vunpack.c.h.b16 %v8440
        %v9533 = vunpack.c.l.b16 %v8441
        %v9534 = vunpack.c.h.b16 %v8441
        %v9535 = vunpack.c.l.b16 %v8442
        %v9536 = vunpack.c.h.b16 %v8442
        %v9537 = vunpack.c.l.b16 %v8443
        %v9538 = vunpack.c.h.b16 %v8443
        %v9539 = vunpack.c.l.b16 %v8444
        %v9540 = vunpack.c.h.b16 %v8444
        %v9541 = vunpack.c.l.b16 %v8445
        %v9542 = vunpack.c.h.b16 %v8445
        %v9543 = vunpack.c.l.b16 %v8446
        %v9544 = vunpack.c.h.b16 %v8446
        %v9545 = vunpack.c.l.b16 %v8447
        %v9546 = vunpack.c.h.b16 %v8447
        %v9547 = vunpack.c.l.b16 %v8448
        %v9548 = vunpack.c.h.b16 %v8448
        %v9549 = vunpack.c.l.b16 %v8449
        %v9550 = vunpack.c.h.b16 %v8449
        %v9551 = vunpack.c.l.b16 %v8450
        %v9552 = vunpack.c.h.b16 %v8450
        %v9553 = vunpack.c.l.b16 %v8451
        %v9554 = vunpack.c.h.b16 %v8451
        %v9555 = vunpack.c.l.b16 %v8452
        %v9556 = vunpack.c.h.b16 %v8452
        %v9557 = vunpack.c.l.b16 %v8453
        %v9558 = vunpack.c.h.b16 %v8453
        %v9559 = vunpack.c.l.b16 %v8454
        %v9560 = vunpack.c.h.b16 %v8454
        %v9561 = vunpack.c.l.b16 %v8455
        %v9562 = vunpack.c.h.b16 %v8455
        %v9563 = vunpack.c.l.b16 %v8456
        %v9564 = vunpack.c.h.b16 %v8456
        %v9565 = vunpack.c.l.b16 %v8457
        %v9566 = vunpack.c.h.b16 %v8457
        %v9567 = vunpack.c.l.b16 %v8458
        %v9568 = vunpack.c.h.b16 %v8458
        %v9569 = vunpack.c.l.b16 %v8459
        %v9570 = vunpack.c.h.b16 %v8459
        %v9571 = vunpack.c.l.b16 %v8460
        %v9572 = vunpack.c.h.b16 %v8460
        %v9573 = vunpack.c.l.b16 %v8461
        %v9574 = vunpack.c.h.b16 %v8461
        %v9575 = vunpack.c.l.b16 %v8462
        %v9576 = vunpack.c.h.b16 %v8462
        %v9577 = vunpack.c.l.b16 %v8463
        %v9578 = vunpack.c.h.b16 %v8463
        %v9579 = vunpack.c.l.b16 %v8464
        %v9580 = vunpack.c.h.b16 %v8464
        %v9581 = vunpack.c.l.b16 %v8465
        %v9582 = vunpack.c.h.b16 %v8465
        %v9583 = vunpack.c.l.b16 %v8466
        %v9584 = vunpack.c.h.b16 %v8466
        %v9585 = vunpack.c.l.b16 %v8467
        %v9586 = vunpack.c.h.b16 %v8467
        %v9587 = vunpack.c.l.b16 %v8468
        %v9588 = vunpack.c.h.b16 %v8468
        %v9589 = vunpack.c.l.b16 %v8469
        %v9590 = vunpack.c.h.b16 %v8469
        %v9591 = vunpack.c.l.b16 %v8470
        %v9592 = vunpack.c.h.b16 %v8470
        %v9593 = vunpack.c.l.b16 %v8471
        %v9594 = vunpack.c.h.b16 %v8471
        %v9595 = vunpack.c.l.b16 %v8472
        %v9596 = vunpack.c.h.b16 %v8472
        %v9597 = vunpack.c.l.b16 %v8473
        %v9598 = vunpack.c.h.b16 %v8473
        %v9599 = vunpack.c.l.b16 %v8474
        %v9600 = vunpack.c.h.b16 %v8474
        %v9601 = vunpack.c.l.b16 %v8475
        %v9602 = vunpack.c.h.b16 %v8475
        %v9603 = vunpack.c.l.b16 %v8476
        %v9604 = vunpack.c.h.b16 %v8476
        %v9605 = vunpack.c.l.b16 %v8477
        %v9606 = vunpack.c.h.b16 %v8477
        %v9607 = vunpack.c.l.b16 %v8478
        %v9608 = vunpack.c.h.b16 %v8478
        %v9609 = vunpack.c.l.b16 %v8479
        %v9610 = vunpack.c.h.b16 %v8479
        %v9611 = vunpack.c.l.b16 %v8480
        %v9612 = vunpack.c.h.b16 %v8480
        %v9613 = vunpack.c.l.b16 %v8481
        %v9614 = vunpack.c.h.b16 %v8481
        %v9615 = vunpack.c.l.b16 %v8482
        %v9616 = vunpack.c.h.b16 %v8482
        %v9617 = vunpack.c.l.b16 %v8483
        %v9618 = vunpack.c.h.b16 %v8483
        %v9619 = vunpack.c.l.b16 %v8484
        %v9620 = vunpack.c.h.b16 %v8484
        %v9621 = vunpack.c.l.b16 %v8485
        %v9622 = vunpack.c.h.b16 %v8485
        %v9623 = vunpack.c.l.b16 %v8486
        %v9624 = vunpack.c.h.b16 %v8486
        %v9625 = vunpack.c.l.b16 %v8487
        %v9626 = vunpack.c.h.b16 %v8487
        %v9627 = vunpack.c.l.b16 %v8488
        %v9628 = vunpack.c.h.b16 %v8488
        %v9629 = vunpack.c.l.b16 %v8489
        %v9630 = vunpack.c.h.b16 %v8489
        %v9631 = vunpack.c.l.b16 %v8490
        %v9632 = vunpack.c.h.b16 %v8490
        %v9633 = vunpack.c.l.b16 %v8491
        %v9634 = vunpack.c.h.b16 %v8491
        %v9635 = vunpack.c.l.b16 %v8492
        %v9636 = vunpack.c.h.b16 %v8492
        %v9637 = vunpack.c.l.b16 %v8493
        %v9638 = vunpack.c.h.b16 %v8493
        %v9639 = vunpack.c.l.b16 %v8494
        %v9640 = vunpack.c.h.b16 %v8494
        %v9641 = vunpack.c.l.b16 %v8495
        %v9642 = vunpack.c.h.b16 %v8495
        %v9643 = vunpack.c.l.b16 %v8496
        %v9644 = vunpack.c.h.b16 %v8496
        %v9645 = vunpack.c.l.b16 %v8497
        %v9646 = vunpack.c.h.b16 %v8497
        %v9647 = vunpack.c.l.b16 %v8498
        %v9648 = vunpack.c.h.b16 %v8498
        %v9649 = vunpack.c.l.b16 %v8499
        %v9650 = vunpack.c.h.b16 %v8499
        %v9651 = vunpack.c.l.b16 %v8500
        %v9652 = vunpack.c.h.b16 %v8500
        %v9653 = vunpack.c.l.b16 %v8501
        %v9654 = vunpack.c.h.b16 %v8501
        %v9655 = vunpack.c.l.b16 %v8502
        %v9656 = vunpack.c.h.b16 %v8502
        %v9657 = vunpack.c.l.b16 %v8503
        %v9658 = vunpack.c.h.b16 %v8503
        %v9659 = vunpack.c.l.b16 %v8504
        %v9660 = vunpack.c.h.b16 %v8504
        %v9661 = vunpack.c.l.b16 %v8505
        %v9662 = vunpack.c.h.b16 %v8505
        %v9663 = vunpack.c.l.b16 %v8506
        %v9664 = vunpack.c.h.b16 %v8506
        %v9665 = vunpack.c.l.b16 %v8507
        %v9666 = vunpack.c.h.b16 %v8507
        %v9667 = vunpack.c.l.b16 %v8508
        %v9668 = vunpack.c.h.b16 %v8508
        %v9669 = vunpack.c.l.b16 %v8509
        %v9670 = vunpack.c.h.b16 %v8509
        %v9671 = vunpack.c.l.b16 %v8510
        %v9672 = vunpack.c.h.b16 %v8510
        %v9673 = vunpack.c.l.b16 %v8511
        %v9674 = vunpack.c.h.b16 %v8511
        %v9675 = vunpack.c.l.b16 %v8512
        %v9676 = vunpack.c.h.b16 %v8512
        %v9677 = vunpack.c.l.b16 %v8513
        %v9678 = vunpack.c.h.b16 %v8513
        %v9679 = vunpack.c.l.b16 %v8514
        %v9680 = vunpack.c.h.b16 %v8514
        %v9681 = vunpack.c.l.b16 %v8515
        %v9682 = vunpack.c.h.b16 %v8515
        %v9683 = vunpack.c.l.b16 %v8516
        %v9684 = vunpack.c.h.b16 %v8516
        %v9685 = vunpack.c.l.b16 %v8517
        %v9686 = vunpack.c.h.b16 %v8517
        %v9687 = vunpack.c.l.b16 %v8518
        %v9688 = vunpack.c.h.b16 %v8518
        %v9689 = vunpack.c.l.b16 %v8519
        %v9690 = vunpack.c.h.b16 %v8519
        %v9691 = vunpack.c.l.b16 %v8520
        %v9692 = vunpack.c.h.b16 %v8520
        %v9693 = vunpack.c.l.b16 %v8521
        %v9694 = vunpack.c.h.b16 %v8521
        %v9695 = vunpack.c.l.b16 %v8522
        %v9696 = vunpack.c.h.b16 %v8522
        %v9697 = vunpack.c.l.b16 %v8523
        %v9698 = vunpack.c.h.b16 %v8523
        %v9699 = vunpack.c.l.b16 %v8524
        %v9700 = vunpack.c.h.b16 %v8524
        %v9701 = vunpack.c.l.b16 %v8525
        %v9702 = vunpack.c.h.b16 %v8525
        %v9703 = vunpack.c.l.b16 %v8526
        %v9704 = vunpack.c.h.b16 %v8526
        %v9705 = vunpack.c.l.b16 %v8527
        %v9706 = vunpack.c.h.b16 %v8527
        %v9707 = vunpack.c.l.b16 %v8528
        %v9708 = vunpack.c.h.b16 %v8528
        %v9709 = vunpack.c.l.b16 %v8529
        %v9710 = vunpack.c.h.b16 %v8529
        %v9711 = vunpack.c.l.b16 %v8530
        %v9712 = vunpack.c.h.b16 %v8530
        %v9713 = vunpack.c.l.b16 %v8531
        %v9714 = vunpack.c.h.b16 %v8531
        %v9715 = vunpack.c.l.b16 %v8532
        %v9716 = vunpack.c.h.b16 %v8532
        %v9717 = vunpack.c.l.b16 %v8533
        %v9718 = vunpack.c.h.b16 %v8533
        %v9719 = vunpack.c.l.b16 %v8534
        %v9720 = vunpack.c.h.b16 %v8534
        %v9721 = vunpack.c.l.b16 %v8535
        %v9722 = vunpack.c.h.b16 %v8535
        %v9723 = vunpack.c.l.b16 %v8536
        %v9724 = vunpack.c.h.b16 %v8536
        %v9725 = vunpack.c.l.b16 %v8537
        %v9726 = vunpack.c.h.b16 %v8537
        %v9727 = vunpack.c.l.b16 %v8538
        %v9728 = vunpack.c.h.b16 %v8538
        %v9729 = vunpack.c.l.b16 %v8539
        %v9730 = vunpack.c.h.b16 %v8539
        %v9731 = vunpack.c.l.b16 %v8540
        %v9732 = vunpack.c.h.b16 %v8540
        %v9733 = vunpack.c.l.b16 %v8541
        %v9734 = vunpack.c.h.b16 %v8541
        %v9735 = vunpack.c.l.b16 %v8542
        %v9736 = vunpack.c.h.b16 %v8542
        %v9737 = vunpack.c.l.b16 %v8543
        %v9738 = vunpack.c.h.b16 %v8543
        %v9739 = vunpack.c.l.b16 %v8544
        %v9740 = vunpack.c.h.b16 %v8544
        %v9741 = vunpack.c.l.b16 %v8545
        %v9742 = vunpack.c.h.b16 %v8545
        %v9743 = vunpack.c.l.b16 %v8546
        %v9744 = vunpack.c.h.b16 %v8546
        %v9745 = vunpack.c.l.b16 %v8547
        %v9746 = vunpack.c.h.b16 %v8547
        %v9747 = vunpack.c.l.b16 %v8548
        %v9748 = vunpack.c.h.b16 %v8548
        %v9749 = vunpack.c.l.b16 %v8549
        %v9750 = vunpack.c.h.b16 %v8549
        %v9751 = vunpack.c.l.b16 %v8550
        %v9752 = vunpack.c.h.b16 %v8550
        %v9753 = vunpack.c.l.b16 %v8551
        %v9754 = vunpack.c.h.b16 %v8551
        %v9755 = vunpack.c.l.b16 %v8552
        %v9756 = vunpack.c.h.b16 %v8552
        %v9757 = vunpack.c.l.b16 %v8553
        %v9758 = vunpack.c.h.b16 %v8553
        %v9759 = vunpack.c.l.b16 %v8554
        %v9760 = vunpack.c.h.b16 %v8554
        %v9761 = vunpack.c.l.b16 %v8555
        %v9762 = vunpack.c.h.b16 %v8555
        %v9763 = vunpack.c.l.b16 %v8556
        %v9764 = vunpack.c.h.b16 %v8556
        %v9765 = vunpack.c.l.b16 %v8557
        %v9766 = vunpack.c.h.b16 %v8557
        %v9767 = vunpack.c.l.b16 %v8558
        %v9768 = vunpack.c.h.b16 %v8558
        %v9769 = vunpack.c.l.b16 %v8559
        %v9770 = vunpack.c.h.b16 %v8559
        %v9771 = vunpack.c.l.b16 %v8560
        %v9772 = vunpack.c.h.b16 %v8560
        %v9773 = vunpack.c.l.b16 %v8561
        %v9774 = vunpack.c.h.b16 %v8561
        %v9775 = vunpack.c.l.b16 %v8562
        %v9776 = vunpack.c.h.b16 %v8562
        %v9777 = vunpack.c.l.b16 %v8563
        %v9778 = vunpack.c.h.b16 %v8563
        %v9779 = vunpack.c.l.b16 %v8564
        %v9780 = vunpack.c.h.b16 %v8564
        %v9781 = vunpack.c.l.b16 %v8565
        %v9782 = vunpack.c.h.b16 %v8565
        %v9783 = vunpack.c.l.b16 %v8566
        %v9784 = vunpack.c.h.b16 %v8566
        %v9785 = vunpack.c.l.b16 %v8567
        %v9786 = vunpack.c.h.b16 %v8567
        %v9787 = vunpack.c.l.b16 %v8568
        %v9788 = vunpack.c.h.b16 %v8568
        %v9789 = vunpack.c.l.b16 %v8569
        %v9790 = vunpack.c.h.b16 %v8569
        %v9791 = vunpack.c.l.b16 %v8570
        %v9792 = vunpack.c.h.b16 %v8570
        %v9793 = vunpack.c.l.b16 %v8571
        %v9794 = vunpack.c.h.b16 %v8571
        %v9795 = vunpack.c.l.b16 %v8572
        %v9796 = vunpack.c.h.b16 %v8572
        %v9797 = vunpack.c.l.b16 %v8573
        %v9798 = vunpack.c.h.b16 %v8573
        %v9799 = vunpack.c.l.b16 %v8574
        %v9800 = vunpack.c.h.b16 %v8574
        %v9801 = vunpack.c.l.b16 %v8575
        %v9802 = vunpack.c.h.b16 %v8575
        %v9803 = vunpack.c.l.b16 %v8576
        %v9804 = vunpack.c.h.b16 %v8576
        %v9805 = vunpack.c.l.b16 %v8577
        %v9806 = vunpack.c.h.b16 %v8577
        %v9807 = vunpack.c.l.b16 %v8578
        %v9808 = vunpack.c.h.b16 %v8578
        %v9809 = vunpack.c.l.b16 %v8579
        %v9810 = vunpack.c.h.b16 %v8579
        %v9811 = vunpack.c.l.b16 %v8580
        %v9812 = vunpack.c.h.b16 %v8580
        %v9813 = vunpack.c.l.b16 %v8581
        %v9814 = vunpack.c.h.b16 %v8581
        %v9815 = vunpack.c.l.b16 %v8582
        %v9816 = vunpack.c.h.b16 %v8582
        %v9817 = vunpack.c.l.b16 %v8583
        %v9818 = vunpack.c.h.b16 %v8583
        %v9819 = vunpack.c.l.b16 %v8584
        %v9820 = vunpack.c.h.b16 %v8584
        %v9821 = vunpack.c.l.b16 %v8585
        %v9822 = vunpack.c.h.b16 %v8585
        %v9823 = vunpack.c.l.b16 %v8586
        %v9824 = vunpack.c.h.b16 %v8586
        %v9825 = vunpack.c.l.b16 %v8587
        %v9826 = vunpack.c.h.b16 %v8587
        %v9827 = vunpack.c.l.b16 %v8588
        %v9828 = vunpack.c.h.b16 %v8588
        %v9829 = vunpack.c.l.b16 %v8589
        %v9830 = vunpack.c.h.b16 %v8589
        %v9831 = vunpack.c.l.b16 %v8590
        %v9832 = vunpack.c.h.b16 %v8590
        %v9833 = vunpack.c.l.b16 %v8591
        %v9834 = vunpack.c.h.b16 %v8591
        %v9835 = vunpack.c.l.b16 %v8592
        %v9836 = vunpack.c.h.b16 %v8592
        %v9837 = vunpack.c.l.b16 %v8593
        %v9838 = vunpack.c.h.b16 %v8593
        %v9839 = vunpack.c.l.b16 %v8594
        %v9840 = vunpack.c.h.b16 %v8594
        %v9841 = vunpack.c.l.b16 %v8595
        %v9842 = vunpack.c.h.b16 %v8595
        %v9843 = vunpack.c.l.b16 %v8596
        %v9844 = vunpack.c.h.b16 %v8596
        %v9845 = vunpack.c.l.b16 %v8597
        %v9846 = vunpack.c.h.b16 %v8597
        %v9847 = vunpack.c.l.b16 %v8598
        %v9848 = vunpack.c.h.b16 %v8598
        %v9849 = vunpack.c.l.b16 %v8599
        %v9850 = vunpack.c.h.b16 %v8599
        %v9851 = vunpack.c.l.b16 %v8600
        %v9852 = vunpack.c.h.b16 %v8600
        %v9853 = vunpack.c.l.b16 %v8601
        %v9854 = vunpack.c.h.b16 %v8601
        %v9855 = vunpack.c.l.b16 %v8602
        %v9856 = vunpack.c.h.b16 %v8602
        %v9857 = vunpack.c.l.b16 %v8603
        %v9858 = vunpack.c.h.b16 %v8603
        %v9859 = vunpack.c.l.b16 %v8604
        %v9860 = vunpack.c.h.b16 %v8604
        %v9861 = vunpack.c.l.b16 %v8605
        %v9862 = vunpack.c.h.b16 %v8605
        %v9863 = vunpack.c.l.b16 %v8606
        %v9864 = vunpack.c.h.b16 %v8606
        %v9865 = vunpack.c.l.b16 %v8607
        %v9866 = vunpack.c.h.b16 %v8607
        %v9867 = vunpack.c.l.b16 %v8608
        %v9868 = vunpack.c.h.b16 %v8608
        %v9869 = vunpack.c.l.b16 %v8609
        %v9870 = vunpack.c.h.b16 %v8609
        %v9871 = vunpack.c.l.b16 %v8610
        %v9872 = vunpack.c.h.b16 %v8610
        %v9873 = vunpack.c.l.b16 %v8611
        %v9874 = vunpack.c.h.b16 %v8611
        %v9875 = vunpack.c.l.b16 %v8612
        %v9876 = vunpack.c.h.b16 %v8612
        %v9877 = vunpack.c.l.b16 %v8613
        %v9878 = vunpack.c.h.b16 %v8613
        %v9879 = vunpack.c.l.b16 %v8614
        %v9880 = vunpack.c.h.b16 %v8614
        %v9881 = vunpack.c.l.b16 %v8615
        %v9882 = vunpack.c.h.b16 %v8615
        %v9883 = vunpack.c.l.b16 %v8616
        %v9884 = vunpack.c.h.b16 %v8616
        %v9885 = vunpack.c.l.b16 %v8617
        %v9886 = vunpack.c.h.b16 %v8617
        %v9887 = vunpack.c.l.b16 %v8618
        %v9888 = vunpack.c.h.b16 %v8618
        %v9889 = vunpack.c.l.b16 %v8619
        %v9890 = vunpack.c.h.b16 %v8619
        %v9891 = vunpack.c.l.b16 %v8620
        %v9892 = vunpack.c.h.b16 %v8620
        %v9893 = vunpack.c.l.b16 %v8621
        %v9894 = vunpack.c.h.b16 %v8621
        %v9895 = vunpack.c.l.b16 %v8622
        %v9896 = vunpack.c.h.b16 %v8622
        %v9897 = vunpack.c.l.b16 %v8623
        %v9898 = vunpack.c.h.b16 %v8623
        %v9899 = vunpack.c.l.b16 %v8624
        %v9900 = vunpack.c.h.b16 %v8624
        %v9901 = vunpack.c.l.b16 %v8625
        %v9902 = vunpack.c.h.b16 %v8625
        %v9903 = vunpack.c.l.b16 %v8626
        %v9904 = vunpack.c.h.b16 %v8626
        %v9905 = vunpack.c.l.b16 %v8627
        %v9906 = vunpack.c.h.b16 %v8627
        %v9907 = vunpack.c.l.b16 %v8628
        %v9908 = vunpack.c.h.b16 %v8628
        %v9909 = vunpack.c.l.b16 %v8629
        %v9910 = vunpack.c.h.b16 %v8629
        %v9911 = vunpack.c.l.b16 %v8630
        %v9912 = vunpack.c.h.b16 %v8630
        %v9913 = vunpack.c.l.b16 %v8631
        %v9914 = vunpack.c.h.b16 %v8631
        %v9915 = vunpack.c.l.b16 %v8632
        %v9916 = vunpack.c.h.b16 %v8632
        %v9917 = vunpack.c.l.b16 %v8633
        %v9918 = vunpack.c.h.b16 %v8633
        %v9919 = vunpack.c.l.b16 %v8634
        %v9920 = vunpack.c.h.b16 %v8634
        %v9921 = vunpack.c.l.b16 %v8635
        %v9922 = vunpack.c.h.b16 %v8635
        %v9923 = vunpack.c.l.b16 %v8636
        %v9924 = vunpack.c.h.b16 %v8636
        %v9925 = vunpack.c.l.b16 %v8637
        %v9926 = vunpack.c.h.b16 %v8637
        %v9927 = vunpack.c.l.b16 %v8638
        %v9928 = vunpack.c.h.b16 %v8638
        %v9929 = vunpack.c.l.b16 %v8639
        %v9930 = vunpack.c.h.b16 %v8639
        %v9931 = vunpack.c.l.b16 %v8640
        %v9932 = vunpack.c.h.b16 %v8640
        %v9933 = vunpack.c.l.b16 %v8641
        %v9934 = vunpack.c.h.b16 %v8641
        %v9935 = vunpack.c.l.b16 %v8642
        %v9936 = vunpack.c.h.b16 %v8642
        %v9937 = vunpack.c.l.b16 %v8643
        %v9938 = vunpack.c.h.b16 %v8643
        %v9939 = vunpack.c.l.b16 %v8644
        %v9940 = vunpack.c.h.b16 %v8644
        %v9941 = vunpack.c.l.b16 %v8645
        %v9942 = vunpack.c.h.b16 %v8645
        %v9943 = vunpack.c.l.b16 %v8646
        %v9944 = vunpack.c.h.b16 %v8646
        %v9945 = vunpack.c.l.b16 %v8647
        %v9946 = vunpack.c.h.b16 %v8647
        %v9947 = vunpack.c.l.b16 %v8648
        %v9948 = vunpack.c.h.b16 %v8648
        %v9949 = vunpack.c.l.b16 %v8649
        %v9950 = vunpack.c.h.b16 %v8649
        %v9951 = vunpack.c.l.b16 %v8650
        %v9952 = vunpack.c.h.b16 %v8650
        %v9953 = vunpack.c.l.b16 %v8651
        %v9954 = vunpack.c.h.b16 %v8651
        %v9955 = vunpack.c.l.b16 %v8652
        %v9956 = vunpack.c.h.b16 %v8652
        %v9957 = vunpack.c.l.b16 %v8653
        %v9958 = vunpack.c.h.b16 %v8653
        %v9959 = vunpack.c.l.b16 %v8654
        %v9960 = vunpack.c.h.b16 %v8654
        %v9961 = vunpack.c.l.b16 %v8655
        %v9962 = vunpack.c.h.b16 %v8655
        %v9963 = vunpack.c.l.b16 %v8656
        %v9964 = vunpack.c.h.b16 %v8656
        %v9965 = vunpack.c.l.b16 %v8657
        %v9966 = vunpack.c.h.b16 %v8657
        %v9967 = vunpack.c.l.b16 %v8658
        %v9968 = vunpack.c.h.b16 %v8658
        %v9969 = vunpack.c.l.b16 %v8659
        %v9970 = vunpack.c.h.b16 %v8659
        %v9971 = vunpack.c.l.b16 %v8660
        %v9972 = vunpack.c.h.b16 %v8660
        %v9973 = vunpack.c.l.b16 %v8661
        %v9974 = vunpack.c.h.b16 %v8661
        %v9975 = vunpack.c.l.b16 %v8662
        %v9976 = vunpack.c.h.b16 %v8662
        %v9977 = vunpack.c.l.b16 %v8663
        %v9978 = vunpack.c.h.b16 %v8663
        %v9979 = vunpack.c.l.b16 %v8664
        %v9980 = vunpack.c.h.b16 %v8664
        %v9981 = vunpack.c.l.b16 %v8665
        %v9982 = vunpack.c.h.b16 %v8665
        %v9983 = vunpack.c.l.b16 %v8666
        %v9984 = vunpack.c.h.b16 %v8666
        %v9985 = vunpack.c.l.b16 %v8667
        %v9986 = vunpack.c.h.b16 %v8667
        %v9987 = vunpack.c.l.b16 %v8668
        %v9988 = vunpack.c.h.b16 %v8668
        %v9989 = vunpack.c.l.b16 %v8669
        %v9990 = vunpack.c.h.b16 %v8669
        %v9991 = vunpack.c.l.b16 %v8670
        %v9992 = vunpack.c.h.b16 %v8670
        %v9993 = vunpack.c.l.b16 %v8671
        %v9994 = vunpack.c.h.b16 %v8671
        %v9995 = vunpack.c.l.b16 %v8672
        %v9996 = vunpack.c.h.b16 %v8672
        %v9997 = vunpack.c.l.b16 %v8673
        %v9998 = vunpack.c.h.b16 %v8673
        %v9999 = vunpack.c.l.b16 %v8674
        %v10000 = vunpack.c.h.b16 %v8674
        %v10001 = vunpack.c.l.b16 %v8675
        %v10002 = vunpack.c.h.b16 %v8675
        %v10003 = vunpack.c.l.b16 %v8676
        %v10004 = vunpack.c.h.b16 %v8676
        %v10005 = vunpack.c.l.b16 %v8677
        %v10006 = vunpack.c.h.b16 %v8677
        %v10007 = vunpack.c.l.b16 %v8678
        %v10008 = vunpack.c.h.b16 %v8678
        %v10009 = vunpack.c.l.b16 %v8679
        %v10010 = vunpack.c.h.b16 %v8679
        %v10011 = vunpack.c.l.b16 %v8680
        %v10012 = vunpack.c.h.b16 %v8680
        %v10013 = vunpack.c.l.b16 %v8681
        %v10014 = vunpack.c.h.b16 %v8681
        %v10015 = vunpack.c.l.b16 %v8682
        %v10016 = vunpack.c.h.b16 %v8682
        %v10017 = vunpack.c.l.b16 %v8683
        %v10018 = vunpack.c.h.b16 %v8683
        %v10019 = vunpack.c.l.b16 %v8684
        %v10020 = vunpack.c.h.b16 %v8684
        %v10021 = vunpack.c.l.b16 %v8685
        %v10022 = vunpack.c.h.b16 %v8685
        %v10023 = vunpack.c.l.b16 %v8686
        %v10024 = vunpack.c.h.b16 %v8686
        %v10025 = vunpack.c.l.b16 %v8687
        %v10026 = vunpack.c.h.b16 %v8687
        %v10027 = vunpack.c.l.b16 %v8688
        %v10028 = vunpack.c.h.b16 %v8688
        %v10029 = vunpack.c.l.b16 %v8689
        %v10030 = vunpack.c.h.b16 %v8689
        %v10031 = vunpack.c.l.b16 %v8690
        %v10032 = vunpack.c.h.b16 %v8690
        %v10033 = vunpack.c.l.b16 %v8691
        %v10034 = vunpack.c.h.b16 %v8691
        %v10035 = vunpack.c.l.b16 %v8692
        %v10036 = vunpack.c.h.b16 %v8692
        %v10037 = vunpack.c.l.b16 %v8693
        %v10038 = vunpack.c.h.b16 %v8693
        %v10039 = vunpack.c.l.b16 %v8694
        %v10040 = vunpack.c.h.b16 %v8694
        %v10041 = vunpack.c.l.b16 %v8695
        %v10042 = vunpack.c.h.b16 %v8695
        %v10043 = vunpack.c.l.b16 %v8696
        %v10044 = vunpack.c.h.b16 %v8696
        %v10045 = vunpack.c.l.b16 %v8697
        %v10046 = vunpack.c.h.b16 %v8697
        %v10047 = vunpack.c.l.b16 %v8698
        %v10048 = vunpack.c.h.b16 %v8698
        %v10049 = vunpack.c.l.b16 %v8699
        %v10050 = vunpack.c.h.b16 %v8699
        %v10051 = vunpack.c.l.b16 %v8700
        %v10052 = vunpack.c.h.b16 %v8700
        %v10053 = vunpack.c.l.b16 %v8701
        %v10054 = vunpack.c.h.b16 %v8701
        %v10055 = vunpack.c.l.b16 %v8702
        %v10056 = vunpack.c.h.b16 %v8702
        %v10057 = vunpack.c.l.b16 %v8703
        %v10058 = vunpack.c.h.b16 %v8703
        %v10059 = vunpack.c.l.b16 %v8704
        %v10060 = vunpack.c.h.b16 %v8704
        %v10061 = vunpack.c.l.b16 %v8705
        %v10062 = vunpack.c.h.b16 %v8705
        %v10063 = vunpack.c.l.b16 %v8706
        %v10064 = vunpack.c.h.b16 %v8706
        %v10065 = vunpack.c.l.b16 %v8707
        %v10066 = vunpack.c.h.b16 %v8707
        %v10067 = vunpack.c.l.b16 %v8708
        %v10068 = vunpack.c.h.b16 %v8708
        %v10069 = vunpack.c.l.b16 %v8709
        %v10070 = vunpack.c.h.b16 %v8709
        %v10071 = vunpack.c.l.b16 %v8710
        %v10072 = vunpack.c.h.b16 %v8710
        %v10073 = vunpack.c.l.b16 %v8711
        %v10074 = vunpack.c.h.b16 %v8711
        %v10075 = vunpack.c.l.b16 %v8712
        %v10076 = vunpack.c.h.b16 %v8712
        %v10077 = vunpack.c.l.b16 %v8713
        %v10078 = vunpack.c.h.b16 %v8713
        %v10079 = vunpack.c.l.b16 %v8714
        %v10080 = vunpack.c.h.b16 %v8714
        %v10081 = vunpack.c.l.b16 %v8715
        %v10082 = vunpack.c.h.b16 %v8715
        %v10083 = vunpack.c.l.b16 %v8716
        %v10084 = vunpack.c.h.b16 %v8716
        %v10085 = vunpack.c.l.b16 %v8717
        %v10086 = vunpack.c.h.b16 %v8717
        %v10087 = vunpack.c.l.b16 %v8718
        %v10088 = vunpack.c.h.b16 %v8718
        %v10089 = vunpack.c.l.b16 %v8719
        %v10090 = vunpack.c.h.b16 %v8719
        %v10091 = vunpack.c.l.b16 %v8720
        %v10092 = vunpack.c.h.b16 %v8720
        %v10093 = vunpack.c.l.b16 %v8721
        %v10094 = vunpack.c.h.b16 %v8721
        %v10095 = vunpack.c.l.b16 %v8722
        %v10096 = vunpack.c.h.b16 %v8722
        %v10097 = vunpack.c.l.b16 %v8723
        %v10098 = vunpack.c.h.b16 %v8723
        %v10099 = vunpack.c.l.b16 %v8724
        %v10100 = vunpack.c.h.b16 %v8724
        %v10101 = vunpack.c.l.b16 %v8725
        %v10102 = vunpack.c.h.b16 %v8725
        %v10103 = vunpack.c.l.b16 %v8726
        %v10104 = vunpack.c.h.b16 %v8726
        %v10105 = vunpack.c.l.b16 %v8727
        %v10106 = vunpack.c.h.b16 %v8727
        %v10107 = vunpack.c.l.b16 %v8728
        %v10108 = vunpack.c.h.b16 %v8728
        %v10109 = vunpack.c.l.b16 %v8729
        %v10110 = vunpack.c.h.b16 %v8729
        %v10111 = vunpack.c.l.b16 %v8730
        %v10112 = vunpack.c.h.b16 %v8730
        %v10113 = vunpack.c.l.b16 %v8731
        %v10114 = vunpack.c.h.b16 %v8731
        %v10115 = vunpack.c.l.b16 %v8732
        %v10116 = vunpack.c.h.b16 %v8732
        %v10117 = vunpack.c.l.b16 %v8733
        %v10118 = vunpack.c.h.b16 %v8733
        %v10119 = vunpack.c.l.b16 %v8734
        %v10120 = vunpack.c.h.b16 %v8734
        %v10121 = vunpack.c.l.b16 %v8735
        %v10122 = vunpack.c.h.b16 %v8735
        %v10123 = vunpack.c.l.b16 %v8736
        %v10124 = vunpack.c.h.b16 %v8736
        %v10125 = vunpack.c.l.b16 %v8737
        %v10126 = vunpack.c.h.b16 %v8737
        %v10127 = vunpack.c.l.b16 %v8738
        %v10128 = vunpack.c.h.b16 %v8738
        %v10129 = vunpack.c.l.b16 %v8739
        %v10130 = vunpack.c.h.b16 %v8739
        %v10131 = vunpack.c.l.b16 %v8740
        %v10132 = vunpack.c.h.b16 %v8740
        %v10133 = vunpack.c.l.b16 %v8741
        %v10134 = vunpack.c.h.b16 %v8741
        %v10135 = vunpack.c.l.b16 %v8742
        %v10136 = vunpack.c.h.b16 %v8742
        %v10137 = vunpack.c.l.b16 %v8743
        %v10138 = vunpack.c.h.b16 %v8743
        %v10139 = vunpack.c.l.b16 %v8744
        %v10140 = vunpack.c.h.b16 %v8744
        %v10141 = vunpack.c.l.b16 %v8745
        %v10142 = vunpack.c.h.b16 %v8745
        %v10143 = vunpack.c.l.b16 %v8746
        %v10144 = vunpack.c.h.b16 %v8746
        %v10145 = vunpack.c.l.b16 %v8747
        %v10146 = vunpack.c.h.b16 %v8747
        %v10147 = vunpack.c.l.b16 %v8748
        %v10148 = vunpack.c.h.b16 %v8748
        %v10149 = vunpack.c.l.b16 %v8749
        %v10150 = vunpack.c.h.b16 %v8749
        %v10151 = vunpack.c.l.b16 %v8750
        %v10152 = vunpack.c.h.b16 %v8750
        %v10153 = vunpack.c.l.b16 %v8751
        %v10154 = vunpack.c.h.b16 %v8751
        %v10155 = vunpack.c.l.b16 %v8752
        %v10156 = vunpack.c.h.b16 %v8752
        %v10157 = vunpack.c.l.b16 %v8753
        %v10158 = vunpack.c.h.b16 %v8753
        %v10159 = vunpack.c.l.b16 %v8754
        %v10160 = vunpack.c.h.b16 %v8754
        %v10161 = vunpack.c.l.b16 %v8755
        %v10162 = vunpack.c.h.b16 %v8755
        %v10163 = vunpack.c.l.b16 %v8756
        %v10164 = vunpack.c.h.b16 %v8756
        %v10165 = vunpack.c.l.b16 %v8757
        %v10166 = vunpack.c.h.b16 %v8757
        %v10167 = vunpack.c.l.b16 %v8758
        %v10168 = vunpack.c.h.b16 %v8758
        %v10169 = vunpack.c.l.b16 %v8759
        %v10170 = vunpack.c.h.b16 %v8759
        %v10171 = vunpack.c.l.b16 %v8760
        %v10172 = vunpack.c.h.b16 %v8760
        %v10173 = vunpack.c.l.b16 %v8761
        %v10174 = vunpack.c.h.b16 %v8761
        %v10175 = vunpack.c.l.b16 %v8762
        %v10176 = vunpack.c.h.b16 %v8762
        %v10177 = vunpack.c.l.b16 %v8763
        %v10178 = vunpack.c.h.b16 %v8763
        %v10179 = vunpack.c.l.b16 %v8764
        %v10180 = vunpack.c.h.b16 %v8764
        %v10181 = vunpack.c.l.b16 %v8765
        %v10182 = vunpack.c.h.b16 %v8765
        %v10183 = vunpack.c.l.b16 %v8766
        %v10184 = vunpack.c.h.b16 %v8766
        %v10185 = vunpack.c.l.b16 %v8767
        %v10186 = vunpack.c.h.b16 %v8767
        %v10187 = vunpack.c.l.b16 %v8768
        %v10188 = vunpack.c.h.b16 %v8768
        %v10189 = vunpack.c.l.b16 %v8769
        %v10190 = vunpack.c.h.b16 %v8769
        %v10191 = vunpack.c.l.b16 %v8770
        %v10192 = vunpack.c.h.b16 %v8770
        %v10193 = vunpack.c.l.b16 %v8771
        %v10194 = vunpack.c.h.b16 %v8771
        %v10195 = vunpack.c.l.b16 %v8772
        %v10196 = vunpack.c.h.b16 %v8772
        %v10197 = vunpack.c.l.b16 %v8773
        %v10198 = vunpack.c.h.b16 %v8773
        %v10199 = vunpack.c.l.b16 %v8774
        %v10200 = vunpack.c.h.b16 %v8774
        %v10201 = vunpack.c.l.b16 %v8775
        %v10202 = vunpack.c.h.b16 %v8775
        %v10203 = vunpack.c.l.b16 %v8776
        %v10204 = vunpack.c.h.b16 %v8776
        %v10205 = vunpack.c.l.b16 %v8777
        %v10206 = vunpack.c.h.b16 %v8777
        %v10207 = vunpack.c.l.b16 %v8778
        %v10208 = vunpack.c.h.b16 %v8778
        %v10209 = vunpack.c.l.b16 %v8779
        %v10210 = vunpack.c.h.b16 %v8779
        %v10211 = vunpack.c.l.b16 %v8780
        %v10212 = vunpack.c.h.b16 %v8780
        %v10213 = vunpack.c.l.b16 %v8781
        %v10214 = vunpack.c.h.b16 %v8781
        %v10215 = vunpack.c.l.b16 %v8782
        %v10216 = vunpack.c.h.b16 %v8782
        %v10217 = vunpack.c.l.b16 %v8783
        %v10218 = vunpack.c.h.b16 %v8783
        %v10219 = vunpack.c.l.b16 %v8784
        %v10220 = vunpack.c.h.b16 %v8784
        %v10221 = vunpack.c.l.b16 %v8785
        %v10222 = vunpack.c.h.b16 %v8785
        %v10223 = vunpack.c.l.b16 %v8786
        %v10224 = vunpack.c.h.b16 %v8786
        %v10225 = vunpack.c.l.b16 %v8787
        %v10226 = vunpack.c.h.b16 %v8787
        %v10227 = vunpack.c.l.b16 %v8788
        %v10228 = vunpack.c.h.b16 %v8788
        %v10229 = vunpack.c.l.b16 %v8789
        %v10230 = vunpack.c.h.b16 %v8789
        %v10231 = vunpack.c.l.b16 %v8790
        %v10232 = vunpack.c.h.b16 %v8790
        %v10233 = vunpack.c.l.b16 %v8791
        %v10234 = vunpack.c.h.b16 %v8791
        %v10235 = vunpack.c.l.b16 %v8792
        %v10236 = vunpack.c.h.b16 %v8792
        %v10237 = vunpack.c.l.b16 %v8793
        %v10238 = vunpack.c.h.b16 %v8793
        %v10239 = vunpack.c.l.b16 %v8794
        %v10240 = vunpack.c.h.b16 %v8794
        %v10241 = vunpack.c.l.b16 %v8795
        %v10242 = vunpack.c.h.b16 %v8795
        %v10243 = vunpack.c.l.b16 %v8796
        %v10244 = vunpack.c.h.b16 %v8796
        %v10245 = vunpack.c.l.b16 %v8797
        %v10246 = vunpack.c.h.b16 %v8797
        %v10247 = vunpack.c.l.b16 %v8798
        %v10248 = vunpack.c.h.b16 %v8798
        %v10249 = vunpack.c.l.b16 %v8799
        %v10250 = vunpack.c.h.b16 %v8799
        %v10251 = vunpack.c.l.b16 %v8800
        %v10252 = vunpack.c.h.b16 %v8800
        %v10253 = vunpack.c.l.b16 %v8801
        %v10254 = vunpack.c.h.b16 %v8801
        %v10255 = vunpack.c.l.b16 %v8802
        %v10256 = vunpack.c.h.b16 %v8802
        %v10257 = vunpack.c.l.b16 %v8803
        %v10258 = vunpack.c.h.b16 %v8803
        %v10259 = vunpack.c.l.b16 %v8804
        %v10260 = vunpack.c.h.b16 %v8804
        %v10261 = vunpack.c.l.b16 %v8805
        %v10262 = vunpack.c.h.b16 %v8805
        %v10263 = vunpack.c.l.b16 %v8806
        %v10264 = vunpack.c.h.b16 %v8806
        %v10265 = vunpack.c.l.b16 %v8807
        %v10266 = vunpack.c.h.b16 %v8807
        %v10267 = vunpack.c.l.b16 %v8808
        %v10268 = vunpack.c.h.b16 %v8808
        %v10269 = vunpack.c.l.b16 %v8809
        %v10270 = vunpack.c.h.b16 %v8809
        %v10271 = vunpack.c.l.b16 %v8810
        %v10272 = vunpack.c.h.b16 %v8810
        %v10273 = vunpack.c.l.b16 %v8811
        %v10274 = vunpack.c.h.b16 %v8811
        %v10275 = vunpack.c.l.b16 %v8812
        %v10276 = vunpack.c.h.b16 %v8812
        %v10277 = vunpack.c.l.b16 %v8813
        %v10278 = vunpack.c.h.b16 %v8813
        %v10279 = vunpack.c.l.b16 %v8814
        %v10280 = vunpack.c.h.b16 %v8814
        %v10281 = vunpack.c.l.b16 %v8815
        %v10282 = vunpack.c.h.b16 %v8815
        %v10283 = vunpack.c.l.b16 %v8816
        %v10284 = vunpack.c.h.b16 %v8816
        %v10285 = vunpack.c.l.b16 %v8817
        %v10286 = vunpack.c.h.b16 %v8817
        %v10287 = vunpack.c.l.b16 %v8818
        %v10288 = vunpack.c.h.b16 %v8818
        %v10289 = vunpack.c.l.b16 %v8819
        %v10290 = vunpack.c.h.b16 %v8819
        %v10291 = vunpack.c.l.b16 %v8820
        %v10292 = vunpack.c.h.b16 %v8820
        %v10293 = vunpack.c.l.b16 %v8821
        %v10294 = vunpack.c.h.b16 %v8821
        %v10295 = vunpack.c.l.b16 %v8822
        %v10296 = vunpack.c.h.b16 %v8822
        %v10297 = vunpack.c.l.b16 %v8823
        %v10298 = vunpack.c.h.b16 %v8823
        %v10299 = vunpack.c.l.b16 %v8824
        %v10300 = vunpack.c.h.b16 %v8824
        %v10301 = vunpack.c.l.b16 %v8825
        %v10302 = vunpack.c.h.b16 %v8825
        %v10303 = vunpack.c.l.b16 %v8826
        %v10304 = vunpack.c.h.b16 %v8826
        %v10305 = vunpack.c.l.b16 %v8827
        %v10306 = vunpack.c.h.b16 %v8827
        %v10307 = vunpack.c.l.b16 %v8828
        %v10308 = vunpack.c.h.b16 %v8828
        %v10309 = vunpack.c.l.b16 %v8829
        %v10310 = vunpack.c.h.b16 %v8829
        %v10311 = vunpack.c.l.b16 %v8830
        %v10312 = vunpack.c.h.b16 %v8830
        %v10313 = vunpack.c.l.b16 %v8831
        %v10314 = vunpack.c.h.b16 %v8831
        %v10315 = vunpack.c.l.b16 %v8832
        %v10316 = vunpack.c.h.b16 %v8832
        %v10317 = vunpack.c.l.b16 %v8833
        %v10318 = vunpack.c.h.b16 %v8833
        %v10319 = vunpack.c.l.b16 %v8834
        %v10320 = vunpack.c.h.b16 %v8834
        %v10321 = vunpack.c.l.b16 %v8835
        %v10322 = vunpack.c.h.b16 %v8835
        %v10323 = vunpack.c.l.b16 %v8836
        %v10324 = vunpack.c.h.b16 %v8836
        %v10325 = vunpack.c.l.b16 %v8837
        %v10326 = vunpack.c.h.b16 %v8837
        %v10327 = vunpack.c.l.b16 %v8838
        %v10328 = vunpack.c.h.b16 %v8838
        %v10329 = vunpack.c.l.b16 %v8839
        %v10330 = vunpack.c.h.b16 %v8839
        %v10331 = vunpack.c.l.b16 %v8840
        %v10332 = vunpack.c.h.b16 %v8840
        %v10333 = vunpack.c.l.b16 %v8841
        %v10334 = vunpack.c.h.b16 %v8841
        %v10335 = vunpack.c.l.b16 %v8842
        %v10336 = vunpack.c.h.b16 %v8842
        %v10337 = vunpack.c.l.b16 %v8843
        %v10338 = vunpack.c.h.b16 %v8843
        %v10339 = vunpack.c.l.b16 %v8844
        %v10340 = vunpack.c.h.b16 %v8844
        %v10341 = vunpack.c.l.b16 %v8845
        %v10342 = vunpack.c.h.b16 %v8845
        %v10343 = vunpack.c.l.b16 %v8846
        %v10344 = vunpack.c.h.b16 %v8846
        %v10345 = vunpack.c.l.b16 %v8847
        %v10346 = vunpack.c.h.b16 %v8847
        %v10347 = vunpack.c.l.b16 %v8848
        %v10348 = vunpack.c.h.b16 %v8848
        %v10349 = vunpack.c.l.b16 %v8849
        %v10350 = vunpack.c.h.b16 %v8849
        %v10351 = vunpack.c.l.b16 %v8850
        %v10352 = vunpack.c.h.b16 %v8850
        %v10353 = vunpack.c.l.b16 %v8851
        %v10354 = vunpack.c.h.b16 %v8851
        %v10355 = vunpack.c.l.b16 %v8852
        %v10356 = vunpack.c.h.b16 %v8852
        %v10357 = vunpack.c.l.b16 %v8853
        %v10358 = vunpack.c.h.b16 %v8853
        %v10359 = vunpack.c.l.b16 %v8854
        %v10360 = vunpack.c.h.b16 %v8854
        %v10361 = vunpack.c.l.b16 %v8855
        %v10362 = vunpack.c.h.b16 %v8855
        %v10363 = vunpack.c.l.b16 %v8856
        %v10364 = vunpack.c.h.b16 %v8856
        %v10365 = vunpack.c.l.b16 %v8857
        %v10366 = vunpack.c.h.b16 %v8857
        %v10367 = vunpack.c.l.b16 %v8858
        %v10368 = vunpack.c.h.b16 %v8858
        %v10369 = vunpack.c.l.b16 %v8859
        %v10370 = vunpack.c.h.b16 %v8859
        %v10371 = vunpack.c.l.b16 %v8860
        %v10372 = vunpack.c.h.b16 %v8860
        %v10373 = vunpack.c.l.b16 %v8861
        %v10374 = vunpack.c.h.b16 %v8861
        %v10375 = vunpack.c.l.b16 %v8862
        %v10376 = vunpack.c.h.b16 %v8862
        %v10377 = vunpack.c.l.b16 %v8863
        %v10378 = vunpack.c.h.b16 %v8863
        %v10379 = vunpack.c.l.b16 %v8864
        %v10380 = vunpack.c.h.b16 %v8864
        %v10381 = vunpack.c.l.b16 %v8865
        %v10382 = vunpack.c.h.b16 %v8865
        %v10383 = vunpack.c.l.b16 %v8866
        %v10384 = vunpack.c.h.b16 %v8866
        %v10385 = vunpack.c.l.b16 %v8867
        %v10386 = vunpack.c.h.b16 %v8867
        %v10387 = vunpack.c.l.b16 %v8868
        %v10388 = vunpack.c.h.b16 %v8868
        %v10389 = vunpack.c.l.b16 %v8869
        %v10390 = vunpack.c.h.b16 %v8869
        %v10391 = vunpack.c.l.b16 %v8870
        %v10392 = vunpack.c.h.b16 %v8870
        %v10393 = vunpack.c.l.b16 %v8871
        %v10394 = vunpack.c.h.b16 %v8871
        %v10395 = vunpack.c.l.b16 %v8872
        %v10396 = vunpack.c.h.b16 %v8872
        %v10397 = vunpack.c.l.b16 %v8873
        %v10398 = vunpack.c.h.b16 %v8873
        %v10399 = vunpack.c.l.b16 %v8874
        %v10400 = vunpack.c.h.b16 %v8874
        %v10401 = vunpack.c.l.b16 %v8875
        %v10402 = vunpack.c.h.b16 %v8875
        %v10403 = vunpack.c.l.b16 %v8876
        %v10404 = vunpack.c.h.b16 %v8876
        %v10405 = vunpack.c.l.b16 %v8877
        %v10406 = vunpack.c.h.b16 %v8877
        %v10407 = vunpack.c.l.b16 %v8878
        %v10408 = vunpack.c.h.b16 %v8878
        %v10409 = vunpack.c.l.b16 %v8879
        %v10410 = vunpack.c.h.b16 %v8879
        %v10411 = vunpack.c.l.b16 %v8880
        %v10412 = vunpack.c.h.b16 %v8880
        %v10413 = vunpack.c.l.b16 %v8881
        %v10414 = vunpack.c.h.b16 %v8881
        %v10415 = vunpack.c.l.b16 %v8882
        %v10416 = vunpack.c.h.b16 %v8882
        %v10417 = vunpack.c.l.b16 %v8883
        %v10418 = vunpack.c.h.b16 %v8883
        %v10419 = vunpack.c.l.b16 %v8884
        %v10420 = vunpack.c.h.b16 %v8884
        %v10421 = vunpack.c.l.b16 %v8885
        %v10422 = vunpack.c.h.b16 %v8885
        %v10423 = vunpack.c.l.b16 %v8886
        %v10424 = vunpack.c.h.b16 %v8886
        %v10425 = vunpack.c.l.b16 %v8887
        %v10426 = vunpack.c.h.b16 %v8887
        %v10427 = vunpack.c.l.b16 %v8888
        %v10428 = vunpack.c.h.b16 %v8888
        %v10429 = vunpack.c.l.b16 %v8889
        %v10430 = vunpack.c.h.b16 %v8889
        %v10431 = vunpack.c.l.b16 %v8890
        %v10432 = vunpack.c.h.b16 %v8890
        %v10433 = vunpack.c.l.b16 %v8891
        %v10434 = vunpack.c.h.b16 %v8891
        %v10435 = vunpack.c.l.b16 %v8892
        %v10436 = vunpack.c.h.b16 %v8892
        %v10437 = vunpack.c.l.b16 %v8893
        %v10438 = vunpack.c.h.b16 %v8893
        %v10439 = vunpack.c.l.b16 %v8894
        %v10440 = vunpack.c.h.b16 %v8894
        %v10441 = vunpack.c.l.b16 %v8895
        %v10442 = vunpack.c.h.b16 %v8895
        %v10443 = vunpack.c.l.b16 %v8896
        %v10444 = vunpack.c.h.b16 %v8896
        %v10445 = vunpack.c.l.b16 %v8897
        %v10446 = vunpack.c.h.b16 %v8897
        %v10447 = vunpack.c.l.b16 %v8898
        %v10448 = vunpack.c.h.b16 %v8898
        %v10449 = vunpack.c.l.b16 %v8899
        %v10450 = vunpack.c.h.b16 %v8899
        %v10451 = vunpack.c.l.b16 %v8900
        %v10452 = vunpack.c.h.b16 %v8900
        %v10453 = vunpack.c.l.b16 %v8901
        %v10454 = vunpack.c.h.b16 %v8901
        %v10455 = vunpack.c.l.b16 %v8902
        %v10456 = vunpack.c.h.b16 %v8902
        %v10457 = vunpack.c.l.b16 %v8903
        %v10458 = vunpack.c.h.b16 %v8903
        %v10459 = vunpack.c.l.b16 %v8904
        %v10460 = vunpack.c.h.b16 %v8904
        %v10461 = vunpack.c.l.b16 %v8905
        %v10462 = vunpack.c.h.b16 %v8905
        %v10463 = vunpack.c.l.b16 %v8906
        %v10464 = vunpack.c.h.b16 %v8906
        %v10465 = vpack.c.b16 %v9445, %v9441
        %v10466 = vpack.c.b16 %v9446, %v9442
        %v10467 = vpack.c.b16 %v9447, %v9443
        %v10468 = vpack.c.b16 %v9448, %v9444
        %v10469 = vpack.c.b16 %v9453, %v9449
        %v10470 = vpack.c.b16 %v9454, %v9450
        %v10471 = vpack.c.b16 %v9455, %v9451
        %v10472 = vpack.c.b16 %v9456, %v9452
        %v10473 = vpack.c.b16 %v9461, %v9457
        %v10474 = vpack.c.b16 %v9462, %v9458
        %v10475 = vpack.c.b16 %v9463, %v9459
        %v10476 = vpack.c.b16 %v9464, %v9460
        %v10477 = vpack.c.b16 %v9469, %v9465
        %v10478 = vpack.c.b16 %v9470, %v9466
        %v10479 = vpack.c.b16 %v9471, %v9467
        %v10480 = vpack.c.b16 %v9472, %v9468
        %v10481 = vpack.c.b16 %v9477, %v9473
        %v10482 = vpack.c.b16 %v9478, %v9474
        %v10483 = vpack.c.b16 %v9479, %v9475
        %v10484 = vpack.c.b16 %v9480, %v9476
        %v10485 = vpack.c.b16 %v9485, %v9481
        %v10486 = vpack.c.b16 %v9486, %v9482
        %v10487 = vpack.c.b16 %v9487, %v9483
        %v10488 = vpack.c.b16 %v9488, %v9484
        %v10489 = vpack.c.b16 %v9493, %v9489
        %v10490 = vpack.c.b16 %v9494, %v9490
        %v10491 = vpack.c.b16 %v9495, %v9491
        %v10492 = vpack.c.b16 %v9496, %v9492
        %v10493 = vpack.c.b16 %v9501, %v9497
        %v10494 = vpack.c.b16 %v9502, %v9498
        %v10495 = vpack.c.b16 %v9503, %v9499
        %v10496 = vpack.c.b16 %v9504, %v9500
        %v10497 = vpack.c.b16 %v9509, %v9505
        %v10498 = vpack.c.b16 %v9510, %v9506
        %v10499 = vpack.c.b16 %v9511, %v9507
        %v10500 = vpack.c.b16 %v9512, %v9508
        %v10501 = vpack.c.b16 %v9517, %v9513
        %v10502 = vpack.c.b16 %v9518, %v9514
        %v10503 = vpack.c.b16 %v9519, %v9515
        %v10504 = vpack.c.b16 %v9520, %v9516
        %v10505 = vpack.c.b16 %v9525, %v9521
        %v10506 = vpack.c.b16 %v9526, %v9522
        %v10507 = vpack.c.b16 %v9527, %v9523
        %v10508 = vpack.c.b16 %v9528, %v9524
        %v10509 = vpack.c.b16 %v9533, %v9529
        %v10510 = vpack.c.b16 %v9534, %v9530
        %v10511 = vpack.c.b16 %v9535, %v9531
        %v10512 = vpack.c.b16 %v9536, %v9532
        %v10513 = vpack.c.b16 %v9541, %v9537
        %v10514 = vpack.c.b16 %v9542, %v9538
        %v10515 = vpack.c.b16 %v9543, %v9539
        %v10516 = vpack.c.b16 %v9544, %v9540
        %v10517 = vpack.c.b16 %v9549, %v9545
        %v10518 = vpack.c.b16 %v9550, %v9546
        %v10519 = vpack.c.b16 %v9551, %v9547
        %v10520 = vpack.c.b16 %v9552, %v9548
        %v10521 = vpack.c.b16 %v9557, %v9553
        %v10522 = vpack.c.b16 %v9558, %v9554
        %v10523 = vpack.c.b16 %v9559, %v9555
        %v10524 = vpack.c.b16 %v9560, %v9556
        %v10525 = vpack.c.b16 %v9565, %v9561
        %v10526 = vpack.c.b16 %v9566, %v9562
        %v10527 = vpack.c.b16 %v9567, %v9563
        %v10528 = vpack.c.b16 %v9568, %v9564
        %v10529 = vpack.c.b16 %v9573, %v9569
        %v10530 = vpack.c.b16 %v9574, %v9570
        %v10531 = vpack.c.b16 %v9575, %v9571
        %v10532 = vpack.c.b16 %v9576, %v9572
        %v10533 = vpack.c.b16 %v9581, %v9577
        %v10534 = vpack.c.b16 %v9582, %v9578
        %v10535 = vpack.c.b16 %v9583, %v9579
        %v10536 = vpack.c.b16 %v9584, %v9580
        %v10537 = vpack.c.b16 %v9589, %v9585
        %v10538 = vpack.c.b16 %v9590, %v9586
        %v10539 = vpack.c.b16 %v9591, %v9587
        %v10540 = vpack.c.b16 %v9592, %v9588
        %v10541 = vpack.c.b16 %v9597, %v9593
        %v10542 = vpack.c.b16 %v9598, %v9594
        %v10543 = vpack.c.b16 %v9599, %v9595
        %v10544 = vpack.c.b16 %v9600, %v9596
        %v10545 = vpack.c.b16 %v9605, %v9601
        %v10546 = vpack.c.b16 %v9606, %v9602
        %v10547 = vpack.c.b16 %v9607, %v9603
        %v10548 = vpack.c.b16 %v9608, %v9604
        %v10549 = vpack.c.b16 %v9613, %v9609
        %v10550 = vpack.c.b16 %v9614, %v9610
        %v10551 = vpack.c.b16 %v9615, %v9611
        %v10552 = vpack.c.b16 %v9616, %v9612
        %v10553 = vpack.c.b16 %v9621, %v9617
        %v10554 = vpack.c.b16 %v9622, %v9618
        %v10555 = vpack.c.b16 %v9623, %v9619
        %v10556 = vpack.c.b16 %v9624, %v9620
        %v10557 = vpack.c.b16 %v9629, %v9625
        %v10558 = vpack.c.b16 %v9630, %v9626
        %v10559 = vpack.c.b16 %v9631, %v9627
        %v10560 = vpack.c.b16 %v9632, %v9628
        %v10561 = vpack.c.b16 %v9637, %v9633
        %v10562 = vpack.c.b16 %v9638, %v9634
        %v10563 = vpack.c.b16 %v9639, %v9635
        %v10564 = vpack.c.b16 %v9640, %v9636
        %v10565 = vpack.c.b16 %v9645, %v9641
        %v10566 = vpack.c.b16 %v9646, %v9642
        %v10567 = vpack.c.b16 %v9647, %v9643
        %v10568 = vpack.c.b16 %v9648, %v9644
        %v10569 = vpack.c.b16 %v9653, %v9649
        %v10570 = vpack.c.b16 %v9654, %v9650
        %v10571 = vpack.c.b16 %v9655, %v9651
        %v10572 = vpack.c.b16 %v9656, %v9652
        %v10573 = vpack.c.b16 %v9661, %v9657
        %v10574 = vpack.c.b16 %v9662, %v9658
        %v10575 = vpack.c.b16 %v9663, %v9659
        %v10576 = vpack.c.b16 %v9664, %v9660
        %v10577 = vpack.c.b16 %v9669, %v9665
        %v10578 = vpack.c.b16 %v9670, %v9666
        %v10579 = vpack.c.b16 %v9671, %v9667
        %v10580 = vpack.c.b16 %v9672, %v9668
        %v10581 = vpack.c.b16 %v9677, %v9673
        %v10582 = vpack.c.b16 %v9678, %v9674
        %v10583 = vpack.c.b16 %v9679, %v9675
        %v10584 = vpack.c.b16 %v9680, %v9676
        %v10585 = vpack.c.b16 %v9685, %v9681
        %v10586 = vpack.c.b16 %v9686, %v9682
        %v10587 = vpack.c.b16 %v9687, %v9683
        %v10588 = vpack.c.b16 %v9688, %v9684
        %v10589 = vpack.c.b16 %v9693, %v9689
        %v10590 = vpack.c.b16 %v9694, %v9690
        %v10591 = vpack.c.b16 %v9695, %v9691
        %v10592 = vpack.c.b16 %v9696, %v9692
        %v10593 = vpack.c.b16 %v9701, %v9697
        %v10594 = vpack.c.b16 %v9702, %v9698
        %v10595 = vpack.c.b16 %v9703, %v9699
        %v10596 = vpack.c.b16 %v9704, %v9700
        %v10597 = vpack.c.b16 %v9709, %v9705
        %v10598 = vpack.c.b16 %v9710, %v9706
        %v10599 = vpack.c.b16 %v9711, %v9707
        %v10600 = vpack.c.b16 %v9712, %v9708
        %v10601 = vpack.c.b16 %v9717, %v9713
        %v10602 = vpack.c.b16 %v9718, %v9714
        %v10603 = vpack.c.b16 %v9719, %v9715
        %v10604 = vpack.c.b16 %v9720, %v9716
        %v10605 = vpack.c.b16 %v9725, %v9721
        %v10606 = vpack.c.b16 %v9726, %v9722
        %v10607 = vpack.c.b16 %v9727, %v9723
        %v10608 = vpack.c.b16 %v9728, %v9724
        %v10609 = vpack.c.b16 %v9733, %v9729
        %v10610 = vpack.c.b16 %v9734, %v9730
        %v10611 = vpack.c.b16 %v9735, %v9731
        %v10612 = vpack.c.b16 %v9736, %v9732
        %v10613 = vpack.c.b16 %v9741, %v9737
        %v10614 = vpack.c.b16 %v9742, %v9738
        %v10615 = vpack.c.b16 %v9743, %v9739
        %v10616 = vpack.c.b16 %v9744, %v9740
        %v10617 = vpack.c.b16 %v9749, %v9745
        %v10618 = vpack.c.b16 %v9750, %v9746
        %v10619 = vpack.c.b16 %v9751, %v9747
        %v10620 = vpack.c.b16 %v9752, %v9748
        %v10621 = vpack.c.b16 %v9757, %v9753
        %v10622 = vpack.c.b16 %v9758, %v9754
        %v10623 = vpack.c.b16 %v9759, %v9755
        %v10624 = vpack.c.b16 %v9760, %v9756
        %v10625 = vpack.c.b16 %v9765, %v9761
        %v10626 = vpack.c.b16 %v9766, %v9762
        %v10627 = vpack.c.b16 %v9767, %v9763
        %v10628 = vpack.c.b16 %v9768, %v9764
        %v10629 = vpack.c.b16 %v9773, %v9769
        %v10630 = vpack.c.b16 %v9774, %v9770
        %v10631 = vpack.c.b16 %v9775, %v9771
        %v10632 = vpack.c.b16 %v9776, %v9772
        %v10633 = vpack.c.b16 %v9781, %v9777
        %v10634 = vpack.c.b16 %v9782, %v9778
        %v10635 = vpack.c.b16 %v9783, %v9779
        %v10636 = vpack.c.b16 %v9784, %v9780
        %v10637 = vpack.c.b16 %v9789, %v9785
        %v10638 = vpack.c.b16 %v9790, %v9786
        %v10639 = vpack.c.b16 %v9791, %v9787
        %v10640 = vpack.c.b16 %v9792, %v9788
        %v10641 = vpack.c.b16 %v9797, %v9793
        %v10642 = vpack.c.b16 %v9798, %v9794
        %v10643 = vpack.c.b16 %v9799, %v9795
        %v10644 = vpack.c.b16 %v9800, %v9796
        %v10645 = vpack.c.b16 %v9805, %v9801
        %v10646 = vpack.c.b16 %v9806, %v9802
        %v10647 = vpack.c.b16 %v9807, %v9803
        %v10648 = vpack.c.b16 %v9808, %v9804
        %v10649 = vpack.c.b16 %v9813, %v9809
        %v10650 = vpack.c.b16 %v9814, %v9810
        %v10651 = vpack.c.b16 %v9815, %v9811
        %v10652 = vpack.c.b16 %v9816, %v9812
        %v10653 = vpack.c.b16 %v9821, %v9817
        %v10654 = vpack.c.b16 %v9822, %v9818
        %v10655 = vpack.c.b16 %v9823, %v9819
        %v10656 = vpack.c.b16 %v9824, %v9820
        %v10657 = vpack.c.b16 %v9829, %v9825
        %v10658 = vpack.c.b16 %v9830, %v9826
        %v10659 = vpack.c.b16 %v9831, %v9827
        %v10660 = vpack.c.b16 %v9832, %v9828
        %v10661 = vpack.c.b16 %v9837, %v9833
        %v10662 = vpack.c.b16 %v9838, %v9834
        %v10663 = vpack.c.b16 %v9839, %v9835
        %v10664 = vpack.c.b16 %v9840, %v9836
        %v10665 = vpack.c.b16 %v9845, %v9841
        %v10666 = vpack.c.b16 %v9846, %v9842
        %v10667 = vpack.c.b16 %v9847, %v9843
        %v10668 = vpack.c.b16 %v9848, %v9844
        %v10669 = vpack.c.b16 %v9853, %v9849
        %v10670 = vpack.c.b16 %v9854, %v9850
        %v10671 = vpack.c.b16 %v9855, %v9851
        %v10672 = vpack.c.b16 %v9856, %v9852
        %v10673 = vpack.c.b16 %v9861, %v9857
        %v10674 = vpack.c.b16 %v9862, %v9858
        %v10675 = vpack.c.b16 %v9863, %v9859
        %v10676 = vpack.c.b16 %v9864, %v9860
        %v10677 = vpack.c.b16 %v9869, %v9865
        %v10678 = vpack.c.b16 %v9870, %v9866
        %v10679 = vpack.c.b16 %v9871, %v9867
        %v10680 = vpack.c.b16 %v9872, %v9868
        %v10681 = vpack.c.b16 %v9877, %v9873
        %v10682 = vpack.c.b16 %v9878, %v9874
        %v10683 = vpack.c.b16 %v9879, %v9875
        %v10684 = vpack.c.b16 %v9880, %v9876
        %v10685 = vpack.c.b16 %v9885, %v9881
        %v10686 = vpack.c.b16 %v9886, %v9882
        %v10687 = vpack.c.b16 %v9887, %v9883
        %v10688 = vpack.c.b16 %v9888, %v9884
        %v10689 = vpack.c.b16 %v9893, %v9889
        %v10690 = vpack.c.b16 %v9894, %v9890
        %v10691 = vpack.c.b16 %v9895, %v9891
        %v10692 = vpack.c.b16 %v9896, %v9892
        %v10693 = vpack.c.b16 %v9901, %v9897
        %v10694 = vpack.c.b16 %v9902, %v9898
        %v10695 = vpack.c.b16 %v9903, %v9899
        %v10696 = vpack.c.b16 %v9904, %v9900
        %v10697 = vpack.c.b16 %v9909, %v9905
        %v10698 = vpack.c.b16 %v9910, %v9906
        %v10699 = vpack.c.b16 %v9911, %v9907
        %v10700 = vpack.c.b16 %v9912, %v9908
        %v10701 = vpack.c.b16 %v9917, %v9913
        %v10702 = vpack.c.b16 %v9918, %v9914
        %v10703 = vpack.c.b16 %v9919, %v9915
        %v10704 = vpack.c.b16 %v9920, %v9916
        %v10705 = vpack.c.b16 %v9925, %v9921
        %v10706 = vpack.c.b16 %v9926, %v9922
        %v10707 = vpack.c.b16 %v9927, %v9923
        %v10708 = vpack.c.b16 %v9928, %v9924
        %v10709 = vpack.c.b16 %v9933, %v9929
        %v10710 = vpack.c.b16 %v9934, %v9930
        %v10711 = vpack.c.b16 %v9935, %v9931
        %v10712 = vpack.c.b16 %v9936, %v9932
        %v10713 = vpack.c.b16 %v9941, %v9937
        %v10714 = vpack.c.b16 %v9942, %v9938
        %v10715 = vpack.c.b16 %v9943, %v9939
        %v10716 = vpack.c.b16 %v9944, %v9940
        %v10717 = vpack.c.b16 %v9949, %v9945
        %v10718 = vpack.c.b16 %v9950, %v9946
        %v10719 = vpack.c.b16 %v9951, %v9947
        %v10720 = vpack.c.b16 %v9952, %v9948
        %v10721 = vpack.c.b16 %v9957, %v9953
        %v10722 = vpack.c.b16 %v9958, %v9954
        %v10723 = vpack.c.b16 %v9959, %v9955
        %v10724 = vpack.c.b16 %v9960, %v9956
        %v10725 = vpack.c.b16 %v9965, %v9961
        %v10726 = vpack.c.b16 %v9966, %v9962
        %v10727 = vpack.c.b16 %v9967, %v9963
        %v10728 = vpack.c.b16 %v9968, %v9964
        %v10729 = vpack.c.b16 %v9973, %v9969
        %v10730 = vpack.c.b16 %v9974, %v9970
        %v10731 = vpack.c.b16 %v9975, %v9971
        %v10732 = vpack.c.b16 %v9976, %v9972
        %v10733 = vpack.c.b16 %v9981, %v9977
        %v10734 = vpack.c.b16 %v9982, %v9978
        %v10735 = vpack.c.b16 %v9983, %v9979
        %v10736 = vpack.c.b16 %v9984, %v9980
        %v10737 = vpack.c.b16 %v9989, %v9985
        %v10738 = vpack.c.b16 %v9990, %v9986
        %v10739 = vpack.c.b16 %v9991, %v9987
        %v10740 = vpack.c.b16 %v9992, %v9988
        %v10741 = vpack.c.b16 %v9997, %v9993
        %v10742 = vpack.c.b16 %v9998, %v9994
        %v10743 = vpack.c.b16 %v9999, %v9995
        %v10744 = vpack.c.b16 %v10000, %v9996
        %v10745 = vpack.c.b16 %v10005, %v10001
        %v10746 = vpack.c.b16 %v10006, %v10002
        %v10747 = vpack.c.b16 %v10007, %v10003
        %v10748 = vpack.c.b16 %v10008, %v10004
        %v10749 = vpack.c.b16 %v10013, %v10009
        %v10750 = vpack.c.b16 %v10014, %v10010
        %v10751 = vpack.c.b16 %v10015, %v10011
        %v10752 = vpack.c.b16 %v10016, %v10012
        %v10753 = vpack.c.b16 %v10021, %v10017
        %v10754 = vpack.c.b16 %v10022, %v10018
        %v10755 = vpack.c.b16 %v10023, %v10019
        %v10756 = vpack.c.b16 %v10024, %v10020
        %v10757 = vpack.c.b16 %v10029, %v10025
        %v10758 = vpack.c.b16 %v10030, %v10026
        %v10759 = vpack.c.b16 %v10031, %v10027
        %v10760 = vpack.c.b16 %v10032, %v10028
        %v10761 = vpack.c.b16 %v10037, %v10033
        %v10762 = vpack.c.b16 %v10038, %v10034
        %v10763 = vpack.c.b16 %v10039, %v10035
        %v10764 = vpack.c.b16 %v10040, %v10036
        %v10765 = vpack.c.b16 %v10045, %v10041
        %v10766 = vpack.c.b16 %v10046, %v10042
        %v10767 = vpack.c.b16 %v10047, %v10043
        %v10768 = vpack.c.b16 %v10048, %v10044
        %v10769 = vpack.c.b16 %v10053, %v10049
        %v10770 = vpack.c.b16 %v10054, %v10050
        %v10771 = vpack.c.b16 %v10055, %v10051
        %v10772 = vpack.c.b16 %v10056, %v10052
        %v10773 = vpack.c.b16 %v10061, %v10057
        %v10774 = vpack.c.b16 %v10062, %v10058
        %v10775 = vpack.c.b16 %v10063, %v10059
        %v10776 = vpack.c.b16 %v10064, %v10060
        %v10777 = vpack.c.b16 %v10069, %v10065
        %v10778 = vpack.c.b16 %v10070, %v10066
        %v10779 = vpack.c.b16 %v10071, %v10067
        %v10780 = vpack.c.b16 %v10072, %v10068
        %v10781 = vpack.c.b16 %v10077, %v10073
        %v10782 = vpack.c.b16 %v10078, %v10074
        %v10783 = vpack.c.b16 %v10079, %v10075
        %v10784 = vpack.c.b16 %v10080, %v10076
        %v10785 = vpack.c.b16 %v10085, %v10081
        %v10786 = vpack.c.b16 %v10086, %v10082
        %v10787 = vpack.c.b16 %v10087, %v10083
        %v10788 = vpack.c.b16 %v10088, %v10084
        %v10789 = vpack.c.b16 %v10093, %v10089
        %v10790 = vpack.c.b16 %v10094, %v10090
        %v10791 = vpack.c.b16 %v10095, %v10091
        %v10792 = vpack.c.b16 %v10096, %v10092
        %v10793 = vpack.c.b16 %v10101, %v10097
        %v10794 = vpack.c.b16 %v10102, %v10098
        %v10795 = vpack.c.b16 %v10103, %v10099
        %v10796 = vpack.c.b16 %v10104, %v10100
        %v10797 = vpack.c.b16 %v10109, %v10105
        %v10798 = vpack.c.b16 %v10110, %v10106
        %v10799 = vpack.c.b16 %v10111, %v10107
        %v10800 = vpack.c.b16 %v10112, %v10108
        %v10801 = vpack.c.b16 %v10117, %v10113
        %v10802 = vpack.c.b16 %v10118, %v10114
        %v10803 = vpack.c.b16 %v10119, %v10115
        %v10804 = vpack.c.b16 %v10120, %v10116
        %v10805 = vpack.c.b16 %v10125, %v10121
        %v10806 = vpack.c.b16 %v10126, %v10122
        %v10807 = vpack.c.b16 %v10127, %v10123
        %v10808 = vpack.c.b16 %v10128, %v10124
        %v10809 = vpack.c.b16 %v10133, %v10129
        %v10810 = vpack.c.b16 %v10134, %v10130
        %v10811 = vpack.c.b16 %v10135, %v10131
        %v10812 = vpack.c.b16 %v10136, %v10132
        %v10813 = vpack.c.b16 %v10141, %v10137
        %v10814 = vpack.c.b16 %v10142, %v10138
        %v10815 = vpack.c.b16 %v10143, %v10139
        %v10816 = vpack.c.b16 %v10144, %v10140
        %v10817 = vpack.c.b16 %v10149, %v10145
        %v10818 = vpack.c.b16 %v10150, %v10146
        %v10819 = vpack.c.b16 %v10151, %v10147
        %v10820 = vpack.c.b16 %v10152, %v10148
        %v10821 = vpack.c.b16 %v10157, %v10153
        %v10822 = vpack.c.b16 %v10158, %v10154
        %v10823 = vpack.c.b16 %v10159, %v10155
        %v10824 = vpack.c.b16 %v10160, %v10156
        %v10825 = vpack.c.b16 %v10165, %v10161
        %v10826 = vpack.c.b16 %v10166, %v10162
        %v10827 = vpack.c.b16 %v10167, %v10163
        %v10828 = vpack.c.b16 %v10168, %v10164
        %v10829 = vpack.c.b16 %v10173, %v10169
        %v10830 = vpack.c.b16 %v10174, %v10170
        %v10831 = vpack.c.b16 %v10175, %v10171
        %v10832 = vpack.c.b16 %v10176, %v10172
        %v10833 = vpack.c.b16 %v10181, %v10177
        %v10834 = vpack.c.b16 %v10182, %v10178
        %v10835 = vpack.c.b16 %v10183, %v10179
        %v10836 = vpack.c.b16 %v10184, %v10180
        %v10837 = vpack.c.b16 %v10189, %v10185
        %v10838 = vpack.c.b16 %v10190, %v10186
        %v10839 = vpack.c.b16 %v10191, %v10187
        %v10840 = vpack.c.b16 %v10192, %v10188
        %v10841 = vpack.c.b16 %v10197, %v10193
        %v10842 = vpack.c.b16 %v10198, %v10194
        %v10843 = vpack.c.b16 %v10199, %v10195
        %v10844 = vpack.c.b16 %v10200, %v10196
        %v10845 = vpack.c.b16 %v10205, %v10201
        %v10846 = vpack.c.b16 %v10206, %v10202
        %v10847 = vpack.c.b16 %v10207, %v10203
        %v10848 = vpack.c.b16 %v10208, %v10204
        %v10849 = vpack.c.b16 %v10213, %v10209
        %v10850 = vpack.c.b16 %v10214, %v10210
        %v10851 = vpack.c.b16 %v10215, %v10211
        %v10852 = vpack.c.b16 %v10216, %v10212
        %v10853 = vpack.c.b16 %v10221, %v10217
        %v10854 = vpack.c.b16 %v10222, %v10218
        %v10855 = vpack.c.b16 %v10223, %v10219
        %v10856 = vpack.c.b16 %v10224, %v10220
        %v10857 = vpack.c.b16 %v10229, %v10225
        %v10858 = vpack.c.b16 %v10230, %v10226
        %v10859 = vpack.c.b16 %v10231, %v10227
        %v10860 = vpack.c.b16 %v10232, %v10228
        %v10861 = vpack.c.b16 %v10237, %v10233
        %v10862 = vpack.c.b16 %v10238, %v10234
        %v10863 = vpack.c.b16 %v10239, %v10235
        %v10864 = vpack.c.b16 %v10240, %v10236
        %v10865 = vpack.c.b16 %v10245, %v10241
        %v10866 = vpack.c.b16 %v10246, %v10242
        %v10867 = vpack.c.b16 %v10247, %v10243
        %v10868 = vpack.c.b16 %v10248, %v10244
        %v10869 = vpack.c.b16 %v10253, %v10249
        %v10870 = vpack.c.b16 %v10254, %v10250
        %v10871 = vpack.c.b16 %v10255, %v10251
        %v10872 = vpack.c.b16 %v10256, %v10252
        %v10873 = vpack.c.b16 %v10261, %v10257
        %v10874 = vpack.c.b16 %v10262, %v10258
        %v10875 = vpack.c.b16 %v10263, %v10259
        %v10876 = vpack.c.b16 %v10264, %v10260
        %v10877 = vpack.c.b16 %v10269, %v10265
        %v10878 = vpack.c.b16 %v10270, %v10266
        %v10879 = vpack.c.b16 %v10271, %v10267
        %v10880 = vpack.c.b16 %v10272, %v10268
        %v10881 = vpack.c.b16 %v10277, %v10273
        %v10882 = vpack.c.b16 %v10278, %v10274
        %v10883 = vpack.c.b16 %v10279, %v10275
        %v10884 = vpack.c.b16 %v10280, %v10276
        %v10885 = vpack.c.b16 %v10285, %v10281
        %v10886 = vpack.c.b16 %v10286, %v10282
        %v10887 = vpack.c.b16 %v10287, %v10283
        %v10888 = vpack.c.b16 %v10288, %v10284
        %v10889 = vpack.c.b16 %v10293, %v10289
        %v10890 = vpack.c.b16 %v10294, %v10290
        %v10891 = vpack.c.b16 %v10295, %v10291
        %v10892 = vpack.c.b16 %v10296, %v10292
        %v10893 = vpack.c.b16 %v10301, %v10297
        %v10894 = vpack.c.b16 %v10302, %v10298
        %v10895 = vpack.c.b16 %v10303, %v10299
        %v10896 = vpack.c.b16 %v10304, %v10300
        %v10897 = vpack.c.b16 %v10309, %v10305
        %v10898 = vpack.c.b16 %v10310, %v10306
        %v10899 = vpack.c.b16 %v10311, %v10307
        %v10900 = vpack.c.b16 %v10312, %v10308
        %v10901 = vpack.c.b16 %v10317, %v10313
        %v10902 = vpack.c.b16 %v10318, %v10314
        %v10903 = vpack.c.b16 %v10319, %v10315
        %v10904 = vpack.c.b16 %v10320, %v10316
        %v10905 = vpack.c.b16 %v10325, %v10321
        %v10906 = vpack.c.b16 %v10326, %v10322
        %v10907 = vpack.c.b16 %v10327, %v10323
        %v10908 = vpack.c.b16 %v10328, %v10324
        %v10909 = vpack.c.b16 %v10333, %v10329
        %v10910 = vpack.c.b16 %v10334, %v10330
        %v10911 = vpack.c.b16 %v10335, %v10331
        %v10912 = vpack.c.b16 %v10336, %v10332
        %v10913 = vpack.c.b16 %v10341, %v10337
        %v10914 = vpack.c.b16 %v10342, %v10338
        %v10915 = vpack.c.b16 %v10343, %v10339
        %v10916 = vpack.c.b16 %v10344, %v10340
        %v10917 = vpack.c.b16 %v10349, %v10345
        %v10918 = vpack.c.b16 %v10350, %v10346
        %v10919 = vpack.c.b16 %v10351, %v10347
        %v10920 = vpack.c.b16 %v10352, %v10348
        %v10921 = vpack.c.b16 %v10357, %v10353
        %v10922 = vpack.c.b16 %v10358, %v10354
        %v10923 = vpack.c.b16 %v10359, %v10355
        %v10924 = vpack.c.b16 %v10360, %v10356
        %v10925 = vpack.c.b16 %v10365, %v10361
        %v10926 = vpack.c.b16 %v10366, %v10362
        %v10927 = vpack.c.b16 %v10367, %v10363
        %v10928 = vpack.c.b16 %v10368, %v10364
        %v10929 = vpack.c.b16 %v10373, %v10369
        %v10930 = vpack.c.b16 %v10374, %v10370
        %v10931 = vpack.c.b16 %v10375, %v10371
        %v10932 = vpack.c.b16 %v10376, %v10372
        %v10933 = vpack.c.b16 %v10381, %v10377
        %v10934 = vpack.c.b16 %v10382, %v10378
        %v10935 = vpack.c.b16 %v10383, %v10379
        %v10936 = vpack.c.b16 %v10384, %v10380
        %v10937 = vpack.c.b16 %v10389, %v10385
        %v10938 = vpack.c.b16 %v10390, %v10386
        %v10939 = vpack.c.b16 %v10391, %v10387
        %v10940 = vpack.c.b16 %v10392, %v10388
        %v10941 = vpack.c.b16 %v10397, %v10393
        %v10942 = vpack.c.b16 %v10398, %v10394
        %v10943 = vpack.c.b16 %v10399, %v10395
        %v10944 = vpack.c.b16 %v10400, %v10396
        %v10945 = vpack.c.b16 %v10405, %v10401
        %v10946 = vpack.c.b16 %v10406, %v10402
        %v10947 = vpack.c.b16 %v10407, %v10403
        %v10948 = vpack.c.b16 %v10408, %v10404
        %v10949 = vpack.c.b16 %v10413, %v10409
        %v10950 = vpack.c.b16 %v10414, %v10410
        %v10951 = vpack.c.b16 %v10415, %v10411
        %v10952 = vpack.c.b16 %v10416, %v10412
        %v10953 = vpack.c.b16 %v10421, %v10417
        %v10954 = vpack.c.b16 %v10422, %v10418
        %v10955 = vpack.c.b16 %v10423, %v10419
        %v10956 = vpack.c.b16 %v10424, %v10420
        %v10957 = vpack.c.b16 %v10429, %v10425
        %v10958 = vpack.c.b16 %v10430, %v10426
        %v10959 = vpack.c.b16 %v10431, %v10427
        %v10960 = vpack.c.b16 %v10432, %v10428
        %v10961 = vpack.c.b16 %v10437, %v10433
        %v10962 = vpack.c.b16 %v10438, %v10434
        %v10963 = vpack.c.b16 %v10439, %v10435
        %v10964 = vpack.c.b16 %v10440, %v10436
        %v10965 = vpack.c.b16 %v10445, %v10441
        %v10966 = vpack.c.b16 %v10446, %v10442
        %v10967 = vpack.c.b16 %v10447, %v10443
        %v10968 = vpack.c.b16 %v10448, %v10444
        %v10969 = vpack.c.b16 %v10453, %v10449
        %v10970 = vpack.c.b16 %v10454, %v10450
        %v10971 = vpack.c.b16 %v10455, %v10451
        %v10972 = vpack.c.b16 %v10456, %v10452
        %v10973 = vpack.c.b16 %v10461, %v10457
        %v10974 = vpack.c.b16 %v10462, %v10458
        %v10975 = vpack.c.b16 %v10463, %v10459
        %v10976 = vpack.c.b16 %v10464, %v10460
        %11489 = vmatprep.subr.bf16.mxu0 %v10466
        %11490 = vmatpush1.bf16.msra.mxu0 %v10465
        %11491 = vmatprep.subr.bf16.mxu0 %v10470
        %11492 = vmatpush1.bf16.msra.mxu0 %v10469
        %11493 = vmatprep.subr.bf16.mxu0 %v10474
        %11494 = vmatpush1.bf16.msra.mxu0 %v10473
        %11495 = vmatprep.subr.bf16.mxu0 %v10478
        %11496 = vmatpush1.bf16.msra.mxu0 %v10477
        %11497 = vmatprep.subr.bf16.mxu0 %v10482
        %11498 = vmatpush1.bf16.msra.mxu0 %v10481
        %11499 = vmatprep.subr.bf16.mxu0 %v10486
        %11500 = vmatpush1.bf16.msra.mxu0 %v10485
        %11501 = vmatprep.subr.bf16.mxu0 %v10490
        %11502 = vmatpush1.bf16.msra.mxu0 %v10489
        %11503 = vmatprep.subr.bf16.mxu0 %v10494
        %11504 = vmatpush1.bf16.msra.mxu0 %v10493
        %11505 = vmatprep.subr.bf16.mxu0 %v10498
        %11506 = vmatpush1.bf16.msra.mxu0 %v10497
        %11507 = vmatprep.subr.bf16.mxu0 %v10502
        %11508 = vmatpush1.bf16.msra.mxu0 %v10501
        %11509 = vmatprep.subr.bf16.mxu0 %v10506
        %11510 = vmatpush1.bf16.msra.mxu0 %v10505
        %11511 = vmatprep.subr.bf16.mxu0 %v10510
        %11512 = vmatpush1.bf16.msra.mxu0 %v10509
        %11513 = vmatprep.subr.bf16.mxu0 %v10514
        %11514 = vmatpush1.bf16.msra.mxu0 %v10513
        %11515 = vmatprep.subr.bf16.mxu0 %v10518
        %11516 = vmatpush1.bf16.msra.mxu0 %v10517
        %11517 = vmatprep.subr.bf16.mxu0 %v10522
        %11518 = vmatpush1.bf16.msra.mxu0 %v10521
        %11519 = vmatprep.subr.bf16.mxu0 %v10526
        %11520 = vmatpush1.bf16.msra.mxu0 %v10525
        %11521 = vmatprep.mubr.bf16.mxu0 %v8380
        %11522 = vmatmul.mubr.bf16.gmra.mrb[0].mxu0 %v8379
        %v11523 = vpop.f32.mrb[0].mxu0
        %v11524 = vadd.f32 %v8912, %v11523
        %v11525 = vpop.f32.mrb[0].mxu0
        %v11526 = vadd.f32 %v8916, %v11525
        %v11527 = vpop.f32.mrb[0].mxu0
        %v11528 = vpop.f32.mrb[0].mxu0
        %11529 = vdwg.mxu0
        %11530 = vmatprep.subr.bf16.mxu0 %v10530
        %11531 = vmatpush1.bf16.msra.mxu0 %v10529
        %11532 = vmatprep.subr.bf16.mxu0 %v10534
        %11533 = vmatpush1.bf16.msra.mxu0 %v10533
        %11534 = vmatprep.subr.bf16.mxu0 %v10538
        %11535 = vmatpush1.bf16.msra.mxu0 %v10537
        %11536 = vmatprep.subr.bf16.mxu0 %v10542
        %11537 = vmatpush1.bf16.msra.mxu0 %v10541
        %11538 = vmatprep.subr.bf16.mxu0 %v10546
        %11539 = vmatpush1.bf16.msra.mxu0 %v10545
        %11540 = vmatprep.subr.bf16.mxu0 %v10550
        %11541 = vmatpush1.bf16.msra.mxu0 %v10549
        %11542 = vmatprep.subr.bf16.mxu0 %v10554
        %11543 = vmatpush1.bf16.msra.mxu0 %v10553
        %11544 = vmatprep.subr.bf16.mxu0 %v10558
        %11545 = vmatpush1.bf16.msra.mxu0 %v10557
        %11546 = vmatprep.subr.bf16.mxu0 %v10562
        %11547 = vmatpush1.bf16.msra.mxu0 %v10561
        %11548 = vmatprep.subr.bf16.mxu0 %v10566
        %11549 = vmatpush1.bf16.msra.mxu0 %v10565
        %11550 = vmatprep.subr.bf16.mxu0 %v10570
        %11551 = vmatpush1.bf16.msra.mxu0 %v10569
        %11552 = vmatprep.subr.bf16.mxu0 %v10574
        %11553 = vmatpush1.bf16.msra.mxu0 %v10573
        %11554 = vmatprep.subr.bf16.mxu0 %v10578
        %11555 = vmatpush1.bf16.msra.mxu0 %v10577
        %11556 = vmatprep.subr.bf16.mxu0 %v10582
        %11557 = vmatpush1.bf16.msra.mxu0 %v10581
        %11558 = vmatprep.subr.bf16.mxu0 %v10586
        %11559 = vmatpush1.bf16.msra.mxu0 %v10585
        %11560 = vmatprep.subr.bf16.mxu0 %v10590
        %11561 = vmatpush1.bf16.msra.mxu0 %v10589
        %11562 = vmatprep.mubr.bf16.mxu0 %v8382
        %11563 = vmatmul.mubr.bf16.gmra.mrb[0].mxu0 %v8381
        %v11564 = vpop.f32.mrb[0].mxu0
        %v11565 = vadd.f32 %v11524, %v11564
        %v11566 = vpop.f32.mrb[0].mxu0
        %v11567 = vadd.f32 %v11526, %v11566
        %v11568 = vpop.f32.mrb[0].mxu0
        %v11569 = vpop.f32.mrb[0].mxu0
        %11570 = vdwg.mxu0
        %11571 = vmatprep.subr.bf16.mxu0 %v10594
        %11572 = vmatpush1.bf16.msra.mxu0 %v10593
        %11573 = vmatprep.subr.bf16.mxu0 %v10598
        %11574 = vmatpush1.bf16.msra.mxu0 %v10597
        %11575 = vmatprep.subr.bf16.mxu0 %v10602
        %11576 = vmatpush1.bf16.msra.mxu0 %v10601
        %11577 = vmatprep.subr.bf16.mxu0 %v10606
        %11578 = vmatpush1.bf16.msra.mxu0 %v10605
        %11579 = vmatprep.subr.bf16.mxu0 %v10610
        %11580 = vmatpush1.bf16.msra.mxu0 %v10609
        %11581 = vmatprep.subr.bf16.mxu0 %v10614
        %11582 = vmatpush1.bf16.msra.mxu0 %v10613
        %11583 = vmatprep.subr.bf16.mxu0 %v10618
        %11584 = vmatpush1.bf16.msra.mxu0 %v10617
        %11585 = vmatprep.subr.bf16.mxu0 %v10622
        %11586 = vmatpush1.bf16.msra.mxu0 %v10621
        %11587 = vmatprep.subr.bf16.mxu0 %v10626
        %11588 = vmatpush1.bf16.msra.mxu0 %v10625
        %11589 = vmatprep.subr.bf16.mxu0 %v10630
        %11590 = vmatpush1.bf16.msra.mxu0 %v10629
        %11591 = vmatprep.subr.bf16.mxu0 %v10634
        %11592 = vmatpush1.bf16.msra.mxu0 %v10633
        %11593 = vmatprep.subr.bf16.mxu0 %v10638
        %11594 = vmatpush1.bf16.msra.mxu0 %v10637
        %11595 = vmatprep.subr.bf16.mxu0 %v10642
        %11596 = vmatpush1.bf16.msra.mxu0 %v10641
        %11597 = vmatprep.subr.bf16.mxu0 %v10646
        %11598 = vmatpush1.bf16.msra.mxu0 %v10645
        %11599 = vmatprep.subr.bf16.mxu0 %v10650
        %11600 = vmatpush1.bf16.msra.mxu0 %v10649
        %11601 = vmatprep.subr.bf16.mxu0 %v10654
        %11602 = vmatpush1.bf16.msra.mxu0 %v10653
        %11603 = vmatprep.mubr.bf16.mxu0 %v8384
        %11604 = vmatmul.mubr.bf16.gmra.mrb[0].mxu0 %v8383
        %v11605 = vpop.f32.mrb[0].mxu0
        %v11606 = vadd.f32 %v11565, %v11605
        %v11607 = vpop.f32.mrb[0].mxu0
        %v11608 = vadd.f32 %v11567, %v11607
        %v11609 = vpop.f32.mrb[0].mxu0
        %v11610 = vpop.f32.mrb[0].mxu0
        %11611 = vdwg.mxu0
        %11612 = vmatprep.subr.bf16.mxu0 %v10658
        %11613 = vmatpush1.bf16.msra.mxu0 %v10657
        %11614 = vmatprep.subr.bf16.mxu0 %v10662
        %11615 = vmatpush1.bf16.msra.mxu0 %v10661
        %11616 = vmatprep.subr.bf16.mxu0 %v10666
        %11617 = vmatpush1.bf16.msra.mxu0 %v10665
        %11618 = vmatprep.subr.bf16.mxu0 %v10670
        %11619 = vmatpush1.bf16.msra.mxu0 %v10669
        %11620 = vmatprep.subr.bf16.mxu0 %v10674
        %11621 = vmatpush1.bf16.msra.mxu0 %v10673
        %11622 = vmatprep.subr.bf16.mxu0 %v10678
        %11623 = vmatpush1.bf16.msra.mxu0 %v10677
        %11624 = vmatprep.subr.bf16.mxu0 %v10682
        %11625 = vmatpush1.bf16.msra.mxu0 %v10681
        %11626 = vmatprep.subr.bf16.mxu0 %v10686
        %11627 = vmatpush1.bf16.msra.mxu0 %v10685
        %11628 = vmatprep.subr.bf16.mxu0 %v10690
        %11629 = vmatpush1.bf16.msra.mxu0 %v10689
        %11630 = vmatprep.subr.bf16.mxu0 %v10694
        %11631 = vmatpush1.bf16.msra.mxu0 %v10693
        %11632 = vmatprep.subr.bf16.mxu0 %v10698
        %11633 = vmatpush1.bf16.msra.mxu0 %v10697
        %11634 = vmatprep.subr.bf16.mxu0 %v10702
        %11635 = vmatpush1.bf16.msra.mxu0 %v10701
        %11636 = vmatprep.subr.bf16.mxu0 %v10706
        %11637 = vmatpush1.bf16.msra.mxu0 %v10705
        %11638 = vmatprep.subr.bf16.mxu0 %v10710
        %11639 = vmatpush1.bf16.msra.mxu0 %v10709
        %11640 = vmatprep.subr.bf16.mxu0 %v10714
        %11641 = vmatpush1.bf16.msra.mxu0 %v10713
        %11642 = vmatprep.subr.bf16.mxu0 %v10718
        %11643 = vmatpush1.bf16.msra.mxu0 %v10717
        %11644 = vmatprep.mubr.bf16.mxu0 %v8386
        %11645 = vmatmul.mubr.bf16.gmra.mrb[0].mxu0 %v8385
        %v11646 = vpop.f32.mrb[0].mxu0
        %v11647 = vadd.f32 %v11606, %v11646
        %v11648 = vpop.f32.mrb[0].mxu0
        %v11649 = vadd.f32 %v11608, %v11648
        %v11650 = vpop.f32.mrb[0].mxu0
        %v11651 = vpop.f32.mrb[0].mxu0
        %11652 = vdwg.mxu0
        %11653 = vmatprep.subr.bf16.mxu0 %v10722
        %11654 = vmatpush1.bf16.msra.mxu0 %v10721
        %11655 = vmatprep.subr.bf16.mxu0 %v10726
        %11656 = vmatpush1.bf16.msra.mxu0 %v10725
        %11657 = vmatprep.subr.bf16.mxu0 %v10730
        %11658 = vmatpush1.bf16.msra.mxu0 %v10729
        %11659 = vmatprep.subr.bf16.mxu0 %v10734
        %11660 = vmatpush1.bf16.msra.mxu0 %v10733
        %11661 = vmatprep.subr.bf16.mxu0 %v10738
        %11662 = vmatpush1.bf16.msra.mxu0 %v10737
        %11663 = vmatprep.subr.bf16.mxu0 %v10742
        %11664 = vmatpush1.bf16.msra.mxu0 %v10741
        %11665 = vmatprep.subr.bf16.mxu0 %v10746
        %11666 = vmatpush1.bf16.msra.mxu0 %v10745
        %11667 = vmatprep.subr.bf16.mxu0 %v10750
        %11668 = vmatpush1.bf16.msra.mxu0 %v10749
        %11669 = vmatprep.subr.bf16.mxu0 %v10754
        %11670 = vmatpush1.bf16.msra.mxu0 %v10753
        %11671 = vmatprep.subr.bf16.mxu0 %v10758
        %11672 = vmatpush1.bf16.msra.mxu0 %v10757
        %11673 = vmatprep.subr.bf16.mxu0 %v10762
        %11674 = vmatpush1.bf16.msra.mxu0 %v10761
        %11675 = vmatprep.subr.bf16.mxu0 %v10766
        %11676 = vmatpush1.bf16.msra.mxu0 %v10765
        %11677 = vmatprep.subr.bf16.mxu0 %v10770
        %11678 = vmatpush1.bf16.msra.mxu0 %v10769
        %11679 = vmatprep.subr.bf16.mxu0 %v10774
        %11680 = vmatpush1.bf16.msra.mxu0 %v10773
        %11681 = vmatprep.subr.bf16.mxu0 %v10778
        %11682 = vmatpush1.bf16.msra.mxu0 %v10777
        %11683 = vmatprep.subr.bf16.mxu0 %v10782
        %11684 = vmatpush1.bf16.msra.mxu0 %v10781
        %11685 = vmatprep.mubr.bf16.mxu0 %v8388
        %11686 = vmatmul.mubr.bf16.gmra.mrb[0].mxu0 %v8387
        %v11687 = vpop.f32.mrb[0].mxu0
        %v11688 = vadd.f32 %v11647, %v11687
        %v11689 = vpop.f32.mrb[0].mxu0
        %v11690 = vadd.f32 %v11649, %v11689
        %v11691 = vpop.f32.mrb[0].mxu0
        %v11692 = vpop.f32.mrb[0].mxu0
        %11693 = vdwg.mxu0
        %11694 = vmatprep.subr.bf16.mxu0 %v10786
        %11695 = vmatpush1.bf16.msra.mxu0 %v10785
        %11696 = vmatprep.subr.bf16.mxu0 %v10790
        %11697 = vmatpush1.bf16.msra.mxu0 %v10789
        %11698 = vmatprep.subr.bf16.mxu0 %v10794
        %11699 = vmatpush1.bf16.msra.mxu0 %v10793
        %11700 = vmatprep.subr.bf16.mxu0 %v10798
        %11701 = vmatpush1.bf16.msra.mxu0 %v10797
        %11702 = vmatprep.subr.bf16.mxu0 %v10802
        %11703 = vmatpush1.bf16.msra.mxu0 %v10801
        %11704 = vmatprep.subr.bf16.mxu0 %v10806
        %11705 = vmatpush1.bf16.msra.mxu0 %v10805
        %11706 = vmatprep.subr.bf16.mxu0 %v10810
        %11707 = vmatpush1.bf16.msra.mxu0 %v10809
        %11708 = vmatprep.subr.bf16.mxu0 %v10814
        %11709 = vmatpush1.bf16.msra.mxu0 %v10813
        %11710 = vmatprep.subr.bf16.mxu0 %v10818
        %11711 = vmatpush1.bf16.msra.mxu0 %v10817
        %11712 = vmatprep.subr.bf16.mxu0 %v10822
        %11713 = vmatpush1.bf16.msra.mxu0 %v10821
        %11714 = vmatprep.subr.bf16.mxu0 %v10826
        %11715 = vmatpush1.bf16.msra.mxu0 %v10825
        %11716 = vmatprep.subr.bf16.mxu0 %v10830
        %11717 = vmatpush1.bf16.msra.mxu0 %v10829
        %11718 = vmatprep.subr.bf16.mxu0 %v10834
        %11719 = vmatpush1.bf16.msra.mxu0 %v10833
        %11720 = vmatprep.subr.bf16.mxu0 %v10838
        %11721 = vmatpush1.bf16.msra.mxu0 %v10837
        %11722 = vmatprep.subr.bf16.mxu0 %v10842
        %11723 = vmatpush1.bf16.msra.mxu0 %v10841
        %11724 = vmatprep.subr.bf16.mxu0 %v10846
        %11725 = vmatpush1.bf16.msra.mxu0 %v10845
        %11726 = vmatprep.mubr.bf16.mxu0 %v8390
        %11727 = vmatmul.mubr.bf16.gmra.mrb[0].mxu0 %v8389
        %v11728 = vpop.f32.mrb[0].mxu0
        %v11729 = vadd.f32 %v11688, %v11728
        %v11730 = vpop.f32.mrb[0].mxu0
        %v11731 = vadd.f32 %v11690, %v11730
        %v11732 = vpop.f32.mrb[0].mxu0
        %v11733 = vpop.f32.mrb[0].mxu0
        %11734 = vdwg.mxu0
        %11735 = vmatprep.subr.bf16.mxu0 %v10850
        %11736 = vmatpush1.bf16.msra.mxu0 %v10849
        %11737 = vmatprep.subr.bf16.mxu0 %v10854
        %11738 = vmatpush1.bf16.msra.mxu0 %v10853
        %11739 = vmatprep.subr.bf16.mxu0 %v10858
        %11740 = vmatpush1.bf16.msra.mxu0 %v10857
        %11741 = vmatprep.subr.bf16.mxu0 %v10862
        %11742 = vmatpush1.bf16.msra.mxu0 %v10861
        %11743 = vmatprep.subr.bf16.mxu0 %v10866
        %11744 = vmatpush1.bf16.msra.mxu0 %v10865
        %11745 = vmatprep.subr.bf16.mxu0 %v10870
        %11746 = vmatpush1.bf16.msra.mxu0 %v10869
        %11747 = vmatprep.subr.bf16.mxu0 %v10874
        %11748 = vmatpush1.bf16.msra.mxu0 %v10873
        %11749 = vmatprep.subr.bf16.mxu0 %v10878
        %11750 = vmatpush1.bf16.msra.mxu0 %v10877
        %11751 = vmatprep.subr.bf16.mxu0 %v10882
        %11752 = vmatpush1.bf16.msra.mxu0 %v10881
        %11753 = vmatprep.subr.bf16.mxu0 %v10886
        %11754 = vmatpush1.bf16.msra.mxu0 %v10885
        %11755 = vmatprep.subr.bf16.mxu0 %v10890
        %11756 = vmatpush1.bf16.msra.mxu0 %v10889
        %11757 = vmatprep.subr.bf16.mxu0 %v10894
        %11758 = vmatpush1.bf16.msra.mxu0 %v10893
        %11759 = vmatprep.subr.bf16.mxu0 %v10898
        %11760 = vmatpush1.bf16.msra.mxu0 %v10897
        %11761 = vmatprep.subr.bf16.mxu0 %v10902
        %11762 = vmatpush1.bf16.msra.mxu0 %v10901
        %11763 = vmatprep.subr.bf16.mxu0 %v10906
        %11764 = vmatpush1.bf16.msra.mxu0 %v10905
        %11765 = vmatprep.subr.bf16.mxu0 %v10910
        %11766 = vmatpush1.bf16.msra.mxu0 %v10909
        %11767 = vmatprep.mubr.bf16.mxu0 %v8392
        %11768 = vmatmul.mubr.bf16.gmra.mrb[0].mxu0 %v8391
        %v11769 = vpop.f32.mrb[0].mxu0
        %v11770 = vadd.f32 %v11729, %v11769
        %v11771 = vpop.f32.mrb[0].mxu0
        %v11772 = vadd.f32 %v11731, %v11771
        %v11773 = vpop.f32.mrb[0].mxu0
        %v11774 = vpop.f32.mrb[0].mxu0
        %11775 = vdwg.mxu0
        %11776 = vmatprep.subr.bf16.mxu0 %v10914
        %11777 = vmatpush1.bf16.msra.mxu0 %v10913
        %11778 = vmatprep.subr.bf16.mxu0 %v10918
        %11779 = vmatpush1.bf16.msra.mxu0 %v10917
        %11780 = vmatprep.subr.bf16.mxu0 %v10922
        %11781 = vmatpush1.bf16.msra.mxu0 %v10921
        %11782 = vmatprep.subr.bf16.mxu0 %v10926
        %11783 = vmatpush1.bf16.msra.mxu0 %v10925
        %11784 = vmatprep.subr.bf16.mxu0 %v10930
        %11785 = vmatpush1.bf16.msra.mxu0 %v10929
        %11786 = vmatprep.subr.bf16.mxu0 %v10934
        %11787 = vmatpush1.bf16.msra.mxu0 %v10933
        %11788 = vmatprep.subr.bf16.mxu0 %v10938
        %11789 = vmatpush1.bf16.msra.mxu0 %v10937
        %11790 = vmatprep.subr.bf16.mxu0 %v10942
        %11791 = vmatpush1.bf16.msra.mxu0 %v10941
        %11792 = vmatprep.subr.bf16.mxu0 %v10946
        %11793 = vmatpush1.bf16.msra.mxu0 %v10945
        %11794 = vmatprep.subr.bf16.mxu0 %v10950
        %11795 = vmatpush1.bf16.msra.mxu0 %v10949
        %11796 = vmatprep.subr.bf16.mxu0 %v10954
        %11797 = vmatpush1.bf16.msra.mxu0 %v10953
        %11798 = vmatprep.subr.bf16.mxu0 %v10958
        %11799 = vmatpush1.bf16.msra.mxu0 %v10957
        %11800 = vmatprep.subr.bf16.mxu0 %v10962
        %11801 = vmatpush1.bf16.msra.mxu0 %v10961
        %11802 = vmatprep.subr.bf16.mxu0 %v10966
        %11803 = vmatpush1.bf16.msra.mxu0 %v10965
        %11804 = vmatprep.subr.bf16.mxu0 %v10970
        %11805 = vmatpush1.bf16.msra.mxu0 %v10969
        %11806 = vmatprep.subr.bf16.mxu0 %v10974
        %11807 = vmatpush1.bf16.msra.mxu0 %v10973
        %11808 = vmatprep.mubr.bf16.mxu0 %v8394
        %11809 = vmatmul.mubr.bf16.gmra.mrb[0].mxu0 %v8393
        %v11810 = vpop.f32.mrb[0].mxu0
        %v11811 = vadd.f32 %v11770, %v11810
        %v11812 = vpop.f32.mrb[0].mxu0
        %v11813 = vadd.f32 %v11772, %v11812
        %v11814 = vpop.f32.mrb[0].mxu0
        %v11815 = vpop.f32.mrb[0].mxu0
        %11816 = vdwg.mxu0
        %11817 = vmatprep.subr.bf16.mxu0 %v10468
        %11818 = vmatpush1.bf16.msra.mxu0 %v10467
        %11819 = vmatprep.subr.bf16.mxu0 %v10472
        %11820 = vmatpush1.bf16.msra.mxu0 %v10471
        %11821 = vmatprep.subr.bf16.mxu0 %v10476
        %11822 = vmatpush1.bf16.msra.mxu0 %v10475
        %11823 = vmatprep.subr.bf16.mxu0 %v10480
        %11824 = vmatpush1.bf16.msra.mxu0 %v10479
        %11825 = vmatprep.subr.bf16.mxu0 %v10484
        %11826 = vmatpush1.bf16.msra.mxu0 %v10483
        %11827 = vmatprep.subr.bf16.mxu0 %v10488
        %11828 = vmatpush1.bf16.msra.mxu0 %v10487
        %11829 = vmatprep.subr.bf16.mxu0 %v10492
        %11830 = vmatpush1.bf16.msra.mxu0 %v10491
        %11831 = vmatprep.subr.bf16.mxu0 %v10496
        %11832 = vmatpush1.bf16.msra.mxu0 %v10495
        %11833 = vmatprep.subr.bf16.mxu0 %v10500
        %11834 = vmatpush1.bf16.msra.mxu0 %v10499
        %11835 = vmatprep.subr.bf16.mxu0 %v10504
        %11836 = vmatpush1.bf16.msra.mxu0 %v10503
        %11837 = vmatprep.subr.bf16.mxu0 %v10508
        %11838 = vmatpush1.bf16.msra.mxu0 %v10507
        %11839 = vmatprep.subr.bf16.mxu0 %v10512
        %11840 = vmatpush1.bf16.msra.mxu0 %v10511
        %11841 = vmatprep.subr.bf16.mxu0 %v10516
        %11842 = vmatpush1.bf16.msra.mxu0 %v10515
        %11843 = vmatprep.subr.bf16.mxu0 %v10520
        %11844 = vmatpush1.bf16.msra.mxu0 %v10519
        %11845 = vmatprep.subr.bf16.mxu0 %v10524
        %11846 = vmatpush1.bf16.msra.mxu0 %v10523
        %11847 = vmatprep.subr.bf16.mxu0 %v10528
        %11848 = vmatpush1.bf16.msra.mxu0 %v10527
        %11849 = vmatprep.mubr.bf16.mxu0 %v8380
        %11850 = vmatmul.mubr.bf16.gmra.mrb[0].mxu0 %v8379
        %v11851 = vpop.f32.mrb[0].mxu0
        %v11852 = vadd.f32 %v8920, %v11851
        %v11853 = vpop.f32.mrb[0].mxu0
        %v11854 = vadd.f32 %v8924, %v11853
        %v11855 = vpop.f32.mrb[0].mxu0
        %v11856 = vpop.f32.mrb[0].mxu0
        %11857 = vdwg.mxu0
        %11858 = vmatprep.subr.bf16.mxu0 %v10532
        %11859 = vmatpush1.bf16.msra.mxu0 %v10531
        %11860 = vmatprep.subr.bf16.mxu0 %v10536
        %11861 = vmatpush1.bf16.msra.mxu0 %v10535
        %11862 = vmatprep.subr.bf16.mxu0 %v10540
        %11863 = vmatpush1.bf16.msra.mxu0 %v10539
        %11864 = vmatprep.subr.bf16.mxu0 %v10544
        %11865 = vmatpush1.bf16.msra.mxu0 %v10543
        %11866 = vmatprep.subr.bf16.mxu0 %v10548
        %11867 = vmatpush1.bf16.msra.mxu0 %v10547
        %11868 = vmatprep.subr.bf16.mxu0 %v10552
        %11869 = vmatpush1.bf16.msra.mxu0 %v10551
        %11870 = vmatprep.subr.bf16.mxu0 %v10556
        %11871 = vmatpush1.bf16.msra.mxu0 %v10555
        %11872 = vmatprep.subr.bf16.mxu0 %v10560
        %11873 = vmatpush1.bf16.msra.mxu0 %v10559
        %11874 = vmatprep.subr.bf16.mxu0 %v10564
        %11875 = vmatpush1.bf16.msra.mxu0 %v10563
        %11876 = vmatprep.subr.bf16.mxu0 %v10568
        %11877 = vmatpush1.bf16.msra.mxu0 %v10567
        %11878 = vmatprep.subr.bf16.mxu0 %v10572
        %11879 = vmatpush1.bf16.msra.mxu0 %v10571
        %11880 = vmatprep.subr.bf16.mxu0 %v10576
        %11881 = vmatpush1.bf16.msra.mxu0 %v10575
        %11882 = vmatprep.subr.bf16.mxu0 %v10580
        %11883 = vmatpush1.bf16.msra.mxu0 %v10579
        %11884 = vmatprep.subr.bf16.mxu0 %v10584
        %11885 = vmatpush1.bf16.msra.mxu0 %v10583
        %11886 = vmatprep.subr.bf16.mxu0 %v10588
        %11887 = vmatpush1.bf16.msra.mxu0 %v10587
        %11888 = vmatprep.subr.bf16.mxu0 %v10592
        %11889 = vmatpush1.bf16.msra.mxu0 %v10591
        %11890 = vmatprep.mubr.bf16.mxu0 %v8382
        %11891 = vmatmul.mubr.bf16.gmra.mrb[0].mxu0 %v8381
        %v11892 = vpop.f32.mrb[0].mxu0
        %v11893 = vadd.f32 %v11852, %v11892
        %v11894 = vpop.f32.mrb[0].mxu0
        %v11895 = vadd.f32 %v11854, %v11894
        %v11896 = vpop.f32.mrb[0].mxu0
        %v11897 = vpop.f32.mrb[0].mxu0
        %11898 = vdwg.mxu0
        %11899 = vmatprep.subr.bf16.mxu0 %v10596
        %11900 = vmatpush1.bf16.msra.mxu0 %v10595
        %11901 = vmatprep.subr.bf16.mxu0 %v10600
        %11902 = vmatpush1.bf16.msra.mxu0 %v10599
        %11903 = vmatprep.subr.bf16.mxu0 %v10604
        %11904 = vmatpush1.bf16.msra.mxu0 %v10603
        %11905 = vmatprep.subr.bf16.mxu0 %v10608
        %11906 = vmatpush1.bf16.msra.mxu0 %v10607
        %11907 = vmatprep.subr.bf16.mxu0 %v10612
        %11908 = vmatpush1.bf16.msra.mxu0 %v10611
        %11909 = vmatprep.subr.bf16.mxu0 %v10616
        %11910 = vmatpush1.bf16.msra.mxu0 %v10615
        %11911 = vmatprep.subr.bf16.mxu0 %v10620
        %11912 = vmatpush1.bf16.msra.mxu0 %v10619
        %11913 = vmatprep.subr.bf16.mxu0 %v10624
        %11914 = vmatpush1.bf16.msra.mxu0 %v10623
        %11915 = vmatprep.subr.bf16.mxu0 %v10628
        %11916 = vmatpush1.bf16.msra.mxu0 %v10627
        %11917 = vmatprep.subr.bf16.mxu0 %v10632
        %11918 = vmatpush1.bf16.msra.mxu0 %v10631
        %11919 = vmatprep.subr.bf16.mxu0 %v10636
        %11920 = vmatpush1.bf16.msra.mxu0 %v10635
        %11921 = vmatprep.subr.bf16.mxu0 %v10640
        %11922 = vmatpush1.bf16.msra.mxu0 %v10639
        %11923 = vmatprep.subr.bf16.mxu0 %v10644
        %11924 = vmatpush1.bf16.msra.mxu0 %v10643
        %11925 = vmatprep.subr.bf16.mxu0 %v10648
        %11926 = vmatpush1.bf16.msra.mxu0 %v10647
        %11927 = vmatprep.subr.bf16.mxu0 %v10652
        %11928 = vmatpush1.bf16.msra.mxu0 %v10651
        %11929 = vmatprep.subr.bf16.mxu0 %v10656
        %11930 = vmatpush1.bf16.msra.mxu0 %v10655
        %11931 = vmatprep.mubr.bf16.mxu0 %v8384
        %11932 = vmatmul.mubr.bf16.gmra.mrb[0].mxu0 %v8383
        %v11933 = vpop.f32.mrb[0].mxu0
        %v11934 = vadd.f32 %v11893, %v11933
        %v11935 = vpop.f32.mrb[0].mxu0
        %v11936 = vadd.f32 %v11895, %v11935
        %v11937 = vpop.f32.mrb[0].mxu0
        %v11938 = vpop.f32.mrb[0].mxu0
        %11939 = vdwg.mxu0
        %11940 = vmatprep.subr.bf16.mxu0 %v10660
        %11941 = vmatpush1.bf16.msra.mxu0 %v10659
        %11942 = vmatprep.subr.bf16.mxu0 %v10664
        %11943 = vmatpush1.bf16.msra.mxu0 %v10663
        %11944 = vmatprep.subr.bf16.mxu0 %v10668
        %11945 = vmatpush1.bf16.msra.mxu0 %v10667
        %11946 = vmatprep.subr.bf16.mxu0 %v10672
        %11947 = vmatpush1.bf16.msra.mxu0 %v10671
        %11948 = vmatprep.subr.bf16.mxu0 %v10676
        %11949 = vmatpush1.bf16.msra.mxu0 %v10675
        %11950 = vmatprep.subr.bf16.mxu0 %v10680
        %11951 = vmatpush1.bf16.msra.mxu0 %v10679
        %11952 = vmatprep.subr.bf16.mxu0 %v10684
        %11953 = vmatpush1.bf16.msra.mxu0 %v10683
        %11954 = vmatprep.subr.bf16.mxu0 %v10688
        %11955 = vmatpush1.bf16.msra.mxu0 %v10687
        %11956 = vmatprep.subr.bf16.mxu0 %v10692
        %11957 = vmatpush1.bf16.msra.mxu0 %v10691
        %11958 = vmatprep.subr.bf16.mxu0 %v10696
        %11959 = vmatpush1.bf16.msra.mxu0 %v10695
        %11960 = vmatprep.subr.bf16.mxu0 %v10700
        %11961 = vmatpush1.bf16.msra.mxu0 %v10699
        %11962 = vmatprep.subr.bf16.mxu0 %v10704
        %11963 = vmatpush1.bf16.msra.mxu0 %v10703
        %11964 = vmatprep.subr.bf16.mxu0 %v10708
        %11965 = vmatpush1.bf16.msra.mxu0 %v10707
        %11966 = vmatprep.subr.bf16.mxu0 %v10712
        %11967 = vmatpush1.bf16.msra.mxu0 %v10711
        %11968 = vmatprep.subr.bf16.mxu0 %v10716
        %11969 = vmatpush1.bf16.msra.mxu0 %v10715
        %11970 = vmatprep.subr.bf16.mxu0 %v10720
        %11971 = vmatpush1.bf16.msra.mxu0 %v10719
        %11972 = vmatprep.mubr.bf16.mxu0 %v8386
        %11973 = vmatmul.mubr.bf16.gmra.mrb[0].mxu0 %v8385
        %v11974 = vpop.f32.mrb[0].mxu0
        %v11975 = vadd.f32 %v11934, %v11974
        %v11976 = vpop.f32.mrb[0].mxu0
        %v11977 = vadd.f32 %v11936, %v11976
        %v11978 = vpop.f32.mrb[0].mxu0
        %v11979 = vpop.f32.mrb[0].mxu0
        %11980 = vdwg.mxu0
        %11981 = vmatprep.subr.bf16.mxu0 %v10724
        %11982 = vmatpush1.bf16.msra.mxu0 %v10723
        %11983 = vmatprep.subr.bf16.mxu0 %v10728
        %11984 = vmatpush1.bf16.msra.mxu0 %v10727
        %11985 = vmatprep.subr.bf16.mxu0 %v10732
        %11986 = vmatpush1.bf16.msra.mxu0 %v10731
        %11987 = vmatprep.subr.bf16.mxu0 %v10736
        %11988 = vmatpush1.bf16.msra.mxu0 %v10735
        %11989 = vmatprep.subr.bf16.mxu0 %v10740
        %11990 = vmatpush1.bf16.msra.mxu0 %v10739
        %11991 = vmatprep.subr.bf16.mxu0 %v10744
        %11992 = vmatpush1.bf16.msra.mxu0 %v10743
        %11993 = vmatprep.subr.bf16.mxu0 %v10748
        %11994 = vmatpush1.bf16.msra.mxu0 %v10747
        %11995 = vmatprep.subr.bf16.mxu0 %v10752
        %11996 = vmatpush1.bf16.msra.mxu0 %v10751
        %11997 = vmatprep.subr.bf16.mxu0 %v10756
        %11998 = vmatpush1.bf16.msra.mxu0 %v10755
        %11999 = vmatprep.subr.bf16.mxu0 %v10760
        %12000 = vmatpush1.bf16.msra.mxu0 %v10759
        %12001 = vmatprep.subr.bf16.mxu0 %v10764
        %12002 = vmatpush1.bf16.msra.mxu0 %v10763
        %12003 = vmatprep.subr.bf16.mxu0 %v10768
        %12004 = vmatpush1.bf16.msra.mxu0 %v10767
        %12005 = vmatprep.subr.bf16.mxu0 %v10772
        %12006 = vmatpush1.bf16.msra.mxu0 %v10771
        %12007 = vmatprep.subr.bf16.mxu0 %v10776
        %12008 = vmatpush1.bf16.msra.mxu0 %v10775
        %12009 = vmatprep.subr.bf16.mxu0 %v10780
        %12010 = vmatpush1.bf16.msra.mxu0 %v10779
        %12011 = vmatprep.subr.bf16.mxu0 %v10784
        %12012 = vmatpush1.bf16.msra.mxu0 %v10783
        %12013 = vmatprep.mubr.bf16.mxu0 %v8388
        %12014 = vmatmul.mubr.bf16.gmra.mrb[0].mxu0 %v8387
        %v12015 = vpop.f32.mrb[0].mxu0
        %v12016 = vadd.f32 %v11975, %v12015
        %v12017 = vpop.f32.mrb[0].mxu0
        %v12018 = vadd.f32 %v11977, %v12017
        %v12019 = vpop.f32.mrb[0].mxu0
        %v12020 = vpop.f32.mrb[0].mxu0
        %12021 = vdwg.mxu0
        %12022 = vmatprep.subr.bf16.mxu0 %v10788
        %12023 = vmatpush1.bf16.msra.mxu0 %v10787
        %12024 = vmatprep.subr.bf16.mxu0 %v10792
        %12025 = vmatpush1.bf16.msra.mxu0 %v10791
        %12026 = vmatprep.subr.bf16.mxu0 %v10796
        %12027 = vmatpush1.bf16.msra.mxu0 %v10795
        %12028 = vmatprep.subr.bf16.mxu0 %v10800
        %12029 = vmatpush1.bf16.msra.mxu0 %v10799
        %12030 = vmatprep.subr.bf16.mxu0 %v10804
        %12031 = vmatpush1.bf16.msra.mxu0 %v10803
        %12032 = vmatprep.subr.bf16.mxu0 %v10808
        %12033 = vmatpush1.bf16.msra.mxu0 %v10807
        %12034 = vmatprep.subr.bf16.mxu0 %v10812
        %12035 = vmatpush1.bf16.msra.mxu0 %v10811
        %12036 = vmatprep.subr.bf16.mxu0 %v10816
        %12037 = vmatpush1.bf16.msra.mxu0 %v10815
        %12038 = vmatprep.subr.bf16.mxu0 %v10820
        %12039 = vmatpush1.bf16.msra.mxu0 %v10819
        %12040 = vmatprep.subr.bf16.mxu0 %v10824
        %12041 = vmatpush1.bf16.msra.mxu0 %v10823
        %12042 = vmatprep.subr.bf16.mxu0 %v10828
        %12043 = vmatpush1.bf16.msra.mxu0 %v10827
        %12044 = vmatprep.subr.bf16.mxu0 %v10832
        %12045 = vmatpush1.bf16.msra.mxu0 %v10831
        %12046 = vmatprep.subr.bf16.mxu0 %v10836
        %12047 = vmatpush1.bf16.msra.mxu0 %v10835
        %12048 = vmatprep.subr.bf16.mxu0 %v10840
        %12049 = vmatpush1.bf16.msra.mxu0 %v10839
        %12050 = vmatprep.subr.bf16.mxu0 %v10844
        %12051 = vmatpush1.bf16.msra.mxu0 %v10843
        %12052 = vmatprep.subr.bf16.mxu0 %v10848
        %12053 = vmatpush1.bf16.msra.mxu0 %v10847
        %12054 = vmatprep.mubr.bf16.mxu0 %v8390
        %12055 = vmatmul.mubr.bf16.gmra.mrb[0].mxu0 %v8389
        %v12056 = vpop.f32.mrb[0].mxu0
        %v12057 = vadd.f32 %v12016, %v12056
        %v12058 = vpop.f32.mrb[0].mxu0
        %v12059 = vadd.f32 %v12018, %v12058
        %v12060 = vpop.f32.mrb[0].mxu0
        %v12061 = vpop.f32.mrb[0].mxu0
        %12062 = vdwg.mxu0
        %12063 = vmatprep.subr.bf16.mxu0 %v10852
        %12064 = vmatpush1.bf16.msra.mxu0 %v10851
        %12065 = vmatprep.subr.bf16.mxu0 %v10856
        %12066 = vmatpush1.bf16.msra.mxu0 %v10855
        %12067 = vmatprep.subr.bf16.mxu0 %v10860
        %12068 = vmatpush1.bf16.msra.mxu0 %v10859
        %12069 = vmatprep.subr.bf16.mxu0 %v10864
        %12070 = vmatpush1.bf16.msra.mxu0 %v10863
        %12071 = vmatprep.subr.bf16.mxu0 %v10868
        %12072 = vmatpush1.bf16.msra.mxu0 %v10867
        %12073 = vmatprep.subr.bf16.mxu0 %v10872
        %12074 = vmatpush1.bf16.msra.mxu0 %v10871
        %12075 = vmatprep.subr.bf16.mxu0 %v10876
        %12076 = vmatpush1.bf16.msra.mxu0 %v10875
        %12077 = vmatprep.subr.bf16.mxu0 %v10880
        %12078 = vmatpush1.bf16.msra.mxu0 %v10879
        %12079 = vmatprep.subr.bf16.mxu0 %v10884
        %12080 = vmatpush1.bf16.msra.mxu0 %v10883
        %12081 = vmatprep.subr.bf16.mxu0 %v10888
        %12082 = vmatpush1.bf16.msra.mxu0 %v10887
        %12083 = vmatprep.subr.bf16.mxu0 %v10892
        %12084 = vmatpush1.bf16.msra.mxu0 %v10891
        %12085 = vmatprep.subr.bf16.mxu0 %v10896
        %12086 = vmatpush1.bf16.msra.mxu0 %v10895
        %12087 = vmatprep.subr.bf16.mxu0 %v10900
        %12088 = vmatpush1.bf16.msra.mxu0 %v10899
        %12089 = vmatprep.subr.bf16.mxu0 %v10904
        %12090 = vmatpush1.bf16.msra.mxu0 %v10903
        %12091 = vmatprep.subr.bf16.mxu0 %v10908
        %12092 = vmatpush1.bf16.msra.mxu0 %v10907
        %12093 = vmatprep.subr.bf16.mxu0 %v10912
        %12094 = vmatpush1.bf16.msra.mxu0 %v10911
        %12095 = vmatprep.mubr.bf16.mxu0 %v8392
        %12096 = vmatmul.mubr.bf16.gmra.mrb[0].mxu0 %v8391
        %v12097 = vpop.f32.mrb[0].mxu0
        %v12098 = vadd.f32 %v12057, %v12097
        %v12099 = vpop.f32.mrb[0].mxu0
        %v12100 = vadd.f32 %v12059, %v12099
        %v12101 = vpop.f32.mrb[0].mxu0
        %v12102 = vpop.f32.mrb[0].mxu0
        %12103 = vdwg.mxu0
        %12104 = vmatprep.subr.bf16.mxu0 %v10916
        %12105 = vmatpush1.bf16.msra.mxu0 %v10915
        %12106 = vmatprep.subr.bf16.mxu0 %v10920
        %12107 = vmatpush1.bf16.msra.mxu0 %v10919
        %12108 = vmatprep.subr.bf16.mxu0 %v10924
        %12109 = vmatpush1.bf16.msra.mxu0 %v10923
        %12110 = vmatprep.subr.bf16.mxu0 %v10928
        %12111 = vmatpush1.bf16.msra.mxu0 %v10927
        %12112 = vmatprep.subr.bf16.mxu0 %v10932
        %12113 = vmatpush1.bf16.msra.mxu0 %v10931
        %12114 = vmatprep.subr.bf16.mxu0 %v10936
        %12115 = vmatpush1.bf16.msra.mxu0 %v10935
        %12116 = vmatprep.subr.bf16.mxu0 %v10940
        %12117 = vmatpush1.bf16.msra.mxu0 %v10939
        %12118 = vmatprep.subr.bf16.mxu0 %v10944
        %12119 = vmatpush1.bf16.msra.mxu0 %v10943
        %12120 = vmatprep.subr.bf16.mxu0 %v10948
        %12121 = vmatpush1.bf16.msra.mxu0 %v10947
        %12122 = vmatprep.subr.bf16.mxu0 %v10952
        %12123 = vmatpush1.bf16.msra.mxu0 %v10951
        %12124 = vmatprep.subr.bf16.mxu0 %v10956
        %12125 = vmatpush1.bf16.msra.mxu0 %v10955
        %12126 = vmatprep.subr.bf16.mxu0 %v10960
        %12127 = vmatpush1.bf16.msra.mxu0 %v10959
        %12128 = vmatprep.subr.bf16.mxu0 %v10964
        %12129 = vmatpush1.bf16.msra.mxu0 %v10963
        %12130 = vmatprep.subr.bf16.mxu0 %v10968
        %12131 = vmatpush1.bf16.msra.mxu0 %v10967
        %12132 = vmatprep.subr.bf16.mxu0 %v10972
        %12133 = vmatpush1.bf16.msra.mxu0 %v10971
        %12134 = vmatprep.subr.bf16.mxu0 %v10976
        %12135 = vmatpush1.bf16.msra.mxu0 %v10975
        %12136 = vmatprep.mubr.bf16.mxu0 %v8394
        %12137 = vmatmul.mubr.bf16.gmra.mrb[0].mxu0 %v8393
        %v12138 = vpop.f32.mrb[0].mxu0
        %v12139 = vadd.f32 %v12098, %v12138
        %v12140 = vpop.f32.mrb[0].mxu0
        %v12141 = vadd.f32 %v12100, %v12140
        %v12142 = vpop.f32.mrb[0].mxu0
        %v12143 = vpop.f32.mrb[0].mxu0
        %12144 = vdwg.mxu0
        %v12145 = vadd.f32 %v11811, %v4543
        %v12146 = vadd.f32 %v11813, %v4544
        %v12147 = vadd.f32 %v12139, %v4545
        %v12148 = vadd.f32 %v12141, %v4546
        %v12149 = vadd.f32 %v12145, %v12146
        %v12150 = vadd.f32 %v12149, %v12147
        %v12151 = vadd.f32 %v12150, %v12148
        %12152 = vadd.xlane.f32.xlu0 %v12151
        %v12153 = vpop.xlane.xlu0 %12152
        %v12154 = vmul.f32 %v12153, %v4473
        %v12155 = vsub.f32 %v12145, %v12154
        %v12156 = vsub.f32 %v12146, %v12154
        %v12157 = vsub.f32 %v12147, %v12154
        %v12158 = vsub.f32 %v12148, %v12154
        %v12159 = vmul.f32 %v12155, %v12155
        %v12160 = vmul.f32 %v12156, %v12156
        %v12161 = vmul.f32 %v12157, %v12157
        %v12162 = vmul.f32 %v12158, %v12158
        %v12163 = vadd.f32 %v12159, %v12160
        %v12164 = vadd.f32 %v12163, %v12161
        %v12165 = vadd.f32 %v12164, %v12162
        %12166 = vadd.xlane.f32.xlu0 %v12165
        %v12167 = vpop.xlane.xlu0 %12166
        %v12168 = vmul.f32 %v12167, %v4473
        %v12169 = vadd.f32 %v12168, 1e-05
        %v12170 = vrsqrt.pop %v12169
        %v12171 = vmul.f32 %v12155, %v12170
        %v12172 = vmul.f32 %v12156, %v12170
        %v12173 = vmul.f32 %v12157, %v12170
        %v12174 = vmul.f32 %v12158, %v12170
        %v12175 = vld [vmem:[#allocation23] sm:$0xf]
        %v12177 = vlaneseq
        %v12178 = vshrl.u32 %v12177, 7
        %v12179 = vsub.s32 0, %v12178
        %v12180 = vrot.slane %v12175, %v12179
        %v12181 = vlaneseq
        %v12182 = vshrl.u32 %v12181, 7
        %v12183 = vsub.s32 1, %v12182
        %v12184 = vrot.slane %v12175, %v12183
        %v12185 = vlaneseq
        %v12186 = vshrl.u32 %v12185, 7
        %v12187 = vsub.s32 2, %v12186
        %v12188 = vrot.slane %v12175, %v12187
        %v12189 = vlaneseq
        %v12190 = vshrl.u32 %v12189, 7
        %v12191 = vsub.s32 3, %v12190
        %v12192 = vrot.slane %v12175, %v12191
        %v12197 = vmul.f32 %v12171, %v12180
        %v12198 = vmul.f32 %v12172, %v12184
        %v12199 = vmul.f32 %v12173, %v12188
        %v12200 = vmul.f32 %v12174, %v12192
        %v12201 = vld [vmem:[#allocation25] sm:$0xf]
        %v12203 = vlaneseq
        %v12204 = vshrl.u32 %v12203, 7
        %v12205 = vsub.s32 0, %v12204
        %v12206 = vrot.slane %v12201, %v12205
        %v12207 = vlaneseq
        %v12208 = vshrl.u32 %v12207, 7
        %v12209 = vsub.s32 1, %v12208
        %v12210 = vrot.slane %v12201, %v12209
        %v12211 = vlaneseq
        %v12212 = vshrl.u32 %v12211, 7
        %v12213 = vsub.s32 2, %v12212
        %v12214 = vrot.slane %v12201, %v12213
        %v12215 = vlaneseq
        %v12216 = vshrl.u32 %v12215, 7
        %v12217 = vsub.s32 3, %v12216
        %v12218 = vrot.slane %v12201, %v12217
        %v12223 = vadd.f32 %v12197, %v12206
        %v12224 = vadd.f32 %v12198, %v12210
        %v12225 = vadd.f32 %v12199, %v12214
        %v12226 = vadd.f32 %v12200, %v12218
        %12227 = vst [vmem:[%s838] sm:$0xff] %v12223
        %12228 = vst [vmem:[%s838 + $0x8] sm:$0xff] %v12224
        %12229 = vst [vmem:[%s838 + $0x10] sm:$0xff] %v12225
        %12230 = vst [vmem:[%s838 + $0x18] sm:$0xff] %v12226
        %s12231 = sand.u32 %s429, 1
        %s12232 = scalar_lea.sflag [#allocation4], %s12231
        %s12233 = sand.u32 %s429, 1
        %s12234 = smul.addr %s12233, 32
        %s12235 = scalar_lea.vmem [#allocation26], %s12234
        %s12236 = sand.u32 %s457, 1
        %s12237 = scalar_lea.sflag [#allocation28], %s12236
        %s12238 = sand.u32 %s457, 1
        %s12239 = smul.addr %s12238, 32
        %s12240 = scalar_lea.vmem [#allocation27], %s12239
        // Predicated region
        $region145: #{tpu_custom_call.1} parent=83 // pred_check
          %p12241 = pneg %p439
        $region146: #{tpu_custom_call.1} parent=83 // pred_check_branch
          %12243 = sbr.rel (%p12241) target = $region148
        $region147: #{tpu_custom_call.1} parent=83 // pred_region
          %s12245 = ssub.s32 512, 512
          %12246 = vsyncadd %s12232, %s12245
          %s12247 = smul.addr %s52, 4
          %s12248 = smul.addr %s51, 4
          %s12249 = sadd.s32 %s12247, %s12248
          %s12250 = smul.addr %s12249, 128
          %s12251 = scalar_lea.hbm %s16, %s12250
          %s12253 = sshll.u32 %s12235, 4
          %s12254 = int_to_ptr.vmem [resolvable:$true] %s12253
          %12256 = dma.vmem_to_hbm [thread:$0]  %s12254, 512, %s12251, %s12232
        $region148: #{tpu_custom_call.1} parent=83 // pred_fallthru
          _
        // Predicated region
        $region149: #{tpu_custom_call.1} parent=83 // pred_check
          %p12257 = pneg %p467
        $region150: #{tpu_custom_call.1} parent=83 // pred_check_branch
          %12259 = sbr.rel (%p12257) target = $region152
        $region151: #{tpu_custom_call.1} parent=83 // pred_region
          %s12261 = ssub.s32 512, 512
          %12262 = vsyncadd %s12237, %s12261
          %s12263 = smul.addr %s51, 8
          %s12264 = sadd.s32 %s52, %s12263
          %s12265 = smul.addr %s12264, 64
          %s12266 = scalar_lea.hbm %s17, %s12265
          %s12267 = sshll.u32 %s12240, 4
          %s12268 = int_to_ptr.vmem [resolvable:$true] %s12267
          %12273 = dma.vmem_to_hbm [thread:$0]  %s12268, 512, %s12266, %s12237, 64, 64, 4
        $region152: #{tpu_custom_call.1} parent=83 // pred_fallthru
          _
      $region84: #{tpu_custom_call.1} parent=5 // pred_fallthru
        _
      %p12274 = scmp.le.s32.totalorder 2, %s42
      // Predicated region
      $region153: #{tpu_custom_call.1} parent=5 // pred_check
        %p12275 = pneg %p12274
      $region154: #{tpu_custom_call.1} parent=5 // pred_check_branch
        %12277 = sbr.rel (%p12275) target = $region156
      $region155: #{tpu_custom_call.1} parent=5 // pred_region
        %s12278 = ssub.s32 %s42, 2
        // Predicated region
        $region157: #{tpu_custom_call.1} parent=155 // pred_check
          %p12279 = pneg %p445
        $region158: #{tpu_custom_call.1} parent=155 // pred_check_branch
          %12281 = sbr.rel (%p12279) target = $region160
        $region159: #{tpu_custom_call.1} parent=155 // pred_region
          %s12282 = sand.u32 %s430, 1
          %s12283 = scalar_lea.sflag [#allocation4], %s12282
          %s12284 = sand.u32 %s430, 1
          %s12285 = smul.addr %s12284, 32
          %s12286 = scalar_lea.vmem [#allocation26], %s12285
          %12287 = dma.done %s12283, 512
        $region160: #{tpu_custom_call.1} parent=155 // pred_fallthru
          _
        // Predicated region
        $region161: #{tpu_custom_call.1} parent=155 // pred_check
          %p12288 = pneg %p473
        $region162: #{tpu_custom_call.1} parent=155 // pred_check_branch
          %12290 = sbr.rel (%p12288) target = $region164
        $region163: #{tpu_custom_call.1} parent=155 // pred_region
          %s12291 = sand.u32 %s458, 1
          %s12292 = scalar_lea.sflag [#allocation28], %s12291
          %s12293 = sand.u32 %s458, 1
          %s12294 = smul.addr %s12293, 32
          %s12295 = scalar_lea.vmem [#allocation27], %s12294
          %12296 = dma.done %s12292, 512
        $region164: #{tpu_custom_call.1} parent=155 // pred_fallthru
          _
      $region156: #{tpu_custom_call.1} parent=5 // pred_fallthru
        _
    $region6: #{tpu_custom_call.1} parent=1 // loop_footer
      %s46 = sadd.s32 1, %s42
    $region7: #{tpu_custom_call.1} parent=1 // loop_footer_branch
      %41 = sbr.rel target = $region3
    $region8: #{tpu_custom_call.1} parent=1 // loop_exit
      _
    %12297 = vsyncpa [#allocation3], 1
    %s12298 = scalar_lea.sflag [#allocation3], 1
    %12299 = vsyncpa %s12298, 1
    %12300 = vsyncpa [#allocation6], 1
    %s12301 = scalar_lea.sflag [#allocation6], 1
    %12302 = vsyncpa %s12301, 1
    %12303 = vsyncpa [#allocation9], 1
    %12304 = vsyncpa [#allocation12], 1
    %12305 = vsyncpa [#allocation15], 1
    %12306 = vsyncpa [#allocation18], 1
    %12307 = vsyncpa [#allocation21], 1
    %12308 = vsyncpa [#allocation24], 1
    %12309 = vsyncpa [#allocation4], 1
    %s12310 = scalar_lea.sflag [#allocation4], 1
    %12311 = vsyncpa %s12310, 1
    %12312 = vsyncpa [#allocation28], 1
    %s12313 = scalar_lea.sflag [#allocation28], 1
    %12314 = vsyncpa %s12313, 1

</llo_original>
